<compile_context>
chip_gen: v7x
topology: tpu7x:2x2x1
jax: 0.10.0
libtpu: 0.0.40
codegen_flags: <defaults>
</compile_context>

<pallas_src>
import jax
import jax.numpy as jnp
from jax.experimental import pallas as pl
from jax.experimental.pallas import tpu as pltpu

LANES = 128  # lane-dense padding target for kernel outputs


# ---------------------------------------------------------------------------
# Pallas kernels
# ---------------------------------------------------------------------------
def _conv_pool_kernel(cols_ref, w_ref, b_ref, o_ref):
    """cols_ref: (4, TM, K)  w_ref: (K, 128)  b_ref: (1, 128)  o_ref: (TM, 128).

    Computes max over the 4 pool-window positions of (cols @ w), then bias+ReLU.
    (max/bias/ReLU commute here since the bias is shared and ReLU is monotone.)
    """
    w = w_ref[...]
    r = jnp.dot(cols_ref[0], w, preferred_element_type=jnp.float32)
    for p in range(1, 4):
        r = jnp.maximum(r, jnp.dot(cols_ref[p], w,
                                   preferred_element_type=jnp.float32))
    o_ref[...] = jnp.maximum(r + b_ref[...], 0.0)


def _fc_fused_kernel(x_ref, w1_ref, b1_ref, w2_ref, b2_ref, o_ref):
    """Fused fc1 + ReLU + fc2 (fc2 output zero-padded to 128 lanes)."""
    h = jnp.dot(x_ref[...], w1_ref[...], preferred_element_type=jnp.float32)
    h = jnp.maximum(h + b1_ref[...], 0.0)
    o_ref[...] = jnp.dot(h, w2_ref[...],
                         preferred_element_type=jnp.float32) + b2_ref[...]


# ---------------------------------------------------------------------------
# pallas_call wrappers
# ---------------------------------------------------------------------------
def _pick_tile(m, target=256):
    # full dim is always a legal block; otherwise a 128/8-aligned tile
    return m if m <= target else target


def conv_pool(cols4, w, b, tm=256):
    """cols4: (4, M4, K), w: (K, 128), b: (1, 128) -> (M4, 128) pooled conv."""
    _, M4, K = cols4.shape
    Cp = w.shape[1]
    tm = _pick_tile(M4, tm)
    return pl.pallas_call(
        _conv_pool_kernel,
        grid=(pl.cdiv(M4, tm),),
        in_specs=[
            pl.BlockSpec((4, tm, K), lambda i: (0, i, 0)),
            pl.BlockSpec((K, Cp), lambda i: (0, 0)),
            pl.BlockSpec((1, Cp), lambda i: (0, 0)),
        ],
        out_specs=pl.BlockSpec((tm, Cp), lambda i: (i, 0)),
        out_shape=jax.ShapeDtypeStruct((M4, Cp), jnp.float32),
        compiler_params=pltpu.CompilerParams(
            dimension_semantics=("parallel",)),
    )(cols4, w, b)


def fc_fused(x, w1, b1, w2, b2, tm=256):
    """x: (M, K) -> (M, 128) = (relu(x@w1+b1)) @ w2 + b2 (w2/b2 lane-padded)."""
    M, K = x.shape
    H = w1.shape[1]
    Cp = w2.shape[1]
    tm = _pick_tile(M, tm)
    return pl.pallas_call(
        _fc_fused_kernel,
        grid=(pl.cdiv(M, tm),),
        in_specs=[
            pl.BlockSpec((tm, K), lambda i: (i, 0)),
            pl.BlockSpec((K, H), lambda i: (0, 0)),
            pl.BlockSpec((1, H), lambda i: (0, 0)),
            pl.BlockSpec((H, Cp), lambda i: (0, 0)),
            pl.BlockSpec((1, Cp), lambda i: (0, 0)),
        ],
        out_specs=pl.BlockSpec((tm, Cp), lambda i: (i, 0)),
        out_shape=jax.ShapeDtypeStruct((M, Cp), jnp.float32),
        compiler_params=pltpu.CompilerParams(
            dimension_semantics=("parallel",)),
    )(x, w1, b1, w2, b2)


# ---------------------------------------------------------------------------
# JAX glue: NHWC im2col grouped by 2x2 pool window, parameter preparation
# ---------------------------------------------------------------------------
def im2col_pooled_nhwc(x, kh, kw):
    """x: (N, H, W, C) -> (4, N*(Ho/2)*(Wo/2), kh*kw*C).

    Patch ordering along K is (kh, kw, C); axis 0 indexes the position inside
    each 2x2 pool window; rows are ordered (n, ph, pw).
    """
    N, H, W, C = x.shape
    Ho, Wo = H - kh + 1, W - kw + 1
    Hp, Wp = Ho // 2, Wo // 2
    taps = []
    for i in range(kh):
        for j in range(kw):
            taps.append(x[:, i:i + Ho, j:j + Wo, :])
    p = jnp.stack(taps, axis=3)                      # (N, Ho, Wo, kh*kw, C)
    p = p.reshape(N, Ho, Wo, kh * kw * C)            # K ordering (kh, kw, C)
    p = p.reshape(N, Hp, 2, Wp, 2, kh * kw * C)
    p = p.transpose(2, 4, 0, 1, 3, 5)                # (2, 2, N, Hp, Wp, K)
    return p.reshape(4, N * Hp * Wp, kh * kw * C), Hp, Wp


def _pad_lanes(a, n=LANES):
    pad = n - a.shape[-1]
    if pad == 0:
        return a
    return jnp.pad(a, [(0, 0)] * (a.ndim - 1) + [(0, pad)])


def init_params(key):
    """Parameters in the PyTorch nn.Module layout (same shapes as state_dict)."""
    ks = jax.random.split(key, 8)

    def w(k, shape, fan_in):
        return (jax.random.normal(k, shape, jnp.float32) /
                jnp.sqrt(fan_in)).astype(jnp.float32)

    return {
        "conv1_w": w(ks[0], (32, 1, 5, 5), 1 * 5 * 5),
        "conv1_b": w(ks[1], (32,), 1 * 5 * 5),
        "conv2_w": w(ks[2], (64, 32, 5, 5), 32 * 5 * 5),
        "conv2_b": w(ks[3], (64,), 32 * 5 * 5),
        "fc1_w":   w(ks[4], (128, 64 * 7 * 7), 64 * 7 * 7),
        "fc1_b":   w(ks[5], (128,), 64 * 7 * 7),
        "fc2_w":   w(ks[6], (10, 128), 128),
        "fc2_b":   w(ks[7], (10,), 128),
    }


def prepare_params(p):
    """One-time transform: PyTorch layout -> kernel-ready, lane-padded layout."""
    def conv_w(w):
        c_out, c_in, kh, kw = w.shape
        wm = w.transpose(2, 3, 1, 0).reshape(kh * kw * c_in, c_out)  # (kh,kw,Cin)-major
        return _pad_lanes(wm)

    # fc1 columns are ordered (c, h, w) in PyTorch (NCHW flatten); permute them
    # to (h, w, c) to match our NHWC flatten, then store pre-transposed (K, N).
    f1w = p["fc1_w"].reshape(128, 64, 7, 7).transpose(0, 2, 3, 1)
    f1w = f1w.reshape(128, 64 * 7 * 7).T

    return {
        "c1w": conv_w(p["conv1_w"]), "c1b": _pad_lanes(p["conv1_b"][None, :]),
        "c2w": conv_w(p["conv2_w"]), "c2b": _pad_lanes(p["conv2_b"][None, :]),
        "f1w": f1w,                  "f1b": p["fc1_b"][None, :],
        "f2w": _pad_lanes(p["fc2_w"].T), "f2b": _pad_lanes(p["fc2_b"][None, :]),
    }


# ---------------------------------------------------------------------------
# Full forward pass
# ---------------------------------------------------------------------------
@jax.jit
def net_forward(kp, x):
    # x: (N, 1, 28, 28) NCHW float32 (28x28 implied by fc1 = 64*7*7)
    N = x.shape[0]
    x = jnp.transpose(x, (0, 2, 3, 1))                       # NHWC (N,28,28,1)

    # conv1 + ReLU + F.pad(2) + maxpool(2,2)  (pad ring == zeros after pool)
    cols, hp, wp = im2col_pooled_nhwc(x, 5, 5)               # (4, N*144, 25)
    y = conv_pool(cols, kp["c1w"], kp["c1b"])                # (N*144, 128)
    y = y.reshape(N, hp, wp, LANES)[..., :32]                # (N,12,12,32)
    y = jnp.pad(y, ((0, 0), (1, 1), (1, 1), (0, 0)))         # (N,14,14,32)

    # conv2 + ReLU + F.pad(2) + maxpool(2,2)
    cols, hp, wp = im2col_pooled_nhwc(y, 5, 5)               # (4, N*25, 800)
    y = conv_pool(cols, kp["c2w"], kp["c2b"])                # (N*25, 128)
    y = y.reshape(N, hp, wp, LANES)[..., :64]                # (N,5,5,64)
    y = jnp.pad(y, ((0, 0), (1, 1), (1, 1), (0, 0)))         # (N,7,7,64)

    # fc1 + ReLU + fc2 (fused; NHWC flatten matched by permuted fc1 weights)
    y = y.reshape(N, 7 * 7 * 64)
    out = fc_fused(y, kp["f1w"], kp["f1b"], kp["f2w"], kp["f2b"])  # (N, 128)
    return out[:, :10]


if __name__ == "__main__":
    key = jax.random.PRNGKey(0)
    pkey, xkey = jax.random.split(key)
    params = init_params(pkey)
    kernel_params = prepare_params(params)   # one-time weight repack (outside jit)
    x = jax.random.normal(xkey, (2, 1, 28, 28), jnp.float32)
    out = net_forward(kernel_params, x)
    jax.block_until_ready(out)
    assert out.shape == (2, 10) and out.dtype == jnp.float32
    print("KERNEL_OK")
</pallas_src>

<mosaic_0001>
module attributes {stable_mosaic.version = 11 : i64} {
  func.func @_conv_pool_kernel(%arg0: i32, %arg1: memref<4x256x25xf32, #tpu.memory_space<vmem>>, %arg2: memref<25x128xf32, #tpu.memory_space<vmem>>, %arg3: memref<1x128xf32, #tpu.memory_space<vmem>>, %arg4: memref<256x128xf32, #tpu.memory_space<vmem>>) attributes {dimension_semantics = [#tpu.dimension_semantics<parallel>], iteration_bounds = array<i64: 2>, scalar_prefetch = 0 : i64, scratch_operands = 0 : i64, tpu.core_type = #tpu.core_type<tc>, window_params = [{transform_indices = @transform_0, window_bounds = array<i64: 4, 256, 25>}, {pipeline_mode = #tpu.pipeline_mode<synchronous>, transform_indices = @transform_1, window_bounds = array<i64: 25, 128>}, {pipeline_mode = #tpu.pipeline_mode<synchronous>, transform_indices = @transform_2, window_bounds = array<i64: 1, 128>}, {transform_indices = @transform_3, window_bounds = array<i64: 256, 128>}]} {
    %c0 = arith.constant 0 : index
    %c0_0 = arith.constant 0 : index
    %0 = vector.load %arg2[%c0, %c0_0] : memref<25x128xf32, #tpu.memory_space<vmem>>, vector<25x128xf32>
    %c0_1 = arith.constant 0 : index
    %c0_2 = arith.constant 0 : index
    %c0_3 = arith.constant 0 : index
    %1 = vector.load %arg1[%c0_1, %c0_2, %c0_3] : memref<4x256x25xf32, #tpu.memory_space<vmem>>, vector<1x256x25xf32>
    %2 = vector.shape_cast %1 : vector<1x256x25xf32> to vector<256x25xf32>
    %cst = arith.constant dense<0.000000e+00> : vector<256x128xf32>
    %3 = tpu.matmul %2, %0, %cst {dimension_numbers = #tpu.dot_dimension_numbers<[1], [0], [0], [1], [0, 0, 1, 1], [], []>} : vector<256x25xf32>, vector<25x128xf32>, vector<256x128xf32> -> vector<256x128xf32>
    %c1 = arith.constant 1 : index
    %c0_4 = arith.constant 0 : index
    %c0_5 = arith.constant 0 : index
    %4 = vector.load %arg1[%c1, %c0_4, %c0_5] : memref<4x256x25xf32, #tpu.memory_space<vmem>>, vector<1x256x25xf32>
    %5 = vector.shape_cast %4 : vector<1x256x25xf32> to vector<256x25xf32>
    %cst_6 = arith.constant dense<0.000000e+00> : vector<256x128xf32>
    %6 = tpu.matmul %5, %0, %cst_6 {dimension_numbers = #tpu.dot_dimension_numbers<[1], [0], [0], [1], [0, 0, 1, 1], [], []>} : vector<256x25xf32>, vector<25x128xf32>, vector<256x128xf32> -> vector<256x128xf32>
    %7 = arith.maximumf %3, %6 : vector<256x128xf32>
    %c2 = arith.constant 2 : index
    %c0_7 = arith.constant 0 : index
    %c0_8 = arith.constant 0 : index
    %8 = vector.load %arg1[%c2, %c0_7, %c0_8] : memref<4x256x25xf32, #tpu.memory_space<vmem>>, vector<1x256x25xf32>
    %9 = vector.shape_cast %8 : vector<1x256x25xf32> to vector<256x25xf32>
    %cst_9 = arith.constant dense<0.000000e+00> : vector<256x128xf32>
    %10 = tpu.matmul %9, %0, %cst_9 {dimension_numbers = #tpu.dot_dimension_numbers<[1], [0], [0], [1], [0, 0, 1, 1], [], []>} : vector<256x25xf32>, vector<25x128xf32>, vector<256x128xf32> -> vector<256x128xf32>
    %11 = arith.maximumf %7, %10 : vector<256x128xf32>
    %c3 = arith.constant 3 : index
    %c0_10 = arith.constant 0 : index
    %c0_11 = arith.constant 0 : index
    %12 = vector.load %arg1[%c3, %c0_10, %c0_11] : memref<4x256x25xf32, #tpu.memory_space<vmem>>, vector<1x256x25xf32>
    %13 = vector.shape_cast %12 : vector<1x256x25xf32> to vector<256x25xf32>
    %cst_12 = arith.constant dense<0.000000e+00> : vector<256x128xf32>
    %14 = tpu.matmul %13, %0, %cst_12 {dimension_numbers = #tpu.dot_dimension_numbers<[1], [0], [0], [1], [0, 0, 1, 1], [], []>} : vector<256x25xf32>, vector<25x128xf32>, vector<256x128xf32> -> vector<256x128xf32>
    %15 = arith.maximumf %11, %14 : vector<256x128xf32>
    %c0_13 = arith.constant 0 : index
    %c0_14 = arith.constant 0 : index
    %16 = vector.load %arg3[%c0_13, %c0_14] : memref<1x128xf32, #tpu.memory_space<vmem>>, vector<1x128xf32>
    %17 = vector.broadcast %16 : vector<1x128xf32> to vector<256x128xf32>
    %18 = arith.addf %15, %17 : vector<256x128xf32>
    %cst_15 = arith.constant 0.000000e+00 : f32
    %19 = vector.broadcast %cst_15 : f32 to vector<256x128xf32>
    %20 = arith.maximumf %18, %19 : vector<256x128xf32>
    %c0_16 = arith.constant 0 : index
    %c0_17 = arith.constant 0 : index
    %21 = vector.load %arg4[%c0_16, %c0_17] : memref<256x128xf32, #tpu.memory_space<vmem>>, vector<256x128xf32>
    tpu.vector_store %arg4[%c0_16, %c0_17], %20 {strides = array<i32>} : memref<256x128xf32, #tpu.memory_space<vmem>>, vector<256x128xf32>,
    return
  }
  func.func @transform_0(%arg0: i32) -> (i32, i32, i32) {
    %c0_i32 = arith.constant 0 : i32
    %c0_i32_0 = arith.constant 0 : i32
    %c0_i32_1 = arith.constant 0 : i32
    return %c0_i32, %arg0, %c0_i32_0 : i32, i32, i32
  }
  func.func @transform_1(%arg0: i32) -> (i32, i32) {
    %c0_i32 = arith.constant 0 : i32
    %c0_i32_0 = arith.constant 0 : i32
    %c0_i32_1 = arith.constant 0 : i32
    return %c0_i32, %c0_i32_0 : i32, i32
  }
  func.func @transform_2(%arg0: i32) -> (i32, i32) {
    %c0_i32 = arith.constant 0 : i32
    %c0_i32_0 = arith.constant 0 : i32
    %c0_i32_1 = arith.constant 0 : i32
    return %c0_i32, %c0_i32_0 : i32, i32
  }
  func.func @transform_3(%arg0: i32) -> (i32, i32) {
    %c0_i32 = arith.constant 0 : i32
    %c0_i32_0 = arith.constant 0 : i32
    return %arg0, %c0_i32 : i32, i32
  }
}

module attributes {stable_mosaic.version = 11 : i64} {
  func.func @_conv_pool_kernel(%arg0: i32, %arg1: memref<4x50x800xf32, #tpu.memory_space<vmem>>, %arg2: memref<800x128xf32, #tpu.memory_space<vmem>>, %arg3: memref<1x128xf32, #tpu.memory_space<vmem>>, %arg4: memref<50x128xf32, #tpu.memory_space<vmem>>) attributes {dimension_semantics = [#tpu.dimension_semantics<parallel>], iteration_bounds = array<i64: 1>, scalar_prefetch = 0 : i64, scratch_operands = 0 : i64, tpu.core_type = #tpu.core_type<tc>, window_params = [{transform_indices = @transform_0, window_bounds = array<i64: 4, 50, 800>}, {pipeline_mode = #tpu.pipeline_mode<synchronous>, transform_indices = @transform_1, window_bounds = array<i64: 800, 128>}, {pipeline_mode = #tpu.pipeline_mode<synchronous>, transform_indices = @transform_2, window_bounds = array<i64: 1, 128>}, {transform_indices = @transform_3, window_bounds = array<i64: 50, 128>}]} {
    %c0 = arith.constant 0 : index
    %c0_0 = arith.constant 0 : index
    %0 = vector.load %arg2[%c0, %c0_0] : memref<800x128xf32, #tpu.memory_space<vmem>>, vector<800x128xf32>
    %c0_1 = arith.constant 0 : index
    %c0_2 = arith.constant 0 : index
    %c0_3 = arith.constant 0 : index
    %1 = vector.load %arg1[%c0_1, %c0_2, %c0_3] : memref<4x50x800xf32, #tpu.memory_space<vmem>>, vector<1x50x800xf32>
    %2 = vector.shape_cast %1 : vector<1x50x800xf32> to vector<50x800xf32>
    %cst = arith.constant dense<0.000000e+00> : vector<50x128xf32>
    %3 = tpu.matmul %2, %0, %cst {dimension_numbers = #tpu.dot_dimension_numbers<[1], [0], [0], [1], [0, 0, 1, 1], [], []>} : vector<50x800xf32>, vector<800x128xf32>, vector<50x128xf32> -> vector<50x128xf32>
    %c1 = arith.constant 1 : index
    %c0_4 = arith.constant 0 : index
    %c0_5 = arith.constant 0 : index
    %4 = vector.load %arg1[%c1, %c0_4, %c0_5] : memref<4x50x800xf32, #tpu.memory_space<vmem>>, vector<1x50x800xf32>
    %5 = vector.shape_cast %4 : vector<1x50x800xf32> to vector<50x800xf32>
    %cst_6 = arith.constant dense<0.000000e+00> : vector<50x128xf32>
    %6 = tpu.matmul %5, %0, %cst_6 {dimension_numbers = #tpu.dot_dimension_numbers<[1], [0], [0], [1], [0, 0, 1, 1], [], []>} : vector<50x800xf32>, vector<800x128xf32>, vector<50x128xf32> -> vector<50x128xf32>
    %7 = arith.maximumf %3, %6 : vector<50x128xf32>
    %c2 = arith.constant 2 : index
    %c0_7 = arith.constant 0 : index
    %c0_8 = arith.constant 0 : index
    %8 = vector.load %arg1[%c2, %c0_7, %c0_8] : memref<4x50x800xf32, #tpu.memory_space<vmem>>, vector<1x50x800xf32>
    %9 = vector.shape_cast %8 : vector<1x50x800xf32> to vector<50x800xf32>
    %cst_9 = arith.constant dense<0.000000e+00> : vector<50x128xf32>
    %10 = tpu.matmul %9, %0, %cst_9 {dimension_numbers = #tpu.dot_dimension_numbers<[1], [0], [0], [1], [0, 0, 1, 1], [], []>} : vector<50x800xf32>, vector<800x128xf32>, vector<50x128xf32> -> vector<50x128xf32>
    %11 = arith.maximumf %7, %10 : vector<50x128xf32>
    %c3 = arith.constant 3 : index
    %c0_10 = arith.constant 0 : index
    %c0_11 = arith.constant 0 : index
    %12 = vector.load %arg1[%c3, %c0_10, %c0_11] : memref<4x50x800xf32, #tpu.memory_space<vmem>>, vector<1x50x800xf32>
    %13 = vector.shape_cast %12 : vector<1x50x800xf32> to vector<50x800xf32>
    %cst_12 = arith.constant dense<0.000000e+00> : vector<50x128xf32>
    %14 = tpu.matmul %13, %0, %cst_12 {dimension_numbers = #tpu.dot_dimension_numbers<[1], [0], [0], [1], [0, 0, 1, 1], [], []>} : vector<50x800xf32>, vector<800x128xf32>, vector<50x128xf32> -> vector<50x128xf32>
    %15 = arith.maximumf %11, %14 : vector<50x128xf32>
    %c0_13 = arith.constant 0 : index
    %c0_14 = arith.constant 0 : index
    %16 = vector.load %arg3[%c0_13, %c0_14] : memref<1x128xf32, #tpu.memory_space<vmem>>, vector<1x128xf32>
    %17 = vector.broadcast %16 : vector<1x128xf32> to vector<50x128xf32>
    %18 = arith.addf %15, %17 : vector<50x128xf32>
    %cst_15 = arith.constant 0.000000e+00 : f32
    %19 = vector.broadcast %cst_15 : f32 to vector<50x128xf32>
    %20 = arith.maximumf %18, %19 : vector<50x128xf32>
    %c0_16 = arith.constant 0 : index
    %c0_17 = arith.constant 0 : index
    %21 = vector.load %arg4[%c0_16, %c0_17] : memref<50x128xf32, #tpu.memory_space<vmem>>, vector<50x128xf32>
    tpu.vector_store %arg4[%c0_16, %c0_17], %20 {strides = array<i32>} : memref<50x128xf32, #tpu.memory_space<vmem>>, vector<50x128xf32>,
    return
  }
  func.func @transform_0(%arg0: i32) -> (i32, i32, i32) {
    %c0_i32 = arith.constant 0 : i32
    %c0_i32_0 = arith.constant 0 : i32
    %c0_i32_1 = arith.constant 0 : i32
    return %c0_i32, %arg0, %c0_i32_0 : i32, i32, i32
  }
  func.func @transform_1(%arg0: i32) -> (i32, i32) {
    %c0_i32 = arith.constant 0 : i32
    %c0_i32_0 = arith.constant 0 : i32
    %c0_i32_1 = arith.constant 0 : i32
    return %c0_i32, %c0_i32_0 : i32, i32
  }
  func.func @transform_2(%arg0: i32) -> (i32, i32) {
    %c0_i32 = arith.constant 0 : i32
    %c0_i32_0 = arith.constant 0 : i32
    %c0_i32_1 = arith.constant 0 : i32
    return %c0_i32, %c0_i32_0 : i32, i32
  }
  func.func @transform_3(%arg0: i32) -> (i32, i32) {
    %c0_i32 = arith.constant 0 : i32
    %c0_i32_0 = arith.constant 0 : i32
    return %arg0, %c0_i32 : i32, i32
  }
}

module attributes {stable_mosaic.version = 11 : i64} {
  func.func @_fc_fused_kernel(%arg0: i32, %arg1: memref<2x3136xf32, #tpu.memory_space<vmem>>, %arg2: memref<3136x128xf32, #tpu.memory_space<vmem>>, %arg3: memref<1x128xf32, #tpu.memory_space<vmem>>, %arg4: memref<128x128xf32, #tpu.memory_space<vmem>>, %arg5: memref<1x128xf32, #tpu.memory_space<vmem>>, %arg6: memref<2x128xf32, #tpu.memory_space<vmem>>) attributes {dimension_semantics = [#tpu.dimension_semantics<parallel>], iteration_bounds = array<i64: 1>, scalar_prefetch = 0 : i64, scratch_operands = 0 : i64, tpu.core_type = #tpu.core_type<tc>, window_params = [{transform_indices = @transform_0, window_bounds = array<i64: 2, 3136>}, {pipeline_mode = #tpu.pipeline_mode<synchronous>, transform_indices = @transform_1, window_bounds = array<i64: 3136, 128>}, {pipeline_mode = #tpu.pipeline_mode<synchronous>, transform_indices = @transform_2, window_bounds = array<i64: 1, 128>}, {pipeline_mode = #tpu.pipeline_mode<synchronous>, transform_indices = @transform_3, window_bounds = array<i64: 128, 128>}, {pipeline_mode = #tpu.pipeline_mode<synchronous>, transform_indices = @transform_4, window_bounds = array<i64: 1, 128>}, {transform_indices = @transform_5, window_bounds = array<i64: 2, 128>}]} {
    %c0 = arith.constant 0 : index
    %c0_0 = arith.constant 0 : index
    %0 = vector.load %arg1[%c0, %c0_0] : memref<2x3136xf32, #tpu.memory_space<vmem>>, vector<2x3136xf32>
    %c0_1 = arith.constant 0 : index
    %c0_2 = arith.constant 0 : index
    %1 = vector.load %arg2[%c0_1, %c0_2] : memref<3136x128xf32, #tpu.memory_space<vmem>>, vector<3136x128xf32>
    %cst = arith.constant dense<0.000000e+00> : vector<2x128xf32>
    %2 = tpu.matmul %0, %1, %cst {dimension_numbers = #tpu.dot_dimension_numbers<[1], [0], [0], [1], [0, 0, 1, 1], [], []>} : vector<2x3136xf32>, vector<3136x128xf32>, vector<2x128xf32> -> vector<2x128xf32>
    %c0_3 = arith.constant 0 : index
    %c0_4 = arith.constant 0 : index
    %3 = vector.load %arg3[%c0_3, %c0_4] : memref<1x128xf32, #tpu.memory_space<vmem>>, vector<1x128xf32>
    %4 = vector.broadcast %3 : vector<1x128xf32> to vector<2x128xf32>
    %5 = arith.addf %2, %4 : vector<2x128xf32>
    %cst_5 = arith.constant 0.000000e+00 : f32
    %6 = vector.broadcast %cst_5 : f32 to vector<2x128xf32>
    %7 = arith.maximumf %5, %6 : vector<2x128xf32>
    %c0_6 = arith.constant 0 : index
    %c0_7 = arith.constant 0 : index
    %8 = vector.load %arg4[%c0_6, %c0_7] : memref<128x128xf32, #tpu.memory_space<vmem>>, vector<128x128xf32>
    %cst_8 = arith.constant dense<0.000000e+00> : vector<2x128xf32>
    %9 = tpu.matmul %7, %8, %cst_8 {dimension_numbers = #tpu.dot_dimension_numbers<[1], [0], [0], [1], [0, 0, 1, 1], [], []>} : vector<2x128xf32>, vector<128x128xf32>, vector<2x128xf32> -> vector<2x128xf32>
    %c0_9 = arith.constant 0 : index
    %c0_10 = arith.constant 0 : index
    %10 = vector.load %arg5[%c0_9, %c0_10] : memref<1x128xf32, #tpu.memory_space<vmem>>, vector<1x128xf32>
    %11 = vector.broadcast %10 : vector<1x128xf32> to vector<2x128xf32>
    %12 = arith.addf %9, %11 : vector<2x128xf32>
    %c0_11 = arith.constant 0 : index
    %c0_12 = arith.constant 0 : index
    %13 = vector.load %arg6[%c0_11, %c0_12] : memref<2x128xf32, #tpu.memory_space<vmem>>, vector<2x128xf32>
    tpu.vector_store %arg6[%c0_11, %c0_12], %12 {strides = array<i32>} : memref<2x128xf32, #tpu.memory_space<vmem>>, vector<2x128xf32>,
    return
  }
  func.func @transform_0(%arg0: i32) -> (i32, i32) {
    %c0_i32 = arith.constant 0 : i32
    %c0_i32_0 = arith.constant 0 : i32
    return %arg0, %c0_i32 : i32, i32
  }
  func.func @transform_1(%arg0: i32) -> (i32, i32) {
    %c0_i32 = arith.constant 0 : i32
    %c0_i32_0 = arith.constant 0 : i32
    %c0_i32_1 = arith.constant 0 : i32
    return %c0_i32, %c0_i32_0 : i32, i32
  }
  func.func @transform_2(%arg0: i32) -> (i32, i32) {
    %c0_i32 = arith.constant 0 : i32
    %c0_i32_0 = arith.constant 0 : i32
    %c0_i32_1 = arith.constant 0 : i32
    return %c0_i32, %c0_i32_0 : i32, i32
  }
  func.func @transform_3(%arg0: i32) -> (i32, i32) {
    %c0_i32 = arith.constant 0 : i32
    %c0_i32_0 = arith.constant 0 : i32
    %c0_i32_1 = arith.constant 0 : i32
    return %c0_i32, %c0_i32_0 : i32, i32
  }
  func.func @transform_4(%arg0: i32) -> (i32, i32) {
    %c0_i32 = arith.constant 0 : i32
    %c0_i32_0 = arith.constant 0 : i32
    %c0_i32_1 = arith.constant 0 : i32
    return %c0_i32, %c0_i32_0 : i32, i32
  }
  func.func @transform_5(%arg0: i32) -> (i32, i32) {
    %c0_i32 = arith.constant 0 : i32
    %c0_i32_0 = arith.constant 0 : i32
    return %arg0, %c0_i32 : i32, i32
  }
}

</mosaic_0001>

<llo_original>
// kernel: net_forward.3
$region0: #{net_forward.3}
  #allocation0 [shape = 'u32[]', space=smem, size = 0x4, offset = 0x4, fixed_abs, tag = 'smem constant byte address 0x4 - core index']
  #allocation1 [shape = 'u32[144,128]{1,0:T(1,128)}', space=vmem, size = 0x12000, scoped, tag = 'internal scratch']
  %s0 = inlined_call_operand.vmem [shape: f32[4,288,25], index: 0, kind: input, shape index: {}]
  %s1 = inlined_call_operand.vmem [shape: f32[25,128], index: 1, kind: input, shape index: {}]
  %s2 = inlined_call_operand.vmem [shape: f32[1,128], index: 2, kind: input, shape index: {}]
  %s3 = inlined_call_operand.vmem [shape: f32[288,128], index: 3, kind: output, shape index: {}]
  %s4 = sld [smem:[#allocation0]]
  $region145: #{net_forward.3} parent=0
    _
  %s6 = ssub.s32 1, %s4
  %s7 = scalar_select 0, %s6, %s4
  $region1: #{net_forward.3} parent=0
    #allocation2 [shape = 'u8[1048576]{0}', space=vmem, size = 0x100000, scoped, tag = 'input window, operand 0']
    #allocation3 [shape = 'u8[262144]{0}', space=vmem, size = 0x40000, scoped, tag = 'output window, operand 0']
    loop: start=0, step=1, limit=4
    $region2: #{net_forward.3} parent=1 // loop_pre_header
      _
    $region3: #{net_forward.3} parent=1 // loop_header
      %s9 = sphi 0, %s13
      %p10 = scmp.ge.s32.totalorder %s9, 4
      %s19 = sphi 0, %s21
      %s22 = sphi 0, %s19
      %s23 = sphi 0, %s22
      %s39 = sphi 0, %s23
      %s43 = sphi 0, %s43
      %s45 = sphi 0, %s43
      %s46 = sphi 0, %s45
      %s60 = sphi 0, %s46
      %s64 = sphi 0, %s64
      %s66 = sphi 0, %s64
      %s67 = sphi 0, %s66
      %s81 = sphi 0, %s67
      %s87 = sphi 0, %s89
      %s90 = sphi 0, %s87
      %s91 = sphi 0, %s90
      %s107 = sphi 0, %s91
    $region4: #{net_forward.3} parent=1 // loop_header_branch
      %12 = sbr.rel (%p10) target = $region8
    $region5: #{net_forward.3} parent=1 // loop_body
      %s14 = ssub.s32 %s9, 1
      %s15 = ssub.s32 %s9, 2
      %s16 = sadd.s32 %s9, 1
      %s17 = ssub.s32 %s9, %s16
      %p18 = scmp.eq.s32.totalorder %s17, 0
      %s20 = sadd.s32 %s19, 1
      %s21 = scalar_select %p18, %s19, %s20
      %p24 = pneg %p18
      %p25 = scmp.eq.s32.totalorder %s9, 1
      %p26 = por %p24, %p25
      %p27 = scmp.ne.s32.totalorder %s19, %s22
      %p28 = scmp.eq.s32.totalorder %s9, 0
      %p29 = por %p27, %p28
      %p30 = scmp.ne.s32.totalorder %s19, %s22
      %p31 = scmp.eq.s32.totalorder %s14, 1
      %p32 = por %p30, %p31
      %p33 = scmp.ne.s32.totalorder %s22, %s23
      %p34 = scmp.eq.s32.totalorder %s14, 0
      %p35 = por %p33, %p34
      %p36 = scmp.ne.s32.totalorder %s22, %s23
      %p37 = scmp.eq.s32.totalorder %s15, 1
      %p38 = por %p36, %p37
      %p40 = scmp.ne.s32.totalorder %s23, %s39
      %p41 = scmp.eq.s32.totalorder %s15, 0
      %p42 = por %p40, %p41
      %s44 = sadd.s32 %s43, 1
      %p47 = scmp.eq.s32.totalorder %s9, 1
      %p48 = scmp.ne.s32.totalorder %s43, %s45
      %p49 = scmp.eq.s32.totalorder %s9, 0
      %p50 = por %p48, %p49
      %p51 = scmp.ne.s32.totalorder %s43, %s45
      %p52 = scmp.eq.s32.totalorder %s14, 1
      %p53 = por %p51, %p52
      %p54 = scmp.ne.s32.totalorder %s45, %s46
      %p55 = scmp.eq.s32.totalorder %s14, 0
      %p56 = por %p54, %p55
      %p57 = scmp.ne.s32.totalorder %s45, %s46
      %p58 = scmp.eq.s32.totalorder %s15, 1
      %p59 = por %p57, %p58
      %p61 = scmp.ne.s32.totalorder %s46, %s60
      %p62 = scmp.eq.s32.totalorder %s15, 0
      %p63 = por %p61, %p62
      %s65 = sadd.s32 %s64, 1
      %p68 = scmp.eq.s32.totalorder %s9, 1
      %p69 = scmp.ne.s32.totalorder %s64, %s66
      %p70 = scmp.eq.s32.totalorder %s9, 0
      %p71 = por %p69, %p70
      %p72 = scmp.ne.s32.totalorder %s64, %s66
      %p73 = scmp.eq.s32.totalorder %s14, 1
      %p74 = por %p72, %p73
      %p75 = scmp.ne.s32.totalorder %s66, %s67
      %p76 = scmp.eq.s32.totalorder %s14, 0
      %p77 = por %p75, %p76
      %p78 = scmp.ne.s32.totalorder %s66, %s67
      %p79 = scmp.eq.s32.totalorder %s15, 1
      %p80 = por %p78, %p79
      %p82 = scmp.ne.s32.totalorder %s67, %s81
      %p83 = scmp.eq.s32.totalorder %s15, 0
      %p84 = por %p82, %p83
      %s85 = ssub.s32 %s9, %s16
      %p86 = scmp.eq.s32.totalorder %s85, 0
      %s88 = sadd.s32 %s87, 1
      %s89 = scalar_select %p86, %s87, %s88
      %p92 = pneg %p86
      %p93 = scmp.eq.s32.totalorder %s9, 1
      %p94 = por %p92, %p93
      %p95 = scmp.ne.s32.totalorder %s87, %s90
      %p96 = scmp.eq.s32.totalorder %s9, 0
      %p97 = por %p95, %p96
      %p98 = scmp.ne.s32.totalorder %s87, %s90
      %p99 = scmp.eq.s32.totalorder %s14, 1
      %p100 = por %p98, %p99
      %p101 = scmp.ne.s32.totalorder %s90, %s91
      %p102 = scmp.eq.s32.totalorder %s14, 0
      %p103 = por %p101, %p102
      %p104 = scmp.ne.s32.totalorder %s90, %s91
      %p105 = scmp.eq.s32.totalorder %s15, 1
      %p106 = por %p104, %p105
      %p108 = scmp.ne.s32.totalorder %s91, %s107
      %p109 = scmp.eq.s32.totalorder %s15, 0
      %p110 = por %p108, %p109
      %p111 = scmp.le.s32.totalorder 1, %s9
      %p112 = scmp.lt.s32.totalorder %s9, 3
      %p113 = pnand %p111, %p112
      %p114 = pneg %p113
      // Predicated region
      $region9: #{net_forward.3} parent=5 // pred_check
        _
      $region10: #{net_forward.3} parent=5 // pred_check_branch
        %116 = sbr.rel (%p113) target = $region12
      $region11: #{net_forward.3} parent=5 // pred_region
        %s117 = ssub.s32 %s9, 1
        // Predicated region
        $region13: #{net_forward.3} parent=11 // pred_check
          %p118 = pneg %p56
        $region14: #{net_forward.3} parent=11 // pred_check_branch
          %120 = sbr.rel (%p118) target = $region16
        $region15: #{net_forward.3} parent=11 // pred_region
          _
        $region16: #{net_forward.3} parent=11 // pred_fallthru
          _
        // Predicated region
        $region17: #{net_forward.3} parent=11 // pred_check
          %p121 = pneg %p77
        $region18: #{net_forward.3} parent=11 // pred_check_branch
          %123 = sbr.rel (%p121) target = $region20
        $region19: #{net_forward.3} parent=11 // pred_region
          _
        $region20: #{net_forward.3} parent=11 // pred_fallthru
          _
      $region12: #{net_forward.3} parent=5 // pred_fallthru
        _
      %p124 = scmp.lt.s32.totalorder %s9, 2
      // Predicated region
      $region21: #{net_forward.3} parent=5 // pred_check
        %p125 = pneg %p124
      $region22: #{net_forward.3} parent=5 // pred_check_branch
        %127 = sbr.rel (%p125) target = $region24
      $region23: #{net_forward.3} parent=5 // pred_region
        // Predicated region
        $region25: #{net_forward.3} parent=23 // pred_check
          %p128 = pneg %p29
        $region26: #{net_forward.3} parent=23 // pred_check_branch
          %130 = sbr.rel (%p128) target = $region28
        $region27: #{net_forward.3} parent=23 // pred_region
          %s131 = sand.u32 %s19, 1
          %s132 = sand.u32 %s19, 1
          %s133 = smul.addr %s132, 1024
          %s134 = scalar_lea.vmem [#allocation2], %s133
          %s135 = smul.u32 32, %s9
          %s136 = ssub.s32 36, %s135
          %p137 = scmp.lt.s32.totalorder %s136, 32
          %s138 = scalar_select %p137, %s136, 32
          %s139 = smul.u32 512, %s138
          %p140 = scmp.ne.s32.totalorder 0, %s139
          %s141 = smul.addr %s135, 8
          %s142 = scalar_lea.vmem %s0, %s141
          // Predicated region
          $region29: #{net_forward.3} parent=27 // pred_check
            %p143 = pneg %p140
          $region30: #{net_forward.3} parent=27 // pred_check_branch
            %145 = sbr.rel (%p143) target = $region32
          $region31: #{net_forward.3} parent=27 // pred_region
            // Predicated region
            $region33: #{net_forward.3} parent=31 // pred_check
              _
            $region34: #{net_forward.3} parent=31 // pred_check_branch
              %147 = sbr.rel (0) target = $region36
            $region35: #{net_forward.3} parent=31 // pred_region
              // Predicated region
              $region55: #{net_forward.3} parent=35 // pred_check
                _
              $region56: #{net_forward.3} parent=35 // pred_check_branch
                %328 = sbr.rel (0) target = $region58
              $region57: #{net_forward.3} parent=35 // pred_region
                %s329 = sshrl.u32 %s138, 4
                // While loop
                $region59: #{net_forward.3} parent=57 // loop_pre_header
                  _
                $region60: #{net_forward.3} parent=57 // loop_header
                  %s331 = sphi 0, %s333
                  %p332 = scmp.ge.s32.totalorder %s331, %s329
                  %s336 = sphi 0, %s469
                  %s337 = sphi %s142, %s472
                  %s338 = sphi %s134, %s473
                $region61: #{net_forward.3} parent=57 // loop_header_branch
                  %335 = sbr.rel (%p332) target = $region65
                $region62: #{net_forward.3} parent=57 // loop_body
                  %v339 = vld [vmem:[%s337] sm:$0xff]
                  %340 = vst [vmem:[%s338] sm:$0xff] %v339
                  %v341 = vld [vmem:[%s337 + $0x8] sm:$0xff]
                  %342 = vst [vmem:[%s338 + $0x8] sm:$0xff] %v341
                  %v343 = vld [vmem:[%s337 + $0x10] sm:$0xff]
                  %344 = vst [vmem:[%s338 + $0x10] sm:$0xff] %v343
                  %v345 = vld [vmem:[%s337 + $0x18] sm:$0xff]
                  %346 = vst [vmem:[%s338 + $0x18] sm:$0xff] %v345
                  %v347 = vld [vmem:[%s337 + $0x20] sm:$0xff]
                  %348 = vst [vmem:[%s338 + $0x20] sm:$0xff] %v347
                  %v349 = vld [vmem:[%s337 + $0x28] sm:$0xff]
                  %350 = vst [vmem:[%s338 + $0x28] sm:$0xff] %v349
                  %v351 = vld [vmem:[%s337 + $0x30] sm:$0xff]
                  %352 = vst [vmem:[%s338 + $0x30] sm:$0xff] %v351
                  %v353 = vld [vmem:[%s337 + $0x38] sm:$0xff]
                  %354 = vst [vmem:[%s338 + $0x38] sm:$0xff] %v353
                  %v355 = vld [vmem:[%s337 + $0x40] sm:$0xff]
                  %356 = vst [vmem:[%s338 + $0x40] sm:$0xff] %v355
                  %v357 = vld [vmem:[%s337 + $0x48] sm:$0xff]
                  %358 = vst [vmem:[%s338 + $0x48] sm:$0xff] %v357
                  %v359 = vld [vmem:[%s337 + $0x50] sm:$0xff]
                  %360 = vst [vmem:[%s338 + $0x50] sm:$0xff] %v359
                  %v361 = vld [vmem:[%s337 + $0x58] sm:$0xff]
                  %362 = vst [vmem:[%s338 + $0x58] sm:$0xff] %v361
                  %v363 = vld [vmem:[%s337 + $0x60] sm:$0xff]
                  %364 = vst [vmem:[%s338 + $0x60] sm:$0xff] %v363
                  %v365 = vld [vmem:[%s337 + $0x68] sm:$0xff]
                  %366 = vst [vmem:[%s338 + $0x68] sm:$0xff] %v365
                  %v367 = vld [vmem:[%s337 + $0x70] sm:$0xff]
                  %368 = vst [vmem:[%s338 + $0x70] sm:$0xff] %v367
                  %v369 = vld [vmem:[%s337 + $0x78] sm:$0xff]
                  %370 = vst [vmem:[%s338 + $0x78] sm:$0xff] %v369
                  %v371 = vld [vmem:[%s337 + $0x120] sm:$0xff]
                  %372 = vst [vmem:[%s338 + $0x100] sm:$0xff] %v371
                  %v373 = vld [vmem:[%s337 + $0x128] sm:$0xff]
                  %374 = vst [vmem:[%s338 + $0x108] sm:$0xff] %v373
                  %v375 = vld [vmem:[%s337 + $0x130] sm:$0xff]
                  %376 = vst [vmem:[%s338 + $0x110] sm:$0xff] %v375
                  %v377 = vld [vmem:[%s337 + $0x138] sm:$0xff]
                  %378 = vst [vmem:[%s338 + $0x118] sm:$0xff] %v377
                  %v379 = vld [vmem:[%s337 + $0x140] sm:$0xff]
                  %380 = vst [vmem:[%s338 + $0x120] sm:$0xff] %v379
                  %v381 = vld [vmem:[%s337 + $0x148] sm:$0xff]
                  %382 = vst [vmem:[%s338 + $0x128] sm:$0xff] %v381
                  %v383 = vld [vmem:[%s337 + $0x150] sm:$0xff]
                  %384 = vst [vmem:[%s338 + $0x130] sm:$0xff] %v383
                  %v385 = vld [vmem:[%s337 + $0x158] sm:$0xff]
                  %386 = vst [vmem:[%s338 + $0x138] sm:$0xff] %v385
                  %v387 = vld [vmem:[%s337 + $0x160] sm:$0xff]
                  %388 = vst [vmem:[%s338 + $0x140] sm:$0xff] %v387
                  %v389 = vld [vmem:[%s337 + $0x168] sm:$0xff]
                  %390 = vst [vmem:[%s338 + $0x148] sm:$0xff] %v389
                  %v391 = vld [vmem:[%s337 + $0x170] sm:$0xff]
                  %392 = vst [vmem:[%s338 + $0x150] sm:$0xff] %v391
                  %v393 = vld [vmem:[%s337 + $0x178] sm:$0xff]
                  %394 = vst [vmem:[%s338 + $0x158] sm:$0xff] %v393
                  %v395 = vld [vmem:[%s337 + $0x180] sm:$0xff]
                  %396 = vst [vmem:[%s338 + $0x160] sm:$0xff] %v395
                  %v397 = vld [vmem:[%s337 + $0x188] sm:$0xff]
                  %398 = vst [vmem:[%s338 + $0x168] sm:$0xff] %v397
                  %v399 = vld [vmem:[%s337 + $0x190] sm:$0xff]
                  %400 = vst [vmem:[%s338 + $0x170] sm:$0xff] %v399
                  %v401 = vld [vmem:[%s337 + $0x198] sm:$0xff]
                  %402 = vst [vmem:[%s338 + $0x178] sm:$0xff] %v401
                  %v403 = vld [vmem:[%s337 + $0x240] sm:$0xff]
                  %404 = vst [vmem:[%s338 + $0x200] sm:$0xff] %v403
                  %v405 = vld [vmem:[%s337 + $0x248] sm:$0xff]
                  %406 = vst [vmem:[%s338 + $0x208] sm:$0xff] %v405
                  %v407 = vld [vmem:[%s337 + $0x250] sm:$0xff]
                  %408 = vst [vmem:[%s338 + $0x210] sm:$0xff] %v407
                  %v409 = vld [vmem:[%s337 + $0x258] sm:$0xff]
                  %410 = vst [vmem:[%s338 + $0x218] sm:$0xff] %v409
                  %v411 = vld [vmem:[%s337 + $0x260] sm:$0xff]
                  %412 = vst [vmem:[%s338 + $0x220] sm:$0xff] %v411
                  %v413 = vld [vmem:[%s337 + $0x268] sm:$0xff]
                  %414 = vst [vmem:[%s338 + $0x228] sm:$0xff] %v413
                  %v415 = vld [vmem:[%s337 + $0x270] sm:$0xff]
                  %416 = vst [vmem:[%s338 + $0x230] sm:$0xff] %v415
                  %v417 = vld [vmem:[%s337 + $0x278] sm:$0xff]
                  %418 = vst [vmem:[%s338 + $0x238] sm:$0xff] %v417
                  %v419 = vld [vmem:[%s337 + $0x280] sm:$0xff]
                  %420 = vst [vmem:[%s338 + $0x240] sm:$0xff] %v419
                  %v421 = vld [vmem:[%s337 + $0x288] sm:$0xff]
                  %422 = vst [vmem:[%s338 + $0x248] sm:$0xff] %v421
                  %v423 = vld [vmem:[%s337 + $0x290] sm:$0xff]
                  %424 = vst [vmem:[%s338 + $0x250] sm:$0xff] %v423
                  %v425 = vld [vmem:[%s337 + $0x298] sm:$0xff]
                  %426 = vst [vmem:[%s338 + $0x258] sm:$0xff] %v425
                  %v427 = vld [vmem:[%s337 + $0x2a0] sm:$0xff]
                  %428 = vst [vmem:[%s338 + $0x260] sm:$0xff] %v427
                  %v429 = vld [vmem:[%s337 + $0x2a8] sm:$0xff]
                  %430 = vst [vmem:[%s338 + $0x268] sm:$0xff] %v429
                  %v431 = vld [vmem:[%s337 + $0x2b0] sm:$0xff]
                  %432 = vst [vmem:[%s338 + $0x270] sm:$0xff] %v431
                  %v433 = vld [vmem:[%s337 + $0x2b8] sm:$0xff]
                  %434 = vst [vmem:[%s338 + $0x278] sm:$0xff] %v433
                  %v435 = vld [vmem:[%s337 + $0x360] sm:$0xff]
                  %436 = vst [vmem:[%s338 + $0x300] sm:$0xff] %v435
                  %v437 = vld [vmem:[%s337 + $0x368] sm:$0xff]
                  %438 = vst [vmem:[%s338 + $0x308] sm:$0xff] %v437
                  %v439 = vld [vmem:[%s337 + $0x370] sm:$0xff]
                  %440 = vst [vmem:[%s338 + $0x310] sm:$0xff] %v439
                  %v441 = vld [vmem:[%s337 + $0x378] sm:$0xff]
                  %442 = vst [vmem:[%s338 + $0x318] sm:$0xff] %v441
                  %v443 = vld [vmem:[%s337 + $0x380] sm:$0xff]
                  %444 = vst [vmem:[%s338 + $0x320] sm:$0xff] %v443
                  %v445 = vld [vmem:[%s337 + $0x388] sm:$0xff]
                  %446 = vst [vmem:[%s338 + $0x328] sm:$0xff] %v445
                  %v447 = vld [vmem:[%s337 + $0x390] sm:$0xff]
                  %448 = vst [vmem:[%s338 + $0x330] sm:$0xff] %v447
                  %v449 = vld [vmem:[%s337 + $0x398] sm:$0xff]
                  %450 = vst [vmem:[%s338 + $0x338] sm:$0xff] %v449
                  %v451 = vld [vmem:[%s337 + $0x3a0] sm:$0xff]
                  %452 = vst [vmem:[%s338 + $0x340] sm:$0xff] %v451
                  %v453 = vld [vmem:[%s337 + $0x3a8] sm:$0xff]
                  %454 = vst [vmem:[%s338 + $0x348] sm:$0xff] %v453
                  %v455 = vld [vmem:[%s337 + $0x3b0] sm:$0xff]
                  %456 = vst [vmem:[%s338 + $0x350] sm:$0xff] %v455
                  %v457 = vld [vmem:[%s337 + $0x3b8] sm:$0xff]
                  %458 = vst [vmem:[%s338 + $0x358] sm:$0xff] %v457
                  %v459 = vld [vmem:[%s337 + $0x3c0] sm:$0xff]
                  %460 = vst [vmem:[%s338 + $0x360] sm:$0xff] %v459
                  %v461 = vld [vmem:[%s337 + $0x3c8] sm:$0xff]
                  %462 = vst [vmem:[%s338 + $0x368] sm:$0xff] %v461
                  %v463 = vld [vmem:[%s337 + $0x3d0] sm:$0xff]
                  %464 = vst [vmem:[%s338 + $0x370] sm:$0xff] %v463
                  %v465 = vld [vmem:[%s337 + $0x3d8] sm:$0xff]
                  %466 = vst [vmem:[%s338 + $0x378] sm:$0xff] %v465
                  %s467 = sadd.s32 1, %s336
                  %p468 = scmp.ge.s32.totalorder %s467, %s329
                  %s469 = scalar_select %p468, 0, %s467
                  %s470 = smul.u32 %s469, 128
                  %s471 = smul.u32 %s469, 128
                  %s472 = scalar_lea.vmem %s142, %s470
                  %s473 = scalar_lea.vmem %s134, %s471 [#allocation2]
                $region63: #{net_forward.3} parent=57 // loop_footer
                  %s333 = sadd.s32 %s331, 1
                $region64: #{net_forward.3} parent=57 // loop_footer_branch
                  %330 = sbr.rel target = $region60
                $region65: #{net_forward.3} parent=57 // loop_exit
                  _
                %s474 = sshrl.u32 %s138, 4
                %s475 = sand.u32 %s138, 15
                %s476 = smul.u32 %s474, 16
                %s477 = smul.u32 8, %s476
                %s478 = scalar_lea.vmem %s142, %s477
                %s479 = smul.u32 8, %s476
                %s480 = scalar_lea.vmem %s134, %s479 [#allocation2]
                // While loop
                $region66: #{net_forward.3} parent=57 // loop_pre_header
                  _
                $region67: #{net_forward.3} parent=57 // loop_header
                  %s482 = sphi 0, %s484
                  %p483 = scmp.ge.s32.totalorder %s482, %s475
                  %s487 = sphi 0, %s500
                  %s488 = sphi %s478, %s503
                  %s489 = sphi %s480, %s504
                $region68: #{net_forward.3} parent=57 // loop_header_branch
                  %486 = sbr.rel (%p483) target = $region72
                $region69: #{net_forward.3} parent=57 // loop_body
                  %v490 = vld [vmem:[%s488] sm:$0xff]
                  %491 = vst [vmem:[%s489] sm:$0xff] %v490
                  %v492 = vld [vmem:[%s488 + $0x120] sm:$0xff]
                  %493 = vst [vmem:[%s489 + $0x100] sm:$0xff] %v492
                  %v494 = vld [vmem:[%s488 + $0x240] sm:$0xff]
                  %495 = vst [vmem:[%s489 + $0x200] sm:$0xff] %v494
                  %v496 = vld [vmem:[%s488 + $0x360] sm:$0xff]
                  %497 = vst [vmem:[%s489 + $0x300] sm:$0xff] %v496
                  %s498 = sadd.s32 1, %s487
                  %p499 = scmp.ge.s32.totalorder %s498, %s475
                  %s500 = scalar_select %p499, 0, %s498
                  %s501 = smul.u32 %s500, 8
                  %s502 = smul.u32 %s500, 8
                  %s503 = scalar_lea.vmem %s478, %s501
                  %s504 = scalar_lea.vmem %s480, %s502 [#allocation2]
                $region70: #{net_forward.3} parent=57 // loop_footer
                  %s484 = sadd.s32 %s482, 1
                $region71: #{net_forward.3} parent=57 // loop_footer_branch
                  %481 = sbr.rel target = $region67
                $region72: #{net_forward.3} parent=57 // loop_exit
                  _
              $region58: #{net_forward.3} parent=35 // pred_fallthru
                _
              // Predicated region
              $region73: #{net_forward.3} parent=35 // pred_check
                _
              $region74: #{net_forward.3} parent=35 // pred_check_branch
                %506 = sbr.rel target = $region76
              $region75: #{net_forward.3} parent=35 // pred_region
                _
              $region76: #{net_forward.3} parent=35 // pred_fallthru
                _
            $region36: #{net_forward.3} parent=31 // pred_fallthru
              _
            // Predicated region
            $region37: #{net_forward.3} parent=31 // pred_check
              _
            $region38: #{net_forward.3} parent=31 // pred_check_branch
              %149 = sbr.rel target = $region40
            $region39: #{net_forward.3} parent=31 // pred_region
              %s151 = sshrl.u32 %s138, 4
              // While loop
              $region41: #{net_forward.3} parent=39 // loop_pre_header
                _
              $region42: #{net_forward.3} parent=39 // loop_header
                %s153 = sphi 0, %s155
                %p154 = scmp.ge.s32.totalorder %s153, %s151
                %s158 = sphi 0, %s291
                %s159 = sphi %s142, %s294
                %s160 = sphi %s134, %s295
              $region43: #{net_forward.3} parent=39 // loop_header_branch
                %157 = sbr.rel (%p154) target = $region47
              $region44: #{net_forward.3} parent=39 // loop_body
                %v161 = vld [vmem:[%s159] sm:$0xff]
                %162 = vst [vmem:[%s160] sm:$0xff] %v161
                %v163 = vld [vmem:[%s159 + $0x8] sm:$0xff]
                %164 = vst [vmem:[%s160 + $0x8] sm:$0xff] %v163
                %v165 = vld [vmem:[%s159 + $0x10] sm:$0xff]
                %166 = vst [vmem:[%s160 + $0x10] sm:$0xff] %v165
                %v167 = vld [vmem:[%s159 + $0x18] sm:$0xff]
                %168 = vst [vmem:[%s160 + $0x18] sm:$0xff] %v167
                %v169 = vld [vmem:[%s159 + $0x20] sm:$0xff]
                %170 = vst [vmem:[%s160 + $0x20] sm:$0xff] %v169
                %v171 = vld [vmem:[%s159 + $0x28] sm:$0xff]
                %172 = vst [vmem:[%s160 + $0x28] sm:$0xff] %v171
                %v173 = vld [vmem:[%s159 + $0x30] sm:$0xff]
                %174 = vst [vmem:[%s160 + $0x30] sm:$0xff] %v173
                %v175 = vld [vmem:[%s159 + $0x38] sm:$0xff]
                %176 = vst [vmem:[%s160 + $0x38] sm:$0xff] %v175
                %v177 = vld [vmem:[%s159 + $0x40] sm:$0xff]
                %178 = vst [vmem:[%s160 + $0x40] sm:$0xff] %v177
                %v179 = vld [vmem:[%s159 + $0x48] sm:$0xff]
                %180 = vst [vmem:[%s160 + $0x48] sm:$0xff] %v179
                %v181 = vld [vmem:[%s159 + $0x50] sm:$0xff]
                %182 = vst [vmem:[%s160 + $0x50] sm:$0xff] %v181
                %v183 = vld [vmem:[%s159 + $0x58] sm:$0xff]
                %184 = vst [vmem:[%s160 + $0x58] sm:$0xff] %v183
                %v185 = vld [vmem:[%s159 + $0x60] sm:$0xff]
                %186 = vst [vmem:[%s160 + $0x60] sm:$0xff] %v185
                %v187 = vld [vmem:[%s159 + $0x68] sm:$0xff]
                %188 = vst [vmem:[%s160 + $0x68] sm:$0xff] %v187
                %v189 = vld [vmem:[%s159 + $0x70] sm:$0xff]
                %190 = vst [vmem:[%s160 + $0x70] sm:$0xff] %v189
                %v191 = vld [vmem:[%s159 + $0x78] sm:$0xff]
                %192 = vst [vmem:[%s160 + $0x78] sm:$0xff] %v191
                %v193 = vld [vmem:[%s159 + $0x120] sm:$0xff]
                %194 = vst [vmem:[%s160 + $0x100] sm:$0xff] %v193
                %v195 = vld [vmem:[%s159 + $0x128] sm:$0xff]
                %196 = vst [vmem:[%s160 + $0x108] sm:$0xff] %v195
                %v197 = vld [vmem:[%s159 + $0x130] sm:$0xff]
                %198 = vst [vmem:[%s160 + $0x110] sm:$0xff] %v197
                %v199 = vld [vmem:[%s159 + $0x138] sm:$0xff]
                %200 = vst [vmem:[%s160 + $0x118] sm:$0xff] %v199
                %v201 = vld [vmem:[%s159 + $0x140] sm:$0xff]
                %202 = vst [vmem:[%s160 + $0x120] sm:$0xff] %v201
                %v203 = vld [vmem:[%s159 + $0x148] sm:$0xff]
                %204 = vst [vmem:[%s160 + $0x128] sm:$0xff] %v203
                %v205 = vld [vmem:[%s159 + $0x150] sm:$0xff]
                %206 = vst [vmem:[%s160 + $0x130] sm:$0xff] %v205
                %v207 = vld [vmem:[%s159 + $0x158] sm:$0xff]
                %208 = vst [vmem:[%s160 + $0x138] sm:$0xff] %v207
                %v209 = vld [vmem:[%s159 + $0x160] sm:$0xff]
                %210 = vst [vmem:[%s160 + $0x140] sm:$0xff] %v209
                %v211 = vld [vmem:[%s159 + $0x168] sm:$0xff]
                %212 = vst [vmem:[%s160 + $0x148] sm:$0xff] %v211
                %v213 = vld [vmem:[%s159 + $0x170] sm:$0xff]
                %214 = vst [vmem:[%s160 + $0x150] sm:$0xff] %v213
                %v215 = vld [vmem:[%s159 + $0x178] sm:$0xff]
                %216 = vst [vmem:[%s160 + $0x158] sm:$0xff] %v215
                %v217 = vld [vmem:[%s159 + $0x180] sm:$0xff]
                %218 = vst [vmem:[%s160 + $0x160] sm:$0xff] %v217
                %v219 = vld [vmem:[%s159 + $0x188] sm:$0xff]
                %220 = vst [vmem:[%s160 + $0x168] sm:$0xff] %v219
                %v221 = vld [vmem:[%s159 + $0x190] sm:$0xff]
                %222 = vst [vmem:[%s160 + $0x170] sm:$0xff] %v221
                %v223 = vld [vmem:[%s159 + $0x198] sm:$0xff]
                %224 = vst [vmem:[%s160 + $0x178] sm:$0xff] %v223
                %v225 = vld [vmem:[%s159 + $0x240] sm:$0xff]
                %226 = vst [vmem:[%s160 + $0x200] sm:$0xff] %v225
                %v227 = vld [vmem:[%s159 + $0x248] sm:$0xff]
                %228 = vst [vmem:[%s160 + $0x208] sm:$0xff] %v227
                %v229 = vld [vmem:[%s159 + $0x250] sm:$0xff]
                %230 = vst [vmem:[%s160 + $0x210] sm:$0xff] %v229
                %v231 = vld [vmem:[%s159 + $0x258] sm:$0xff]
                %232 = vst [vmem:[%s160 + $0x218] sm:$0xff] %v231
                %v233 = vld [vmem:[%s159 + $0x260] sm:$0xff]
                %234 = vst [vmem:[%s160 + $0x220] sm:$0xff] %v233
                %v235 = vld [vmem:[%s159 + $0x268] sm:$0xff]
                %236 = vst [vmem:[%s160 + $0x228] sm:$0xff] %v235
                %v237 = vld [vmem:[%s159 + $0x270] sm:$0xff]
                %238 = vst [vmem:[%s160 + $0x230] sm:$0xff] %v237
                %v239 = vld [vmem:[%s159 + $0x278] sm:$0xff]
                %240 = vst [vmem:[%s160 + $0x238] sm:$0xff] %v239
                %v241 = vld [vmem:[%s159 + $0x280] sm:$0xff]
                %242 = vst [vmem:[%s160 + $0x240] sm:$0xff] %v241
                %v243 = vld [vmem:[%s159 + $0x288] sm:$0xff]
                %244 = vst [vmem:[%s160 + $0x248] sm:$0xff] %v243
                %v245 = vld [vmem:[%s159 + $0x290] sm:$0xff]
                %246 = vst [vmem:[%s160 + $0x250] sm:$0xff] %v245
                %v247 = vld [vmem:[%s159 + $0x298] sm:$0xff]
                %248 = vst [vmem:[%s160 + $0x258] sm:$0xff] %v247
                %v249 = vld [vmem:[%s159 + $0x2a0] sm:$0xff]
                %250 = vst [vmem:[%s160 + $0x260] sm:$0xff] %v249
                %v251 = vld [vmem:[%s159 + $0x2a8] sm:$0xff]
                %252 = vst [vmem:[%s160 + $0x268] sm:$0xff] %v251
                %v253 = vld [vmem:[%s159 + $0x2b0] sm:$0xff]
                %254 = vst [vmem:[%s160 + $0x270] sm:$0xff] %v253
                %v255 = vld [vmem:[%s159 + $0x2b8] sm:$0xff]
                %256 = vst [vmem:[%s160 + $0x278] sm:$0xff] %v255
                %v257 = vld [vmem:[%s159 + $0x360] sm:$0xff]
                %258 = vst [vmem:[%s160 + $0x300] sm:$0xff] %v257
                %v259 = vld [vmem:[%s159 + $0x368] sm:$0xff]
                %260 = vst [vmem:[%s160 + $0x308] sm:$0xff] %v259
                %v261 = vld [vmem:[%s159 + $0x370] sm:$0xff]
                %262 = vst [vmem:[%s160 + $0x310] sm:$0xff] %v261
                %v263 = vld [vmem:[%s159 + $0x378] sm:$0xff]
                %264 = vst [vmem:[%s160 + $0x318] sm:$0xff] %v263
                %v265 = vld [vmem:[%s159 + $0x380] sm:$0xff]
                %266 = vst [vmem:[%s160 + $0x320] sm:$0xff] %v265
                %v267 = vld [vmem:[%s159 + $0x388] sm:$0xff]
                %268 = vst [vmem:[%s160 + $0x328] sm:$0xff] %v267
                %v269 = vld [vmem:[%s159 + $0x390] sm:$0xff]
                %270 = vst [vmem:[%s160 + $0x330] sm:$0xff] %v269
                %v271 = vld [vmem:[%s159 + $0x398] sm:$0xff]
                %272 = vst [vmem:[%s160 + $0x338] sm:$0xff] %v271
                %v273 = vld [vmem:[%s159 + $0x3a0] sm:$0xff]
                %274 = vst [vmem:[%s160 + $0x340] sm:$0xff] %v273
                %v275 = vld [vmem:[%s159 + $0x3a8] sm:$0xff]
                %276 = vst [vmem:[%s160 + $0x348] sm:$0xff] %v275
                %v277 = vld [vmem:[%s159 + $0x3b0] sm:$0xff]
                %278 = vst [vmem:[%s160 + $0x350] sm:$0xff] %v277
                %v279 = vld [vmem:[%s159 + $0x3b8] sm:$0xff]
                %280 = vst [vmem:[%s160 + $0x358] sm:$0xff] %v279
                %v281 = vld [vmem:[%s159 + $0x3c0] sm:$0xff]
                %282 = vst [vmem:[%s160 + $0x360] sm:$0xff] %v281
                %v283 = vld [vmem:[%s159 + $0x3c8] sm:$0xff]
                %284 = vst [vmem:[%s160 + $0x368] sm:$0xff] %v283
                %v285 = vld [vmem:[%s159 + $0x3d0] sm:$0xff]
                %286 = vst [vmem:[%s160 + $0x370] sm:$0xff] %v285
                %v287 = vld [vmem:[%s159 + $0x3d8] sm:$0xff]
                %288 = vst [vmem:[%s160 + $0x378] sm:$0xff] %v287
                %s289 = sadd.s32 1, %s158
                %p290 = scmp.ge.s32.totalorder %s289, %s151
                %s291 = scalar_select %p290, 0, %s289
                %s292 = smul.u32 %s291, 128
                %s293 = smul.u32 %s291, 128
                %s294 = scalar_lea.vmem %s142, %s292
                %s295 = scalar_lea.vmem %s134, %s293 [#allocation2]
              $region45: #{net_forward.3} parent=39 // loop_footer
                %s155 = sadd.s32 %s153, 1
              $region46: #{net_forward.3} parent=39 // loop_footer_branch
                %152 = sbr.rel target = $region42
              $region47: #{net_forward.3} parent=39 // loop_exit
                _
              %s296 = sshrl.u32 %s138, 4
              %s297 = sand.u32 %s138, 15
              %s298 = smul.u32 %s296, 16
              %s299 = smul.u32 8, %s298
              %s300 = scalar_lea.vmem %s142, %s299
              %s301 = smul.u32 8, %s298
              %s302 = scalar_lea.vmem %s134, %s301 [#allocation2]
              // While loop
              $region48: #{net_forward.3} parent=39 // loop_pre_header
                _
              $region49: #{net_forward.3} parent=39 // loop_header
                %s304 = sphi 0, %s306
                %p305 = scmp.ge.s32.totalorder %s304, %s297
                %s309 = sphi 0, %s322
                %s310 = sphi %s300, %s325
                %s311 = sphi %s302, %s326
              $region50: #{net_forward.3} parent=39 // loop_header_branch
                %308 = sbr.rel (%p305) target = $region54
              $region51: #{net_forward.3} parent=39 // loop_body
                %v312 = vld [vmem:[%s310] sm:$0xff]
                %313 = vst [vmem:[%s311] sm:$0xff] %v312
                %v314 = vld [vmem:[%s310 + $0x120] sm:$0xff]
                %315 = vst [vmem:[%s311 + $0x100] sm:$0xff] %v314
                %v316 = vld [vmem:[%s310 + $0x240] sm:$0xff]
                %317 = vst [vmem:[%s311 + $0x200] sm:$0xff] %v316
                %v318 = vld [vmem:[%s310 + $0x360] sm:$0xff]
                %319 = vst [vmem:[%s311 + $0x300] sm:$0xff] %v318
                %s320 = sadd.s32 1, %s309
                %p321 = scmp.ge.s32.totalorder %s320, %s297
                %s322 = scalar_select %p321, 0, %s320
                %s323 = smul.u32 %s322, 8
                %s324 = smul.u32 %s322, 8
                %s325 = scalar_lea.vmem %s300, %s323
                %s326 = scalar_lea.vmem %s302, %s324 [#allocation2]
              $region52: #{net_forward.3} parent=39 // loop_footer
                %s306 = sadd.s32 %s304, 1
              $region53: #{net_forward.3} parent=39 // loop_footer_branch
                %303 = sbr.rel target = $region49
              $region54: #{net_forward.3} parent=39 // loop_exit
                _
            $region40: #{net_forward.3} parent=31 // pred_fallthru
              _
          $region32: #{net_forward.3} parent=27 // pred_fallthru
            _
          %507 = vnop
        $region28: #{net_forward.3} parent=23 // pred_fallthru
          _
      $region24: #{net_forward.3} parent=5 // pred_fallthru
        _
      %p508 = scmp.le.s32.totalorder 1, %s9
      %p509 = scmp.lt.s32.totalorder %s9, 3
      %p510 = pnand %p508, %p509
      %p511 = pneg %p510
      // Predicated region
      $region77: #{net_forward.3} parent=5 // pred_check
        _
      $region78: #{net_forward.3} parent=5 // pred_check_branch
        %513 = sbr.rel (%p510) target = $region80
      $region79: #{net_forward.3} parent=5 // pred_region
        %s514 = ssub.s32 %s9, 1
        %s515 = sand.u32 %s22, 1
        %s516 = sand.u32 %s22, 1
        %s517 = smul.addr %s516, 1024
        %s518 = scalar_lea.vmem [#allocation2], %s517
        // Predicated region
        $region81: #{net_forward.3} parent=79 // pred_check
          %p519 = pneg %p35
        $region82: #{net_forward.3} parent=79 // pred_check_branch
          %521 = sbr.rel (%p519) target = $region84
        $region83: #{net_forward.3} parent=79 // pred_region
          _
        $region84: #{net_forward.3} parent=79 // pred_fallthru
          _
        %s522 = sand.u32 %s22, 1
        %s523 = sand.u32 %s22, 1
        %s524 = smul.addr %s523, 1024
        %s525 = scalar_lea.vmem [#allocation2], %s524
        %p526 = pneg %p35
        %p527 = pneg %p32
        %p528 = pneg %p56
        %p529 = pneg %p53
        %p530 = pneg %p77
        %p531 = pneg %p74
        %p532 = pneg %p103
        %p533 = pneg %p100
        %s534 = sand.u32 %s90, 1
        %s535 = sand.u32 %s90, 1
        %s536 = smul.addr %s535, 256
        %s537 = scalar_lea.vmem [#allocation3], %s536
        %s538 = smul.u32 32, %s14
        %s539 = ssub.s32 36, %s538
        %p540 = scmp.lt.s32.totalorder %s539, 32
        %s541 = scalar_select %p540, %s539, 32
        %s542 = smul.u32 512, %s541
        %s543 = smul.u32 32, %s14
        %s544 = ssub.s32 36, %s543
        %p545 = scmp.lt.s32.totalorder %s544, 32
        %s546 = scalar_select %p545, %s544, 32
        %s547 = smul.u32 128, %s546
        %v548 = vld [vmem:[%s1] sm:$0xff]
        %v549 = vld [vmem:[%s1 + $0x8] sm:$0xff]
        %v550 = vld [vmem:[%s1 + $0x10] sm:$0xff]
        %v551 = vld [vmem:[%s1 + $0x18] sm:$0x1]
        %v552 = vld [vmem:[%s518] sm:$0xff]
        %v553 = vld [vmem:[%s518 + $0x8] sm:$0xff]
        %v554 = vld [vmem:[%s518 + $0x10] sm:$0xff]
        %v555 = vld [vmem:[%s518 + $0x18] sm:$0xff]
        %v556 = vld [vmem:[%s518 + $0x20] sm:$0xff]
        %v557 = vld [vmem:[%s518 + $0x28] sm:$0xff]
        %v558 = vld [vmem:[%s518 + $0x30] sm:$0xff]
        %v559 = vld [vmem:[%s518 + $0x38] sm:$0xff]
        %v560 = vld [vmem:[%s518 + $0x40] sm:$0xff]
        %v561 = vld [vmem:[%s518 + $0x48] sm:$0xff]
        %v562 = vld [vmem:[%s518 + $0x50] sm:$0xff]
        %v563 = vld [vmem:[%s518 + $0x58] sm:$0xff]
        %v564 = vld [vmem:[%s518 + $0x60] sm:$0xff]
        %v565 = vld [vmem:[%s518 + $0x68] sm:$0xff]
        %v566 = vld [vmem:[%s518 + $0x70] sm:$0xff]
        %v567 = vld [vmem:[%s518 + $0x78] sm:$0xff]
        %v568 = vld [vmem:[%s518 + $0x80] sm:$0xff]
        %v569 = vld [vmem:[%s518 + $0x88] sm:$0xff]
        %v570 = vld [vmem:[%s518 + $0x90] sm:$0xff]
        %v571 = vld [vmem:[%s518 + $0x98] sm:$0xff]
        %v572 = vld [vmem:[%s518 + $0xa0] sm:$0xff]
        %v573 = vld [vmem:[%s518 + $0xa8] sm:$0xff]
        %v574 = vld [vmem:[%s518 + $0xb0] sm:$0xff]
        %v575 = vld [vmem:[%s518 + $0xb8] sm:$0xff]
        %v576 = vld [vmem:[%s518 + $0xc0] sm:$0xff]
        %v577 = vld [vmem:[%s518 + $0xc8] sm:$0xff]
        %v578 = vld [vmem:[%s518 + $0xd0] sm:$0xff]
        %v579 = vld [vmem:[%s518 + $0xd8] sm:$0xff]
        %v580 = vld [vmem:[%s518 + $0xe0] sm:$0xff]
        %v581 = vld [vmem:[%s518 + $0xe8] sm:$0xff]
        %v582 = vld [vmem:[%s518 + $0xf0] sm:$0xff]
        %v583 = vld [vmem:[%s518 + $0xf8] sm:$0xff]
        %vm584 = vcmask 203776
        %v586 = vsel %vm584, %v552, 0
        %v589 = vsel %vm584, %v553, 0
        %v592 = vsel %vm584, %v554, 0
        %v595 = vsel %vm584, %v555, 0
        %v598 = vsel %vm584, %v556, 0
        %v601 = vsel %vm584, %v557, 0
        %v604 = vsel %vm584, %v558, 0
        %v607 = vsel %vm584, %v559, 0
        %v610 = vsel %vm584, %v560, 0
        %v613 = vsel %vm584, %v561, 0
        %v616 = vsel %vm584, %v562, 0
        %v619 = vsel %vm584, %v563, 0
        %v622 = vsel %vm584, %v564, 0
        %v625 = vsel %vm584, %v565, 0
        %v628 = vsel %vm584, %v566, 0
        %v631 = vsel %vm584, %v567, 0
        %v634 = vsel %vm584, %v568, 0
        %v637 = vsel %vm584, %v569, 0
        %v640 = vsel %vm584, %v570, 0
        %v643 = vsel %vm584, %v571, 0
        %v646 = vsel %vm584, %v572, 0
        %v649 = vsel %vm584, %v573, 0
        %v652 = vsel %vm584, %v574, 0
        %v655 = vsel %vm584, %v575, 0
        %v658 = vsel %vm584, %v576, 0
        %v661 = vsel %vm584, %v577, 0
        %v664 = vsel %vm584, %v578, 0
        %v667 = vsel %vm584, %v579, 0
        %v670 = vsel %vm584, %v580, 0
        %v673 = vsel %vm584, %v581, 0
        %v676 = vsel %vm584, %v582, 0
        %v679 = vsel %vm584, %v583, 0
        %vm681 = vcmask 1040384
        %v683 = vsel %vm681, %v551, 0
        %685 = vmatprep.subr.mxu0 0.0
        %686 = vmatpush1.msra.mxu0 %v548
        %687 = vmatprep.subr.mxu0 0.0
        %688 = vmatpush1.msra.mxu0 %v549
        %689 = vmatprep.subr.mxu0 0.0
        %690 = vmatpush1.msra.mxu0 %v550
        %691 = vmatprep.subr.mxu0 0.0
        %692 = vmatpush1.msra.mxu0 %v683
        %693 = vmatprep.subr.mxu0 0.0
        %694 = vmatpush1.msra.mxu0 0.0
        %695 = vmatprep.subr.mxu0 0.0
        %696 = vmatpush1.msra.mxu0 0.0
        %697 = vmatprep.subr.mxu0 0.0
        %698 = vmatpush1.msra.mxu0 0.0
        %699 = vmatprep.subr.mxu0 0.0
        %700 = vmatpush1.msra.mxu0 0.0
        %701 = vmatprep.subr.mxu0 0.0
        %702 = vmatpush1.msra.mxu0 0.0
        %703 = vmatprep.subr.mxu0 0.0
        %704 = vmatpush1.msra.mxu0 0.0
        %705 = vmatprep.subr.mxu0 0.0
        %706 = vmatpush1.msra.mxu0 0.0
        %707 = vmatprep.subr.mxu0 0.0
        %708 = vmatpush1.msra.mxu0 0.0
        %709 = vmatprep.subr.mxu0 0.0
        %710 = vmatpush1.msra.mxu0 0.0
        %711 = vmatprep.subr.mxu0 0.0
        %712 = vmatpush1.msra.mxu0 0.0
        %713 = vmatprep.subr.mxu0 0.0
        %714 = vmatpush1.msra.mxu0 0.0
        %715 = vmatprep.subr.mxu0 0.0
        %716 = vmatpush1.msra.mxu0 0.0
        %717 = vmatprep.subr.mxu0 0.0
        %718 = vmatpush1.msra.mxu0 0.0
        %719 = vmatprep.subr.mxu0 0.0
        %720 = vmatpush1.msra.mxu0 0.0
        %721 = vmatprep.subr.mxu0 0.0
        %722 = vmatpush1.msra.mxu0 0.0
        %723 = vmatprep.subr.mxu0 0.0
        %724 = vmatpush1.msra.mxu0 0.0
        %725 = vmatprep.subr.mxu0 0.0
        %726 = vmatpush1.msra.mxu0 0.0
        %727 = vmatprep.subr.mxu0 0.0
        %728 = vmatpush1.msra.mxu0 0.0
        %729 = vmatprep.subr.mxu0 0.0
        %730 = vmatpush1.msra.mxu0 0.0
        %731 = vmatprep.subr.mxu0 0.0
        %732 = vmatpush1.msra.mxu0 0.0
        %733 = vmatprep.subr.mxu0 0.0
        %734 = vmatpush1.msra.mxu0 0.0
        %735 = vmatprep.subr.mxu0 0.0
        %736 = vmatpush1.msra.mxu0 0.0
        %737 = vmatprep.subr.mxu0 0.0
        %738 = vmatpush1.msra.mxu0 0.0
        %739 = vmatprep.subr.mxu0 0.0
        %740 = vmatpush1.msra.mxu0 0.0
        %741 = vmatprep.subr.mxu0 0.0
        %742 = vmatpush1.msra.mxu0 0.0
        %743 = vmatprep.subr.mxu0 0.0
        %744 = vmatpush1.msra.mxu0 0.0
        %745 = vmatprep.subr.mxu0 0.0
        %746 = vmatpush1.msra.mxu0 0.0
        %747 = vmatprep.subr.mxu0 0.0
        %748 = vmatpush1.msra.mxu0 0.0
        %749 = vmatprep.mubr.f32.mxu0 0.0
        %750 = vmatmul.mubr.f32.gmra.mrb[0].mxu0 %v586
        %v751 = vpop.f32.mrb[0].mxu0
        %v752 = vadd.f32 0.0, %v751
        %v753 = vpop.f32.mrb[0].mxu0
        %754 = vmatprep.mubr.f32.mxu0 0.0
        %755 = vmatmul.mubr.f32.gmra.mrb[0].mxu0 %v589
        %v756 = vpop.f32.mrb[0].mxu0
        %v757 = vadd.f32 0.0, %v756
        %v758 = vpop.f32.mrb[0].mxu0
        %759 = vmatprep.mubr.f32.mxu0 0.0
        %760 = vmatmul.mubr.f32.gmra.mrb[0].mxu0 %v592
        %v761 = vpop.f32.mrb[0].mxu0
        %v762 = vadd.f32 0.0, %v761
        %v763 = vpop.f32.mrb[0].mxu0
        %764 = vmatprep.mubr.f32.mxu0 0.0
        %765 = vmatmul.mubr.f32.gmra.mrb[0].mxu0 %v595
        %v766 = vpop.f32.mrb[0].mxu0
        %v767 = vadd.f32 0.0, %v766
        %v768 = vpop.f32.mrb[0].mxu0
        %769 = vmatprep.mubr.f32.mxu0 0.0
        %770 = vmatmul.mubr.f32.gmra.mrb[0].mxu0 %v598
        %v771 = vpop.f32.mrb[0].mxu0
        %v772 = vadd.f32 0.0, %v771
        %v773 = vpop.f32.mrb[0].mxu0
        %774 = vmatprep.mubr.f32.mxu0 0.0
        %775 = vmatmul.mubr.f32.gmra.mrb[0].mxu0 %v601
        %v776 = vpop.f32.mrb[0].mxu0
        %v777 = vadd.f32 0.0, %v776
        %v778 = vpop.f32.mrb[0].mxu0
        %779 = vmatprep.mubr.f32.mxu0 0.0
        %780 = vmatmul.mubr.f32.gmra.mrb[0].mxu0 %v604
        %v781 = vpop.f32.mrb[0].mxu0
        %v782 = vadd.f32 0.0, %v781
        %v783 = vpop.f32.mrb[0].mxu0
        %784 = vmatprep.mubr.f32.mxu0 0.0
        %785 = vmatmul.mubr.f32.gmra.mrb[0].mxu0 %v607
        %v786 = vpop.f32.mrb[0].mxu0
        %v787 = vadd.f32 0.0, %v786
        %v788 = vpop.f32.mrb[0].mxu0
        %789 = vmatprep.mubr.f32.mxu0 0.0
        %790 = vmatmul.mubr.f32.gmra.mrb[0].mxu0 %v610
        %v791 = vpop.f32.mrb[0].mxu0
        %v792 = vadd.f32 0.0, %v791
        %v793 = vpop.f32.mrb[0].mxu0
        %794 = vmatprep.mubr.f32.mxu0 0.0
        %795 = vmatmul.mubr.f32.gmra.mrb[0].mxu0 %v613
        %v796 = vpop.f32.mrb[0].mxu0
        %v797 = vadd.f32 0.0, %v796
        %v798 = vpop.f32.mrb[0].mxu0
        %799 = vmatprep.mubr.f32.mxu0 0.0
        %800 = vmatmul.mubr.f32.gmra.mrb[0].mxu0 %v616
        %v801 = vpop.f32.mrb[0].mxu0
        %v802 = vadd.f32 0.0, %v801
        %v803 = vpop.f32.mrb[0].mxu0
        %804 = vmatprep.mubr.f32.mxu0 0.0
        %805 = vmatmul.mubr.f32.gmra.mrb[0].mxu0 %v619
        %v806 = vpop.f32.mrb[0].mxu0
        %v807 = vadd.f32 0.0, %v806
        %v808 = vpop.f32.mrb[0].mxu0
        %809 = vmatprep.mubr.f32.mxu0 0.0
        %810 = vmatmul.mubr.f32.gmra.mrb[0].mxu0 %v622
        %v811 = vpop.f32.mrb[0].mxu0
        %v812 = vadd.f32 0.0, %v811
        %v813 = vpop.f32.mrb[0].mxu0
        %814 = vmatprep.mubr.f32.mxu0 0.0
        %815 = vmatmul.mubr.f32.gmra.mrb[0].mxu0 %v625
        %v816 = vpop.f32.mrb[0].mxu0
        %v817 = vadd.f32 0.0, %v816
        %v818 = vpop.f32.mrb[0].mxu0
        %819 = vmatprep.mubr.f32.mxu0 0.0
        %820 = vmatmul.mubr.f32.gmra.mrb[0].mxu0 %v628
        %v821 = vpop.f32.mrb[0].mxu0
        %v822 = vadd.f32 0.0, %v821
        %v823 = vpop.f32.mrb[0].mxu0
        %824 = vmatprep.mubr.f32.mxu0 0.0
        %825 = vmatmul.mubr.f32.gmra.mrb[0].mxu0 %v631
        %v826 = vpop.f32.mrb[0].mxu0
        %v827 = vadd.f32 0.0, %v826
        %v828 = vpop.f32.mrb[0].mxu0
        %829 = vmatprep.mubr.f32.mxu0 0.0
        %830 = vmatmul.mubr.f32.gmra.mrb[0].mxu0 %v634
        %v831 = vpop.f32.mrb[0].mxu0
        %v832 = vadd.f32 0.0, %v831
        %v833 = vpop.f32.mrb[0].mxu0
        %834 = vmatprep.mubr.f32.mxu0 0.0
        %835 = vmatmul.mubr.f32.gmra.mrb[0].mxu0 %v637
        %v836 = vpop.f32.mrb[0].mxu0
        %v837 = vadd.f32 0.0, %v836
        %v838 = vpop.f32.mrb[0].mxu0
        %839 = vmatprep.mubr.f32.mxu0 0.0
        %840 = vmatmul.mubr.f32.gmra.mrb[0].mxu0 %v640
        %v841 = vpop.f32.mrb[0].mxu0
        %v842 = vadd.f32 0.0, %v841
        %v843 = vpop.f32.mrb[0].mxu0
        %844 = vmatprep.mubr.f32.mxu0 0.0
        %845 = vmatmul.mubr.f32.gmra.mrb[0].mxu0 %v643
        %v846 = vpop.f32.mrb[0].mxu0
        %v847 = vadd.f32 0.0, %v846
        %v848 = vpop.f32.mrb[0].mxu0
        %849 = vmatprep.mubr.f32.mxu0 0.0
        %850 = vmatmul.mubr.f32.gmra.mrb[0].mxu0 %v646
        %v851 = vpop.f32.mrb[0].mxu0
        %v852 = vadd.f32 0.0, %v851
        %v853 = vpop.f32.mrb[0].mxu0
        %854 = vmatprep.mubr.f32.mxu0 0.0
        %855 = vmatmul.mubr.f32.gmra.mrb[0].mxu0 %v649
        %v856 = vpop.f32.mrb[0].mxu0
        %v857 = vadd.f32 0.0, %v856
        %v858 = vpop.f32.mrb[0].mxu0
        %859 = vmatprep.mubr.f32.mxu0 0.0
        %860 = vmatmul.mubr.f32.gmra.mrb[0].mxu0 %v652
        %v861 = vpop.f32.mrb[0].mxu0
        %v862 = vadd.f32 0.0, %v861
        %v863 = vpop.f32.mrb[0].mxu0
        %864 = vmatprep.mubr.f32.mxu0 0.0
        %865 = vmatmul.mubr.f32.gmra.mrb[0].mxu0 %v655
        %v866 = vpop.f32.mrb[0].mxu0
        %v867 = vadd.f32 0.0, %v866
        %v868 = vpop.f32.mrb[0].mxu0
        %869 = vmatprep.mubr.f32.mxu0 0.0
        %870 = vmatmul.mubr.f32.gmra.mrb[0].mxu0 %v658
        %v871 = vpop.f32.mrb[0].mxu0
        %v872 = vadd.f32 0.0, %v871
        %v873 = vpop.f32.mrb[0].mxu0
        %874 = vmatprep.mubr.f32.mxu0 0.0
        %875 = vmatmul.mubr.f32.gmra.mrb[0].mxu0 %v661
        %v876 = vpop.f32.mrb[0].mxu0
        %v877 = vadd.f32 0.0, %v876
        %v878 = vpop.f32.mrb[0].mxu0
        %879 = vmatprep.mubr.f32.mxu0 0.0
        %880 = vmatmul.mubr.f32.gmra.mrb[0].mxu0 %v664
        %v881 = vpop.f32.mrb[0].mxu0
        %v882 = vadd.f32 0.0, %v881
        %v883 = vpop.f32.mrb[0].mxu0
        %884 = vmatprep.mubr.f32.mxu0 0.0
        %885 = vmatmul.mubr.f32.gmra.mrb[0].mxu0 %v667
        %v886 = vpop.f32.mrb[0].mxu0
        %v887 = vadd.f32 0.0, %v886
        %v888 = vpop.f32.mrb[0].mxu0
        %889 = vmatprep.mubr.f32.mxu0 0.0
        %890 = vmatmul.mubr.f32.gmra.mrb[0].mxu0 %v670
        %v891 = vpop.f32.mrb[0].mxu0
        %v892 = vadd.f32 0.0, %v891
        %v893 = vpop.f32.mrb[0].mxu0
        %894 = vmatprep.mubr.f32.mxu0 0.0
        %895 = vmatmul.mubr.f32.gmra.mrb[0].mxu0 %v673
        %v896 = vpop.f32.mrb[0].mxu0
        %v897 = vadd.f32 0.0, %v896
        %v898 = vpop.f32.mrb[0].mxu0
        %899 = vmatprep.mubr.f32.mxu0 0.0
        %900 = vmatmul.mubr.f32.gmra.mrb[0].mxu0 %v676
        %v901 = vpop.f32.mrb[0].mxu0
        %v902 = vadd.f32 0.0, %v901
        %v903 = vpop.f32.mrb[0].mxu0
        %904 = vmatprep.mubr.f32.mxu0 0.0
        %905 = vmatmul.mubr.f32.gmra.mrb[0].mxu0 %v679
        %v906 = vpop.f32.mrb[0].mxu0
        %v907 = vadd.f32 0.0, %v906
        %v908 = vpop.f32.mrb[0].mxu0
        %909 = vdwg.mxu0
        %s910 = scalar_lea.vmem %s518, 256 [#allocation2]
        %v911 = vld [vmem:[%s910] sm:$0xff]
        %v912 = vld [vmem:[%s910 + $0x8] sm:$0xff]
        %v913 = vld [vmem:[%s910 + $0x10] sm:$0xff]
        %v914 = vld [vmem:[%s910 + $0x18] sm:$0xff]
        %v915 = vld [vmem:[%s910 + $0x20] sm:$0xff]
        %v916 = vld [vmem:[%s910 + $0x28] sm:$0xff]
        %v917 = vld [vmem:[%s910 + $0x30] sm:$0xff]
        %v918 = vld [vmem:[%s910 + $0x38] sm:$0xff]
        %v919 = vld [vmem:[%s910 + $0x40] sm:$0xff]
        %v920 = vld [vmem:[%s910 + $0x48] sm:$0xff]
        %v921 = vld [vmem:[%s910 + $0x50] sm:$0xff]
        %v922 = vld [vmem:[%s910 + $0x58] sm:$0xff]
        %v923 = vld [vmem:[%s910 + $0x60] sm:$0xff]
        %v924 = vld [vmem:[%s910 + $0x68] sm:$0xff]
        %v925 = vld [vmem:[%s910 + $0x70] sm:$0xff]
        %v926 = vld [vmem:[%s910 + $0x78] sm:$0xff]
        %v927 = vld [vmem:[%s910 + $0x80] sm:$0xff]
        %v928 = vld [vmem:[%s910 + $0x88] sm:$0xff]
        %v929 = vld [vmem:[%s910 + $0x90] sm:$0xff]
        %v930 = vld [vmem:[%s910 + $0x98] sm:$0xff]
        %v931 = vld [vmem:[%s910 + $0xa0] sm:$0xff]
        %v932 = vld [vmem:[%s910 + $0xa8] sm:$0xff]
        %v933 = vld [vmem:[%s910 + $0xb0] sm:$0xff]
        %v934 = vld [vmem:[%s910 + $0xb8] sm:$0xff]
        %v935 = vld [vmem:[%s910 + $0xc0] sm:$0xff]
        %v936 = vld [vmem:[%s910 + $0xc8] sm:$0xff]
        %v937 = vld [vmem:[%s910 + $0xd0] sm:$0xff]
        %v938 = vld [vmem:[%s910 + $0xd8] sm:$0xff]
        %v939 = vld [vmem:[%s910 + $0xe0] sm:$0xff]
        %v940 = vld [vmem:[%s910 + $0xe8] sm:$0xff]
        %v941 = vld [vmem:[%s910 + $0xf0] sm:$0xff]
        %v942 = vld [vmem:[%s910 + $0xf8] sm:$0xff]
        %v944 = vsel %vm584, %v911, 0
        %v947 = vsel %vm584, %v912, 0
        %v950 = vsel %vm584, %v913, 0
        %v953 = vsel %vm584, %v914, 0
        %v956 = vsel %vm584, %v915, 0
        %v959 = vsel %vm584, %v916, 0
        %v962 = vsel %vm584, %v917, 0
        %v965 = vsel %vm584, %v918, 0
        %v968 = vsel %vm584, %v919, 0
        %v971 = vsel %vm584, %v920, 0
        %v974 = vsel %vm584, %v921, 0
        %v977 = vsel %vm584, %v922, 0
        %v980 = vsel %vm584, %v923, 0
        %v983 = vsel %vm584, %v924, 0
        %v986 = vsel %vm584, %v925, 0
        %v989 = vsel %vm584, %v926, 0
        %v992 = vsel %vm584, %v927, 0
        %v995 = vsel %vm584, %v928, 0
        %v998 = vsel %vm584, %v929, 0
        %v1001 = vsel %vm584, %v930, 0
        %v1004 = vsel %vm584, %v931, 0
        %v1007 = vsel %vm584, %v932, 0
        %v1010 = vsel %vm584, %v933, 0
        %v1013 = vsel %vm584, %v934, 0
        %v1016 = vsel %vm584, %v935, 0
        %v1019 = vsel %vm584, %v936, 0
        %v1022 = vsel %vm584, %v937, 0
        %v1025 = vsel %vm584, %v938, 0
        %v1028 = vsel %vm584, %v939, 0
        %v1031 = vsel %vm584, %v940, 0
        %v1034 = vsel %vm584, %v941, 0
        %v1037 = vsel %vm584, %v942, 0
        %1039 = vmatprep.subr.mxu0 0.0
        %1040 = vmatpush1.msra.mxu0 %v548
        %1041 = vmatprep.subr.mxu0 0.0
        %1042 = vmatpush1.msra.mxu0 %v549
        %1043 = vmatprep.subr.mxu0 0.0
        %1044 = vmatpush1.msra.mxu0 %v550
        %1045 = vmatprep.subr.mxu0 0.0
        %1046 = vmatpush1.msra.mxu0 %v683
        %1047 = vmatprep.subr.mxu0 0.0
        %1048 = vmatpush1.msra.mxu0 0.0
        %1049 = vmatprep.subr.mxu0 0.0
        %1050 = vmatpush1.msra.mxu0 0.0
        %1051 = vmatprep.subr.mxu0 0.0
        %1052 = vmatpush1.msra.mxu0 0.0
        %1053 = vmatprep.subr.mxu0 0.0
        %1054 = vmatpush1.msra.mxu0 0.0
        %1055 = vmatprep.subr.mxu0 0.0
        %1056 = vmatpush1.msra.mxu0 0.0
        %1057 = vmatprep.subr.mxu0 0.0
        %1058 = vmatpush1.msra.mxu0 0.0
        %1059 = vmatprep.subr.mxu0 0.0
        %1060 = vmatpush1.msra.mxu0 0.0
        %1061 = vmatprep.subr.mxu0 0.0
        %1062 = vmatpush1.msra.mxu0 0.0
        %1063 = vmatprep.subr.mxu0 0.0
        %1064 = vmatpush1.msra.mxu0 0.0
        %1065 = vmatprep.subr.mxu0 0.0
        %1066 = vmatpush1.msra.mxu0 0.0
        %1067 = vmatprep.subr.mxu0 0.0
        %1068 = vmatpush1.msra.mxu0 0.0
        %1069 = vmatprep.subr.mxu0 0.0
        %1070 = vmatpush1.msra.mxu0 0.0
        %1071 = vmatprep.subr.mxu0 0.0
        %1072 = vmatpush1.msra.mxu0 0.0
        %1073 = vmatprep.subr.mxu0 0.0
        %1074 = vmatpush1.msra.mxu0 0.0
        %1075 = vmatprep.subr.mxu0 0.0
        %1076 = vmatpush1.msra.mxu0 0.0
        %1077 = vmatprep.subr.mxu0 0.0
        %1078 = vmatpush1.msra.mxu0 0.0
        %1079 = vmatprep.subr.mxu0 0.0
        %1080 = vmatpush1.msra.mxu0 0.0
        %1081 = vmatprep.subr.mxu0 0.0
        %1082 = vmatpush1.msra.mxu0 0.0
        %1083 = vmatprep.subr.mxu0 0.0
        %1084 = vmatpush1.msra.mxu0 0.0
        %1085 = vmatprep.subr.mxu0 0.0
        %1086 = vmatpush1.msra.mxu0 0.0
        %1087 = vmatprep.subr.mxu0 0.0
        %1088 = vmatpush1.msra.mxu0 0.0
        %1089 = vmatprep.subr.mxu0 0.0
        %1090 = vmatpush1.msra.mxu0 0.0
        %1091 = vmatprep.subr.mxu0 0.0
        %1092 = vmatpush1.msra.mxu0 0.0
        %1093 = vmatprep.subr.mxu0 0.0
        %1094 = vmatpush1.msra.mxu0 0.0
        %1095 = vmatprep.subr.mxu0 0.0
        %1096 = vmatpush1.msra.mxu0 0.0
        %1097 = vmatprep.subr.mxu0 0.0
        %1098 = vmatpush1.msra.mxu0 0.0
        %1099 = vmatprep.subr.mxu0 0.0
        %1100 = vmatpush1.msra.mxu0 0.0
        %1101 = vmatprep.subr.mxu0 0.0
        %1102 = vmatpush1.msra.mxu0 0.0
        %1103 = vmatprep.mubr.f32.mxu0 0.0
        %1104 = vmatmul.mubr.f32.gmra.mrb[0].mxu0 %v944
        %v1105 = vpop.f32.mrb[0].mxu0
        %v1106 = vadd.f32 0.0, %v1105
        %v1107 = vpop.f32.mrb[0].mxu0
        %1108 = vmatprep.mubr.f32.mxu0 0.0
        %1109 = vmatmul.mubr.f32.gmra.mrb[0].mxu0 %v947
        %v1110 = vpop.f32.mrb[0].mxu0
        %v1111 = vadd.f32 0.0, %v1110
        %v1112 = vpop.f32.mrb[0].mxu0
        %1113 = vmatprep.mubr.f32.mxu0 0.0
        %1114 = vmatmul.mubr.f32.gmra.mrb[0].mxu0 %v950
        %v1115 = vpop.f32.mrb[0].mxu0
        %v1116 = vadd.f32 0.0, %v1115
        %v1117 = vpop.f32.mrb[0].mxu0
        %1118 = vmatprep.mubr.f32.mxu0 0.0
        %1119 = vmatmul.mubr.f32.gmra.mrb[0].mxu0 %v953
        %v1120 = vpop.f32.mrb[0].mxu0
        %v1121 = vadd.f32 0.0, %v1120
        %v1122 = vpop.f32.mrb[0].mxu0
        %1123 = vmatprep.mubr.f32.mxu0 0.0
        %1124 = vmatmul.mubr.f32.gmra.mrb[0].mxu0 %v956
        %v1125 = vpop.f32.mrb[0].mxu0
        %v1126 = vadd.f32 0.0, %v1125
        %v1127 = vpop.f32.mrb[0].mxu0
        %1128 = vmatprep.mubr.f32.mxu0 0.0
        %1129 = vmatmul.mubr.f32.gmra.mrb[0].mxu0 %v959
        %v1130 = vpop.f32.mrb[0].mxu0
        %v1131 = vadd.f32 0.0, %v1130
        %v1132 = vpop.f32.mrb[0].mxu0
        %1133 = vmatprep.mubr.f32.mxu0 0.0
        %1134 = vmatmul.mubr.f32.gmra.mrb[0].mxu0 %v962
        %v1135 = vpop.f32.mrb[0].mxu0
        %v1136 = vadd.f32 0.0, %v1135
        %v1137 = vpop.f32.mrb[0].mxu0
        %1138 = vmatprep.mubr.f32.mxu0 0.0
        %1139 = vmatmul.mubr.f32.gmra.mrb[0].mxu0 %v965
        %v1140 = vpop.f32.mrb[0].mxu0
        %v1141 = vadd.f32 0.0, %v1140
        %v1142 = vpop.f32.mrb[0].mxu0
        %1143 = vmatprep.mubr.f32.mxu0 0.0
        %1144 = vmatmul.mubr.f32.gmra.mrb[0].mxu0 %v968
        %v1145 = vpop.f32.mrb[0].mxu0
        %v1146 = vadd.f32 0.0, %v1145
        %v1147 = vpop.f32.mrb[0].mxu0
        %1148 = vmatprep.mubr.f32.mxu0 0.0
        %1149 = vmatmul.mubr.f32.gmra.mrb[0].mxu0 %v971
        %v1150 = vpop.f32.mrb[0].mxu0
        %v1151 = vadd.f32 0.0, %v1150
        %v1152 = vpop.f32.mrb[0].mxu0
        %1153 = vmatprep.mubr.f32.mxu0 0.0
        %1154 = vmatmul.mubr.f32.gmra.mrb[0].mxu0 %v974
        %v1155 = vpop.f32.mrb[0].mxu0
        %v1156 = vadd.f32 0.0, %v1155
        %v1157 = vpop.f32.mrb[0].mxu0
        %1158 = vmatprep.mubr.f32.mxu0 0.0
        %1159 = vmatmul.mubr.f32.gmra.mrb[0].mxu0 %v977
        %v1160 = vpop.f32.mrb[0].mxu0
        %v1161 = vadd.f32 0.0, %v1160
        %v1162 = vpop.f32.mrb[0].mxu0
        %1163 = vmatprep.mubr.f32.mxu0 0.0
        %1164 = vmatmul.mubr.f32.gmra.mrb[0].mxu0 %v980
        %v1165 = vpop.f32.mrb[0].mxu0
        %v1166 = vadd.f32 0.0, %v1165
        %v1167 = vpop.f32.mrb[0].mxu0
        %1168 = vmatprep.mubr.f32.mxu0 0.0
        %1169 = vmatmul.mubr.f32.gmra.mrb[0].mxu0 %v983
        %v1170 = vpop.f32.mrb[0].mxu0
        %v1171 = vadd.f32 0.0, %v1170
        %v1172 = vpop.f32.mrb[0].mxu0
        %1173 = vmatprep.mubr.f32.mxu0 0.0
        %1174 = vmatmul.mubr.f32.gmra.mrb[0].mxu0 %v986
        %v1175 = vpop.f32.mrb[0].mxu0
        %v1176 = vadd.f32 0.0, %v1175
        %v1177 = vpop.f32.mrb[0].mxu0
        %1178 = vmatprep.mubr.f32.mxu0 0.0
        %1179 = vmatmul.mubr.f32.gmra.mrb[0].mxu0 %v989
        %v1180 = vpop.f32.mrb[0].mxu0
        %v1181 = vadd.f32 0.0, %v1180
        %v1182 = vpop.f32.mrb[0].mxu0
        %1183 = vmatprep.mubr.f32.mxu0 0.0
        %1184 = vmatmul.mubr.f32.gmra.mrb[0].mxu0 %v992
        %v1185 = vpop.f32.mrb[0].mxu0
        %v1186 = vadd.f32 0.0, %v1185
        %v1187 = vpop.f32.mrb[0].mxu0
        %1188 = vmatprep.mubr.f32.mxu0 0.0
        %1189 = vmatmul.mubr.f32.gmra.mrb[0].mxu0 %v995
        %v1190 = vpop.f32.mrb[0].mxu0
        %v1191 = vadd.f32 0.0, %v1190
        %v1192 = vpop.f32.mrb[0].mxu0
        %1193 = vmatprep.mubr.f32.mxu0 0.0
        %1194 = vmatmul.mubr.f32.gmra.mrb[0].mxu0 %v998
        %v1195 = vpop.f32.mrb[0].mxu0
        %v1196 = vadd.f32 0.0, %v1195
        %v1197 = vpop.f32.mrb[0].mxu0
        %1198 = vmatprep.mubr.f32.mxu0 0.0
        %1199 = vmatmul.mubr.f32.gmra.mrb[0].mxu0 %v1001
        %v1200 = vpop.f32.mrb[0].mxu0
        %v1201 = vadd.f32 0.0, %v1200
        %v1202 = vpop.f32.mrb[0].mxu0
        %1203 = vmatprep.mubr.f32.mxu0 0.0
        %1204 = vmatmul.mubr.f32.gmra.mrb[0].mxu0 %v1004
        %v1205 = vpop.f32.mrb[0].mxu0
        %v1206 = vadd.f32 0.0, %v1205
        %v1207 = vpop.f32.mrb[0].mxu0
        %1208 = vmatprep.mubr.f32.mxu0 0.0
        %1209 = vmatmul.mubr.f32.gmra.mrb[0].mxu0 %v1007
        %v1210 = vpop.f32.mrb[0].mxu0
        %v1211 = vadd.f32 0.0, %v1210
        %v1212 = vpop.f32.mrb[0].mxu0
        %1213 = vmatprep.mubr.f32.mxu0 0.0
        %1214 = vmatmul.mubr.f32.gmra.mrb[0].mxu0 %v1010
        %v1215 = vpop.f32.mrb[0].mxu0
        %v1216 = vadd.f32 0.0, %v1215
        %v1217 = vpop.f32.mrb[0].mxu0
        %1218 = vmatprep.mubr.f32.mxu0 0.0
        %1219 = vmatmul.mubr.f32.gmra.mrb[0].mxu0 %v1013
        %v1220 = vpop.f32.mrb[0].mxu0
        %v1221 = vadd.f32 0.0, %v1220
        %v1222 = vpop.f32.mrb[0].mxu0
        %1223 = vmatprep.mubr.f32.mxu0 0.0
        %1224 = vmatmul.mubr.f32.gmra.mrb[0].mxu0 %v1016
        %v1225 = vpop.f32.mrb[0].mxu0
        %v1226 = vadd.f32 0.0, %v1225
        %v1227 = vpop.f32.mrb[0].mxu0
        %1228 = vmatprep.mubr.f32.mxu0 0.0
        %1229 = vmatmul.mubr.f32.gmra.mrb[0].mxu0 %v1019
        %v1230 = vpop.f32.mrb[0].mxu0
        %v1231 = vadd.f32 0.0, %v1230
        %v1232 = vpop.f32.mrb[0].mxu0
        %1233 = vmatprep.mubr.f32.mxu0 0.0
        %1234 = vmatmul.mubr.f32.gmra.mrb[0].mxu0 %v1022
        %v1235 = vpop.f32.mrb[0].mxu0
        %v1236 = vadd.f32 0.0, %v1235
        %v1237 = vpop.f32.mrb[0].mxu0
        %1238 = vmatprep.mubr.f32.mxu0 0.0
        %1239 = vmatmul.mubr.f32.gmra.mrb[0].mxu0 %v1025
        %v1240 = vpop.f32.mrb[0].mxu0
        %v1241 = vadd.f32 0.0, %v1240
        %v1242 = vpop.f32.mrb[0].mxu0
        %1243 = vmatprep.mubr.f32.mxu0 0.0
        %1244 = vmatmul.mubr.f32.gmra.mrb[0].mxu0 %v1028
        %v1245 = vpop.f32.mrb[0].mxu0
        %v1246 = vadd.f32 0.0, %v1245
        %v1247 = vpop.f32.mrb[0].mxu0
        %1248 = vmatprep.mubr.f32.mxu0 0.0
        %1249 = vmatmul.mubr.f32.gmra.mrb[0].mxu0 %v1031
        %v1250 = vpop.f32.mrb[0].mxu0
        %v1251 = vadd.f32 0.0, %v1250
        %v1252 = vpop.f32.mrb[0].mxu0
        %1253 = vmatprep.mubr.f32.mxu0 0.0
        %1254 = vmatmul.mubr.f32.gmra.mrb[0].mxu0 %v1034
        %v1255 = vpop.f32.mrb[0].mxu0
        %v1256 = vadd.f32 0.0, %v1255
        %v1257 = vpop.f32.mrb[0].mxu0
        %1258 = vmatprep.mubr.f32.mxu0 0.0
        %1259 = vmatmul.mubr.f32.gmra.mrb[0].mxu0 %v1037
        %v1260 = vpop.f32.mrb[0].mxu0
        %v1261 = vadd.f32 0.0, %v1260
        %v1262 = vpop.f32.mrb[0].mxu0
        %1263 = vdwg.mxu0
        %v1264 = vmax.f32 %v752, %v1106
        %v1265 = vmax.f32 %v757, %v1111
        %v1266 = vmax.f32 %v762, %v1116
        %v1267 = vmax.f32 %v767, %v1121
        %v1268 = vmax.f32 %v772, %v1126
        %v1269 = vmax.f32 %v777, %v1131
        %v1270 = vmax.f32 %v782, %v1136
        %v1271 = vmax.f32 %v787, %v1141
        %v1272 = vmax.f32 %v792, %v1146
        %v1273 = vmax.f32 %v797, %v1151
        %v1274 = vmax.f32 %v802, %v1156
        %v1275 = vmax.f32 %v807, %v1161
        %v1276 = vmax.f32 %v812, %v1166
        %v1277 = vmax.f32 %v817, %v1171
        %v1278 = vmax.f32 %v822, %v1176
        %v1279 = vmax.f32 %v827, %v1181
        %v1280 = vmax.f32 %v832, %v1186
        %v1281 = vmax.f32 %v837, %v1191
        %v1282 = vmax.f32 %v842, %v1196
        %v1283 = vmax.f32 %v847, %v1201
        %v1284 = vmax.f32 %v852, %v1206
        %v1285 = vmax.f32 %v857, %v1211
        %v1286 = vmax.f32 %v862, %v1216
        %v1287 = vmax.f32 %v867, %v1221
        %v1288 = vmax.f32 %v872, %v1226
        %v1289 = vmax.f32 %v877, %v1231
        %v1290 = vmax.f32 %v882, %v1236
        %v1291 = vmax.f32 %v887, %v1241
        %v1292 = vmax.f32 %v892, %v1246
        %v1293 = vmax.f32 %v897, %v1251
        %v1294 = vmax.f32 %v902, %v1256
        %v1295 = vmax.f32 %v907, %v1261
        %s1296 = scalar_lea.vmem %s518, 512 [#allocation2]
        %v1297 = vld [vmem:[%s1296] sm:$0xff]
        %v1298 = vld [vmem:[%s1296 + $0x8] sm:$0xff]
        %v1299 = vld [vmem:[%s1296 + $0x10] sm:$0xff]
        %v1300 = vld [vmem:[%s1296 + $0x18] sm:$0xff]
        %v1301 = vld [vmem:[%s1296 + $0x20] sm:$0xff]
        %v1302 = vld [vmem:[%s1296 + $0x28] sm:$0xff]
        %v1303 = vld [vmem:[%s1296 + $0x30] sm:$0xff]
        %v1304 = vld [vmem:[%s1296 + $0x38] sm:$0xff]
        %v1305 = vld [vmem:[%s1296 + $0x40] sm:$0xff]
        %v1306 = vld [vmem:[%s1296 + $0x48] sm:$0xff]
        %v1307 = vld [vmem:[%s1296 + $0x50] sm:$0xff]
        %v1308 = vld [vmem:[%s1296 + $0x58] sm:$0xff]
        %v1309 = vld [vmem:[%s1296 + $0x60] sm:$0xff]
        %v1310 = vld [vmem:[%s1296 + $0x68] sm:$0xff]
        %v1311 = vld [vmem:[%s1296 + $0x70] sm:$0xff]
        %v1312 = vld [vmem:[%s1296 + $0x78] sm:$0xff]
        %v1313 = vld [vmem:[%s1296 + $0x80] sm:$0xff]
        %v1314 = vld [vmem:[%s1296 + $0x88] sm:$0xff]
        %v1315 = vld [vmem:[%s1296 + $0x90] sm:$0xff]
        %v1316 = vld [vmem:[%s1296 + $0x98] sm:$0xff]
        %v1317 = vld [vmem:[%s1296 + $0xa0] sm:$0xff]
        %v1318 = vld [vmem:[%s1296 + $0xa8] sm:$0xff]
        %v1319 = vld [vmem:[%s1296 + $0xb0] sm:$0xff]
        %v1320 = vld [vmem:[%s1296 + $0xb8] sm:$0xff]
        %v1321 = vld [vmem:[%s1296 + $0xc0] sm:$0xff]
        %v1322 = vld [vmem:[%s1296 + $0xc8] sm:$0xff]
        %v1323 = vld [vmem:[%s1296 + $0xd0] sm:$0xff]
        %v1324 = vld [vmem:[%s1296 + $0xd8] sm:$0xff]
        %v1325 = vld [vmem:[%s1296 + $0xe0] sm:$0xff]
        %v1326 = vld [vmem:[%s1296 + $0xe8] sm:$0xff]
        %v1327 = vld [vmem:[%s1296 + $0xf0] sm:$0xff]
        %v1328 = vld [vmem:[%s1296 + $0xf8] sm:$0xff]
        %v1330 = vsel %vm584, %v1297, 0
        %v1333 = vsel %vm584, %v1298, 0
        %v1336 = vsel %vm584, %v1299, 0
        %v1339 = vsel %vm584, %v1300, 0
        %v1342 = vsel %vm584, %v1301, 0
        %v1345 = vsel %vm584, %v1302, 0
        %v1348 = vsel %vm584, %v1303, 0
        %v1351 = vsel %vm584, %v1304, 0
        %v1354 = vsel %vm584, %v1305, 0
        %v1357 = vsel %vm584, %v1306, 0
        %v1360 = vsel %vm584, %v1307, 0
        %v1363 = vsel %vm584, %v1308, 0
        %v1366 = vsel %vm584, %v1309, 0
        %v1369 = vsel %vm584, %v1310, 0
        %v1372 = vsel %vm584, %v1311, 0
        %v1375 = vsel %vm584, %v1312, 0
        %v1378 = vsel %vm584, %v1313, 0
        %v1381 = vsel %vm584, %v1314, 0
        %v1384 = vsel %vm584, %v1315, 0
        %v1387 = vsel %vm584, %v1316, 0
        %v1390 = vsel %vm584, %v1317, 0
        %v1393 = vsel %vm584, %v1318, 0
        %v1396 = vsel %vm584, %v1319, 0
        %v1399 = vsel %vm584, %v1320, 0
        %v1402 = vsel %vm584, %v1321, 0
        %v1405 = vsel %vm584, %v1322, 0
        %v1408 = vsel %vm584, %v1323, 0
        %v1411 = vsel %vm584, %v1324, 0
        %v1414 = vsel %vm584, %v1325, 0
        %v1417 = vsel %vm584, %v1326, 0
        %v1420 = vsel %vm584, %v1327, 0
        %v1423 = vsel %vm584, %v1328, 0
        %1425 = vmatprep.subr.mxu0 0.0
        %1426 = vmatpush1.msra.mxu0 %v548
        %1427 = vmatprep.subr.mxu0 0.0
        %1428 = vmatpush1.msra.mxu0 %v549
        %1429 = vmatprep.subr.mxu0 0.0
        %1430 = vmatpush1.msra.mxu0 %v550
        %1431 = vmatprep.subr.mxu0 0.0
        %1432 = vmatpush1.msra.mxu0 %v683
        %1433 = vmatprep.subr.mxu0 0.0
        %1434 = vmatpush1.msra.mxu0 0.0
        %1435 = vmatprep.subr.mxu0 0.0
        %1436 = vmatpush1.msra.mxu0 0.0
        %1437 = vmatprep.subr.mxu0 0.0
        %1438 = vmatpush1.msra.mxu0 0.0
        %1439 = vmatprep.subr.mxu0 0.0
        %1440 = vmatpush1.msra.mxu0 0.0
        %1441 = vmatprep.subr.mxu0 0.0
        %1442 = vmatpush1.msra.mxu0 0.0
        %1443 = vmatprep.subr.mxu0 0.0
        %1444 = vmatpush1.msra.mxu0 0.0
        %1445 = vmatprep.subr.mxu0 0.0
        %1446 = vmatpush1.msra.mxu0 0.0
        %1447 = vmatprep.subr.mxu0 0.0
        %1448 = vmatpush1.msra.mxu0 0.0
        %1449 = vmatprep.subr.mxu0 0.0
        %1450 = vmatpush1.msra.mxu0 0.0
        %1451 = vmatprep.subr.mxu0 0.0
        %1452 = vmatpush1.msra.mxu0 0.0
        %1453 = vmatprep.subr.mxu0 0.0
        %1454 = vmatpush1.msra.mxu0 0.0
        %1455 = vmatprep.subr.mxu0 0.0
        %1456 = vmatpush1.msra.mxu0 0.0
        %1457 = vmatprep.subr.mxu0 0.0
        %1458 = vmatpush1.msra.mxu0 0.0
        %1459 = vmatprep.subr.mxu0 0.0
        %1460 = vmatpush1.msra.mxu0 0.0
        %1461 = vmatprep.subr.mxu0 0.0
        %1462 = vmatpush1.msra.mxu0 0.0
        %1463 = vmatprep.subr.mxu0 0.0
        %1464 = vmatpush1.msra.mxu0 0.0
        %1465 = vmatprep.subr.mxu0 0.0
        %1466 = vmatpush1.msra.mxu0 0.0
        %1467 = vmatprep.subr.mxu0 0.0
        %1468 = vmatpush1.msra.mxu0 0.0
        %1469 = vmatprep.subr.mxu0 0.0
        %1470 = vmatpush1.msra.mxu0 0.0
        %1471 = vmatprep.subr.mxu0 0.0
        %1472 = vmatpush1.msra.mxu0 0.0
        %1473 = vmatprep.subr.mxu0 0.0
        %1474 = vmatpush1.msra.mxu0 0.0
        %1475 = vmatprep.subr.mxu0 0.0
        %1476 = vmatpush1.msra.mxu0 0.0
        %1477 = vmatprep.subr.mxu0 0.0
        %1478 = vmatpush1.msra.mxu0 0.0
        %1479 = vmatprep.subr.mxu0 0.0
        %1480 = vmatpush1.msra.mxu0 0.0
        %1481 = vmatprep.subr.mxu0 0.0
        %1482 = vmatpush1.msra.mxu0 0.0
        %1483 = vmatprep.subr.mxu0 0.0
        %1484 = vmatpush1.msra.mxu0 0.0
        %1485 = vmatprep.subr.mxu0 0.0
        %1486 = vmatpush1.msra.mxu0 0.0
        %1487 = vmatprep.subr.mxu0 0.0
        %1488 = vmatpush1.msra.mxu0 0.0
        %1489 = vmatprep.mubr.f32.mxu0 0.0
        %1490 = vmatmul.mubr.f32.gmra.mrb[0].mxu0 %v1330
        %v1491 = vpop.f32.mrb[0].mxu0
        %v1492 = vadd.f32 0.0, %v1491
        %v1493 = vpop.f32.mrb[0].mxu0
        %1494 = vmatprep.mubr.f32.mxu0 0.0
        %1495 = vmatmul.mubr.f32.gmra.mrb[0].mxu0 %v1333
        %v1496 = vpop.f32.mrb[0].mxu0
        %v1497 = vadd.f32 0.0, %v1496
        %v1498 = vpop.f32.mrb[0].mxu0
        %1499 = vmatprep.mubr.f32.mxu0 0.0
        %1500 = vmatmul.mubr.f32.gmra.mrb[0].mxu0 %v1336
        %v1501 = vpop.f32.mrb[0].mxu0
        %v1502 = vadd.f32 0.0, %v1501
        %v1503 = vpop.f32.mrb[0].mxu0
        %1504 = vmatprep.mubr.f32.mxu0 0.0
        %1505 = vmatmul.mubr.f32.gmra.mrb[0].mxu0 %v1339
        %v1506 = vpop.f32.mrb[0].mxu0
        %v1507 = vadd.f32 0.0, %v1506
        %v1508 = vpop.f32.mrb[0].mxu0
        %1509 = vmatprep.mubr.f32.mxu0 0.0
        %1510 = vmatmul.mubr.f32.gmra.mrb[0].mxu0 %v1342
        %v1511 = vpop.f32.mrb[0].mxu0
        %v1512 = vadd.f32 0.0, %v1511
        %v1513 = vpop.f32.mrb[0].mxu0
        %1514 = vmatprep.mubr.f32.mxu0 0.0
        %1515 = vmatmul.mubr.f32.gmra.mrb[0].mxu0 %v1345
        %v1516 = vpop.f32.mrb[0].mxu0
        %v1517 = vadd.f32 0.0, %v1516
        %v1518 = vpop.f32.mrb[0].mxu0
        %1519 = vmatprep.mubr.f32.mxu0 0.0
        %1520 = vmatmul.mubr.f32.gmra.mrb[0].mxu0 %v1348
        %v1521 = vpop.f32.mrb[0].mxu0
        %v1522 = vadd.f32 0.0, %v1521
        %v1523 = vpop.f32.mrb[0].mxu0
        %1524 = vmatprep.mubr.f32.mxu0 0.0
        %1525 = vmatmul.mubr.f32.gmra.mrb[0].mxu0 %v1351
        %v1526 = vpop.f32.mrb[0].mxu0
        %v1527 = vadd.f32 0.0, %v1526
        %v1528 = vpop.f32.mrb[0].mxu0
        %1529 = vmatprep.mubr.f32.mxu0 0.0
        %1530 = vmatmul.mubr.f32.gmra.mrb[0].mxu0 %v1354
        %v1531 = vpop.f32.mrb[0].mxu0
        %v1532 = vadd.f32 0.0, %v1531
        %v1533 = vpop.f32.mrb[0].mxu0
        %1534 = vmatprep.mubr.f32.mxu0 0.0
        %1535 = vmatmul.mubr.f32.gmra.mrb[0].mxu0 %v1357
        %v1536 = vpop.f32.mrb[0].mxu0
        %v1537 = vadd.f32 0.0, %v1536
        %v1538 = vpop.f32.mrb[0].mxu0
        %1539 = vmatprep.mubr.f32.mxu0 0.0
        %1540 = vmatmul.mubr.f32.gmra.mrb[0].mxu0 %v1360
        %v1541 = vpop.f32.mrb[0].mxu0
        %v1542 = vadd.f32 0.0, %v1541
        %v1543 = vpop.f32.mrb[0].mxu0
        %1544 = vmatprep.mubr.f32.mxu0 0.0
        %1545 = vmatmul.mubr.f32.gmra.mrb[0].mxu0 %v1363
        %v1546 = vpop.f32.mrb[0].mxu0
        %v1547 = vadd.f32 0.0, %v1546
        %v1548 = vpop.f32.mrb[0].mxu0
        %1549 = vmatprep.mubr.f32.mxu0 0.0
        %1550 = vmatmul.mubr.f32.gmra.mrb[0].mxu0 %v1366
        %v1551 = vpop.f32.mrb[0].mxu0
        %v1552 = vadd.f32 0.0, %v1551
        %v1553 = vpop.f32.mrb[0].mxu0
        %1554 = vmatprep.mubr.f32.mxu0 0.0
        %1555 = vmatmul.mubr.f32.gmra.mrb[0].mxu0 %v1369
        %v1556 = vpop.f32.mrb[0].mxu0
        %v1557 = vadd.f32 0.0, %v1556
        %v1558 = vpop.f32.mrb[0].mxu0
        %1559 = vmatprep.mubr.f32.mxu0 0.0
        %1560 = vmatmul.mubr.f32.gmra.mrb[0].mxu0 %v1372
        %v1561 = vpop.f32.mrb[0].mxu0
        %v1562 = vadd.f32 0.0, %v1561
        %v1563 = vpop.f32.mrb[0].mxu0
        %1564 = vmatprep.mubr.f32.mxu0 0.0
        %1565 = vmatmul.mubr.f32.gmra.mrb[0].mxu0 %v1375
        %v1566 = vpop.f32.mrb[0].mxu0
        %v1567 = vadd.f32 0.0, %v1566
        %v1568 = vpop.f32.mrb[0].mxu0
        %1569 = vmatprep.mubr.f32.mxu0 0.0
        %1570 = vmatmul.mubr.f32.gmra.mrb[0].mxu0 %v1378
        %v1571 = vpop.f32.mrb[0].mxu0
        %v1572 = vadd.f32 0.0, %v1571
        %v1573 = vpop.f32.mrb[0].mxu0
        %1574 = vmatprep.mubr.f32.mxu0 0.0
        %1575 = vmatmul.mubr.f32.gmra.mrb[0].mxu0 %v1381
        %v1576 = vpop.f32.mrb[0].mxu0
        %v1577 = vadd.f32 0.0, %v1576
        %v1578 = vpop.f32.mrb[0].mxu0
        %1579 = vmatprep.mubr.f32.mxu0 0.0
        %1580 = vmatmul.mubr.f32.gmra.mrb[0].mxu0 %v1384
        %v1581 = vpop.f32.mrb[0].mxu0
        %v1582 = vadd.f32 0.0, %v1581
        %v1583 = vpop.f32.mrb[0].mxu0
        %1584 = vmatprep.mubr.f32.mxu0 0.0
        %1585 = vmatmul.mubr.f32.gmra.mrb[0].mxu0 %v1387
        %v1586 = vpop.f32.mrb[0].mxu0
        %v1587 = vadd.f32 0.0, %v1586
        %v1588 = vpop.f32.mrb[0].mxu0
        %1589 = vmatprep.mubr.f32.mxu0 0.0
        %1590 = vmatmul.mubr.f32.gmra.mrb[0].mxu0 %v1390
        %v1591 = vpop.f32.mrb[0].mxu0
        %v1592 = vadd.f32 0.0, %v1591
        %v1593 = vpop.f32.mrb[0].mxu0
        %1594 = vmatprep.mubr.f32.mxu0 0.0
        %1595 = vmatmul.mubr.f32.gmra.mrb[0].mxu0 %v1393
        %v1596 = vpop.f32.mrb[0].mxu0
        %v1597 = vadd.f32 0.0, %v1596
        %v1598 = vpop.f32.mrb[0].mxu0
        %1599 = vmatprep.mubr.f32.mxu0 0.0
        %1600 = vmatmul.mubr.f32.gmra.mrb[0].mxu0 %v1396
        %v1601 = vpop.f32.mrb[0].mxu0
        %v1602 = vadd.f32 0.0, %v1601
        %v1603 = vpop.f32.mrb[0].mxu0
        %1604 = vmatprep.mubr.f32.mxu0 0.0
        %1605 = vmatmul.mubr.f32.gmra.mrb[0].mxu0 %v1399
        %v1606 = vpop.f32.mrb[0].mxu0
        %v1607 = vadd.f32 0.0, %v1606
        %v1608 = vpop.f32.mrb[0].mxu0
        %1609 = vmatprep.mubr.f32.mxu0 0.0
        %1610 = vmatmul.mubr.f32.gmra.mrb[0].mxu0 %v1402
        %v1611 = vpop.f32.mrb[0].mxu0
        %v1612 = vadd.f32 0.0, %v1611
        %v1613 = vpop.f32.mrb[0].mxu0
        %1614 = vmatprep.mubr.f32.mxu0 0.0
        %1615 = vmatmul.mubr.f32.gmra.mrb[0].mxu0 %v1405
        %v1616 = vpop.f32.mrb[0].mxu0
        %v1617 = vadd.f32 0.0, %v1616
        %v1618 = vpop.f32.mrb[0].mxu0
        %1619 = vmatprep.mubr.f32.mxu0 0.0
        %1620 = vmatmul.mubr.f32.gmra.mrb[0].mxu0 %v1408
        %v1621 = vpop.f32.mrb[0].mxu0
        %v1622 = vadd.f32 0.0, %v1621
        %v1623 = vpop.f32.mrb[0].mxu0
        %1624 = vmatprep.mubr.f32.mxu0 0.0
        %1625 = vmatmul.mubr.f32.gmra.mrb[0].mxu0 %v1411
        %v1626 = vpop.f32.mrb[0].mxu0
        %v1627 = vadd.f32 0.0, %v1626
        %v1628 = vpop.f32.mrb[0].mxu0
        %1629 = vmatprep.mubr.f32.mxu0 0.0
        %1630 = vmatmul.mubr.f32.gmra.mrb[0].mxu0 %v1414
        %v1631 = vpop.f32.mrb[0].mxu0
        %v1632 = vadd.f32 0.0, %v1631
        %v1633 = vpop.f32.mrb[0].mxu0
        %1634 = vmatprep.mubr.f32.mxu0 0.0
        %1635 = vmatmul.mubr.f32.gmra.mrb[0].mxu0 %v1417
        %v1636 = vpop.f32.mrb[0].mxu0
        %v1637 = vadd.f32 0.0, %v1636
        %v1638 = vpop.f32.mrb[0].mxu0
        %1639 = vmatprep.mubr.f32.mxu0 0.0
        %1640 = vmatmul.mubr.f32.gmra.mrb[0].mxu0 %v1420
        %v1641 = vpop.f32.mrb[0].mxu0
        %v1642 = vadd.f32 0.0, %v1641
        %v1643 = vpop.f32.mrb[0].mxu0
        %1644 = vmatprep.mubr.f32.mxu0 0.0
        %1645 = vmatmul.mubr.f32.gmra.mrb[0].mxu0 %v1423
        %v1646 = vpop.f32.mrb[0].mxu0
        %v1647 = vadd.f32 0.0, %v1646
        %v1648 = vpop.f32.mrb[0].mxu0
        %1649 = vdwg.mxu0
        %v1650 = vmax.f32 %v1264, %v1492
        %v1651 = vmax.f32 %v1265, %v1497
        %v1652 = vmax.f32 %v1266, %v1502
        %v1653 = vmax.f32 %v1267, %v1507
        %v1654 = vmax.f32 %v1268, %v1512
        %v1655 = vmax.f32 %v1269, %v1517
        %v1656 = vmax.f32 %v1270, %v1522
        %v1657 = vmax.f32 %v1271, %v1527
        %v1658 = vmax.f32 %v1272, %v1532
        %v1659 = vmax.f32 %v1273, %v1537
        %v1660 = vmax.f32 %v1274, %v1542
        %v1661 = vmax.f32 %v1275, %v1547
        %v1662 = vmax.f32 %v1276, %v1552
        %v1663 = vmax.f32 %v1277, %v1557
        %v1664 = vmax.f32 %v1278, %v1562
        %v1665 = vmax.f32 %v1279, %v1567
        %v1666 = vmax.f32 %v1280, %v1572
        %v1667 = vmax.f32 %v1281, %v1577
        %v1668 = vmax.f32 %v1282, %v1582
        %v1669 = vmax.f32 %v1283, %v1587
        %v1670 = vmax.f32 %v1284, %v1592
        %v1671 = vmax.f32 %v1285, %v1597
        %v1672 = vmax.f32 %v1286, %v1602
        %v1673 = vmax.f32 %v1287, %v1607
        %v1674 = vmax.f32 %v1288, %v1612
        %v1675 = vmax.f32 %v1289, %v1617
        %v1676 = vmax.f32 %v1290, %v1622
        %v1677 = vmax.f32 %v1291, %v1627
        %v1678 = vmax.f32 %v1292, %v1632
        %v1679 = vmax.f32 %v1293, %v1637
        %v1680 = vmax.f32 %v1294, %v1642
        %v1681 = vmax.f32 %v1295, %v1647
        %s1682 = scalar_lea.vmem %s518, 768 [#allocation2]
        %v1683 = vld [vmem:[%s1682] sm:$0xff]
        %v1684 = vld [vmem:[%s1682 + $0x8] sm:$0xff]
        %v1685 = vld [vmem:[%s1682 + $0x10] sm:$0xff]
        %v1686 = vld [vmem:[%s1682 + $0x18] sm:$0xff]
        %v1687 = vld [vmem:[%s1682 + $0x20] sm:$0xff]
        %v1688 = vld [vmem:[%s1682 + $0x28] sm:$0xff]
        %v1689 = vld [vmem:[%s1682 + $0x30] sm:$0xff]
        %v1690 = vld [vmem:[%s1682 + $0x38] sm:$0xff]
        %v1691 = vld [vmem:[%s1682 + $0x40] sm:$0xff]
        %v1692 = vld [vmem:[%s1682 + $0x48] sm:$0xff]
        %v1693 = vld [vmem:[%s1682 + $0x50] sm:$0xff]
        %v1694 = vld [vmem:[%s1682 + $0x58] sm:$0xff]
        %v1695 = vld [vmem:[%s1682 + $0x60] sm:$0xff]
        %v1696 = vld [vmem:[%s1682 + $0x68] sm:$0xff]
        %v1697 = vld [vmem:[%s1682 + $0x70] sm:$0xff]
        %v1698 = vld [vmem:[%s1682 + $0x78] sm:$0xff]
        %v1699 = vld [vmem:[%s1682 + $0x80] sm:$0xff]
        %v1700 = vld [vmem:[%s1682 + $0x88] sm:$0xff]
        %v1701 = vld [vmem:[%s1682 + $0x90] sm:$0xff]
        %v1702 = vld [vmem:[%s1682 + $0x98] sm:$0xff]
        %v1703 = vld [vmem:[%s1682 + $0xa0] sm:$0xff]
        %v1704 = vld [vmem:[%s1682 + $0xa8] sm:$0xff]
        %v1705 = vld [vmem:[%s1682 + $0xb0] sm:$0xff]
        %v1706 = vld [vmem:[%s1682 + $0xb8] sm:$0xff]
        %v1707 = vld [vmem:[%s1682 + $0xc0] sm:$0xff]
        %v1708 = vld [vmem:[%s1682 + $0xc8] sm:$0xff]
        %v1709 = vld [vmem:[%s1682 + $0xd0] sm:$0xff]
        %v1710 = vld [vmem:[%s1682 + $0xd8] sm:$0xff]
        %v1711 = vld [vmem:[%s1682 + $0xe0] sm:$0xff]
        %v1712 = vld [vmem:[%s1682 + $0xe8] sm:$0xff]
        %v1713 = vld [vmem:[%s1682 + $0xf0] sm:$0xff]
        %v1714 = vld [vmem:[%s1682 + $0xf8] sm:$0xff]
        %v1716 = vsel %vm584, %v1683, 0
        %v1719 = vsel %vm584, %v1684, 0
        %v1722 = vsel %vm584, %v1685, 0
        %v1725 = vsel %vm584, %v1686, 0
        %v1728 = vsel %vm584, %v1687, 0
        %v1731 = vsel %vm584, %v1688, 0
        %v1734 = vsel %vm584, %v1689, 0
        %v1737 = vsel %vm584, %v1690, 0
        %v1740 = vsel %vm584, %v1691, 0
        %v1743 = vsel %vm584, %v1692, 0
        %v1746 = vsel %vm584, %v1693, 0
        %v1749 = vsel %vm584, %v1694, 0
        %v1752 = vsel %vm584, %v1695, 0
        %v1755 = vsel %vm584, %v1696, 0
        %v1758 = vsel %vm584, %v1697, 0
        %v1761 = vsel %vm584, %v1698, 0
        %v1764 = vsel %vm584, %v1699, 0
        %v1767 = vsel %vm584, %v1700, 0
        %v1770 = vsel %vm584, %v1701, 0
        %v1773 = vsel %vm584, %v1702, 0
        %v1776 = vsel %vm584, %v1703, 0
        %v1779 = vsel %vm584, %v1704, 0
        %v1782 = vsel %vm584, %v1705, 0
        %v1785 = vsel %vm584, %v1706, 0
        %v1788 = vsel %vm584, %v1707, 0
        %v1791 = vsel %vm584, %v1708, 0
        %v1794 = vsel %vm584, %v1709, 0
        %v1797 = vsel %vm584, %v1710, 0
        %v1800 = vsel %vm584, %v1711, 0
        %v1803 = vsel %vm584, %v1712, 0
        %v1806 = vsel %vm584, %v1713, 0
        %v1809 = vsel %vm584, %v1714, 0
        %1811 = vmatprep.subr.mxu0 0.0
        %1812 = vmatpush1.msra.mxu0 %v548
        %1813 = vmatprep.subr.mxu0 0.0
        %1814 = vmatpush1.msra.mxu0 %v549
        %1815 = vmatprep.subr.mxu0 0.0
        %1816 = vmatpush1.msra.mxu0 %v550
        %1817 = vmatprep.subr.mxu0 0.0
        %1818 = vmatpush1.msra.mxu0 %v683
        %1819 = vmatprep.subr.mxu0 0.0
        %1820 = vmatpush1.msra.mxu0 0.0
        %1821 = vmatprep.subr.mxu0 0.0
        %1822 = vmatpush1.msra.mxu0 0.0
        %1823 = vmatprep.subr.mxu0 0.0
        %1824 = vmatpush1.msra.mxu0 0.0
        %1825 = vmatprep.subr.mxu0 0.0
        %1826 = vmatpush1.msra.mxu0 0.0
        %1827 = vmatprep.subr.mxu0 0.0
        %1828 = vmatpush1.msra.mxu0 0.0
        %1829 = vmatprep.subr.mxu0 0.0
        %1830 = vmatpush1.msra.mxu0 0.0
        %1831 = vmatprep.subr.mxu0 0.0
        %1832 = vmatpush1.msra.mxu0 0.0
        %1833 = vmatprep.subr.mxu0 0.0
        %1834 = vmatpush1.msra.mxu0 0.0
        %1835 = vmatprep.subr.mxu0 0.0
        %1836 = vmatpush1.msra.mxu0 0.0
        %1837 = vmatprep.subr.mxu0 0.0
        %1838 = vmatpush1.msra.mxu0 0.0
        %1839 = vmatprep.subr.mxu0 0.0
        %1840 = vmatpush1.msra.mxu0 0.0
        %1841 = vmatprep.subr.mxu0 0.0
        %1842 = vmatpush1.msra.mxu0 0.0
        %1843 = vmatprep.subr.mxu0 0.0
        %1844 = vmatpush1.msra.mxu0 0.0
        %1845 = vmatprep.subr.mxu0 0.0
        %1846 = vmatpush1.msra.mxu0 0.0
        %1847 = vmatprep.subr.mxu0 0.0
        %1848 = vmatpush1.msra.mxu0 0.0
        %1849 = vmatprep.subr.mxu0 0.0
        %1850 = vmatpush1.msra.mxu0 0.0
        %1851 = vmatprep.subr.mxu0 0.0
        %1852 = vmatpush1.msra.mxu0 0.0
        %1853 = vmatprep.subr.mxu0 0.0
        %1854 = vmatpush1.msra.mxu0 0.0
        %1855 = vmatprep.subr.mxu0 0.0
        %1856 = vmatpush1.msra.mxu0 0.0
        %1857 = vmatprep.subr.mxu0 0.0
        %1858 = vmatpush1.msra.mxu0 0.0
        %1859 = vmatprep.subr.mxu0 0.0
        %1860 = vmatpush1.msra.mxu0 0.0
        %1861 = vmatprep.subr.mxu0 0.0
        %1862 = vmatpush1.msra.mxu0 0.0
        %1863 = vmatprep.subr.mxu0 0.0
        %1864 = vmatpush1.msra.mxu0 0.0
        %1865 = vmatprep.subr.mxu0 0.0
        %1866 = vmatpush1.msra.mxu0 0.0
        %1867 = vmatprep.subr.mxu0 0.0
        %1868 = vmatpush1.msra.mxu0 0.0
        %1869 = vmatprep.subr.mxu0 0.0
        %1870 = vmatpush1.msra.mxu0 0.0
        %1871 = vmatprep.subr.mxu0 0.0
        %1872 = vmatpush1.msra.mxu0 0.0
        %1873 = vmatprep.subr.mxu0 0.0
        %1874 = vmatpush1.msra.mxu0 0.0
        %1875 = vmatprep.mubr.f32.mxu0 0.0
        %1876 = vmatmul.mubr.f32.gmra.mrb[0].mxu0 %v1716
        %v1877 = vpop.f32.mrb[0].mxu0
        %v1878 = vadd.f32 0.0, %v1877
        %v1879 = vpop.f32.mrb[0].mxu0
        %1880 = vmatprep.mubr.f32.mxu0 0.0
        %1881 = vmatmul.mubr.f32.gmra.mrb[0].mxu0 %v1719
        %v1882 = vpop.f32.mrb[0].mxu0
        %v1883 = vadd.f32 0.0, %v1882
        %v1884 = vpop.f32.mrb[0].mxu0
        %1885 = vmatprep.mubr.f32.mxu0 0.0
        %1886 = vmatmul.mubr.f32.gmra.mrb[0].mxu0 %v1722
        %v1887 = vpop.f32.mrb[0].mxu0
        %v1888 = vadd.f32 0.0, %v1887
        %v1889 = vpop.f32.mrb[0].mxu0
        %1890 = vmatprep.mubr.f32.mxu0 0.0
        %1891 = vmatmul.mubr.f32.gmra.mrb[0].mxu0 %v1725
        %v1892 = vpop.f32.mrb[0].mxu0
        %v1893 = vadd.f32 0.0, %v1892
        %v1894 = vpop.f32.mrb[0].mxu0
        %1895 = vmatprep.mubr.f32.mxu0 0.0
        %1896 = vmatmul.mubr.f32.gmra.mrb[0].mxu0 %v1728
        %v1897 = vpop.f32.mrb[0].mxu0
        %v1898 = vadd.f32 0.0, %v1897
        %v1899 = vpop.f32.mrb[0].mxu0
        %1900 = vmatprep.mubr.f32.mxu0 0.0
        %1901 = vmatmul.mubr.f32.gmra.mrb[0].mxu0 %v1731
        %v1902 = vpop.f32.mrb[0].mxu0
        %v1903 = vadd.f32 0.0, %v1902
        %v1904 = vpop.f32.mrb[0].mxu0
        %1905 = vmatprep.mubr.f32.mxu0 0.0
        %1906 = vmatmul.mubr.f32.gmra.mrb[0].mxu0 %v1734
        %v1907 = vpop.f32.mrb[0].mxu0
        %v1908 = vadd.f32 0.0, %v1907
        %v1909 = vpop.f32.mrb[0].mxu0
        %1910 = vmatprep.mubr.f32.mxu0 0.0
        %1911 = vmatmul.mubr.f32.gmra.mrb[0].mxu0 %v1737
        %v1912 = vpop.f32.mrb[0].mxu0
        %v1913 = vadd.f32 0.0, %v1912
        %v1914 = vpop.f32.mrb[0].mxu0
        %1915 = vmatprep.mubr.f32.mxu0 0.0
        %1916 = vmatmul.mubr.f32.gmra.mrb[0].mxu0 %v1740
        %v1917 = vpop.f32.mrb[0].mxu0
        %v1918 = vadd.f32 0.0, %v1917
        %v1919 = vpop.f32.mrb[0].mxu0
        %1920 = vmatprep.mubr.f32.mxu0 0.0
        %1921 = vmatmul.mubr.f32.gmra.mrb[0].mxu0 %v1743
        %v1922 = vpop.f32.mrb[0].mxu0
        %v1923 = vadd.f32 0.0, %v1922
        %v1924 = vpop.f32.mrb[0].mxu0
        %1925 = vmatprep.mubr.f32.mxu0 0.0
        %1926 = vmatmul.mubr.f32.gmra.mrb[0].mxu0 %v1746
        %v1927 = vpop.f32.mrb[0].mxu0
        %v1928 = vadd.f32 0.0, %v1927
        %v1929 = vpop.f32.mrb[0].mxu0
        %1930 = vmatprep.mubr.f32.mxu0 0.0
        %1931 = vmatmul.mubr.f32.gmra.mrb[0].mxu0 %v1749
        %v1932 = vpop.f32.mrb[0].mxu0
        %v1933 = vadd.f32 0.0, %v1932
        %v1934 = vpop.f32.mrb[0].mxu0
        %1935 = vmatprep.mubr.f32.mxu0 0.0
        %1936 = vmatmul.mubr.f32.gmra.mrb[0].mxu0 %v1752
        %v1937 = vpop.f32.mrb[0].mxu0
        %v1938 = vadd.f32 0.0, %v1937
        %v1939 = vpop.f32.mrb[0].mxu0
        %1940 = vmatprep.mubr.f32.mxu0 0.0
        %1941 = vmatmul.mubr.f32.gmra.mrb[0].mxu0 %v1755
        %v1942 = vpop.f32.mrb[0].mxu0
        %v1943 = vadd.f32 0.0, %v1942
        %v1944 = vpop.f32.mrb[0].mxu0
        %1945 = vmatprep.mubr.f32.mxu0 0.0
        %1946 = vmatmul.mubr.f32.gmra.mrb[0].mxu0 %v1758
        %v1947 = vpop.f32.mrb[0].mxu0
        %v1948 = vadd.f32 0.0, %v1947
        %v1949 = vpop.f32.mrb[0].mxu0
        %1950 = vmatprep.mubr.f32.mxu0 0.0
        %1951 = vmatmul.mubr.f32.gmra.mrb[0].mxu0 %v1761
        %v1952 = vpop.f32.mrb[0].mxu0
        %v1953 = vadd.f32 0.0, %v1952
        %v1954 = vpop.f32.mrb[0].mxu0
        %1955 = vmatprep.mubr.f32.mxu0 0.0
        %1956 = vmatmul.mubr.f32.gmra.mrb[0].mxu0 %v1764
        %v1957 = vpop.f32.mrb[0].mxu0
        %v1958 = vadd.f32 0.0, %v1957
        %v1959 = vpop.f32.mrb[0].mxu0
        %1960 = vmatprep.mubr.f32.mxu0 0.0
        %1961 = vmatmul.mubr.f32.gmra.mrb[0].mxu0 %v1767
        %v1962 = vpop.f32.mrb[0].mxu0
        %v1963 = vadd.f32 0.0, %v1962
        %v1964 = vpop.f32.mrb[0].mxu0
        %1965 = vmatprep.mubr.f32.mxu0 0.0
        %1966 = vmatmul.mubr.f32.gmra.mrb[0].mxu0 %v1770
        %v1967 = vpop.f32.mrb[0].mxu0
        %v1968 = vadd.f32 0.0, %v1967
        %v1969 = vpop.f32.mrb[0].mxu0
        %1970 = vmatprep.mubr.f32.mxu0 0.0
        %1971 = vmatmul.mubr.f32.gmra.mrb[0].mxu0 %v1773
        %v1972 = vpop.f32.mrb[0].mxu0
        %v1973 = vadd.f32 0.0, %v1972
        %v1974 = vpop.f32.mrb[0].mxu0
        %1975 = vmatprep.mubr.f32.mxu0 0.0
        %1976 = vmatmul.mubr.f32.gmra.mrb[0].mxu0 %v1776
        %v1977 = vpop.f32.mrb[0].mxu0
        %v1978 = vadd.f32 0.0, %v1977
        %v1979 = vpop.f32.mrb[0].mxu0
        %1980 = vmatprep.mubr.f32.mxu0 0.0
        %1981 = vmatmul.mubr.f32.gmra.mrb[0].mxu0 %v1779
        %v1982 = vpop.f32.mrb[0].mxu0
        %v1983 = vadd.f32 0.0, %v1982
        %v1984 = vpop.f32.mrb[0].mxu0
        %1985 = vmatprep.mubr.f32.mxu0 0.0
        %1986 = vmatmul.mubr.f32.gmra.mrb[0].mxu0 %v1782
        %v1987 = vpop.f32.mrb[0].mxu0
        %v1988 = vadd.f32 0.0, %v1987
        %v1989 = vpop.f32.mrb[0].mxu0
        %1990 = vmatprep.mubr.f32.mxu0 0.0
        %1991 = vmatmul.mubr.f32.gmra.mrb[0].mxu0 %v1785
        %v1992 = vpop.f32.mrb[0].mxu0
        %v1993 = vadd.f32 0.0, %v1992
        %v1994 = vpop.f32.mrb[0].mxu0
        %1995 = vmatprep.mubr.f32.mxu0 0.0
        %1996 = vmatmul.mubr.f32.gmra.mrb[0].mxu0 %v1788
        %v1997 = vpop.f32.mrb[0].mxu0
        %v1998 = vadd.f32 0.0, %v1997
        %v1999 = vpop.f32.mrb[0].mxu0
        %2000 = vmatprep.mubr.f32.mxu0 0.0
        %2001 = vmatmul.mubr.f32.gmra.mrb[0].mxu0 %v1791
        %v2002 = vpop.f32.mrb[0].mxu0
        %v2003 = vadd.f32 0.0, %v2002
        %v2004 = vpop.f32.mrb[0].mxu0
        %2005 = vmatprep.mubr.f32.mxu0 0.0
        %2006 = vmatmul.mubr.f32.gmra.mrb[0].mxu0 %v1794
        %v2007 = vpop.f32.mrb[0].mxu0
        %v2008 = vadd.f32 0.0, %v2007
        %v2009 = vpop.f32.mrb[0].mxu0
        %2010 = vmatprep.mubr.f32.mxu0 0.0
        %2011 = vmatmul.mubr.f32.gmra.mrb[0].mxu0 %v1797
        %v2012 = vpop.f32.mrb[0].mxu0
        %v2013 = vadd.f32 0.0, %v2012
        %v2014 = vpop.f32.mrb[0].mxu0
        %2015 = vmatprep.mubr.f32.mxu0 0.0
        %2016 = vmatmul.mubr.f32.gmra.mrb[0].mxu0 %v1800
        %v2017 = vpop.f32.mrb[0].mxu0
        %v2018 = vadd.f32 0.0, %v2017
        %v2019 = vpop.f32.mrb[0].mxu0
        %2020 = vmatprep.mubr.f32.mxu0 0.0
        %2021 = vmatmul.mubr.f32.gmra.mrb[0].mxu0 %v1803
        %v2022 = vpop.f32.mrb[0].mxu0
        %v2023 = vadd.f32 0.0, %v2022
        %v2024 = vpop.f32.mrb[0].mxu0
        %2025 = vmatprep.mubr.f32.mxu0 0.0
        %2026 = vmatmul.mubr.f32.gmra.mrb[0].mxu0 %v1806
        %v2027 = vpop.f32.mrb[0].mxu0
        %v2028 = vadd.f32 0.0, %v2027
        %v2029 = vpop.f32.mrb[0].mxu0
        %2030 = vmatprep.mubr.f32.mxu0 0.0
        %2031 = vmatmul.mubr.f32.gmra.mrb[0].mxu0 %v1809
        %v2032 = vpop.f32.mrb[0].mxu0
        %v2033 = vadd.f32 0.0, %v2032
        %v2034 = vpop.f32.mrb[0].mxu0
        %2035 = vdwg.mxu0
        %v2036 = vmax.f32 %v1650, %v1878
        %v2037 = vmax.f32 %v1651, %v1883
        %v2038 = vmax.f32 %v1652, %v1888
        %v2039 = vmax.f32 %v1653, %v1893
        %v2040 = vmax.f32 %v1654, %v1898
        %v2041 = vmax.f32 %v1655, %v1903
        %v2042 = vmax.f32 %v1656, %v1908
        %v2043 = vmax.f32 %v1657, %v1913
        %v2044 = vmax.f32 %v1658, %v1918
        %v2045 = vmax.f32 %v1659, %v1923
        %v2046 = vmax.f32 %v1660, %v1928
        %v2047 = vmax.f32 %v1661, %v1933
        %v2048 = vmax.f32 %v1662, %v1938
        %v2049 = vmax.f32 %v1663, %v1943
        %v2050 = vmax.f32 %v1664, %v1948
        %v2051 = vmax.f32 %v1665, %v1953
        %v2052 = vmax.f32 %v1666, %v1958
        %v2053 = vmax.f32 %v1667, %v1963
        %v2054 = vmax.f32 %v1668, %v1968
        %v2055 = vmax.f32 %v1669, %v1973
        %v2056 = vmax.f32 %v1670, %v1978
        %v2057 = vmax.f32 %v1671, %v1983
        %v2058 = vmax.f32 %v1672, %v1988
        %v2059 = vmax.f32 %v1673, %v1993
        %v2060 = vmax.f32 %v1674, %v1998
        %v2061 = vmax.f32 %v1675, %v2003
        %v2062 = vmax.f32 %v1676, %v2008
        %v2063 = vmax.f32 %v1677, %v2013
        %v2064 = vmax.f32 %v1678, %v2018
        %v2065 = vmax.f32 %v1679, %v2023
        %v2066 = vmax.f32 %v1680, %v2028
        %v2067 = vmax.f32 %v1681, %v2033
        %v2068 = vld [vmem:[%s2] sm:$0x1]
        %v2070 = vlaneseq
        %v2071 = vshrl.u32 %v2070, 7
        %v2072 = vsub.s32 0, %v2071
        %v2073 = vrot.slane %v2068, %v2072
        %v2075 = vadd.f32 %v2036, %v2073
        %v2076 = vadd.f32 %v2037, %v2073
        %v2077 = vadd.f32 %v2038, %v2073
        %v2078 = vadd.f32 %v2039, %v2073
        %v2079 = vadd.f32 %v2040, %v2073
        %v2080 = vadd.f32 %v2041, %v2073
        %v2081 = vadd.f32 %v2042, %v2073
        %v2082 = vadd.f32 %v2043, %v2073
        %v2083 = vadd.f32 %v2044, %v2073
        %v2084 = vadd.f32 %v2045, %v2073
        %v2085 = vadd.f32 %v2046, %v2073
        %v2086 = vadd.f32 %v2047, %v2073
        %v2087 = vadd.f32 %v2048, %v2073
        %v2088 = vadd.f32 %v2049, %v2073
        %v2089 = vadd.f32 %v2050, %v2073
        %v2090 = vadd.f32 %v2051, %v2073
        %v2091 = vadd.f32 %v2052, %v2073
        %v2092 = vadd.f32 %v2053, %v2073
        %v2093 = vadd.f32 %v2054, %v2073
        %v2094 = vadd.f32 %v2055, %v2073
        %v2095 = vadd.f32 %v2056, %v2073
        %v2096 = vadd.f32 %v2057, %v2073
        %v2097 = vadd.f32 %v2058, %v2073
        %v2098 = vadd.f32 %v2059, %v2073
        %v2099 = vadd.f32 %v2060, %v2073
        %v2100 = vadd.f32 %v2061, %v2073
        %v2101 = vadd.f32 %v2062, %v2073
        %v2102 = vadd.f32 %v2063, %v2073
        %v2103 = vadd.f32 %v2064, %v2073
        %v2104 = vadd.f32 %v2065, %v2073
        %v2105 = vadd.f32 %v2066, %v2073
        %v2106 = vadd.f32 %v2067, %v2073
        %v2107 = vmax.f32 %v2075, 0.0
        %v2108 = vmax.f32 %v2076, 0.0
        %v2109 = vmax.f32 %v2077, 0.0
        %v2110 = vmax.f32 %v2078, 0.0
        %v2111 = vmax.f32 %v2079, 0.0
        %v2112 = vmax.f32 %v2080, 0.0
        %v2113 = vmax.f32 %v2081, 0.0
        %v2114 = vmax.f32 %v2082, 0.0
        %v2115 = vmax.f32 %v2083, 0.0
        %v2116 = vmax.f32 %v2084, 0.0
        %v2117 = vmax.f32 %v2085, 0.0
        %v2118 = vmax.f32 %v2086, 0.0
        %v2119 = vmax.f32 %v2087, 0.0
        %v2120 = vmax.f32 %v2088, 0.0
        %v2121 = vmax.f32 %v2089, 0.0
        %v2122 = vmax.f32 %v2090, 0.0
        %v2123 = vmax.f32 %v2091, 0.0
        %v2124 = vmax.f32 %v2092, 0.0
        %v2125 = vmax.f32 %v2093, 0.0
        %v2126 = vmax.f32 %v2094, 0.0
        %v2127 = vmax.f32 %v2095, 0.0
        %v2128 = vmax.f32 %v2096, 0.0
        %v2129 = vmax.f32 %v2097, 0.0
        %v2130 = vmax.f32 %v2098, 0.0
        %v2131 = vmax.f32 %v2099, 0.0
        %v2132 = vmax.f32 %v2100, 0.0
        %v2133 = vmax.f32 %v2101, 0.0
        %v2134 = vmax.f32 %v2102, 0.0
        %v2135 = vmax.f32 %v2103, 0.0
        %v2136 = vmax.f32 %v2104, 0.0
        %v2137 = vmax.f32 %v2105, 0.0
        %v2138 = vmax.f32 %v2106, 0.0
        %2139 = vst [vmem:[%s537] sm:$0xff] %v2107
        %2140 = vst [vmem:[%s537 + $0x8] sm:$0xff] %v2108
        %2141 = vst [vmem:[%s537 + $0x10] sm:$0xff] %v2109
        %2142 = vst [vmem:[%s537 + $0x18] sm:$0xff] %v2110
        %2143 = vst [vmem:[%s537 + $0x20] sm:$0xff] %v2111
        %2144 = vst [vmem:[%s537 + $0x28] sm:$0xff] %v2112
        %2145 = vst [vmem:[%s537 + $0x30] sm:$0xff] %v2113
        %2146 = vst [vmem:[%s537 + $0x38] sm:$0xff] %v2114
        %2147 = vst [vmem:[%s537 + $0x40] sm:$0xff] %v2115
        %2148 = vst [vmem:[%s537 + $0x48] sm:$0xff] %v2116
        %2149 = vst [vmem:[%s537 + $0x50] sm:$0xff] %v2117
        %2150 = vst [vmem:[%s537 + $0x58] sm:$0xff] %v2118
        %2151 = vst [vmem:[%s537 + $0x60] sm:$0xff] %v2119
        %2152 = vst [vmem:[%s537 + $0x68] sm:$0xff] %v2120
        %2153 = vst [vmem:[%s537 + $0x70] sm:$0xff] %v2121
        %2154 = vst [vmem:[%s537 + $0x78] sm:$0xff] %v2122
        %2155 = vst [vmem:[%s537 + $0x80] sm:$0xff] %v2123
        %2156 = vst [vmem:[%s537 + $0x88] sm:$0xff] %v2124
        %2157 = vst [vmem:[%s537 + $0x90] sm:$0xff] %v2125
        %2158 = vst [vmem:[%s537 + $0x98] sm:$0xff] %v2126
        %2159 = vst [vmem:[%s537 + $0xa0] sm:$0xff] %v2127
        %2160 = vst [vmem:[%s537 + $0xa8] sm:$0xff] %v2128
        %2161 = vst [vmem:[%s537 + $0xb0] sm:$0xff] %v2129
        %2162 = vst [vmem:[%s537 + $0xb8] sm:$0xff] %v2130
        %2163 = vst [vmem:[%s537 + $0xc0] sm:$0xff] %v2131
        %2164 = vst [vmem:[%s537 + $0xc8] sm:$0xff] %v2132
        %2165 = vst [vmem:[%s537 + $0xd0] sm:$0xff] %v2133
        %2166 = vst [vmem:[%s537 + $0xd8] sm:$0xff] %v2134
        %2167 = vst [vmem:[%s537 + $0xe0] sm:$0xff] %v2135
        %2168 = vst [vmem:[%s537 + $0xe8] sm:$0xff] %v2136
        %2169 = vst [vmem:[%s537 + $0xf0] sm:$0xff] %v2137
        %2170 = vst [vmem:[%s537 + $0xf8] sm:$0xff] %v2138
        %s2171 = sand.u32 %s90, 1
        %s2172 = sand.u32 %s90, 1
        %s2173 = smul.addr %s2172, 256
        %s2174 = scalar_lea.vmem [#allocation3], %s2173
        // Predicated region
        $region85: #{net_forward.3} parent=79 // pred_check
          %p2175 = pneg %p100
        $region86: #{net_forward.3} parent=79 // pred_check_branch
          %2177 = sbr.rel (%p2175) target = $region88
        $region87: #{net_forward.3} parent=79 // pred_region
          %s2178 = smul.u32 32, %s14
          %s2179 = ssub.s32 36, %s2178
          %p2180 = scmp.lt.s32.totalorder %s2179, 32
          %s2181 = scalar_select %p2180, %s2179, 32
          %s2182 = smul.u32 128, %s2181
          %p2183 = scmp.ne.s32.totalorder 0, %s2182
          %s2184 = smul.addr %s2178, 8
          %s2185 = scalar_lea.vmem %s3, %s2184
          // Predicated region
          $region89: #{net_forward.3} parent=87 // pred_check
            %p2186 = pneg %p2183
          $region90: #{net_forward.3} parent=87 // pred_check_branch
            %2188 = sbr.rel (%p2186) target = $region92
          $region91: #{net_forward.3} parent=87 // pred_region
            // Predicated region
            $region93: #{net_forward.3} parent=91 // pred_check
              _
            $region94: #{net_forward.3} parent=91 // pred_check_branch
              %2190 = sbr.rel (0) target = $region96
            $region95: #{net_forward.3} parent=91 // pred_region
              // Predicated region
              $region115: #{net_forward.3} parent=95 // pred_check
                _
              $region116: #{net_forward.3} parent=95 // pred_check_branch
                %2301 = sbr.rel (0) target = $region118
              $region117: #{net_forward.3} parent=95 // pred_region
                %s2302 = sshrl.u32 %s2181, 5
                // While loop
                $region119: #{net_forward.3} parent=117 // loop_pre_header
                  _
                $region120: #{net_forward.3} parent=117 // loop_header
                  %s2304 = sphi 0, %s2306
                  %p2305 = scmp.ge.s32.totalorder %s2304, %s2302
                  %s2309 = sphi 0, %s2378
                  %s2310 = sphi %s2174, %s2381
                  %s2311 = sphi %s2185, %s2382
                $region121: #{net_forward.3} parent=117 // loop_header_branch
                  %2308 = sbr.rel (%p2305) target = $region125
                $region122: #{net_forward.3} parent=117 // loop_body
                  %v2312 = vld [vmem:[%s2310] sm:$0xff]
                  %2313 = vst [vmem:[%s2311] sm:$0xff] %v2312
                  %v2314 = vld [vmem:[%s2310 + $0x8] sm:$0xff]
                  %2315 = vst [vmem:[%s2311 + $0x8] sm:$0xff] %v2314
                  %v2316 = vld [vmem:[%s2310 + $0x10] sm:$0xff]
                  %2317 = vst [vmem:[%s2311 + $0x10] sm:$0xff] %v2316
                  %v2318 = vld [vmem:[%s2310 + $0x18] sm:$0xff]
                  %2319 = vst [vmem:[%s2311 + $0x18] sm:$0xff] %v2318
                  %v2320 = vld [vmem:[%s2310 + $0x20] sm:$0xff]
                  %2321 = vst [vmem:[%s2311 + $0x20] sm:$0xff] %v2320
                  %v2322 = vld [vmem:[%s2310 + $0x28] sm:$0xff]
                  %2323 = vst [vmem:[%s2311 + $0x28] sm:$0xff] %v2322
                  %v2324 = vld [vmem:[%s2310 + $0x30] sm:$0xff]
                  %2325 = vst [vmem:[%s2311 + $0x30] sm:$0xff] %v2324
                  %v2326 = vld [vmem:[%s2310 + $0x38] sm:$0xff]
                  %2327 = vst [vmem:[%s2311 + $0x38] sm:$0xff] %v2326
                  %v2328 = vld [vmem:[%s2310 + $0x40] sm:$0xff]
                  %2329 = vst [vmem:[%s2311 + $0x40] sm:$0xff] %v2328
                  %v2330 = vld [vmem:[%s2310 + $0x48] sm:$0xff]
                  %2331 = vst [vmem:[%s2311 + $0x48] sm:$0xff] %v2330
                  %v2332 = vld [vmem:[%s2310 + $0x50] sm:$0xff]
                  %2333 = vst [vmem:[%s2311 + $0x50] sm:$0xff] %v2332
                  %v2334 = vld [vmem:[%s2310 + $0x58] sm:$0xff]
                  %2335 = vst [vmem:[%s2311 + $0x58] sm:$0xff] %v2334
                  %v2336 = vld [vmem:[%s2310 + $0x60] sm:$0xff]
                  %2337 = vst [vmem:[%s2311 + $0x60] sm:$0xff] %v2336
                  %v2338 = vld [vmem:[%s2310 + $0x68] sm:$0xff]
                  %2339 = vst [vmem:[%s2311 + $0x68] sm:$0xff] %v2338
                  %v2340 = vld [vmem:[%s2310 + $0x70] sm:$0xff]
                  %2341 = vst [vmem:[%s2311 + $0x70] sm:$0xff] %v2340
                  %v2342 = vld [vmem:[%s2310 + $0x78] sm:$0xff]
                  %2343 = vst [vmem:[%s2311 + $0x78] sm:$0xff] %v2342
                  %v2344 = vld [vmem:[%s2310 + $0x80] sm:$0xff]
                  %2345 = vst [vmem:[%s2311 + $0x80] sm:$0xff] %v2344
                  %v2346 = vld [vmem:[%s2310 + $0x88] sm:$0xff]
                  %2347 = vst [vmem:[%s2311 + $0x88] sm:$0xff] %v2346
                  %v2348 = vld [vmem:[%s2310 + $0x90] sm:$0xff]
                  %2349 = vst [vmem:[%s2311 + $0x90] sm:$0xff] %v2348
                  %v2350 = vld [vmem:[%s2310 + $0x98] sm:$0xff]
                  %2351 = vst [vmem:[%s2311 + $0x98] sm:$0xff] %v2350
                  %v2352 = vld [vmem:[%s2310 + $0xa0] sm:$0xff]
                  %2353 = vst [vmem:[%s2311 + $0xa0] sm:$0xff] %v2352
                  %v2354 = vld [vmem:[%s2310 + $0xa8] sm:$0xff]
                  %2355 = vst [vmem:[%s2311 + $0xa8] sm:$0xff] %v2354
                  %v2356 = vld [vmem:[%s2310 + $0xb0] sm:$0xff]
                  %2357 = vst [vmem:[%s2311 + $0xb0] sm:$0xff] %v2356
                  %v2358 = vld [vmem:[%s2310 + $0xb8] sm:$0xff]
                  %2359 = vst [vmem:[%s2311 + $0xb8] sm:$0xff] %v2358
                  %v2360 = vld [vmem:[%s2310 + $0xc0] sm:$0xff]
                  %2361 = vst [vmem:[%s2311 + $0xc0] sm:$0xff] %v2360
                  %v2362 = vld [vmem:[%s2310 + $0xc8] sm:$0xff]
                  %2363 = vst [vmem:[%s2311 + $0xc8] sm:$0xff] %v2362
                  %v2364 = vld [vmem:[%s2310 + $0xd0] sm:$0xff]
                  %2365 = vst [vmem:[%s2311 + $0xd0] sm:$0xff] %v2364
                  %v2366 = vld [vmem:[%s2310 + $0xd8] sm:$0xff]
                  %2367 = vst [vmem:[%s2311 + $0xd8] sm:$0xff] %v2366
                  %v2368 = vld [vmem:[%s2310 + $0xe0] sm:$0xff]
                  %2369 = vst [vmem:[%s2311 + $0xe0] sm:$0xff] %v2368
                  %v2370 = vld [vmem:[%s2310 + $0xe8] sm:$0xff]
                  %2371 = vst [vmem:[%s2311 + $0xe8] sm:$0xff] %v2370
                  %v2372 = vld [vmem:[%s2310 + $0xf0] sm:$0xff]
                  %2373 = vst [vmem:[%s2311 + $0xf0] sm:$0xff] %v2372
                  %v2374 = vld [vmem:[%s2310 + $0xf8] sm:$0xff]
                  %2375 = vst [vmem:[%s2311 + $0xf8] sm:$0xff] %v2374
                  %s2376 = sadd.s32 1, %s2309
                  %p2377 = scmp.ge.s32.totalorder %s2376, %s2302
                  %s2378 = scalar_select %p2377, 0, %s2376
                  %s2379 = smul.u32 %s2378, 256
                  %s2380 = smul.u32 %s2378, 256
                  %s2381 = scalar_lea.vmem %s2174, %s2379 [#allocation3]
                  %s2382 = scalar_lea.vmem %s2185, %s2380
                $region123: #{net_forward.3} parent=117 // loop_footer
                  %s2306 = sadd.s32 %s2304, 1
                $region124: #{net_forward.3} parent=117 // loop_footer_branch
                  %2303 = sbr.rel target = $region120
                $region125: #{net_forward.3} parent=117 // loop_exit
                  _
                %s2383 = sshrl.u32 %s2181, 5
                %s2384 = sand.u32 %s2181, 31
                %s2385 = smul.u32 %s2383, 32
                %s2386 = smul.u32 8, %s2385
                %s2387 = scalar_lea.vmem %s2174, %s2386 [#allocation3]
                %s2388 = smul.u32 8, %s2385
                %s2389 = scalar_lea.vmem %s2185, %s2388
                // While loop
                $region126: #{net_forward.3} parent=117 // loop_pre_header
                  _
                $region127: #{net_forward.3} parent=117 // loop_header
                  %s2391 = sphi 0, %s2393
                  %p2392 = scmp.ge.s32.totalorder %s2391, %s2384
                  %s2396 = sphi 0, %s2403
                  %s2397 = sphi %s2387, %s2406
                  %s2398 = sphi %s2389, %s2407
                $region128: #{net_forward.3} parent=117 // loop_header_branch
                  %2395 = sbr.rel (%p2392) target = $region132
                $region129: #{net_forward.3} parent=117 // loop_body
                  %v2399 = vld [vmem:[%s2397] sm:$0xff]
                  %2400 = vst [vmem:[%s2398] sm:$0xff] %v2399
                  %s2401 = sadd.s32 1, %s2396
                  %p2402 = scmp.ge.s32.totalorder %s2401, %s2384
                  %s2403 = scalar_select %p2402, 0, %s2401
                  %s2404 = smul.u32 %s2403, 8
                  %s2405 = smul.u32 %s2403, 8
                  %s2406 = scalar_lea.vmem %s2387, %s2404 [#allocation3]
                  %s2407 = scalar_lea.vmem %s2389, %s2405
                $region130: #{net_forward.3} parent=117 // loop_footer
                  %s2393 = sadd.s32 %s2391, 1
                $region131: #{net_forward.3} parent=117 // loop_footer_branch
                  %2390 = sbr.rel target = $region127
                $region132: #{net_forward.3} parent=117 // loop_exit
                  _
              $region118: #{net_forward.3} parent=95 // pred_fallthru
                _
              // Predicated region
              $region133: #{net_forward.3} parent=95 // pred_check
                _
              $region134: #{net_forward.3} parent=95 // pred_check_branch
                %2409 = sbr.rel target = $region136
              $region135: #{net_forward.3} parent=95 // pred_region
                _
              $region136: #{net_forward.3} parent=95 // pred_fallthru
                _
            $region96: #{net_forward.3} parent=91 // pred_fallthru
              _
            // Predicated region
            $region97: #{net_forward.3} parent=91 // pred_check
              _
            $region98: #{net_forward.3} parent=91 // pred_check_branch
              %2192 = sbr.rel target = $region100
            $region99: #{net_forward.3} parent=91 // pred_region
              %s2194 = sshrl.u32 %s2181, 5
              // While loop
              $region101: #{net_forward.3} parent=99 // loop_pre_header
                _
              $region102: #{net_forward.3} parent=99 // loop_header
                %s2196 = sphi 0, %s2198
                %p2197 = scmp.ge.s32.totalorder %s2196, %s2194
                %s2201 = sphi 0, %s2270
                %s2202 = sphi %s2174, %s2273
                %s2203 = sphi %s2185, %s2274
              $region103: #{net_forward.3} parent=99 // loop_header_branch
                %2200 = sbr.rel (%p2197) target = $region107
              $region104: #{net_forward.3} parent=99 // loop_body
                %v2204 = vld [vmem:[%s2202] sm:$0xff]
                %2205 = vst [vmem:[%s2203] sm:$0xff] %v2204
                %v2206 = vld [vmem:[%s2202 + $0x8] sm:$0xff]
                %2207 = vst [vmem:[%s2203 + $0x8] sm:$0xff] %v2206
                %v2208 = vld [vmem:[%s2202 + $0x10] sm:$0xff]
                %2209 = vst [vmem:[%s2203 + $0x10] sm:$0xff] %v2208
                %v2210 = vld [vmem:[%s2202 + $0x18] sm:$0xff]
                %2211 = vst [vmem:[%s2203 + $0x18] sm:$0xff] %v2210
                %v2212 = vld [vmem:[%s2202 + $0x20] sm:$0xff]
                %2213 = vst [vmem:[%s2203 + $0x20] sm:$0xff] %v2212
                %v2214 = vld [vmem:[%s2202 + $0x28] sm:$0xff]
                %2215 = vst [vmem:[%s2203 + $0x28] sm:$0xff] %v2214
                %v2216 = vld [vmem:[%s2202 + $0x30] sm:$0xff]
                %2217 = vst [vmem:[%s2203 + $0x30] sm:$0xff] %v2216
                %v2218 = vld [vmem:[%s2202 + $0x38] sm:$0xff]
                %2219 = vst [vmem:[%s2203 + $0x38] sm:$0xff] %v2218
                %v2220 = vld [vmem:[%s2202 + $0x40] sm:$0xff]
                %2221 = vst [vmem:[%s2203 + $0x40] sm:$0xff] %v2220
                %v2222 = vld [vmem:[%s2202 + $0x48] sm:$0xff]
                %2223 = vst [vmem:[%s2203 + $0x48] sm:$0xff] %v2222
                %v2224 = vld [vmem:[%s2202 + $0x50] sm:$0xff]
                %2225 = vst [vmem:[%s2203 + $0x50] sm:$0xff] %v2224
                %v2226 = vld [vmem:[%s2202 + $0x58] sm:$0xff]
                %2227 = vst [vmem:[%s2203 + $0x58] sm:$0xff] %v2226
                %v2228 = vld [vmem:[%s2202 + $0x60] sm:$0xff]
                %2229 = vst [vmem:[%s2203 + $0x60] sm:$0xff] %v2228
                %v2230 = vld [vmem:[%s2202 + $0x68] sm:$0xff]
                %2231 = vst [vmem:[%s2203 + $0x68] sm:$0xff] %v2230
                %v2232 = vld [vmem:[%s2202 + $0x70] sm:$0xff]
                %2233 = vst [vmem:[%s2203 + $0x70] sm:$0xff] %v2232
                %v2234 = vld [vmem:[%s2202 + $0x78] sm:$0xff]
                %2235 = vst [vmem:[%s2203 + $0x78] sm:$0xff] %v2234
                %v2236 = vld [vmem:[%s2202 + $0x80] sm:$0xff]
                %2237 = vst [vmem:[%s2203 + $0x80] sm:$0xff] %v2236
                %v2238 = vld [vmem:[%s2202 + $0x88] sm:$0xff]
                %2239 = vst [vmem:[%s2203 + $0x88] sm:$0xff] %v2238
                %v2240 = vld [vmem:[%s2202 + $0x90] sm:$0xff]
                %2241 = vst [vmem:[%s2203 + $0x90] sm:$0xff] %v2240
                %v2242 = vld [vmem:[%s2202 + $0x98] sm:$0xff]
                %2243 = vst [vmem:[%s2203 + $0x98] sm:$0xff] %v2242
                %v2244 = vld [vmem:[%s2202 + $0xa0] sm:$0xff]
                %2245 = vst [vmem:[%s2203 + $0xa0] sm:$0xff] %v2244
                %v2246 = vld [vmem:[%s2202 + $0xa8] sm:$0xff]
                %2247 = vst [vmem:[%s2203 + $0xa8] sm:$0xff] %v2246
                %v2248 = vld [vmem:[%s2202 + $0xb0] sm:$0xff]
                %2249 = vst [vmem:[%s2203 + $0xb0] sm:$0xff] %v2248
                %v2250 = vld [vmem:[%s2202 + $0xb8] sm:$0xff]
                %2251 = vst [vmem:[%s2203 + $0xb8] sm:$0xff] %v2250
                %v2252 = vld [vmem:[%s2202 + $0xc0] sm:$0xff]
                %2253 = vst [vmem:[%s2203 + $0xc0] sm:$0xff] %v2252
                %v2254 = vld [vmem:[%s2202 + $0xc8] sm:$0xff]
                %2255 = vst [vmem:[%s2203 + $0xc8] sm:$0xff] %v2254
                %v2256 = vld [vmem:[%s2202 + $0xd0] sm:$0xff]
                %2257 = vst [vmem:[%s2203 + $0xd0] sm:$0xff] %v2256
                %v2258 = vld [vmem:[%s2202 + $0xd8] sm:$0xff]
                %2259 = vst [vmem:[%s2203 + $0xd8] sm:$0xff] %v2258
                %v2260 = vld [vmem:[%s2202 + $0xe0] sm:$0xff]
                %2261 = vst [vmem:[%s2203 + $0xe0] sm:$0xff] %v2260
                %v2262 = vld [vmem:[%s2202 + $0xe8] sm:$0xff]
                %2263 = vst [vmem:[%s2203 + $0xe8] sm:$0xff] %v2262
                %v2264 = vld [vmem:[%s2202 + $0xf0] sm:$0xff]
                %2265 = vst [vmem:[%s2203 + $0xf0] sm:$0xff] %v2264
                %v2266 = vld [vmem:[%s2202 + $0xf8] sm:$0xff]
                %2267 = vst [vmem:[%s2203 + $0xf8] sm:$0xff] %v2266
                %s2268 = sadd.s32 1, %s2201
                %p2269 = scmp.ge.s32.totalorder %s2268, %s2194
                %s2270 = scalar_select %p2269, 0, %s2268
                %s2271 = smul.u32 %s2270, 256
                %s2272 = smul.u32 %s2270, 256
                %s2273 = scalar_lea.vmem %s2174, %s2271 [#allocation3]
                %s2274 = scalar_lea.vmem %s2185, %s2272
              $region105: #{net_forward.3} parent=99 // loop_footer
                %s2198 = sadd.s32 %s2196, 1
              $region106: #{net_forward.3} parent=99 // loop_footer_branch
                %2195 = sbr.rel target = $region102
              $region107: #{net_forward.3} parent=99 // loop_exit
                _
              %s2275 = sshrl.u32 %s2181, 5
              %s2276 = sand.u32 %s2181, 31
              %s2277 = smul.u32 %s2275, 32
              %s2278 = smul.u32 8, %s2277
              %s2279 = scalar_lea.vmem %s2174, %s2278 [#allocation3]
              %s2280 = smul.u32 8, %s2277
              %s2281 = scalar_lea.vmem %s2185, %s2280
              // While loop
              $region108: #{net_forward.3} parent=99 // loop_pre_header
                _
              $region109: #{net_forward.3} parent=99 // loop_header
                %s2283 = sphi 0, %s2285
                %p2284 = scmp.ge.s32.totalorder %s2283, %s2276
                %s2288 = sphi 0, %s2295
                %s2289 = sphi %s2279, %s2298
                %s2290 = sphi %s2281, %s2299
              $region110: #{net_forward.3} parent=99 // loop_header_branch
                %2287 = sbr.rel (%p2284) target = $region114
              $region111: #{net_forward.3} parent=99 // loop_body
                %v2291 = vld [vmem:[%s2289] sm:$0xff]
                %2292 = vst [vmem:[%s2290] sm:$0xff] %v2291
                %s2293 = sadd.s32 1, %s2288
                %p2294 = scmp.ge.s32.totalorder %s2293, %s2276
                %s2295 = scalar_select %p2294, 0, %s2293
                %s2296 = smul.u32 %s2295, 8
                %s2297 = smul.u32 %s2295, 8
                %s2298 = scalar_lea.vmem %s2279, %s2296 [#allocation3]
                %s2299 = scalar_lea.vmem %s2281, %s2297
              $region112: #{net_forward.3} parent=99 // loop_footer
                %s2285 = sadd.s32 %s2283, 1
              $region113: #{net_forward.3} parent=99 // loop_footer_branch
                %2282 = sbr.rel target = $region109
              $region114: #{net_forward.3} parent=99 // loop_exit
                _
            $region100: #{net_forward.3} parent=91 // pred_fallthru
              _
          $region92: #{net_forward.3} parent=87 // pred_fallthru
            _
          %2410 = vnop
        $region88: #{net_forward.3} parent=79 // pred_fallthru
          _
      $region80: #{net_forward.3} parent=5 // pred_fallthru
        _
      %p2411 = scmp.le.s32.totalorder 2, %s9
      // Predicated region
      $region137: #{net_forward.3} parent=5 // pred_check
        %p2412 = pneg %p2411
      $region138: #{net_forward.3} parent=5 // pred_check_branch
        %2414 = sbr.rel (%p2412) target = $region140
      $region139: #{net_forward.3} parent=5 // pred_region
        %s2415 = ssub.s32 %s9, 2
        // Predicated region
        $region141: #{net_forward.3} parent=139 // pred_check
          %p2416 = pneg %p106
        $region142: #{net_forward.3} parent=139 // pred_check_branch
          %2418 = sbr.rel (%p2416) target = $region144
        $region143: #{net_forward.3} parent=139 // pred_region
          %s2419 = sand.u32 %s91, 1
          %s2420 = sand.u32 %s91, 1
          %s2421 = smul.addr %s2420, 256
          %s2422 = scalar_lea.vmem [#allocation3], %s2421
        $region144: #{net_forward.3} parent=139 // pred_fallthru
          _
      $region140: #{net_forward.3} parent=5 // pred_fallthru
        _
    $region6: #{net_forward.3} parent=1 // loop_footer
      %s13 = sadd.s32 1, %s9
    $region7: #{net_forward.3} parent=1 // loop_footer_branch
      %8 = sbr.rel target = $region3
    $region8: #{net_forward.3} parent=1 // loop_exit
      _

// kernel: net_forward.4
$region0: #{net_forward.4}
  #allocation0 [shape = 'u32[]', space=smem, size = 0x4, offset = 0x4, fixed_abs, tag = 'smem constant byte address 0x4 - core index']
  #allocation1 [shape = 'u32[144,128]{1,0:T(1,128)}', space=vmem, size = 0x12000, scoped, tag = 'internal scratch']
  %s0 = inlined_call_operand.vmem [shape: f32[4,50,800], index: 0, kind: input, shape index: {}]
  %s1 = inlined_call_operand.vmem [shape: f32[800,128], index: 1, kind: input, shape index: {}]
  %s2 = inlined_call_operand.vmem [shape: f32[1,128], index: 2, kind: input, shape index: {}]
  %s3 = inlined_call_operand.vmem [shape: f32[50,128], index: 3, kind: output, shape index: {}]
  %s4 = sld [smem:[#allocation0]]
  $region22: #{net_forward.4} parent=0
    _
  %s6 = ssub.s32 1, %s4
  %s7 = scalar_select 0, %s6, %s4
  // Predicated region
  $region2: #{net_forward.4} parent=0 // pred_check
    _
  $region3: #{net_forward.4} parent=0 // pred_check_branch
    %9 = sbr.rel (0) target = $region5
  $region4: #{net_forward.4} parent=0 // pred_region
    _
  $region5: #{net_forward.4} parent=0 // pred_fallthru
    _
  // Predicated region
  $region6: #{net_forward.4} parent=0 // pred_check
    _
  $region7: #{net_forward.4} parent=0 // pred_check_branch
    %11 = sbr.rel (0) target = $region9
  $region8: #{net_forward.4} parent=0 // pred_region
    _
  $region9: #{net_forward.4} parent=0 // pred_fallthru
    _
  // Predicated region
  $region10: #{net_forward.4} parent=0 // pred_check
    _
  $region11: #{net_forward.4} parent=0 // pred_check_branch
    %13 = sbr.rel (0) target = $region13
  $region12: #{net_forward.4} parent=0 // pred_region
    _
  $region13: #{net_forward.4} parent=0 // pred_fallthru
    _
  %v14 = vld [vmem:[%s1] sm:$0xff]
  %v15 = vld [vmem:[%s1 + $0x8] sm:$0xff]
  %v16 = vld [vmem:[%s1 + $0x10] sm:$0xff]
  %v17 = vld [vmem:[%s1 + $0x18] sm:$0xff]
  %v18 = vld [vmem:[%s1 + $0x20] sm:$0xff]
  %v19 = vld [vmem:[%s1 + $0x28] sm:$0xff]
  %v20 = vld [vmem:[%s1 + $0x30] sm:$0xff]
  %v21 = vld [vmem:[%s1 + $0x38] sm:$0xff]
  %v22 = vld [vmem:[%s1 + $0x40] sm:$0xff]
  %v23 = vld [vmem:[%s1 + $0x48] sm:$0xff]
  %v24 = vld [vmem:[%s1 + $0x50] sm:$0xff]
  %v25 = vld [vmem:[%s1 + $0x58] sm:$0xff]
  %v26 = vld [vmem:[%s1 + $0x60] sm:$0xff]
  %v27 = vld [vmem:[%s1 + $0x68] sm:$0xff]
  %v28 = vld [vmem:[%s1 + $0x70] sm:$0xff]
  %v29 = vld [vmem:[%s1 + $0x78] sm:$0xff]
  %v30 = vld [vmem:[%s1 + $0x80] sm:$0xff]
  %v31 = vld [vmem:[%s1 + $0x88] sm:$0xff]
  %v32 = vld [vmem:[%s1 + $0x90] sm:$0xff]
  %v33 = vld [vmem:[%s1 + $0x98] sm:$0xff]
  %v34 = vld [vmem:[%s1 + $0xa0] sm:$0xff]
  %v35 = vld [vmem:[%s1 + $0xa8] sm:$0xff]
  %v36 = vld [vmem:[%s1 + $0xb0] sm:$0xff]
  %v37 = vld [vmem:[%s1 + $0xb8] sm:$0xff]
  %v38 = vld [vmem:[%s1 + $0xc0] sm:$0xff]
  %v39 = vld [vmem:[%s1 + $0xc8] sm:$0xff]
  %v40 = vld [vmem:[%s1 + $0xd0] sm:$0xff]
  %v41 = vld [vmem:[%s1 + $0xd8] sm:$0xff]
  %v42 = vld [vmem:[%s1 + $0xe0] sm:$0xff]
  %v43 = vld [vmem:[%s1 + $0xe8] sm:$0xff]
  %v44 = vld [vmem:[%s1 + $0xf0] sm:$0xff]
  %v45 = vld [vmem:[%s1 + $0xf8] sm:$0xff]
  %v46 = vld [vmem:[%s1 + $0x100] sm:$0xff]
  %v47 = vld [vmem:[%s1 + $0x108] sm:$0xff]
  %v48 = vld [vmem:[%s1 + $0x110] sm:$0xff]
  %v49 = vld [vmem:[%s1 + $0x118] sm:$0xff]
  %v50 = vld [vmem:[%s1 + $0x120] sm:$0xff]
  %v51 = vld [vmem:[%s1 + $0x128] sm:$0xff]
  %v52 = vld [vmem:[%s1 + $0x130] sm:$0xff]
  %v53 = vld [vmem:[%s1 + $0x138] sm:$0xff]
  %v54 = vld [vmem:[%s1 + $0x140] sm:$0xff]
  %v55 = vld [vmem:[%s1 + $0x148] sm:$0xff]
  %v56 = vld [vmem:[%s1 + $0x150] sm:$0xff]
  %v57 = vld [vmem:[%s1 + $0x158] sm:$0xff]
  %v58 = vld [vmem:[%s1 + $0x160] sm:$0xff]
  %v59 = vld [vmem:[%s1 + $0x168] sm:$0xff]
  %v60 = vld [vmem:[%s1 + $0x170] sm:$0xff]
  %v61 = vld [vmem:[%s1 + $0x178] sm:$0xff]
  %v62 = vld [vmem:[%s1 + $0x180] sm:$0xff]
  %v63 = vld [vmem:[%s1 + $0x188] sm:$0xff]
  %v64 = vld [vmem:[%s1 + $0x190] sm:$0xff]
  %v65 = vld [vmem:[%s1 + $0x198] sm:$0xff]
  %v66 = vld [vmem:[%s1 + $0x1a0] sm:$0xff]
  %v67 = vld [vmem:[%s1 + $0x1a8] sm:$0xff]
  %v68 = vld [vmem:[%s1 + $0x1b0] sm:$0xff]
  %v69 = vld [vmem:[%s1 + $0x1b8] sm:$0xff]
  %v70 = vld [vmem:[%s1 + $0x1c0] sm:$0xff]
  %v71 = vld [vmem:[%s1 + $0x1c8] sm:$0xff]
  %v72 = vld [vmem:[%s1 + $0x1d0] sm:$0xff]
  %v73 = vld [vmem:[%s1 + $0x1d8] sm:$0xff]
  %v74 = vld [vmem:[%s1 + $0x1e0] sm:$0xff]
  %v75 = vld [vmem:[%s1 + $0x1e8] sm:$0xff]
  %v76 = vld [vmem:[%s1 + $0x1f0] sm:$0xff]
  %v77 = vld [vmem:[%s1 + $0x1f8] sm:$0xff]
  %v78 = vld [vmem:[%s1 + $0x200] sm:$0xff]
  %v79 = vld [vmem:[%s1 + $0x208] sm:$0xff]
  %v80 = vld [vmem:[%s1 + $0x210] sm:$0xff]
  %v81 = vld [vmem:[%s1 + $0x218] sm:$0xff]
  %v82 = vld [vmem:[%s1 + $0x220] sm:$0xff]
  %v83 = vld [vmem:[%s1 + $0x228] sm:$0xff]
  %v84 = vld [vmem:[%s1 + $0x230] sm:$0xff]
  %v85 = vld [vmem:[%s1 + $0x238] sm:$0xff]
  %v86 = vld [vmem:[%s1 + $0x240] sm:$0xff]
  %v87 = vld [vmem:[%s1 + $0x248] sm:$0xff]
  %v88 = vld [vmem:[%s1 + $0x250] sm:$0xff]
  %v89 = vld [vmem:[%s1 + $0x258] sm:$0xff]
  %v90 = vld [vmem:[%s1 + $0x260] sm:$0xff]
  %v91 = vld [vmem:[%s1 + $0x268] sm:$0xff]
  %v92 = vld [vmem:[%s1 + $0x270] sm:$0xff]
  %v93 = vld [vmem:[%s1 + $0x278] sm:$0xff]
  %v94 = vld [vmem:[%s1 + $0x280] sm:$0xff]
  %v95 = vld [vmem:[%s1 + $0x288] sm:$0xff]
  %v96 = vld [vmem:[%s1 + $0x290] sm:$0xff]
  %v97 = vld [vmem:[%s1 + $0x298] sm:$0xff]
  %v98 = vld [vmem:[%s1 + $0x2a0] sm:$0xff]
  %v99 = vld [vmem:[%s1 + $0x2a8] sm:$0xff]
  %v100 = vld [vmem:[%s1 + $0x2b0] sm:$0xff]
  %v101 = vld [vmem:[%s1 + $0x2b8] sm:$0xff]
  %v102 = vld [vmem:[%s1 + $0x2c0] sm:$0xff]
  %v103 = vld [vmem:[%s1 + $0x2c8] sm:$0xff]
  %v104 = vld [vmem:[%s1 + $0x2d0] sm:$0xff]
  %v105 = vld [vmem:[%s1 + $0x2d8] sm:$0xff]
  %v106 = vld [vmem:[%s1 + $0x2e0] sm:$0xff]
  %v107 = vld [vmem:[%s1 + $0x2e8] sm:$0xff]
  %v108 = vld [vmem:[%s1 + $0x2f0] sm:$0xff]
  %v109 = vld [vmem:[%s1 + $0x2f8] sm:$0xff]
  %v110 = vld [vmem:[%s1 + $0x300] sm:$0xff]
  %v111 = vld [vmem:[%s1 + $0x308] sm:$0xff]
  %v112 = vld [vmem:[%s1 + $0x310] sm:$0xff]
  %v113 = vld [vmem:[%s1 + $0x318] sm:$0xff]
  %v114 = vld [vmem:[%s0] sm:$0xff]
  %v115 = vld [vmem:[%s0 + $0x8] sm:$0xff]
  %v116 = vld [vmem:[%s0 + $0x10] sm:$0xff]
  %v117 = vld [vmem:[%s0 + $0x18] sm:$0xff]
  %v118 = vld [vmem:[%s0 + $0x20] sm:$0xff]
  %v119 = vld [vmem:[%s0 + $0x28] sm:$0xff]
  %v120 = vld [vmem:[%s0 + $0x30] sm:$0xff]
  %v121 = vld [vmem:[%s0 + $0x38] sm:$0xff]
  %v122 = vld [vmem:[%s0 + $0x40] sm:$0xff]
  %v123 = vld [vmem:[%s0 + $0x48] sm:$0xff]
  %v124 = vld [vmem:[%s0 + $0x50] sm:$0xff]
  %v125 = vld [vmem:[%s0 + $0x58] sm:$0xff]
  %v126 = vld [vmem:[%s0 + $0x60] sm:$0xff]
  %v127 = vld [vmem:[%s0 + $0x68] sm:$0xff]
  %v128 = vld [vmem:[%s0 + $0x70] sm:$0xff]
  %v129 = vld [vmem:[%s0 + $0x78] sm:$0xff]
  %v130 = vld [vmem:[%s0 + $0x80] sm:$0xff]
  %v131 = vld [vmem:[%s0 + $0x88] sm:$0xff]
  %v132 = vld [vmem:[%s0 + $0x90] sm:$0xff]
  %v133 = vld [vmem:[%s0 + $0x98] sm:$0xff]
  %v134 = vld [vmem:[%s0 + $0xa0] sm:$0xff]
  %v135 = vld [vmem:[%s0 + $0xa8] sm:$0xff]
  %v136 = vld [vmem:[%s0 + $0xb0] sm:$0xff]
  %v137 = vld [vmem:[%s0 + $0xb8] sm:$0xff]
  %v138 = vld [vmem:[%s0 + $0xc0] sm:$0xff]
  %v139 = vld [vmem:[%s0 + $0xc8] sm:$0xff]
  %v140 = vld [vmem:[%s0 + $0xd0] sm:$0xff]
  %v141 = vld [vmem:[%s0 + $0xd8] sm:$0xff]
  %v142 = vld [vmem:[%s0 + $0xe0] sm:$0xff]
  %v143 = vld [vmem:[%s0 + $0xe8] sm:$0xff]
  %v144 = vld [vmem:[%s0 + $0xf0] sm:$0xff]
  %v145 = vld [vmem:[%s0 + $0xf8] sm:$0xff]
  %v146 = vld [vmem:[%s0 + $0x100] sm:$0xff]
  %v147 = vld [vmem:[%s0 + $0x108] sm:$0xff]
  %v148 = vld [vmem:[%s0 + $0x110] sm:$0xff]
  %v149 = vld [vmem:[%s0 + $0x118] sm:$0xff]
  %v150 = vld [vmem:[%s0 + $0x120] sm:$0xff]
  %v151 = vld [vmem:[%s0 + $0x128] sm:$0xff]
  %v152 = vld [vmem:[%s0 + $0x130] sm:$0xff]
  %v153 = vld [vmem:[%s0 + $0x138] sm:$0xff]
  %v154 = vld [vmem:[%s0 + $0x140] sm:$0xff]
  %v155 = vld [vmem:[%s0 + $0x148] sm:$0xff]
  %v156 = vld [vmem:[%s0 + $0x150] sm:$0x3]
  %v157 = vld [vmem:[%s0 + $0x158] sm:$0x3]
  %v158 = vld [vmem:[%s0 + $0x160] sm:$0x3]
  %v159 = vld [vmem:[%s0 + $0x168] sm:$0x3]
  %v160 = vld [vmem:[%s0 + $0x170] sm:$0x3]
  %v161 = vld [vmem:[%s0 + $0x178] sm:$0x3]
  %v162 = vld [vmem:[%s0 + $0x180] sm:$0x3]
  %vm163 = vcmask 261120
  %v165 = vsel %vm163, %v120, 0
  %v168 = vsel %vm163, %v127, 0
  %v171 = vsel %vm163, %v134, 0
  %v174 = vsel %vm163, %v141, 0
  %v177 = vsel %vm163, %v148, 0
  %v180 = vsel %vm163, %v155, 0
  %v183 = vsel %vm163, %v162, 0
  %185 = vmatprep.subr.mxu0 0.0
  %186 = vmatpush1.msra.mxu0 %v14
  %187 = vmatprep.subr.mxu0 0.0
  %188 = vmatpush1.msra.mxu0 %v15
  %189 = vmatprep.subr.mxu0 0.0
  %190 = vmatpush1.msra.mxu0 %v16
  %191 = vmatprep.subr.mxu0 0.0
  %192 = vmatpush1.msra.mxu0 %v17
  %193 = vmatprep.subr.mxu0 0.0
  %194 = vmatpush1.msra.mxu0 %v18
  %195 = vmatprep.subr.mxu0 0.0
  %196 = vmatpush1.msra.mxu0 %v19
  %197 = vmatprep.subr.mxu0 0.0
  %198 = vmatpush1.msra.mxu0 %v20
  %199 = vmatprep.subr.mxu0 0.0
  %200 = vmatpush1.msra.mxu0 %v21
  %201 = vmatprep.subr.mxu0 0.0
  %202 = vmatpush1.msra.mxu0 %v22
  %203 = vmatprep.subr.mxu0 0.0
  %204 = vmatpush1.msra.mxu0 %v23
  %205 = vmatprep.subr.mxu0 0.0
  %206 = vmatpush1.msra.mxu0 %v24
  %207 = vmatprep.subr.mxu0 0.0
  %208 = vmatpush1.msra.mxu0 %v25
  %209 = vmatprep.subr.mxu0 0.0
  %210 = vmatpush1.msra.mxu0 %v26
  %211 = vmatprep.subr.mxu0 0.0
  %212 = vmatpush1.msra.mxu0 %v27
  %213 = vmatprep.subr.mxu0 0.0
  %214 = vmatpush1.msra.mxu0 %v28
  %215 = vmatprep.subr.mxu0 0.0
  %216 = vmatpush1.msra.mxu0 %v29
  %217 = vmatprep.subr.mxu0 0.0
  %218 = vmatpush1.msra.mxu0 %v30
  %219 = vmatprep.subr.mxu0 0.0
  %220 = vmatpush1.msra.mxu0 %v31
  %221 = vmatprep.subr.mxu0 0.0
  %222 = vmatpush1.msra.mxu0 %v32
  %223 = vmatprep.subr.mxu0 0.0
  %224 = vmatpush1.msra.mxu0 %v33
  %225 = vmatprep.subr.mxu0 0.0
  %226 = vmatpush1.msra.mxu0 %v34
  %227 = vmatprep.subr.mxu0 0.0
  %228 = vmatpush1.msra.mxu0 %v35
  %229 = vmatprep.subr.mxu0 0.0
  %230 = vmatpush1.msra.mxu0 %v36
  %231 = vmatprep.subr.mxu0 0.0
  %232 = vmatpush1.msra.mxu0 %v37
  %233 = vmatprep.subr.mxu0 0.0
  %234 = vmatpush1.msra.mxu0 %v38
  %235 = vmatprep.subr.mxu0 0.0
  %236 = vmatpush1.msra.mxu0 %v39
  %237 = vmatprep.subr.mxu0 0.0
  %238 = vmatpush1.msra.mxu0 %v40
  %239 = vmatprep.subr.mxu0 0.0
  %240 = vmatpush1.msra.mxu0 %v41
  %241 = vmatprep.subr.mxu0 0.0
  %242 = vmatpush1.msra.mxu0 %v42
  %243 = vmatprep.subr.mxu0 0.0
  %244 = vmatpush1.msra.mxu0 %v43
  %245 = vmatprep.subr.mxu0 0.0
  %246 = vmatpush1.msra.mxu0 %v44
  %247 = vmatprep.subr.mxu0 0.0
  %248 = vmatpush1.msra.mxu0 %v45
  %249 = vmatprep.mubr.f32.mxu0 %v115
  %250 = vmatmul.mubr.f32.gmra.mrb[0].mxu0 %v114
  %v251 = vpop.f32.mrb[0].mxu0
  %v252 = vadd.f32 0.0, %v251
  %v253 = vpop.f32.mrb[0].mxu0
  %254 = vmatprep.mubr.f32.mxu0 %v122
  %255 = vmatmul.mubr.f32.gmra.mrb[0].mxu0 %v121
  %v256 = vpop.f32.mrb[0].mxu0
  %v257 = vadd.f32 0.0, %v256
  %v258 = vpop.f32.mrb[0].mxu0
  %259 = vmatprep.mubr.f32.mxu0 %v129
  %260 = vmatmul.mubr.f32.gmra.mrb[0].mxu0 %v128
  %v261 = vpop.f32.mrb[0].mxu0
  %v262 = vadd.f32 0.0, %v261
  %v263 = vpop.f32.mrb[0].mxu0
  %264 = vmatprep.mubr.f32.mxu0 %v136
  %265 = vmatmul.mubr.f32.gmra.mrb[0].mxu0 %v135
  %v266 = vpop.f32.mrb[0].mxu0
  %v267 = vadd.f32 0.0, %v266
  %v268 = vpop.f32.mrb[0].mxu0
  %269 = vmatprep.mubr.f32.mxu0 %v143
  %270 = vmatmul.mubr.f32.gmra.mrb[0].mxu0 %v142
  %v271 = vpop.f32.mrb[0].mxu0
  %v272 = vadd.f32 0.0, %v271
  %v273 = vpop.f32.mrb[0].mxu0
  %274 = vmatprep.mubr.f32.mxu0 %v150
  %275 = vmatmul.mubr.f32.gmra.mrb[0].mxu0 %v149
  %v276 = vpop.f32.mrb[0].mxu0
  %v277 = vadd.f32 0.0, %v276
  %v278 = vpop.f32.mrb[0].mxu0
  %279 = vmatprep.mubr.f32.mxu0 %v157
  %280 = vmatmul.mubr.f32.gmra.mrb[0].mxu0 %v156
  %v281 = vpop.f32.mrb[0].mxu0
  %v282 = vadd.f32 0.0, %v281
  %v283 = vpop.f32.mrb[0].mxu0
  %284 = vdwg.mxu0
  %285 = vmatprep.subr.mxu0 0.0
  %286 = vmatpush1.msra.mxu0 %v46
  %287 = vmatprep.subr.mxu0 0.0
  %288 = vmatpush1.msra.mxu0 %v47
  %289 = vmatprep.subr.mxu0 0.0
  %290 = vmatpush1.msra.mxu0 %v48
  %291 = vmatprep.subr.mxu0 0.0
  %292 = vmatpush1.msra.mxu0 %v49
  %293 = vmatprep.subr.mxu0 0.0
  %294 = vmatpush1.msra.mxu0 %v50
  %295 = vmatprep.subr.mxu0 0.0
  %296 = vmatpush1.msra.mxu0 %v51
  %297 = vmatprep.subr.mxu0 0.0
  %298 = vmatpush1.msra.mxu0 %v52
  %299 = vmatprep.subr.mxu0 0.0
  %300 = vmatpush1.msra.mxu0 %v53
  %301 = vmatprep.subr.mxu0 0.0
  %302 = vmatpush1.msra.mxu0 %v54
  %303 = vmatprep.subr.mxu0 0.0
  %304 = vmatpush1.msra.mxu0 %v55
  %305 = vmatprep.subr.mxu0 0.0
  %306 = vmatpush1.msra.mxu0 %v56
  %307 = vmatprep.subr.mxu0 0.0
  %308 = vmatpush1.msra.mxu0 %v57
  %309 = vmatprep.subr.mxu0 0.0
  %310 = vmatpush1.msra.mxu0 %v58
  %311 = vmatprep.subr.mxu0 0.0
  %312 = vmatpush1.msra.mxu0 %v59
  %313 = vmatprep.subr.mxu0 0.0
  %314 = vmatpush1.msra.mxu0 %v60
  %315 = vmatprep.subr.mxu0 0.0
  %316 = vmatpush1.msra.mxu0 %v61
  %317 = vmatprep.subr.mxu0 0.0
  %318 = vmatpush1.msra.mxu0 %v62
  %319 = vmatprep.subr.mxu0 0.0
  %320 = vmatpush1.msra.mxu0 %v63
  %321 = vmatprep.subr.mxu0 0.0
  %322 = vmatpush1.msra.mxu0 %v64
  %323 = vmatprep.subr.mxu0 0.0
  %324 = vmatpush1.msra.mxu0 %v65
  %325 = vmatprep.subr.mxu0 0.0
  %326 = vmatpush1.msra.mxu0 %v66
  %327 = vmatprep.subr.mxu0 0.0
  %328 = vmatpush1.msra.mxu0 %v67
  %329 = vmatprep.subr.mxu0 0.0
  %330 = vmatpush1.msra.mxu0 %v68
  %331 = vmatprep.subr.mxu0 0.0
  %332 = vmatpush1.msra.mxu0 %v69
  %333 = vmatprep.subr.mxu0 0.0
  %334 = vmatpush1.msra.mxu0 %v70
  %335 = vmatprep.subr.mxu0 0.0
  %336 = vmatpush1.msra.mxu0 %v71
  %337 = vmatprep.subr.mxu0 0.0
  %338 = vmatpush1.msra.mxu0 %v72
  %339 = vmatprep.subr.mxu0 0.0
  %340 = vmatpush1.msra.mxu0 %v73
  %341 = vmatprep.subr.mxu0 0.0
  %342 = vmatpush1.msra.mxu0 %v74
  %343 = vmatprep.subr.mxu0 0.0
  %344 = vmatpush1.msra.mxu0 %v75
  %345 = vmatprep.subr.mxu0 0.0
  %346 = vmatpush1.msra.mxu0 %v76
  %347 = vmatprep.subr.mxu0 0.0
  %348 = vmatpush1.msra.mxu0 %v77
  %349 = vmatprep.mubr.f32.mxu0 %v117
  %350 = vmatmul.mubr.f32.gmra.mrb[0].mxu0 %v116
  %v351 = vpop.f32.mrb[0].mxu0
  %v352 = vadd.f32 %v252, %v351
  %v353 = vpop.f32.mrb[0].mxu0
  %354 = vmatprep.mubr.f32.mxu0 %v124
  %355 = vmatmul.mubr.f32.gmra.mrb[0].mxu0 %v123
  %v356 = vpop.f32.mrb[0].mxu0
  %v357 = vadd.f32 %v257, %v356
  %v358 = vpop.f32.mrb[0].mxu0
  %359 = vmatprep.mubr.f32.mxu0 %v131
  %360 = vmatmul.mubr.f32.gmra.mrb[0].mxu0 %v130
  %v361 = vpop.f32.mrb[0].mxu0
  %v362 = vadd.f32 %v262, %v361
  %v363 = vpop.f32.mrb[0].mxu0
  %364 = vmatprep.mubr.f32.mxu0 %v138
  %365 = vmatmul.mubr.f32.gmra.mrb[0].mxu0 %v137
  %v366 = vpop.f32.mrb[0].mxu0
  %v367 = vadd.f32 %v267, %v366
  %v368 = vpop.f32.mrb[0].mxu0
  %369 = vmatprep.mubr.f32.mxu0 %v145
  %370 = vmatmul.mubr.f32.gmra.mrb[0].mxu0 %v144
  %v371 = vpop.f32.mrb[0].mxu0
  %v372 = vadd.f32 %v272, %v371
  %v373 = vpop.f32.mrb[0].mxu0
  %374 = vmatprep.mubr.f32.mxu0 %v152
  %375 = vmatmul.mubr.f32.gmra.mrb[0].mxu0 %v151
  %v376 = vpop.f32.mrb[0].mxu0
  %v377 = vadd.f32 %v277, %v376
  %v378 = vpop.f32.mrb[0].mxu0
  %379 = vmatprep.mubr.f32.mxu0 %v159
  %380 = vmatmul.mubr.f32.gmra.mrb[0].mxu0 %v158
  %v381 = vpop.f32.mrb[0].mxu0
  %v382 = vadd.f32 %v282, %v381
  %v383 = vpop.f32.mrb[0].mxu0
  %384 = vdwg.mxu0
  %385 = vmatprep.subr.mxu0 0.0
  %386 = vmatpush1.msra.mxu0 %v78
  %387 = vmatprep.subr.mxu0 0.0
  %388 = vmatpush1.msra.mxu0 %v79
  %389 = vmatprep.subr.mxu0 0.0
  %390 = vmatpush1.msra.mxu0 %v80
  %391 = vmatprep.subr.mxu0 0.0
  %392 = vmatpush1.msra.mxu0 %v81
  %393 = vmatprep.subr.mxu0 0.0
  %394 = vmatpush1.msra.mxu0 %v82
  %395 = vmatprep.subr.mxu0 0.0
  %396 = vmatpush1.msra.mxu0 %v83
  %397 = vmatprep.subr.mxu0 0.0
  %398 = vmatpush1.msra.mxu0 %v84
  %399 = vmatprep.subr.mxu0 0.0
  %400 = vmatpush1.msra.mxu0 %v85
  %401 = vmatprep.subr.mxu0 0.0
  %402 = vmatpush1.msra.mxu0 %v86
  %403 = vmatprep.subr.mxu0 0.0
  %404 = vmatpush1.msra.mxu0 %v87
  %405 = vmatprep.subr.mxu0 0.0
  %406 = vmatpush1.msra.mxu0 %v88
  %407 = vmatprep.subr.mxu0 0.0
  %408 = vmatpush1.msra.mxu0 %v89
  %409 = vmatprep.subr.mxu0 0.0
  %410 = vmatpush1.msra.mxu0 %v90
  %411 = vmatprep.subr.mxu0 0.0
  %412 = vmatpush1.msra.mxu0 %v91
  %413 = vmatprep.subr.mxu0 0.0
  %414 = vmatpush1.msra.mxu0 %v92
  %415 = vmatprep.subr.mxu0 0.0
  %416 = vmatpush1.msra.mxu0 %v93
  %417 = vmatprep.subr.mxu0 0.0
  %418 = vmatpush1.msra.mxu0 %v94
  %419 = vmatprep.subr.mxu0 0.0
  %420 = vmatpush1.msra.mxu0 %v95
  %421 = vmatprep.subr.mxu0 0.0
  %422 = vmatpush1.msra.mxu0 %v96
  %423 = vmatprep.subr.mxu0 0.0
  %424 = vmatpush1.msra.mxu0 %v97
  %425 = vmatprep.subr.mxu0 0.0
  %426 = vmatpush1.msra.mxu0 %v98
  %427 = vmatprep.subr.mxu0 0.0
  %428 = vmatpush1.msra.mxu0 %v99
  %429 = vmatprep.subr.mxu0 0.0
  %430 = vmatpush1.msra.mxu0 %v100
  %431 = vmatprep.subr.mxu0 0.0
  %432 = vmatpush1.msra.mxu0 %v101
  %433 = vmatprep.subr.mxu0 0.0
  %434 = vmatpush1.msra.mxu0 %v102
  %435 = vmatprep.subr.mxu0 0.0
  %436 = vmatpush1.msra.mxu0 %v103
  %437 = vmatprep.subr.mxu0 0.0
  %438 = vmatpush1.msra.mxu0 %v104
  %439 = vmatprep.subr.mxu0 0.0
  %440 = vmatpush1.msra.mxu0 %v105
  %441 = vmatprep.subr.mxu0 0.0
  %442 = vmatpush1.msra.mxu0 %v106
  %443 = vmatprep.subr.mxu0 0.0
  %444 = vmatpush1.msra.mxu0 %v107
  %445 = vmatprep.subr.mxu0 0.0
  %446 = vmatpush1.msra.mxu0 %v108
  %447 = vmatprep.subr.mxu0 0.0
  %448 = vmatpush1.msra.mxu0 %v109
  %449 = vmatprep.mubr.f32.mxu0 %v119
  %450 = vmatmul.mubr.f32.gmra.mrb[0].mxu0 %v118
  %v451 = vpop.f32.mrb[0].mxu0
  %v452 = vadd.f32 %v352, %v451
  %v453 = vpop.f32.mrb[0].mxu0
  %454 = vmatprep.mubr.f32.mxu0 %v126
  %455 = vmatmul.mubr.f32.gmra.mrb[0].mxu0 %v125
  %v456 = vpop.f32.mrb[0].mxu0
  %v457 = vadd.f32 %v357, %v456
  %v458 = vpop.f32.mrb[0].mxu0
  %459 = vmatprep.mubr.f32.mxu0 %v133
  %460 = vmatmul.mubr.f32.gmra.mrb[0].mxu0 %v132
  %v461 = vpop.f32.mrb[0].mxu0
  %v462 = vadd.f32 %v362, %v461
  %v463 = vpop.f32.mrb[0].mxu0
  %464 = vmatprep.mubr.f32.mxu0 %v140
  %465 = vmatmul.mubr.f32.gmra.mrb[0].mxu0 %v139
  %v466 = vpop.f32.mrb[0].mxu0
  %v467 = vadd.f32 %v367, %v466
  %v468 = vpop.f32.mrb[0].mxu0
  %469 = vmatprep.mubr.f32.mxu0 %v147
  %470 = vmatmul.mubr.f32.gmra.mrb[0].mxu0 %v146
  %v471 = vpop.f32.mrb[0].mxu0
  %v472 = vadd.f32 %v372, %v471
  %v473 = vpop.f32.mrb[0].mxu0
  %474 = vmatprep.mubr.f32.mxu0 %v154
  %475 = vmatmul.mubr.f32.gmra.mrb[0].mxu0 %v153
  %v476 = vpop.f32.mrb[0].mxu0
  %v477 = vadd.f32 %v377, %v476
  %v478 = vpop.f32.mrb[0].mxu0
  %479 = vmatprep.mubr.f32.mxu0 %v161
  %480 = vmatmul.mubr.f32.gmra.mrb[0].mxu0 %v160
  %v481 = vpop.f32.mrb[0].mxu0
  %v482 = vadd.f32 %v382, %v481
  %v483 = vpop.f32.mrb[0].mxu0
  %484 = vdwg.mxu0
  %485 = vmatprep.subr.mxu0 0.0
  %486 = vmatpush1.msra.mxu0 %v110
  %487 = vmatprep.subr.mxu0 0.0
  %488 = vmatpush1.msra.mxu0 %v111
  %489 = vmatprep.subr.mxu0 0.0
  %490 = vmatpush1.msra.mxu0 %v112
  %491 = vmatprep.subr.mxu0 0.0
  %492 = vmatpush1.msra.mxu0 %v113
  %493 = vmatprep.subr.mxu0 0.0
  %494 = vmatpush1.msra.mxu0 0.0
  %495 = vmatprep.subr.mxu0 0.0
  %496 = vmatpush1.msra.mxu0 0.0
  %497 = vmatprep.subr.mxu0 0.0
  %498 = vmatpush1.msra.mxu0 0.0
  %499 = vmatprep.subr.mxu0 0.0
  %500 = vmatpush1.msra.mxu0 0.0
  %501 = vmatprep.subr.mxu0 0.0
  %502 = vmatpush1.msra.mxu0 0.0
  %503 = vmatprep.subr.mxu0 0.0
  %504 = vmatpush1.msra.mxu0 0.0
  %505 = vmatprep.subr.mxu0 0.0
  %506 = vmatpush1.msra.mxu0 0.0
  %507 = vmatprep.subr.mxu0 0.0
  %508 = vmatpush1.msra.mxu0 0.0
  %509 = vmatprep.subr.mxu0 0.0
  %510 = vmatpush1.msra.mxu0 0.0
  %511 = vmatprep.subr.mxu0 0.0
  %512 = vmatpush1.msra.mxu0 0.0
  %513 = vmatprep.subr.mxu0 0.0
  %514 = vmatpush1.msra.mxu0 0.0
  %515 = vmatprep.subr.mxu0 0.0
  %516 = vmatpush1.msra.mxu0 0.0
  %517 = vmatprep.subr.mxu0 0.0
  %518 = vmatpush1.msra.mxu0 0.0
  %519 = vmatprep.subr.mxu0 0.0
  %520 = vmatpush1.msra.mxu0 0.0
  %521 = vmatprep.subr.mxu0 0.0
  %522 = vmatpush1.msra.mxu0 0.0
  %523 = vmatprep.subr.mxu0 0.0
  %524 = vmatpush1.msra.mxu0 0.0
  %525 = vmatprep.subr.mxu0 0.0
  %526 = vmatpush1.msra.mxu0 0.0
  %527 = vmatprep.subr.mxu0 0.0
  %528 = vmatpush1.msra.mxu0 0.0
  %529 = vmatprep.subr.mxu0 0.0
  %530 = vmatpush1.msra.mxu0 0.0
  %531 = vmatprep.subr.mxu0 0.0
  %532 = vmatpush1.msra.mxu0 0.0
  %533 = vmatprep.subr.mxu0 0.0
  %534 = vmatpush1.msra.mxu0 0.0
  %535 = vmatprep.subr.mxu0 0.0
  %536 = vmatpush1.msra.mxu0 0.0
  %537 = vmatprep.subr.mxu0 0.0
  %538 = vmatpush1.msra.mxu0 0.0
  %539 = vmatprep.subr.mxu0 0.0
  %540 = vmatpush1.msra.mxu0 0.0
  %541 = vmatprep.subr.mxu0 0.0
  %542 = vmatpush1.msra.mxu0 0.0
  %543 = vmatprep.subr.mxu0 0.0
  %544 = vmatpush1.msra.mxu0 0.0
  %545 = vmatprep.subr.mxu0 0.0
  %546 = vmatpush1.msra.mxu0 0.0
  %547 = vmatprep.subr.mxu0 0.0
  %548 = vmatpush1.msra.mxu0 0.0
  %549 = vmatprep.mubr.f32.mxu0 0.0
  %550 = vmatmul.mubr.f32.gmra.mrb[0].mxu0 %v165
  %v551 = vpop.f32.mrb[0].mxu0
  %v552 = vadd.f32 %v452, %v551
  %v553 = vpop.f32.mrb[0].mxu0
  %554 = vmatprep.mubr.f32.mxu0 0.0
  %555 = vmatmul.mubr.f32.gmra.mrb[0].mxu0 %v168
  %v556 = vpop.f32.mrb[0].mxu0
  %v557 = vadd.f32 %v457, %v556
  %v558 = vpop.f32.mrb[0].mxu0
  %559 = vmatprep.mubr.f32.mxu0 0.0
  %560 = vmatmul.mubr.f32.gmra.mrb[0].mxu0 %v171
  %v561 = vpop.f32.mrb[0].mxu0
  %v562 = vadd.f32 %v462, %v561
  %v563 = vpop.f32.mrb[0].mxu0
  %564 = vmatprep.mubr.f32.mxu0 0.0
  %565 = vmatmul.mubr.f32.gmra.mrb[0].mxu0 %v174
  %v566 = vpop.f32.mrb[0].mxu0
  %v567 = vadd.f32 %v467, %v566
  %v568 = vpop.f32.mrb[0].mxu0
  %569 = vmatprep.mubr.f32.mxu0 0.0
  %570 = vmatmul.mubr.f32.gmra.mrb[0].mxu0 %v177
  %v571 = vpop.f32.mrb[0].mxu0
  %v572 = vadd.f32 %v472, %v571
  %v573 = vpop.f32.mrb[0].mxu0
  %574 = vmatprep.mubr.f32.mxu0 0.0
  %575 = vmatmul.mubr.f32.gmra.mrb[0].mxu0 %v180
  %v576 = vpop.f32.mrb[0].mxu0
  %v577 = vadd.f32 %v477, %v576
  %v578 = vpop.f32.mrb[0].mxu0
  %579 = vmatprep.mubr.f32.mxu0 0.0
  %580 = vmatmul.mubr.f32.gmra.mrb[0].mxu0 %v183
  %v581 = vpop.f32.mrb[0].mxu0
  %v582 = vadd.f32 %v482, %v581
  %v583 = vpop.f32.mrb[0].mxu0
  %584 = vdwg.mxu0
  %s585 = scalar_lea.vmem %s0, 392
  %v586 = vld [vmem:[%s585] sm:$0xff]
  %v587 = vld [vmem:[%s585 + $0x8] sm:$0xff]
  %v588 = vld [vmem:[%s585 + $0x10] sm:$0xff]
  %v589 = vld [vmem:[%s585 + $0x18] sm:$0xff]
  %v590 = vld [vmem:[%s585 + $0x20] sm:$0xff]
  %v591 = vld [vmem:[%s585 + $0x28] sm:$0xff]
  %v592 = vld [vmem:[%s585 + $0x30] sm:$0xff]
  %v593 = vld [vmem:[%s585 + $0x38] sm:$0xff]
  %v594 = vld [vmem:[%s585 + $0x40] sm:$0xff]
  %v595 = vld [vmem:[%s585 + $0x48] sm:$0xff]
  %v596 = vld [vmem:[%s585 + $0x50] sm:$0xff]
  %v597 = vld [vmem:[%s585 + $0x58] sm:$0xff]
  %v598 = vld [vmem:[%s585 + $0x60] sm:$0xff]
  %v599 = vld [vmem:[%s585 + $0x68] sm:$0xff]
  %v600 = vld [vmem:[%s585 + $0x70] sm:$0xff]
  %v601 = vld [vmem:[%s585 + $0x78] sm:$0xff]
  %v602 = vld [vmem:[%s585 + $0x80] sm:$0xff]
  %v603 = vld [vmem:[%s585 + $0x88] sm:$0xff]
  %v604 = vld [vmem:[%s585 + $0x90] sm:$0xff]
  %v605 = vld [vmem:[%s585 + $0x98] sm:$0xff]
  %v606 = vld [vmem:[%s585 + $0xa0] sm:$0xff]
  %v607 = vld [vmem:[%s585 + $0xa8] sm:$0xff]
  %v608 = vld [vmem:[%s585 + $0xb0] sm:$0xff]
  %v609 = vld [vmem:[%s585 + $0xb8] sm:$0xff]
  %v610 = vld [vmem:[%s585 + $0xc0] sm:$0xff]
  %v611 = vld [vmem:[%s585 + $0xc8] sm:$0xff]
  %v612 = vld [vmem:[%s585 + $0xd0] sm:$0xff]
  %v613 = vld [vmem:[%s585 + $0xd8] sm:$0xff]
  %v614 = vld [vmem:[%s585 + $0xe0] sm:$0xff]
  %v615 = vld [vmem:[%s585 + $0xe8] sm:$0xff]
  %v616 = vld [vmem:[%s585 + $0xf0] sm:$0xff]
  %v617 = vld [vmem:[%s585 + $0xf8] sm:$0xff]
  %v618 = vld [vmem:[%s585 + $0x100] sm:$0xff]
  %v619 = vld [vmem:[%s585 + $0x108] sm:$0xff]
  %v620 = vld [vmem:[%s585 + $0x110] sm:$0xff]
  %v621 = vld [vmem:[%s585 + $0x118] sm:$0xff]
  %v622 = vld [vmem:[%s585 + $0x120] sm:$0xff]
  %v623 = vld [vmem:[%s585 + $0x128] sm:$0xff]
  %v624 = vld [vmem:[%s585 + $0x130] sm:$0xff]
  %v625 = vld [vmem:[%s585 + $0x138] sm:$0xff]
  %v626 = vld [vmem:[%s585 + $0x140] sm:$0xff]
  %v627 = vld [vmem:[%s585 + $0x148] sm:$0xff]
  %v628 = vld [vmem:[%s585 + $0x150] sm:$0x3]
  %v629 = vld [vmem:[%s585 + $0x158] sm:$0x3]
  %v630 = vld [vmem:[%s585 + $0x160] sm:$0x3]
  %v631 = vld [vmem:[%s585 + $0x168] sm:$0x3]
  %v632 = vld [vmem:[%s585 + $0x170] sm:$0x3]
  %v633 = vld [vmem:[%s585 + $0x178] sm:$0x3]
  %v634 = vld [vmem:[%s585 + $0x180] sm:$0x3]
  %v636 = vsel %vm163, %v592, 0
  %v639 = vsel %vm163, %v599, 0
  %v642 = vsel %vm163, %v606, 0
  %v645 = vsel %vm163, %v613, 0
  %v648 = vsel %vm163, %v620, 0
  %v651 = vsel %vm163, %v627, 0
  %v654 = vsel %vm163, %v634, 0
  %656 = vmatprep.subr.mxu0 0.0
  %657 = vmatpush1.msra.mxu0 %v14
  %658 = vmatprep.subr.mxu0 0.0
  %659 = vmatpush1.msra.mxu0 %v15
  %660 = vmatprep.subr.mxu0 0.0
  %661 = vmatpush1.msra.mxu0 %v16
  %662 = vmatprep.subr.mxu0 0.0
  %663 = vmatpush1.msra.mxu0 %v17
  %664 = vmatprep.subr.mxu0 0.0
  %665 = vmatpush1.msra.mxu0 %v18
  %666 = vmatprep.subr.mxu0 0.0
  %667 = vmatpush1.msra.mxu0 %v19
  %668 = vmatprep.subr.mxu0 0.0
  %669 = vmatpush1.msra.mxu0 %v20
  %670 = vmatprep.subr.mxu0 0.0
  %671 = vmatpush1.msra.mxu0 %v21
  %672 = vmatprep.subr.mxu0 0.0
  %673 = vmatpush1.msra.mxu0 %v22
  %674 = vmatprep.subr.mxu0 0.0
  %675 = vmatpush1.msra.mxu0 %v23
  %676 = vmatprep.subr.mxu0 0.0
  %677 = vmatpush1.msra.mxu0 %v24
  %678 = vmatprep.subr.mxu0 0.0
  %679 = vmatpush1.msra.mxu0 %v25
  %680 = vmatprep.subr.mxu0 0.0
  %681 = vmatpush1.msra.mxu0 %v26
  %682 = vmatprep.subr.mxu0 0.0
  %683 = vmatpush1.msra.mxu0 %v27
  %684 = vmatprep.subr.mxu0 0.0
  %685 = vmatpush1.msra.mxu0 %v28
  %686 = vmatprep.subr.mxu0 0.0
  %687 = vmatpush1.msra.mxu0 %v29
  %688 = vmatprep.subr.mxu0 0.0
  %689 = vmatpush1.msra.mxu0 %v30
  %690 = vmatprep.subr.mxu0 0.0
  %691 = vmatpush1.msra.mxu0 %v31
  %692 = vmatprep.subr.mxu0 0.0
  %693 = vmatpush1.msra.mxu0 %v32
  %694 = vmatprep.subr.mxu0 0.0
  %695 = vmatpush1.msra.mxu0 %v33
  %696 = vmatprep.subr.mxu0 0.0
  %697 = vmatpush1.msra.mxu0 %v34
  %698 = vmatprep.subr.mxu0 0.0
  %699 = vmatpush1.msra.mxu0 %v35
  %700 = vmatprep.subr.mxu0 0.0
  %701 = vmatpush1.msra.mxu0 %v36
  %702 = vmatprep.subr.mxu0 0.0
  %703 = vmatpush1.msra.mxu0 %v37
  %704 = vmatprep.subr.mxu0 0.0
  %705 = vmatpush1.msra.mxu0 %v38
  %706 = vmatprep.subr.mxu0 0.0
  %707 = vmatpush1.msra.mxu0 %v39
  %708 = vmatprep.subr.mxu0 0.0
  %709 = vmatpush1.msra.mxu0 %v40
  %710 = vmatprep.subr.mxu0 0.0
  %711 = vmatpush1.msra.mxu0 %v41
  %712 = vmatprep.subr.mxu0 0.0
  %713 = vmatpush1.msra.mxu0 %v42
  %714 = vmatprep.subr.mxu0 0.0
  %715 = vmatpush1.msra.mxu0 %v43
  %716 = vmatprep.subr.mxu0 0.0
  %717 = vmatpush1.msra.mxu0 %v44
  %718 = vmatprep.subr.mxu0 0.0
  %719 = vmatpush1.msra.mxu0 %v45
  %720 = vmatprep.mubr.f32.mxu0 %v587
  %721 = vmatmul.mubr.f32.gmra.mrb[0].mxu0 %v586
  %v722 = vpop.f32.mrb[0].mxu0
  %v723 = vadd.f32 0.0, %v722
  %v724 = vpop.f32.mrb[0].mxu0
  %725 = vmatprep.mubr.f32.mxu0 %v594
  %726 = vmatmul.mubr.f32.gmra.mrb[0].mxu0 %v593
  %v727 = vpop.f32.mrb[0].mxu0
  %v728 = vadd.f32 0.0, %v727
  %v729 = vpop.f32.mrb[0].mxu0
  %730 = vmatprep.mubr.f32.mxu0 %v601
  %731 = vmatmul.mubr.f32.gmra.mrb[0].mxu0 %v600
  %v732 = vpop.f32.mrb[0].mxu0
  %v733 = vadd.f32 0.0, %v732
  %v734 = vpop.f32.mrb[0].mxu0
  %735 = vmatprep.mubr.f32.mxu0 %v608
  %736 = vmatmul.mubr.f32.gmra.mrb[0].mxu0 %v607
  %v737 = vpop.f32.mrb[0].mxu0
  %v738 = vadd.f32 0.0, %v737
  %v739 = vpop.f32.mrb[0].mxu0
  %740 = vmatprep.mubr.f32.mxu0 %v615
  %741 = vmatmul.mubr.f32.gmra.mrb[0].mxu0 %v614
  %v742 = vpop.f32.mrb[0].mxu0
  %v743 = vadd.f32 0.0, %v742
  %v744 = vpop.f32.mrb[0].mxu0
  %745 = vmatprep.mubr.f32.mxu0 %v622
  %746 = vmatmul.mubr.f32.gmra.mrb[0].mxu0 %v621
  %v747 = vpop.f32.mrb[0].mxu0
  %v748 = vadd.f32 0.0, %v747
  %v749 = vpop.f32.mrb[0].mxu0
  %750 = vmatprep.mubr.f32.mxu0 %v629
  %751 = vmatmul.mubr.f32.gmra.mrb[0].mxu0 %v628
  %v752 = vpop.f32.mrb[0].mxu0
  %v753 = vadd.f32 0.0, %v752
  %v754 = vpop.f32.mrb[0].mxu0
  %755 = vdwg.mxu0
  %756 = vmatprep.subr.mxu0 0.0
  %757 = vmatpush1.msra.mxu0 %v46
  %758 = vmatprep.subr.mxu0 0.0
  %759 = vmatpush1.msra.mxu0 %v47
  %760 = vmatprep.subr.mxu0 0.0
  %761 = vmatpush1.msra.mxu0 %v48
  %762 = vmatprep.subr.mxu0 0.0
  %763 = vmatpush1.msra.mxu0 %v49
  %764 = vmatprep.subr.mxu0 0.0
  %765 = vmatpush1.msra.mxu0 %v50
  %766 = vmatprep.subr.mxu0 0.0
  %767 = vmatpush1.msra.mxu0 %v51
  %768 = vmatprep.subr.mxu0 0.0
  %769 = vmatpush1.msra.mxu0 %v52
  %770 = vmatprep.subr.mxu0 0.0
  %771 = vmatpush1.msra.mxu0 %v53
  %772 = vmatprep.subr.mxu0 0.0
  %773 = vmatpush1.msra.mxu0 %v54
  %774 = vmatprep.subr.mxu0 0.0
  %775 = vmatpush1.msra.mxu0 %v55
  %776 = vmatprep.subr.mxu0 0.0
  %777 = vmatpush1.msra.mxu0 %v56
  %778 = vmatprep.subr.mxu0 0.0
  %779 = vmatpush1.msra.mxu0 %v57
  %780 = vmatprep.subr.mxu0 0.0
  %781 = vmatpush1.msra.mxu0 %v58
  %782 = vmatprep.subr.mxu0 0.0
  %783 = vmatpush1.msra.mxu0 %v59
  %784 = vmatprep.subr.mxu0 0.0
  %785 = vmatpush1.msra.mxu0 %v60
  %786 = vmatprep.subr.mxu0 0.0
  %787 = vmatpush1.msra.mxu0 %v61
  %788 = vmatprep.subr.mxu0 0.0
  %789 = vmatpush1.msra.mxu0 %v62
  %790 = vmatprep.subr.mxu0 0.0
  %791 = vmatpush1.msra.mxu0 %v63
  %792 = vmatprep.subr.mxu0 0.0
  %793 = vmatpush1.msra.mxu0 %v64
  %794 = vmatprep.subr.mxu0 0.0
  %795 = vmatpush1.msra.mxu0 %v65
  %796 = vmatprep.subr.mxu0 0.0
  %797 = vmatpush1.msra.mxu0 %v66
  %798 = vmatprep.subr.mxu0 0.0
  %799 = vmatpush1.msra.mxu0 %v67
  %800 = vmatprep.subr.mxu0 0.0
  %801 = vmatpush1.msra.mxu0 %v68
  %802 = vmatprep.subr.mxu0 0.0
  %803 = vmatpush1.msra.mxu0 %v69
  %804 = vmatprep.subr.mxu0 0.0
  %805 = vmatpush1.msra.mxu0 %v70
  %806 = vmatprep.subr.mxu0 0.0
  %807 = vmatpush1.msra.mxu0 %v71
  %808 = vmatprep.subr.mxu0 0.0
  %809 = vmatpush1.msra.mxu0 %v72
  %810 = vmatprep.subr.mxu0 0.0
  %811 = vmatpush1.msra.mxu0 %v73
  %812 = vmatprep.subr.mxu0 0.0
  %813 = vmatpush1.msra.mxu0 %v74
  %814 = vmatprep.subr.mxu0 0.0
  %815 = vmatpush1.msra.mxu0 %v75
  %816 = vmatprep.subr.mxu0 0.0
  %817 = vmatpush1.msra.mxu0 %v76
  %818 = vmatprep.subr.mxu0 0.0
  %819 = vmatpush1.msra.mxu0 %v77
  %820 = vmatprep.mubr.f32.mxu0 %v589
  %821 = vmatmul.mubr.f32.gmra.mrb[0].mxu0 %v588
  %v822 = vpop.f32.mrb[0].mxu0
  %v823 = vadd.f32 %v723, %v822
  %v824 = vpop.f32.mrb[0].mxu0
  %825 = vmatprep.mubr.f32.mxu0 %v596
  %826 = vmatmul.mubr.f32.gmra.mrb[0].mxu0 %v595
  %v827 = vpop.f32.mrb[0].mxu0
  %v828 = vadd.f32 %v728, %v827
  %v829 = vpop.f32.mrb[0].mxu0
  %830 = vmatprep.mubr.f32.mxu0 %v603
  %831 = vmatmul.mubr.f32.gmra.mrb[0].mxu0 %v602
  %v832 = vpop.f32.mrb[0].mxu0
  %v833 = vadd.f32 %v733, %v832
  %v834 = vpop.f32.mrb[0].mxu0
  %835 = vmatprep.mubr.f32.mxu0 %v610
  %836 = vmatmul.mubr.f32.gmra.mrb[0].mxu0 %v609
  %v837 = vpop.f32.mrb[0].mxu0
  %v838 = vadd.f32 %v738, %v837
  %v839 = vpop.f32.mrb[0].mxu0
  %840 = vmatprep.mubr.f32.mxu0 %v617
  %841 = vmatmul.mubr.f32.gmra.mrb[0].mxu0 %v616
  %v842 = vpop.f32.mrb[0].mxu0
  %v843 = vadd.f32 %v743, %v842
  %v844 = vpop.f32.mrb[0].mxu0
  %845 = vmatprep.mubr.f32.mxu0 %v624
  %846 = vmatmul.mubr.f32.gmra.mrb[0].mxu0 %v623
  %v847 = vpop.f32.mrb[0].mxu0
  %v848 = vadd.f32 %v748, %v847
  %v849 = vpop.f32.mrb[0].mxu0
  %850 = vmatprep.mubr.f32.mxu0 %v631
  %851 = vmatmul.mubr.f32.gmra.mrb[0].mxu0 %v630
  %v852 = vpop.f32.mrb[0].mxu0
  %v853 = vadd.f32 %v753, %v852
  %v854 = vpop.f32.mrb[0].mxu0
  %855 = vdwg.mxu0
  %856 = vmatprep.subr.mxu0 0.0
  %857 = vmatpush1.msra.mxu0 %v78
  %858 = vmatprep.subr.mxu0 0.0
  %859 = vmatpush1.msra.mxu0 %v79
  %860 = vmatprep.subr.mxu0 0.0
  %861 = vmatpush1.msra.mxu0 %v80
  %862 = vmatprep.subr.mxu0 0.0
  %863 = vmatpush1.msra.mxu0 %v81
  %864 = vmatprep.subr.mxu0 0.0
  %865 = vmatpush1.msra.mxu0 %v82
  %866 = vmatprep.subr.mxu0 0.0
  %867 = vmatpush1.msra.mxu0 %v83
  %868 = vmatprep.subr.mxu0 0.0
  %869 = vmatpush1.msra.mxu0 %v84
  %870 = vmatprep.subr.mxu0 0.0
  %871 = vmatpush1.msra.mxu0 %v85
  %872 = vmatprep.subr.mxu0 0.0
  %873 = vmatpush1.msra.mxu0 %v86
  %874 = vmatprep.subr.mxu0 0.0
  %875 = vmatpush1.msra.mxu0 %v87
  %876 = vmatprep.subr.mxu0 0.0
  %877 = vmatpush1.msra.mxu0 %v88
  %878 = vmatprep.subr.mxu0 0.0
  %879 = vmatpush1.msra.mxu0 %v89
  %880 = vmatprep.subr.mxu0 0.0
  %881 = vmatpush1.msra.mxu0 %v90
  %882 = vmatprep.subr.mxu0 0.0
  %883 = vmatpush1.msra.mxu0 %v91
  %884 = vmatprep.subr.mxu0 0.0
  %885 = vmatpush1.msra.mxu0 %v92
  %886 = vmatprep.subr.mxu0 0.0
  %887 = vmatpush1.msra.mxu0 %v93
  %888 = vmatprep.subr.mxu0 0.0
  %889 = vmatpush1.msra.mxu0 %v94
  %890 = vmatprep.subr.mxu0 0.0
  %891 = vmatpush1.msra.mxu0 %v95
  %892 = vmatprep.subr.mxu0 0.0
  %893 = vmatpush1.msra.mxu0 %v96
  %894 = vmatprep.subr.mxu0 0.0
  %895 = vmatpush1.msra.mxu0 %v97
  %896 = vmatprep.subr.mxu0 0.0
  %897 = vmatpush1.msra.mxu0 %v98
  %898 = vmatprep.subr.mxu0 0.0
  %899 = vmatpush1.msra.mxu0 %v99
  %900 = vmatprep.subr.mxu0 0.0
  %901 = vmatpush1.msra.mxu0 %v100
  %902 = vmatprep.subr.mxu0 0.0
  %903 = vmatpush1.msra.mxu0 %v101
  %904 = vmatprep.subr.mxu0 0.0
  %905 = vmatpush1.msra.mxu0 %v102
  %906 = vmatprep.subr.mxu0 0.0
  %907 = vmatpush1.msra.mxu0 %v103
  %908 = vmatprep.subr.mxu0 0.0
  %909 = vmatpush1.msra.mxu0 %v104
  %910 = vmatprep.subr.mxu0 0.0
  %911 = vmatpush1.msra.mxu0 %v105
  %912 = vmatprep.subr.mxu0 0.0
  %913 = vmatpush1.msra.mxu0 %v106
  %914 = vmatprep.subr.mxu0 0.0
  %915 = vmatpush1.msra.mxu0 %v107
  %916 = vmatprep.subr.mxu0 0.0
  %917 = vmatpush1.msra.mxu0 %v108
  %918 = vmatprep.subr.mxu0 0.0
  %919 = vmatpush1.msra.mxu0 %v109
  %920 = vmatprep.mubr.f32.mxu0 %v591
  %921 = vmatmul.mubr.f32.gmra.mrb[0].mxu0 %v590
  %v922 = vpop.f32.mrb[0].mxu0
  %v923 = vadd.f32 %v823, %v922
  %v924 = vpop.f32.mrb[0].mxu0
  %925 = vmatprep.mubr.f32.mxu0 %v598
  %926 = vmatmul.mubr.f32.gmra.mrb[0].mxu0 %v597
  %v927 = vpop.f32.mrb[0].mxu0
  %v928 = vadd.f32 %v828, %v927
  %v929 = vpop.f32.mrb[0].mxu0
  %930 = vmatprep.mubr.f32.mxu0 %v605
  %931 = vmatmul.mubr.f32.gmra.mrb[0].mxu0 %v604
  %v932 = vpop.f32.mrb[0].mxu0
  %v933 = vadd.f32 %v833, %v932
  %v934 = vpop.f32.mrb[0].mxu0
  %935 = vmatprep.mubr.f32.mxu0 %v612
  %936 = vmatmul.mubr.f32.gmra.mrb[0].mxu0 %v611
  %v937 = vpop.f32.mrb[0].mxu0
  %v938 = vadd.f32 %v838, %v937
  %v939 = vpop.f32.mrb[0].mxu0
  %940 = vmatprep.mubr.f32.mxu0 %v619
  %941 = vmatmul.mubr.f32.gmra.mrb[0].mxu0 %v618
  %v942 = vpop.f32.mrb[0].mxu0
  %v943 = vadd.f32 %v843, %v942
  %v944 = vpop.f32.mrb[0].mxu0
  %945 = vmatprep.mubr.f32.mxu0 %v626
  %946 = vmatmul.mubr.f32.gmra.mrb[0].mxu0 %v625
  %v947 = vpop.f32.mrb[0].mxu0
  %v948 = vadd.f32 %v848, %v947
  %v949 = vpop.f32.mrb[0].mxu0
  %950 = vmatprep.mubr.f32.mxu0 %v633
  %951 = vmatmul.mubr.f32.gmra.mrb[0].mxu0 %v632
  %v952 = vpop.f32.mrb[0].mxu0
  %v953 = vadd.f32 %v853, %v952
  %v954 = vpop.f32.mrb[0].mxu0
  %955 = vdwg.mxu0
  %956 = vmatprep.subr.mxu0 0.0
  %957 = vmatpush1.msra.mxu0 %v110
  %958 = vmatprep.subr.mxu0 0.0
  %959 = vmatpush1.msra.mxu0 %v111
  %960 = vmatprep.subr.mxu0 0.0
  %961 = vmatpush1.msra.mxu0 %v112
  %962 = vmatprep.subr.mxu0 0.0
  %963 = vmatpush1.msra.mxu0 %v113
  %964 = vmatprep.subr.mxu0 0.0
  %965 = vmatpush1.msra.mxu0 0.0
  %966 = vmatprep.subr.mxu0 0.0
  %967 = vmatpush1.msra.mxu0 0.0
  %968 = vmatprep.subr.mxu0 0.0
  %969 = vmatpush1.msra.mxu0 0.0
  %970 = vmatprep.subr.mxu0 0.0
  %971 = vmatpush1.msra.mxu0 0.0
  %972 = vmatprep.subr.mxu0 0.0
  %973 = vmatpush1.msra.mxu0 0.0
  %974 = vmatprep.subr.mxu0 0.0
  %975 = vmatpush1.msra.mxu0 0.0
  %976 = vmatprep.subr.mxu0 0.0
  %977 = vmatpush1.msra.mxu0 0.0
  %978 = vmatprep.subr.mxu0 0.0
  %979 = vmatpush1.msra.mxu0 0.0
  %980 = vmatprep.subr.mxu0 0.0
  %981 = vmatpush1.msra.mxu0 0.0
  %982 = vmatprep.subr.mxu0 0.0
  %983 = vmatpush1.msra.mxu0 0.0
  %984 = vmatprep.subr.mxu0 0.0
  %985 = vmatpush1.msra.mxu0 0.0
  %986 = vmatprep.subr.mxu0 0.0
  %987 = vmatpush1.msra.mxu0 0.0
  %988 = vmatprep.subr.mxu0 0.0
  %989 = vmatpush1.msra.mxu0 0.0
  %990 = vmatprep.subr.mxu0 0.0
  %991 = vmatpush1.msra.mxu0 0.0
  %992 = vmatprep.subr.mxu0 0.0
  %993 = vmatpush1.msra.mxu0 0.0
  %994 = vmatprep.subr.mxu0 0.0
  %995 = vmatpush1.msra.mxu0 0.0
  %996 = vmatprep.subr.mxu0 0.0
  %997 = vmatpush1.msra.mxu0 0.0
  %998 = vmatprep.subr.mxu0 0.0
  %999 = vmatpush1.msra.mxu0 0.0
  %1000 = vmatprep.subr.mxu0 0.0
  %1001 = vmatpush1.msra.mxu0 0.0
  %1002 = vmatprep.subr.mxu0 0.0
  %1003 = vmatpush1.msra.mxu0 0.0
  %1004 = vmatprep.subr.mxu0 0.0
  %1005 = vmatpush1.msra.mxu0 0.0
  %1006 = vmatprep.subr.mxu0 0.0
  %1007 = vmatpush1.msra.mxu0 0.0
  %1008 = vmatprep.subr.mxu0 0.0
  %1009 = vmatpush1.msra.mxu0 0.0
  %1010 = vmatprep.subr.mxu0 0.0
  %1011 = vmatpush1.msra.mxu0 0.0
  %1012 = vmatprep.subr.mxu0 0.0
  %1013 = vmatpush1.msra.mxu0 0.0
  %1014 = vmatprep.subr.mxu0 0.0
  %1015 = vmatpush1.msra.mxu0 0.0
  %1016 = vmatprep.subr.mxu0 0.0
  %1017 = vmatpush1.msra.mxu0 0.0
  %1018 = vmatprep.subr.mxu0 0.0
  %1019 = vmatpush1.msra.mxu0 0.0
  %1020 = vmatprep.mubr.f32.mxu0 0.0
  %1021 = vmatmul.mubr.f32.gmra.mrb[0].mxu0 %v636
  %v1022 = vpop.f32.mrb[0].mxu0
  %v1023 = vadd.f32 %v923, %v1022
  %v1024 = vpop.f32.mrb[0].mxu0
  %1025 = vmatprep.mubr.f32.mxu0 0.0
  %1026 = vmatmul.mubr.f32.gmra.mrb[0].mxu0 %v639
  %v1027 = vpop.f32.mrb[0].mxu0
  %v1028 = vadd.f32 %v928, %v1027
  %v1029 = vpop.f32.mrb[0].mxu0
  %1030 = vmatprep.mubr.f32.mxu0 0.0
  %1031 = vmatmul.mubr.f32.gmra.mrb[0].mxu0 %v642
  %v1032 = vpop.f32.mrb[0].mxu0
  %v1033 = vadd.f32 %v933, %v1032
  %v1034 = vpop.f32.mrb[0].mxu0
  %1035 = vmatprep.mubr.f32.mxu0 0.0
  %1036 = vmatmul.mubr.f32.gmra.mrb[0].mxu0 %v645
  %v1037 = vpop.f32.mrb[0].mxu0
  %v1038 = vadd.f32 %v938, %v1037
  %v1039 = vpop.f32.mrb[0].mxu0
  %1040 = vmatprep.mubr.f32.mxu0 0.0
  %1041 = vmatmul.mubr.f32.gmra.mrb[0].mxu0 %v648
  %v1042 = vpop.f32.mrb[0].mxu0
  %v1043 = vadd.f32 %v943, %v1042
  %v1044 = vpop.f32.mrb[0].mxu0
  %1045 = vmatprep.mubr.f32.mxu0 0.0
  %1046 = vmatmul.mubr.f32.gmra.mrb[0].mxu0 %v651
  %v1047 = vpop.f32.mrb[0].mxu0
  %v1048 = vadd.f32 %v948, %v1047
  %v1049 = vpop.f32.mrb[0].mxu0
  %1050 = vmatprep.mubr.f32.mxu0 0.0
  %1051 = vmatmul.mubr.f32.gmra.mrb[0].mxu0 %v654
  %v1052 = vpop.f32.mrb[0].mxu0
  %v1053 = vadd.f32 %v953, %v1052
  %v1054 = vpop.f32.mrb[0].mxu0
  %1055 = vdwg.mxu0
  %v1056 = vmax.f32 %v552, %v1023
  %v1057 = vmax.f32 %v557, %v1028
  %v1058 = vmax.f32 %v562, %v1033
  %v1059 = vmax.f32 %v567, %v1038
  %v1060 = vmax.f32 %v572, %v1043
  %v1061 = vmax.f32 %v577, %v1048
  %v1062 = vmax.f32 %v582, %v1053
  %s1063 = scalar_lea.vmem %s0, 784
  %v1064 = vld [vmem:[%s1063] sm:$0xff]
  %v1065 = vld [vmem:[%s1063 + $0x8] sm:$0xff]
  %v1066 = vld [vmem:[%s1063 + $0x10] sm:$0xff]
  %v1067 = vld [vmem:[%s1063 + $0x18] sm:$0xff]
  %v1068 = vld [vmem:[%s1063 + $0x20] sm:$0xff]
  %v1069 = vld [vmem:[%s1063 + $0x28] sm:$0xff]
  %v1070 = vld [vmem:[%s1063 + $0x30] sm:$0xff]
  %v1071 = vld [vmem:[%s1063 + $0x38] sm:$0xff]
  %v1072 = vld [vmem:[%s1063 + $0x40] sm:$0xff]
  %v1073 = vld [vmem:[%s1063 + $0x48] sm:$0xff]
  %v1074 = vld [vmem:[%s1063 + $0x50] sm:$0xff]
  %v1075 = vld [vmem:[%s1063 + $0x58] sm:$0xff]
  %v1076 = vld [vmem:[%s1063 + $0x60] sm:$0xff]
  %v1077 = vld [vmem:[%s1063 + $0x68] sm:$0xff]
  %v1078 = vld [vmem:[%s1063 + $0x70] sm:$0xff]
  %v1079 = vld [vmem:[%s1063 + $0x78] sm:$0xff]
  %v1080 = vld [vmem:[%s1063 + $0x80] sm:$0xff]
  %v1081 = vld [vmem:[%s1063 + $0x88] sm:$0xff]
  %v1082 = vld [vmem:[%s1063 + $0x90] sm:$0xff]
  %v1083 = vld [vmem:[%s1063 + $0x98] sm:$0xff]
  %v1084 = vld [vmem:[%s1063 + $0xa0] sm:$0xff]
  %v1085 = vld [vmem:[%s1063 + $0xa8] sm:$0xff]
  %v1086 = vld [vmem:[%s1063 + $0xb0] sm:$0xff]
  %v1087 = vld [vmem:[%s1063 + $0xb8] sm:$0xff]
  %v1088 = vld [vmem:[%s1063 + $0xc0] sm:$0xff]
  %v1089 = vld [vmem:[%s1063 + $0xc8] sm:$0xff]
  %v1090 = vld [vmem:[%s1063 + $0xd0] sm:$0xff]
  %v1091 = vld [vmem:[%s1063 + $0xd8] sm:$0xff]
  %v1092 = vld [vmem:[%s1063 + $0xe0] sm:$0xff]
  %v1093 = vld [vmem:[%s1063 + $0xe8] sm:$0xff]
  %v1094 = vld [vmem:[%s1063 + $0xf0] sm:$0xff]
  %v1095 = vld [vmem:[%s1063 + $0xf8] sm:$0xff]
  %v1096 = vld [vmem:[%s1063 + $0x100] sm:$0xff]
  %v1097 = vld [vmem:[%s1063 + $0x108] sm:$0xff]
  %v1098 = vld [vmem:[%s1063 + $0x110] sm:$0xff]
  %v1099 = vld [vmem:[%s1063 + $0x118] sm:$0xff]
  %v1100 = vld [vmem:[%s1063 + $0x120] sm:$0xff]
  %v1101 = vld [vmem:[%s1063 + $0x128] sm:$0xff]
  %v1102 = vld [vmem:[%s1063 + $0x130] sm:$0xff]
  %v1103 = vld [vmem:[%s1063 + $0x138] sm:$0xff]
  %v1104 = vld [vmem:[%s1063 + $0x140] sm:$0xff]
  %v1105 = vld [vmem:[%s1063 + $0x148] sm:$0xff]
  %v1106 = vld [vmem:[%s1063 + $0x150] sm:$0x3]
  %v1107 = vld [vmem:[%s1063 + $0x158] sm:$0x3]
  %v1108 = vld [vmem:[%s1063 + $0x160] sm:$0x3]
  %v1109 = vld [vmem:[%s1063 + $0x168] sm:$0x3]
  %v1110 = vld [vmem:[%s1063 + $0x170] sm:$0x3]
  %v1111 = vld [vmem:[%s1063 + $0x178] sm:$0x3]
  %v1112 = vld [vmem:[%s1063 + $0x180] sm:$0x3]
  %v1114 = vsel %vm163, %v1070, 0
  %v1117 = vsel %vm163, %v1077, 0
  %v1120 = vsel %vm163, %v1084, 0
  %v1123 = vsel %vm163, %v1091, 0
  %v1126 = vsel %vm163, %v1098, 0
  %v1129 = vsel %vm163, %v1105, 0
  %v1132 = vsel %vm163, %v1112, 0
  %1134 = vmatprep.subr.mxu0 0.0
  %1135 = vmatpush1.msra.mxu0 %v14
  %1136 = vmatprep.subr.mxu0 0.0
  %1137 = vmatpush1.msra.mxu0 %v15
  %1138 = vmatprep.subr.mxu0 0.0
  %1139 = vmatpush1.msra.mxu0 %v16
  %1140 = vmatprep.subr.mxu0 0.0
  %1141 = vmatpush1.msra.mxu0 %v17
  %1142 = vmatprep.subr.mxu0 0.0
  %1143 = vmatpush1.msra.mxu0 %v18
  %1144 = vmatprep.subr.mxu0 0.0
  %1145 = vmatpush1.msra.mxu0 %v19
  %1146 = vmatprep.subr.mxu0 0.0
  %1147 = vmatpush1.msra.mxu0 %v20
  %1148 = vmatprep.subr.mxu0 0.0
  %1149 = vmatpush1.msra.mxu0 %v21
  %1150 = vmatprep.subr.mxu0 0.0
  %1151 = vmatpush1.msra.mxu0 %v22
  %1152 = vmatprep.subr.mxu0 0.0
  %1153 = vmatpush1.msra.mxu0 %v23
  %1154 = vmatprep.subr.mxu0 0.0
  %1155 = vmatpush1.msra.mxu0 %v24
  %1156 = vmatprep.subr.mxu0 0.0
  %1157 = vmatpush1.msra.mxu0 %v25
  %1158 = vmatprep.subr.mxu0 0.0
  %1159 = vmatpush1.msra.mxu0 %v26
  %1160 = vmatprep.subr.mxu0 0.0
  %1161 = vmatpush1.msra.mxu0 %v27
  %1162 = vmatprep.subr.mxu0 0.0
  %1163 = vmatpush1.msra.mxu0 %v28
  %1164 = vmatprep.subr.mxu0 0.0
  %1165 = vmatpush1.msra.mxu0 %v29
  %1166 = vmatprep.subr.mxu0 0.0
  %1167 = vmatpush1.msra.mxu0 %v30
  %1168 = vmatprep.subr.mxu0 0.0
  %1169 = vmatpush1.msra.mxu0 %v31
  %1170 = vmatprep.subr.mxu0 0.0
  %1171 = vmatpush1.msra.mxu0 %v32
  %1172 = vmatprep.subr.mxu0 0.0
  %1173 = vmatpush1.msra.mxu0 %v33
  %1174 = vmatprep.subr.mxu0 0.0
  %1175 = vmatpush1.msra.mxu0 %v34
  %1176 = vmatprep.subr.mxu0 0.0
  %1177 = vmatpush1.msra.mxu0 %v35
  %1178 = vmatprep.subr.mxu0 0.0
  %1179 = vmatpush1.msra.mxu0 %v36
  %1180 = vmatprep.subr.mxu0 0.0
  %1181 = vmatpush1.msra.mxu0 %v37
  %1182 = vmatprep.subr.mxu0 0.0
  %1183 = vmatpush1.msra.mxu0 %v38
  %1184 = vmatprep.subr.mxu0 0.0
  %1185 = vmatpush1.msra.mxu0 %v39
  %1186 = vmatprep.subr.mxu0 0.0
  %1187 = vmatpush1.msra.mxu0 %v40
  %1188 = vmatprep.subr.mxu0 0.0
  %1189 = vmatpush1.msra.mxu0 %v41
  %1190 = vmatprep.subr.mxu0 0.0
  %1191 = vmatpush1.msra.mxu0 %v42
  %1192 = vmatprep.subr.mxu0 0.0
  %1193 = vmatpush1.msra.mxu0 %v43
  %1194 = vmatprep.subr.mxu0 0.0
  %1195 = vmatpush1.msra.mxu0 %v44
  %1196 = vmatprep.subr.mxu0 0.0
  %1197 = vmatpush1.msra.mxu0 %v45
  %1198 = vmatprep.mubr.f32.mxu0 %v1065
  %1199 = vmatmul.mubr.f32.gmra.mrb[0].mxu0 %v1064
  %v1200 = vpop.f32.mrb[0].mxu0
  %v1201 = vadd.f32 0.0, %v1200
  %v1202 = vpop.f32.mrb[0].mxu0
  %1203 = vmatprep.mubr.f32.mxu0 %v1072
  %1204 = vmatmul.mubr.f32.gmra.mrb[0].mxu0 %v1071
  %v1205 = vpop.f32.mrb[0].mxu0
  %v1206 = vadd.f32 0.0, %v1205
  %v1207 = vpop.f32.mrb[0].mxu0
  %1208 = vmatprep.mubr.f32.mxu0 %v1079
  %1209 = vmatmul.mubr.f32.gmra.mrb[0].mxu0 %v1078
  %v1210 = vpop.f32.mrb[0].mxu0
  %v1211 = vadd.f32 0.0, %v1210
  %v1212 = vpop.f32.mrb[0].mxu0
  %1213 = vmatprep.mubr.f32.mxu0 %v1086
  %1214 = vmatmul.mubr.f32.gmra.mrb[0].mxu0 %v1085
  %v1215 = vpop.f32.mrb[0].mxu0
  %v1216 = vadd.f32 0.0, %v1215
  %v1217 = vpop.f32.mrb[0].mxu0
  %1218 = vmatprep.mubr.f32.mxu0 %v1093
  %1219 = vmatmul.mubr.f32.gmra.mrb[0].mxu0 %v1092
  %v1220 = vpop.f32.mrb[0].mxu0
  %v1221 = vadd.f32 0.0, %v1220
  %v1222 = vpop.f32.mrb[0].mxu0
  %1223 = vmatprep.mubr.f32.mxu0 %v1100
  %1224 = vmatmul.mubr.f32.gmra.mrb[0].mxu0 %v1099
  %v1225 = vpop.f32.mrb[0].mxu0
  %v1226 = vadd.f32 0.0, %v1225
  %v1227 = vpop.f32.mrb[0].mxu0
  %1228 = vmatprep.mubr.f32.mxu0 %v1107
  %1229 = vmatmul.mubr.f32.gmra.mrb[0].mxu0 %v1106
  %v1230 = vpop.f32.mrb[0].mxu0
  %v1231 = vadd.f32 0.0, %v1230
  %v1232 = vpop.f32.mrb[0].mxu0
  %1233 = vdwg.mxu0
  %1234 = vmatprep.subr.mxu0 0.0
  %1235 = vmatpush1.msra.mxu0 %v46
  %1236 = vmatprep.subr.mxu0 0.0
  %1237 = vmatpush1.msra.mxu0 %v47
  %1238 = vmatprep.subr.mxu0 0.0
  %1239 = vmatpush1.msra.mxu0 %v48
  %1240 = vmatprep.subr.mxu0 0.0
  %1241 = vmatpush1.msra.mxu0 %v49
  %1242 = vmatprep.subr.mxu0 0.0
  %1243 = vmatpush1.msra.mxu0 %v50
  %1244 = vmatprep.subr.mxu0 0.0
  %1245 = vmatpush1.msra.mxu0 %v51
  %1246 = vmatprep.subr.mxu0 0.0
  %1247 = vmatpush1.msra.mxu0 %v52
  %1248 = vmatprep.subr.mxu0 0.0
  %1249 = vmatpush1.msra.mxu0 %v53
  %1250 = vmatprep.subr.mxu0 0.0
  %1251 = vmatpush1.msra.mxu0 %v54
  %1252 = vmatprep.subr.mxu0 0.0
  %1253 = vmatpush1.msra.mxu0 %v55
  %1254 = vmatprep.subr.mxu0 0.0
  %1255 = vmatpush1.msra.mxu0 %v56
  %1256 = vmatprep.subr.mxu0 0.0
  %1257 = vmatpush1.msra.mxu0 %v57
  %1258 = vmatprep.subr.mxu0 0.0
  %1259 = vmatpush1.msra.mxu0 %v58
  %1260 = vmatprep.subr.mxu0 0.0
  %1261 = vmatpush1.msra.mxu0 %v59
  %1262 = vmatprep.subr.mxu0 0.0
  %1263 = vmatpush1.msra.mxu0 %v60
  %1264 = vmatprep.subr.mxu0 0.0
  %1265 = vmatpush1.msra.mxu0 %v61
  %1266 = vmatprep.subr.mxu0 0.0
  %1267 = vmatpush1.msra.mxu0 %v62
  %1268 = vmatprep.subr.mxu0 0.0
  %1269 = vmatpush1.msra.mxu0 %v63
  %1270 = vmatprep.subr.mxu0 0.0
  %1271 = vmatpush1.msra.mxu0 %v64
  %1272 = vmatprep.subr.mxu0 0.0
  %1273 = vmatpush1.msra.mxu0 %v65
  %1274 = vmatprep.subr.mxu0 0.0
  %1275 = vmatpush1.msra.mxu0 %v66
  %1276 = vmatprep.subr.mxu0 0.0
  %1277 = vmatpush1.msra.mxu0 %v67
  %1278 = vmatprep.subr.mxu0 0.0
  %1279 = vmatpush1.msra.mxu0 %v68
  %1280 = vmatprep.subr.mxu0 0.0
  %1281 = vmatpush1.msra.mxu0 %v69
  %1282 = vmatprep.subr.mxu0 0.0
  %1283 = vmatpush1.msra.mxu0 %v70
  %1284 = vmatprep.subr.mxu0 0.0
  %1285 = vmatpush1.msra.mxu0 %v71
  %1286 = vmatprep.subr.mxu0 0.0
  %1287 = vmatpush1.msra.mxu0 %v72
  %1288 = vmatprep.subr.mxu0 0.0
  %1289 = vmatpush1.msra.mxu0 %v73
  %1290 = vmatprep.subr.mxu0 0.0
  %1291 = vmatpush1.msra.mxu0 %v74
  %1292 = vmatprep.subr.mxu0 0.0
  %1293 = vmatpush1.msra.mxu0 %v75
  %1294 = vmatprep.subr.mxu0 0.0
  %1295 = vmatpush1.msra.mxu0 %v76
  %1296 = vmatprep.subr.mxu0 0.0
  %1297 = vmatpush1.msra.mxu0 %v77
  %1298 = vmatprep.mubr.f32.mxu0 %v1067
  %1299 = vmatmul.mubr.f32.gmra.mrb[0].mxu0 %v1066
  %v1300 = vpop.f32.mrb[0].mxu0
  %v1301 = vadd.f32 %v1201, %v1300
  %v1302 = vpop.f32.mrb[0].mxu0
  %1303 = vmatprep.mubr.f32.mxu0 %v1074
  %1304 = vmatmul.mubr.f32.gmra.mrb[0].mxu0 %v1073
  %v1305 = vpop.f32.mrb[0].mxu0
  %v1306 = vadd.f32 %v1206, %v1305
  %v1307 = vpop.f32.mrb[0].mxu0
  %1308 = vmatprep.mubr.f32.mxu0 %v1081
  %1309 = vmatmul.mubr.f32.gmra.mrb[0].mxu0 %v1080
  %v1310 = vpop.f32.mrb[0].mxu0
  %v1311 = vadd.f32 %v1211, %v1310
  %v1312 = vpop.f32.mrb[0].mxu0
  %1313 = vmatprep.mubr.f32.mxu0 %v1088
  %1314 = vmatmul.mubr.f32.gmra.mrb[0].mxu0 %v1087
  %v1315 = vpop.f32.mrb[0].mxu0
  %v1316 = vadd.f32 %v1216, %v1315
  %v1317 = vpop.f32.mrb[0].mxu0
  %1318 = vmatprep.mubr.f32.mxu0 %v1095
  %1319 = vmatmul.mubr.f32.gmra.mrb[0].mxu0 %v1094
  %v1320 = vpop.f32.mrb[0].mxu0
  %v1321 = vadd.f32 %v1221, %v1320
  %v1322 = vpop.f32.mrb[0].mxu0
  %1323 = vmatprep.mubr.f32.mxu0 %v1102
  %1324 = vmatmul.mubr.f32.gmra.mrb[0].mxu0 %v1101
  %v1325 = vpop.f32.mrb[0].mxu0
  %v1326 = vadd.f32 %v1226, %v1325
  %v1327 = vpop.f32.mrb[0].mxu0
  %1328 = vmatprep.mubr.f32.mxu0 %v1109
  %1329 = vmatmul.mubr.f32.gmra.mrb[0].mxu0 %v1108
  %v1330 = vpop.f32.mrb[0].mxu0
  %v1331 = vadd.f32 %v1231, %v1330
  %v1332 = vpop.f32.mrb[0].mxu0
  %1333 = vdwg.mxu0
  %1334 = vmatprep.subr.mxu0 0.0
  %1335 = vmatpush1.msra.mxu0 %v78
  %1336 = vmatprep.subr.mxu0 0.0
  %1337 = vmatpush1.msra.mxu0 %v79
  %1338 = vmatprep.subr.mxu0 0.0
  %1339 = vmatpush1.msra.mxu0 %v80
  %1340 = vmatprep.subr.mxu0 0.0
  %1341 = vmatpush1.msra.mxu0 %v81
  %1342 = vmatprep.subr.mxu0 0.0
  %1343 = vmatpush1.msra.mxu0 %v82
  %1344 = vmatprep.subr.mxu0 0.0
  %1345 = vmatpush1.msra.mxu0 %v83
  %1346 = vmatprep.subr.mxu0 0.0
  %1347 = vmatpush1.msra.mxu0 %v84
  %1348 = vmatprep.subr.mxu0 0.0
  %1349 = vmatpush1.msra.mxu0 %v85
  %1350 = vmatprep.subr.mxu0 0.0
  %1351 = vmatpush1.msra.mxu0 %v86
  %1352 = vmatprep.subr.mxu0 0.0
  %1353 = vmatpush1.msra.mxu0 %v87
  %1354 = vmatprep.subr.mxu0 0.0
  %1355 = vmatpush1.msra.mxu0 %v88
  %1356 = vmatprep.subr.mxu0 0.0
  %1357 = vmatpush1.msra.mxu0 %v89
  %1358 = vmatprep.subr.mxu0 0.0
  %1359 = vmatpush1.msra.mxu0 %v90
  %1360 = vmatprep.subr.mxu0 0.0
  %1361 = vmatpush1.msra.mxu0 %v91
  %1362 = vmatprep.subr.mxu0 0.0
  %1363 = vmatpush1.msra.mxu0 %v92
  %1364 = vmatprep.subr.mxu0 0.0
  %1365 = vmatpush1.msra.mxu0 %v93
  %1366 = vmatprep.subr.mxu0 0.0
  %1367 = vmatpush1.msra.mxu0 %v94
  %1368 = vmatprep.subr.mxu0 0.0
  %1369 = vmatpush1.msra.mxu0 %v95
  %1370 = vmatprep.subr.mxu0 0.0
  %1371 = vmatpush1.msra.mxu0 %v96
  %1372 = vmatprep.subr.mxu0 0.0
  %1373 = vmatpush1.msra.mxu0 %v97
  %1374 = vmatprep.subr.mxu0 0.0
  %1375 = vmatpush1.msra.mxu0 %v98
  %1376 = vmatprep.subr.mxu0 0.0
  %1377 = vmatpush1.msra.mxu0 %v99
  %1378 = vmatprep.subr.mxu0 0.0
  %1379 = vmatpush1.msra.mxu0 %v100
  %1380 = vmatprep.subr.mxu0 0.0
  %1381 = vmatpush1.msra.mxu0 %v101
  %1382 = vmatprep.subr.mxu0 0.0
  %1383 = vmatpush1.msra.mxu0 %v102
  %1384 = vmatprep.subr.mxu0 0.0
  %1385 = vmatpush1.msra.mxu0 %v103
  %1386 = vmatprep.subr.mxu0 0.0
  %1387 = vmatpush1.msra.mxu0 %v104
  %1388 = vmatprep.subr.mxu0 0.0
  %1389 = vmatpush1.msra.mxu0 %v105
  %1390 = vmatprep.subr.mxu0 0.0
  %1391 = vmatpush1.msra.mxu0 %v106
  %1392 = vmatprep.subr.mxu0 0.0
  %1393 = vmatpush1.msra.mxu0 %v107
  %1394 = vmatprep.subr.mxu0 0.0
  %1395 = vmatpush1.msra.mxu0 %v108
  %1396 = vmatprep.subr.mxu0 0.0
  %1397 = vmatpush1.msra.mxu0 %v109
  %1398 = vmatprep.mubr.f32.mxu0 %v1069
  %1399 = vmatmul.mubr.f32.gmra.mrb[0].mxu0 %v1068
  %v1400 = vpop.f32.mrb[0].mxu0
  %v1401 = vadd.f32 %v1301, %v1400
  %v1402 = vpop.f32.mrb[0].mxu0
  %1403 = vmatprep.mubr.f32.mxu0 %v1076
  %1404 = vmatmul.mubr.f32.gmra.mrb[0].mxu0 %v1075
  %v1405 = vpop.f32.mrb[0].mxu0
  %v1406 = vadd.f32 %v1306, %v1405
  %v1407 = vpop.f32.mrb[0].mxu0
  %1408 = vmatprep.mubr.f32.mxu0 %v1083
  %1409 = vmatmul.mubr.f32.gmra.mrb[0].mxu0 %v1082
  %v1410 = vpop.f32.mrb[0].mxu0
  %v1411 = vadd.f32 %v1311, %v1410
  %v1412 = vpop.f32.mrb[0].mxu0
  %1413 = vmatprep.mubr.f32.mxu0 %v1090
  %1414 = vmatmul.mubr.f32.gmra.mrb[0].mxu0 %v1089
  %v1415 = vpop.f32.mrb[0].mxu0
  %v1416 = vadd.f32 %v1316, %v1415
  %v1417 = vpop.f32.mrb[0].mxu0
  %1418 = vmatprep.mubr.f32.mxu0 %v1097
  %1419 = vmatmul.mubr.f32.gmra.mrb[0].mxu0 %v1096
  %v1420 = vpop.f32.mrb[0].mxu0
  %v1421 = vadd.f32 %v1321, %v1420
  %v1422 = vpop.f32.mrb[0].mxu0
  %1423 = vmatprep.mubr.f32.mxu0 %v1104
  %1424 = vmatmul.mubr.f32.gmra.mrb[0].mxu0 %v1103
  %v1425 = vpop.f32.mrb[0].mxu0
  %v1426 = vadd.f32 %v1326, %v1425
  %v1427 = vpop.f32.mrb[0].mxu0
  %1428 = vmatprep.mubr.f32.mxu0 %v1111
  %1429 = vmatmul.mubr.f32.gmra.mrb[0].mxu0 %v1110
  %v1430 = vpop.f32.mrb[0].mxu0
  %v1431 = vadd.f32 %v1331, %v1430
  %v1432 = vpop.f32.mrb[0].mxu0
  %1433 = vdwg.mxu0
  %1434 = vmatprep.subr.mxu0 0.0
  %1435 = vmatpush1.msra.mxu0 %v110
  %1436 = vmatprep.subr.mxu0 0.0
  %1437 = vmatpush1.msra.mxu0 %v111
  %1438 = vmatprep.subr.mxu0 0.0
  %1439 = vmatpush1.msra.mxu0 %v112
  %1440 = vmatprep.subr.mxu0 0.0
  %1441 = vmatpush1.msra.mxu0 %v113
  %1442 = vmatprep.subr.mxu0 0.0
  %1443 = vmatpush1.msra.mxu0 0.0
  %1444 = vmatprep.subr.mxu0 0.0
  %1445 = vmatpush1.msra.mxu0 0.0
  %1446 = vmatprep.subr.mxu0 0.0
  %1447 = vmatpush1.msra.mxu0 0.0
  %1448 = vmatprep.subr.mxu0 0.0
  %1449 = vmatpush1.msra.mxu0 0.0
  %1450 = vmatprep.subr.mxu0 0.0
  %1451 = vmatpush1.msra.mxu0 0.0
  %1452 = vmatprep.subr.mxu0 0.0
  %1453 = vmatpush1.msra.mxu0 0.0
  %1454 = vmatprep.subr.mxu0 0.0
  %1455 = vmatpush1.msra.mxu0 0.0
  %1456 = vmatprep.subr.mxu0 0.0
  %1457 = vmatpush1.msra.mxu0 0.0
  %1458 = vmatprep.subr.mxu0 0.0
  %1459 = vmatpush1.msra.mxu0 0.0
  %1460 = vmatprep.subr.mxu0 0.0
  %1461 = vmatpush1.msra.mxu0 0.0
  %1462 = vmatprep.subr.mxu0 0.0
  %1463 = vmatpush1.msra.mxu0 0.0
  %1464 = vmatprep.subr.mxu0 0.0
  %1465 = vmatpush1.msra.mxu0 0.0
  %1466 = vmatprep.subr.mxu0 0.0
  %1467 = vmatpush1.msra.mxu0 0.0
  %1468 = vmatprep.subr.mxu0 0.0
  %1469 = vmatpush1.msra.mxu0 0.0
  %1470 = vmatprep.subr.mxu0 0.0
  %1471 = vmatpush1.msra.mxu0 0.0
  %1472 = vmatprep.subr.mxu0 0.0
  %1473 = vmatpush1.msra.mxu0 0.0
  %1474 = vmatprep.subr.mxu0 0.0
  %1475 = vmatpush1.msra.mxu0 0.0
  %1476 = vmatprep.subr.mxu0 0.0
  %1477 = vmatpush1.msra.mxu0 0.0
  %1478 = vmatprep.subr.mxu0 0.0
  %1479 = vmatpush1.msra.mxu0 0.0
  %1480 = vmatprep.subr.mxu0 0.0
  %1481 = vmatpush1.msra.mxu0 0.0
  %1482 = vmatprep.subr.mxu0 0.0
  %1483 = vmatpush1.msra.mxu0 0.0
  %1484 = vmatprep.subr.mxu0 0.0
  %1485 = vmatpush1.msra.mxu0 0.0
  %1486 = vmatprep.subr.mxu0 0.0
  %1487 = vmatpush1.msra.mxu0 0.0
  %1488 = vmatprep.subr.mxu0 0.0
  %1489 = vmatpush1.msra.mxu0 0.0
  %1490 = vmatprep.subr.mxu0 0.0
  %1491 = vmatpush1.msra.mxu0 0.0
  %1492 = vmatprep.subr.mxu0 0.0
  %1493 = vmatpush1.msra.mxu0 0.0
  %1494 = vmatprep.subr.mxu0 0.0
  %1495 = vmatpush1.msra.mxu0 0.0
  %1496 = vmatprep.subr.mxu0 0.0
  %1497 = vmatpush1.msra.mxu0 0.0
  %1498 = vmatprep.mubr.f32.mxu0 0.0
  %1499 = vmatmul.mubr.f32.gmra.mrb[0].mxu0 %v1114
  %v1500 = vpop.f32.mrb[0].mxu0
  %v1501 = vadd.f32 %v1401, %v1500
  %v1502 = vpop.f32.mrb[0].mxu0
  %1503 = vmatprep.mubr.f32.mxu0 0.0
  %1504 = vmatmul.mubr.f32.gmra.mrb[0].mxu0 %v1117
  %v1505 = vpop.f32.mrb[0].mxu0
  %v1506 = vadd.f32 %v1406, %v1505
  %v1507 = vpop.f32.mrb[0].mxu0
  %1508 = vmatprep.mubr.f32.mxu0 0.0
  %1509 = vmatmul.mubr.f32.gmra.mrb[0].mxu0 %v1120
  %v1510 = vpop.f32.mrb[0].mxu0
  %v1511 = vadd.f32 %v1411, %v1510
  %v1512 = vpop.f32.mrb[0].mxu0
  %1513 = vmatprep.mubr.f32.mxu0 0.0
  %1514 = vmatmul.mubr.f32.gmra.mrb[0].mxu0 %v1123
  %v1515 = vpop.f32.mrb[0].mxu0
  %v1516 = vadd.f32 %v1416, %v1515
  %v1517 = vpop.f32.mrb[0].mxu0
  %1518 = vmatprep.mubr.f32.mxu0 0.0
  %1519 = vmatmul.mubr.f32.gmra.mrb[0].mxu0 %v1126
  %v1520 = vpop.f32.mrb[0].mxu0
  %v1521 = vadd.f32 %v1421, %v1520
  %v1522 = vpop.f32.mrb[0].mxu0
  %1523 = vmatprep.mubr.f32.mxu0 0.0
  %1524 = vmatmul.mubr.f32.gmra.mrb[0].mxu0 %v1129
  %v1525 = vpop.f32.mrb[0].mxu0
  %v1526 = vadd.f32 %v1426, %v1525
  %v1527 = vpop.f32.mrb[0].mxu0
  %1528 = vmatprep.mubr.f32.mxu0 0.0
  %1529 = vmatmul.mubr.f32.gmra.mrb[0].mxu0 %v1132
  %v1530 = vpop.f32.mrb[0].mxu0
  %v1531 = vadd.f32 %v1431, %v1530
  %v1532 = vpop.f32.mrb[0].mxu0
  %1533 = vdwg.mxu0
  %v1534 = vmax.f32 %v1056, %v1501
  %v1535 = vmax.f32 %v1057, %v1506
  %v1536 = vmax.f32 %v1058, %v1511
  %v1537 = vmax.f32 %v1059, %v1516
  %v1538 = vmax.f32 %v1060, %v1521
  %v1539 = vmax.f32 %v1061, %v1526
  %v1540 = vmax.f32 %v1062, %v1531
  %s1541 = scalar_lea.vmem %s0, 1176
  %v1542 = vld [vmem:[%s1541] sm:$0xff]
  %v1543 = vld [vmem:[%s1541 + $0x8] sm:$0xff]
  %v1544 = vld [vmem:[%s1541 + $0x10] sm:$0xff]
  %v1545 = vld [vmem:[%s1541 + $0x18] sm:$0xff]
  %v1546 = vld [vmem:[%s1541 + $0x20] sm:$0xff]
  %v1547 = vld [vmem:[%s1541 + $0x28] sm:$0xff]
  %v1548 = vld [vmem:[%s1541 + $0x30] sm:$0xff]
  %v1549 = vld [vmem:[%s1541 + $0x38] sm:$0xff]
  %v1550 = vld [vmem:[%s1541 + $0x40] sm:$0xff]
  %v1551 = vld [vmem:[%s1541 + $0x48] sm:$0xff]
  %v1552 = vld [vmem:[%s1541 + $0x50] sm:$0xff]
  %v1553 = vld [vmem:[%s1541 + $0x58] sm:$0xff]
  %v1554 = vld [vmem:[%s1541 + $0x60] sm:$0xff]
  %v1555 = vld [vmem:[%s1541 + $0x68] sm:$0xff]
  %v1556 = vld [vmem:[%s1541 + $0x70] sm:$0xff]
  %v1557 = vld [vmem:[%s1541 + $0x78] sm:$0xff]
  %v1558 = vld [vmem:[%s1541 + $0x80] sm:$0xff]
  %v1559 = vld [vmem:[%s1541 + $0x88] sm:$0xff]
  %v1560 = vld [vmem:[%s1541 + $0x90] sm:$0xff]
  %v1561 = vld [vmem:[%s1541 + $0x98] sm:$0xff]
  %v1562 = vld [vmem:[%s1541 + $0xa0] sm:$0xff]
  %v1563 = vld [vmem:[%s1541 + $0xa8] sm:$0xff]
  %v1564 = vld [vmem:[%s1541 + $0xb0] sm:$0xff]
  %v1565 = vld [vmem:[%s1541 + $0xb8] sm:$0xff]
  %v1566 = vld [vmem:[%s1541 + $0xc0] sm:$0xff]
  %v1567 = vld [vmem:[%s1541 + $0xc8] sm:$0xff]
  %v1568 = vld [vmem:[%s1541 + $0xd0] sm:$0xff]
  %v1569 = vld [vmem:[%s1541 + $0xd8] sm:$0xff]
  %v1570 = vld [vmem:[%s1541 + $0xe0] sm:$0xff]
  %v1571 = vld [vmem:[%s1541 + $0xe8] sm:$0xff]
  %v1572 = vld [vmem:[%s1541 + $0xf0] sm:$0xff]
  %v1573 = vld [vmem:[%s1541 + $0xf8] sm:$0xff]
  %v1574 = vld [vmem:[%s1541 + $0x100] sm:$0xff]
  %v1575 = vld [vmem:[%s1541 + $0x108] sm:$0xff]
  %v1576 = vld [vmem:[%s1541 + $0x110] sm:$0xff]
  %v1577 = vld [vmem:[%s1541 + $0x118] sm:$0xff]
  %v1578 = vld [vmem:[%s1541 + $0x120] sm:$0xff]
  %v1579 = vld [vmem:[%s1541 + $0x128] sm:$0xff]
  %v1580 = vld [vmem:[%s1541 + $0x130] sm:$0xff]
  %v1581 = vld [vmem:[%s1541 + $0x138] sm:$0xff]
  %v1582 = vld [vmem:[%s1541 + $0x140] sm:$0xff]
  %v1583 = vld [vmem:[%s1541 + $0x148] sm:$0xff]
  %v1584 = vld [vmem:[%s1541 + $0x150] sm:$0x3]
  %v1585 = vld [vmem:[%s1541 + $0x158] sm:$0x3]
  %v1586 = vld [vmem:[%s1541 + $0x160] sm:$0x3]
  %v1587 = vld [vmem:[%s1541 + $0x168] sm:$0x3]
  %v1588 = vld [vmem:[%s1541 + $0x170] sm:$0x3]
  %v1589 = vld [vmem:[%s1541 + $0x178] sm:$0x3]
  %v1590 = vld [vmem:[%s1541 + $0x180] sm:$0x3]
  %v1592 = vsel %vm163, %v1548, 0
  %v1595 = vsel %vm163, %v1555, 0
  %v1598 = vsel %vm163, %v1562, 0
  %v1601 = vsel %vm163, %v1569, 0
  %v1604 = vsel %vm163, %v1576, 0
  %v1607 = vsel %vm163, %v1583, 0
  %v1610 = vsel %vm163, %v1590, 0
  %1612 = vmatprep.subr.mxu0 0.0
  %1613 = vmatpush1.msra.mxu0 %v14
  %1614 = vmatprep.subr.mxu0 0.0
  %1615 = vmatpush1.msra.mxu0 %v15
  %1616 = vmatprep.subr.mxu0 0.0
  %1617 = vmatpush1.msra.mxu0 %v16
  %1618 = vmatprep.subr.mxu0 0.0
  %1619 = vmatpush1.msra.mxu0 %v17
  %1620 = vmatprep.subr.mxu0 0.0
  %1621 = vmatpush1.msra.mxu0 %v18
  %1622 = vmatprep.subr.mxu0 0.0
  %1623 = vmatpush1.msra.mxu0 %v19
  %1624 = vmatprep.subr.mxu0 0.0
  %1625 = vmatpush1.msra.mxu0 %v20
  %1626 = vmatprep.subr.mxu0 0.0
  %1627 = vmatpush1.msra.mxu0 %v21
  %1628 = vmatprep.subr.mxu0 0.0
  %1629 = vmatpush1.msra.mxu0 %v22
  %1630 = vmatprep.subr.mxu0 0.0
  %1631 = vmatpush1.msra.mxu0 %v23
  %1632 = vmatprep.subr.mxu0 0.0
  %1633 = vmatpush1.msra.mxu0 %v24
  %1634 = vmatprep.subr.mxu0 0.0
  %1635 = vmatpush1.msra.mxu0 %v25
  %1636 = vmatprep.subr.mxu0 0.0
  %1637 = vmatpush1.msra.mxu0 %v26
  %1638 = vmatprep.subr.mxu0 0.0
  %1639 = vmatpush1.msra.mxu0 %v27
  %1640 = vmatprep.subr.mxu0 0.0
  %1641 = vmatpush1.msra.mxu0 %v28
  %1642 = vmatprep.subr.mxu0 0.0
  %1643 = vmatpush1.msra.mxu0 %v29
  %1644 = vmatprep.subr.mxu0 0.0
  %1645 = vmatpush1.msra.mxu0 %v30
  %1646 = vmatprep.subr.mxu0 0.0
  %1647 = vmatpush1.msra.mxu0 %v31
  %1648 = vmatprep.subr.mxu0 0.0
  %1649 = vmatpush1.msra.mxu0 %v32
  %1650 = vmatprep.subr.mxu0 0.0
  %1651 = vmatpush1.msra.mxu0 %v33
  %1652 = vmatprep.subr.mxu0 0.0
  %1653 = vmatpush1.msra.mxu0 %v34
  %1654 = vmatprep.subr.mxu0 0.0
  %1655 = vmatpush1.msra.mxu0 %v35
  %1656 = vmatprep.subr.mxu0 0.0
  %1657 = vmatpush1.msra.mxu0 %v36
  %1658 = vmatprep.subr.mxu0 0.0
  %1659 = vmatpush1.msra.mxu0 %v37
  %1660 = vmatprep.subr.mxu0 0.0
  %1661 = vmatpush1.msra.mxu0 %v38
  %1662 = vmatprep.subr.mxu0 0.0
  %1663 = vmatpush1.msra.mxu0 %v39
  %1664 = vmatprep.subr.mxu0 0.0
  %1665 = vmatpush1.msra.mxu0 %v40
  %1666 = vmatprep.subr.mxu0 0.0
  %1667 = vmatpush1.msra.mxu0 %v41
  %1668 = vmatprep.subr.mxu0 0.0
  %1669 = vmatpush1.msra.mxu0 %v42
  %1670 = vmatprep.subr.mxu0 0.0
  %1671 = vmatpush1.msra.mxu0 %v43
  %1672 = vmatprep.subr.mxu0 0.0
  %1673 = vmatpush1.msra.mxu0 %v44
  %1674 = vmatprep.subr.mxu0 0.0
  %1675 = vmatpush1.msra.mxu0 %v45
  %1676 = vmatprep.mubr.f32.mxu0 %v1543
  %1677 = vmatmul.mubr.f32.gmra.mrb[0].mxu0 %v1542
  %v1678 = vpop.f32.mrb[0].mxu0
  %v1679 = vadd.f32 0.0, %v1678
  %v1680 = vpop.f32.mrb[0].mxu0
  %1681 = vmatprep.mubr.f32.mxu0 %v1550
  %1682 = vmatmul.mubr.f32.gmra.mrb[0].mxu0 %v1549
  %v1683 = vpop.f32.mrb[0].mxu0
  %v1684 = vadd.f32 0.0, %v1683
  %v1685 = vpop.f32.mrb[0].mxu0
  %1686 = vmatprep.mubr.f32.mxu0 %v1557
  %1687 = vmatmul.mubr.f32.gmra.mrb[0].mxu0 %v1556
  %v1688 = vpop.f32.mrb[0].mxu0
  %v1689 = vadd.f32 0.0, %v1688
  %v1690 = vpop.f32.mrb[0].mxu0
  %1691 = vmatprep.mubr.f32.mxu0 %v1564
  %1692 = vmatmul.mubr.f32.gmra.mrb[0].mxu0 %v1563
  %v1693 = vpop.f32.mrb[0].mxu0
  %v1694 = vadd.f32 0.0, %v1693
  %v1695 = vpop.f32.mrb[0].mxu0
  %1696 = vmatprep.mubr.f32.mxu0 %v1571
  %1697 = vmatmul.mubr.f32.gmra.mrb[0].mxu0 %v1570
  %v1698 = vpop.f32.mrb[0].mxu0
  %v1699 = vadd.f32 0.0, %v1698
  %v1700 = vpop.f32.mrb[0].mxu0
  %1701 = vmatprep.mubr.f32.mxu0 %v1578
  %1702 = vmatmul.mubr.f32.gmra.mrb[0].mxu0 %v1577
  %v1703 = vpop.f32.mrb[0].mxu0
  %v1704 = vadd.f32 0.0, %v1703
  %v1705 = vpop.f32.mrb[0].mxu0
  %1706 = vmatprep.mubr.f32.mxu0 %v1585
  %1707 = vmatmul.mubr.f32.gmra.mrb[0].mxu0 %v1584
  %v1708 = vpop.f32.mrb[0].mxu0
  %v1709 = vadd.f32 0.0, %v1708
  %v1710 = vpop.f32.mrb[0].mxu0
  %1711 = vdwg.mxu0
  %1712 = vmatprep.subr.mxu0 0.0
  %1713 = vmatpush1.msra.mxu0 %v46
  %1714 = vmatprep.subr.mxu0 0.0
  %1715 = vmatpush1.msra.mxu0 %v47
  %1716 = vmatprep.subr.mxu0 0.0
  %1717 = vmatpush1.msra.mxu0 %v48
  %1718 = vmatprep.subr.mxu0 0.0
  %1719 = vmatpush1.msra.mxu0 %v49
  %1720 = vmatprep.subr.mxu0 0.0
  %1721 = vmatpush1.msra.mxu0 %v50
  %1722 = vmatprep.subr.mxu0 0.0
  %1723 = vmatpush1.msra.mxu0 %v51
  %1724 = vmatprep.subr.mxu0 0.0
  %1725 = vmatpush1.msra.mxu0 %v52
  %1726 = vmatprep.subr.mxu0 0.0
  %1727 = vmatpush1.msra.mxu0 %v53
  %1728 = vmatprep.subr.mxu0 0.0
  %1729 = vmatpush1.msra.mxu0 %v54
  %1730 = vmatprep.subr.mxu0 0.0
  %1731 = vmatpush1.msra.mxu0 %v55
  %1732 = vmatprep.subr.mxu0 0.0
  %1733 = vmatpush1.msra.mxu0 %v56
  %1734 = vmatprep.subr.mxu0 0.0
  %1735 = vmatpush1.msra.mxu0 %v57
  %1736 = vmatprep.subr.mxu0 0.0
  %1737 = vmatpush1.msra.mxu0 %v58
  %1738 = vmatprep.subr.mxu0 0.0
  %1739 = vmatpush1.msra.mxu0 %v59
  %1740 = vmatprep.subr.mxu0 0.0
  %1741 = vmatpush1.msra.mxu0 %v60
  %1742 = vmatprep.subr.mxu0 0.0
  %1743 = vmatpush1.msra.mxu0 %v61
  %1744 = vmatprep.subr.mxu0 0.0
  %1745 = vmatpush1.msra.mxu0 %v62
  %1746 = vmatprep.subr.mxu0 0.0
  %1747 = vmatpush1.msra.mxu0 %v63
  %1748 = vmatprep.subr.mxu0 0.0
  %1749 = vmatpush1.msra.mxu0 %v64
  %1750 = vmatprep.subr.mxu0 0.0
  %1751 = vmatpush1.msra.mxu0 %v65
  %1752 = vmatprep.subr.mxu0 0.0
  %1753 = vmatpush1.msra.mxu0 %v66
  %1754 = vmatprep.subr.mxu0 0.0
  %1755 = vmatpush1.msra.mxu0 %v67
  %1756 = vmatprep.subr.mxu0 0.0
  %1757 = vmatpush1.msra.mxu0 %v68
  %1758 = vmatprep.subr.mxu0 0.0
  %1759 = vmatpush1.msra.mxu0 %v69
  %1760 = vmatprep.subr.mxu0 0.0
  %1761 = vmatpush1.msra.mxu0 %v70
  %1762 = vmatprep.subr.mxu0 0.0
  %1763 = vmatpush1.msra.mxu0 %v71
  %1764 = vmatprep.subr.mxu0 0.0
  %1765 = vmatpush1.msra.mxu0 %v72
  %1766 = vmatprep.subr.mxu0 0.0
  %1767 = vmatpush1.msra.mxu0 %v73
  %1768 = vmatprep.subr.mxu0 0.0
  %1769 = vmatpush1.msra.mxu0 %v74
  %1770 = vmatprep.subr.mxu0 0.0
  %1771 = vmatpush1.msra.mxu0 %v75
  %1772 = vmatprep.subr.mxu0 0.0
  %1773 = vmatpush1.msra.mxu0 %v76
  %1774 = vmatprep.subr.mxu0 0.0
  %1775 = vmatpush1.msra.mxu0 %v77
  %1776 = vmatprep.mubr.f32.mxu0 %v1545
  %1777 = vmatmul.mubr.f32.gmra.mrb[0].mxu0 %v1544
  %v1778 = vpop.f32.mrb[0].mxu0
  %v1779 = vadd.f32 %v1679, %v1778
  %v1780 = vpop.f32.mrb[0].mxu0
  %1781 = vmatprep.mubr.f32.mxu0 %v1552
  %1782 = vmatmul.mubr.f32.gmra.mrb[0].mxu0 %v1551
  %v1783 = vpop.f32.mrb[0].mxu0
  %v1784 = vadd.f32 %v1684, %v1783
  %v1785 = vpop.f32.mrb[0].mxu0
  %1786 = vmatprep.mubr.f32.mxu0 %v1559
  %1787 = vmatmul.mubr.f32.gmra.mrb[0].mxu0 %v1558
  %v1788 = vpop.f32.mrb[0].mxu0
  %v1789 = vadd.f32 %v1689, %v1788
  %v1790 = vpop.f32.mrb[0].mxu0
  %1791 = vmatprep.mubr.f32.mxu0 %v1566
  %1792 = vmatmul.mubr.f32.gmra.mrb[0].mxu0 %v1565
  %v1793 = vpop.f32.mrb[0].mxu0
  %v1794 = vadd.f32 %v1694, %v1793
  %v1795 = vpop.f32.mrb[0].mxu0
  %1796 = vmatprep.mubr.f32.mxu0 %v1573
  %1797 = vmatmul.mubr.f32.gmra.mrb[0].mxu0 %v1572
  %v1798 = vpop.f32.mrb[0].mxu0
  %v1799 = vadd.f32 %v1699, %v1798
  %v1800 = vpop.f32.mrb[0].mxu0
  %1801 = vmatprep.mubr.f32.mxu0 %v1580
  %1802 = vmatmul.mubr.f32.gmra.mrb[0].mxu0 %v1579
  %v1803 = vpop.f32.mrb[0].mxu0
  %v1804 = vadd.f32 %v1704, %v1803
  %v1805 = vpop.f32.mrb[0].mxu0
  %1806 = vmatprep.mubr.f32.mxu0 %v1587
  %1807 = vmatmul.mubr.f32.gmra.mrb[0].mxu0 %v1586
  %v1808 = vpop.f32.mrb[0].mxu0
  %v1809 = vadd.f32 %v1709, %v1808
  %v1810 = vpop.f32.mrb[0].mxu0
  %1811 = vdwg.mxu0
  %1812 = vmatprep.subr.mxu0 0.0
  %1813 = vmatpush1.msra.mxu0 %v78
  %1814 = vmatprep.subr.mxu0 0.0
  %1815 = vmatpush1.msra.mxu0 %v79
  %1816 = vmatprep.subr.mxu0 0.0
  %1817 = vmatpush1.msra.mxu0 %v80
  %1818 = vmatprep.subr.mxu0 0.0
  %1819 = vmatpush1.msra.mxu0 %v81
  %1820 = vmatprep.subr.mxu0 0.0
  %1821 = vmatpush1.msra.mxu0 %v82
  %1822 = vmatprep.subr.mxu0 0.0
  %1823 = vmatpush1.msra.mxu0 %v83
  %1824 = vmatprep.subr.mxu0 0.0
  %1825 = vmatpush1.msra.mxu0 %v84
  %1826 = vmatprep.subr.mxu0 0.0
  %1827 = vmatpush1.msra.mxu0 %v85
  %1828 = vmatprep.subr.mxu0 0.0
  %1829 = vmatpush1.msra.mxu0 %v86
  %1830 = vmatprep.subr.mxu0 0.0
  %1831 = vmatpush1.msra.mxu0 %v87
  %1832 = vmatprep.subr.mxu0 0.0
  %1833 = vmatpush1.msra.mxu0 %v88
  %1834 = vmatprep.subr.mxu0 0.0
  %1835 = vmatpush1.msra.mxu0 %v89
  %1836 = vmatprep.subr.mxu0 0.0
  %1837 = vmatpush1.msra.mxu0 %v90
  %1838 = vmatprep.subr.mxu0 0.0
  %1839 = vmatpush1.msra.mxu0 %v91
  %1840 = vmatprep.subr.mxu0 0.0
  %1841 = vmatpush1.msra.mxu0 %v92
  %1842 = vmatprep.subr.mxu0 0.0
  %1843 = vmatpush1.msra.mxu0 %v93
  %1844 = vmatprep.subr.mxu0 0.0
  %1845 = vmatpush1.msra.mxu0 %v94
  %1846 = vmatprep.subr.mxu0 0.0
  %1847 = vmatpush1.msra.mxu0 %v95
  %1848 = vmatprep.subr.mxu0 0.0
  %1849 = vmatpush1.msra.mxu0 %v96
  %1850 = vmatprep.subr.mxu0 0.0
  %1851 = vmatpush1.msra.mxu0 %v97
  %1852 = vmatprep.subr.mxu0 0.0
  %1853 = vmatpush1.msra.mxu0 %v98
  %1854 = vmatprep.subr.mxu0 0.0
  %1855 = vmatpush1.msra.mxu0 %v99
  %1856 = vmatprep.subr.mxu0 0.0
  %1857 = vmatpush1.msra.mxu0 %v100
  %1858 = vmatprep.subr.mxu0 0.0
  %1859 = vmatpush1.msra.mxu0 %v101
  %1860 = vmatprep.subr.mxu0 0.0
  %1861 = vmatpush1.msra.mxu0 %v102
  %1862 = vmatprep.subr.mxu0 0.0
  %1863 = vmatpush1.msra.mxu0 %v103
  %1864 = vmatprep.subr.mxu0 0.0
  %1865 = vmatpush1.msra.mxu0 %v104
  %1866 = vmatprep.subr.mxu0 0.0
  %1867 = vmatpush1.msra.mxu0 %v105
  %1868 = vmatprep.subr.mxu0 0.0
  %1869 = vmatpush1.msra.mxu0 %v106
  %1870 = vmatprep.subr.mxu0 0.0
  %1871 = vmatpush1.msra.mxu0 %v107
  %1872 = vmatprep.subr.mxu0 0.0
  %1873 = vmatpush1.msra.mxu0 %v108
  %1874 = vmatprep.subr.mxu0 0.0
  %1875 = vmatpush1.msra.mxu0 %v109
  %1876 = vmatprep.mubr.f32.mxu0 %v1547
  %1877 = vmatmul.mubr.f32.gmra.mrb[0].mxu0 %v1546
  %v1878 = vpop.f32.mrb[0].mxu0
  %v1879 = vadd.f32 %v1779, %v1878
  %v1880 = vpop.f32.mrb[0].mxu0
  %1881 = vmatprep.mubr.f32.mxu0 %v1554
  %1882 = vmatmul.mubr.f32.gmra.mrb[0].mxu0 %v1553
  %v1883 = vpop.f32.mrb[0].mxu0
  %v1884 = vadd.f32 %v1784, %v1883
  %v1885 = vpop.f32.mrb[0].mxu0
  %1886 = vmatprep.mubr.f32.mxu0 %v1561
  %1887 = vmatmul.mubr.f32.gmra.mrb[0].mxu0 %v1560
  %v1888 = vpop.f32.mrb[0].mxu0
  %v1889 = vadd.f32 %v1789, %v1888
  %v1890 = vpop.f32.mrb[0].mxu0
  %1891 = vmatprep.mubr.f32.mxu0 %v1568
  %1892 = vmatmul.mubr.f32.gmra.mrb[0].mxu0 %v1567
  %v1893 = vpop.f32.mrb[0].mxu0
  %v1894 = vadd.f32 %v1794, %v1893
  %v1895 = vpop.f32.mrb[0].mxu0
  %1896 = vmatprep.mubr.f32.mxu0 %v1575
  %1897 = vmatmul.mubr.f32.gmra.mrb[0].mxu0 %v1574
  %v1898 = vpop.f32.mrb[0].mxu0
  %v1899 = vadd.f32 %v1799, %v1898
  %v1900 = vpop.f32.mrb[0].mxu0
  %1901 = vmatprep.mubr.f32.mxu0 %v1582
  %1902 = vmatmul.mubr.f32.gmra.mrb[0].mxu0 %v1581
  %v1903 = vpop.f32.mrb[0].mxu0
  %v1904 = vadd.f32 %v1804, %v1903
  %v1905 = vpop.f32.mrb[0].mxu0
  %1906 = vmatprep.mubr.f32.mxu0 %v1589
  %1907 = vmatmul.mubr.f32.gmra.mrb[0].mxu0 %v1588
  %v1908 = vpop.f32.mrb[0].mxu0
  %v1909 = vadd.f32 %v1809, %v1908
  %v1910 = vpop.f32.mrb[0].mxu0
  %1911 = vdwg.mxu0
  %1912 = vmatprep.subr.mxu0 0.0
  %1913 = vmatpush1.msra.mxu0 %v110
  %1914 = vmatprep.subr.mxu0 0.0
  %1915 = vmatpush1.msra.mxu0 %v111
  %1916 = vmatprep.subr.mxu0 0.0
  %1917 = vmatpush1.msra.mxu0 %v112
  %1918 = vmatprep.subr.mxu0 0.0
  %1919 = vmatpush1.msra.mxu0 %v113
  %1920 = vmatprep.subr.mxu0 0.0
  %1921 = vmatpush1.msra.mxu0 0.0
  %1922 = vmatprep.subr.mxu0 0.0
  %1923 = vmatpush1.msra.mxu0 0.0
  %1924 = vmatprep.subr.mxu0 0.0
  %1925 = vmatpush1.msra.mxu0 0.0
  %1926 = vmatprep.subr.mxu0 0.0
  %1927 = vmatpush1.msra.mxu0 0.0
  %1928 = vmatprep.subr.mxu0 0.0
  %1929 = vmatpush1.msra.mxu0 0.0
  %1930 = vmatprep.subr.mxu0 0.0
  %1931 = vmatpush1.msra.mxu0 0.0
  %1932 = vmatprep.subr.mxu0 0.0
  %1933 = vmatpush1.msra.mxu0 0.0
  %1934 = vmatprep.subr.mxu0 0.0
  %1935 = vmatpush1.msra.mxu0 0.0
  %1936 = vmatprep.subr.mxu0 0.0
  %1937 = vmatpush1.msra.mxu0 0.0
  %1938 = vmatprep.subr.mxu0 0.0
  %1939 = vmatpush1.msra.mxu0 0.0
  %1940 = vmatprep.subr.mxu0 0.0
  %1941 = vmatpush1.msra.mxu0 0.0
  %1942 = vmatprep.subr.mxu0 0.0
  %1943 = vmatpush1.msra.mxu0 0.0
  %1944 = vmatprep.subr.mxu0 0.0
  %1945 = vmatpush1.msra.mxu0 0.0
  %1946 = vmatprep.subr.mxu0 0.0
  %1947 = vmatpush1.msra.mxu0 0.0
  %1948 = vmatprep.subr.mxu0 0.0
  %1949 = vmatpush1.msra.mxu0 0.0
  %1950 = vmatprep.subr.mxu0 0.0
  %1951 = vmatpush1.msra.mxu0 0.0
  %1952 = vmatprep.subr.mxu0 0.0
  %1953 = vmatpush1.msra.mxu0 0.0
  %1954 = vmatprep.subr.mxu0 0.0
  %1955 = vmatpush1.msra.mxu0 0.0
  %1956 = vmatprep.subr.mxu0 0.0
  %1957 = vmatpush1.msra.mxu0 0.0
  %1958 = vmatprep.subr.mxu0 0.0
  %1959 = vmatpush1.msra.mxu0 0.0
  %1960 = vmatprep.subr.mxu0 0.0
  %1961 = vmatpush1.msra.mxu0 0.0
  %1962 = vmatprep.subr.mxu0 0.0
  %1963 = vmatpush1.msra.mxu0 0.0
  %1964 = vmatprep.subr.mxu0 0.0
  %1965 = vmatpush1.msra.mxu0 0.0
  %1966 = vmatprep.subr.mxu0 0.0
  %1967 = vmatpush1.msra.mxu0 0.0
  %1968 = vmatprep.subr.mxu0 0.0
  %1969 = vmatpush1.msra.mxu0 0.0
  %1970 = vmatprep.subr.mxu0 0.0
  %1971 = vmatpush1.msra.mxu0 0.0
  %1972 = vmatprep.subr.mxu0 0.0
  %1973 = vmatpush1.msra.mxu0 0.0
  %1974 = vmatprep.subr.mxu0 0.0
  %1975 = vmatpush1.msra.mxu0 0.0
  %1976 = vmatprep.mubr.f32.mxu0 0.0
  %1977 = vmatmul.mubr.f32.gmra.mrb[0].mxu0 %v1592
  %v1978 = vpop.f32.mrb[0].mxu0
  %v1979 = vadd.f32 %v1879, %v1978
  %v1980 = vpop.f32.mrb[0].mxu0
  %1981 = vmatprep.mubr.f32.mxu0 0.0
  %1982 = vmatmul.mubr.f32.gmra.mrb[0].mxu0 %v1595
  %v1983 = vpop.f32.mrb[0].mxu0
  %v1984 = vadd.f32 %v1884, %v1983
  %v1985 = vpop.f32.mrb[0].mxu0
  %1986 = vmatprep.mubr.f32.mxu0 0.0
  %1987 = vmatmul.mubr.f32.gmra.mrb[0].mxu0 %v1598
  %v1988 = vpop.f32.mrb[0].mxu0
  %v1989 = vadd.f32 %v1889, %v1988
  %v1990 = vpop.f32.mrb[0].mxu0
  %1991 = vmatprep.mubr.f32.mxu0 0.0
  %1992 = vmatmul.mubr.f32.gmra.mrb[0].mxu0 %v1601
  %v1993 = vpop.f32.mrb[0].mxu0
  %v1994 = vadd.f32 %v1894, %v1993
  %v1995 = vpop.f32.mrb[0].mxu0
  %1996 = vmatprep.mubr.f32.mxu0 0.0
  %1997 = vmatmul.mubr.f32.gmra.mrb[0].mxu0 %v1604
  %v1998 = vpop.f32.mrb[0].mxu0
  %v1999 = vadd.f32 %v1899, %v1998
  %v2000 = vpop.f32.mrb[0].mxu0
  %2001 = vmatprep.mubr.f32.mxu0 0.0
  %2002 = vmatmul.mubr.f32.gmra.mrb[0].mxu0 %v1607
  %v2003 = vpop.f32.mrb[0].mxu0
  %v2004 = vadd.f32 %v1904, %v2003
  %v2005 = vpop.f32.mrb[0].mxu0
  %2006 = vmatprep.mubr.f32.mxu0 0.0
  %2007 = vmatmul.mubr.f32.gmra.mrb[0].mxu0 %v1610
  %v2008 = vpop.f32.mrb[0].mxu0
  %v2009 = vadd.f32 %v1909, %v2008
  %v2010 = vpop.f32.mrb[0].mxu0
  %2011 = vdwg.mxu0
  %v2012 = vmax.f32 %v1534, %v1979
  %v2013 = vmax.f32 %v1535, %v1984
  %v2014 = vmax.f32 %v1536, %v1989
  %v2015 = vmax.f32 %v1537, %v1994
  %v2016 = vmax.f32 %v1538, %v1999
  %v2017 = vmax.f32 %v1539, %v2004
  %v2018 = vmax.f32 %v1540, %v2009
  %v2019 = vld [vmem:[%s2] sm:$0x1]
  %v2021 = vlaneseq
  %v2022 = vshrl.u32 %v2021, 7
  %v2023 = vsub.s32 0, %v2022
  %v2024 = vrot.slane %v2019, %v2023
  %v2026 = vadd.f32 %v2012, %v2024
  %v2027 = vadd.f32 %v2013, %v2024
  %v2028 = vadd.f32 %v2014, %v2024
  %v2029 = vadd.f32 %v2015, %v2024
  %v2030 = vadd.f32 %v2016, %v2024
  %v2031 = vadd.f32 %v2017, %v2024
  %v2032 = vadd.f32 %v2018, %v2024
  %v2033 = vmax.f32 %v2026, 0.0
  %v2034 = vmax.f32 %v2027, 0.0
  %v2035 = vmax.f32 %v2028, 0.0
  %v2036 = vmax.f32 %v2029, 0.0
  %v2037 = vmax.f32 %v2030, 0.0
  %v2038 = vmax.f32 %v2031, 0.0
  %v2039 = vmax.f32 %v2032, 0.0
  %2040 = vst [vmem:[%s3] sm:$0xff] %v2033
  %2041 = vst [vmem:[%s3 + $0x8] sm:$0xff] %v2034
  %2042 = vst [vmem:[%s3 + $0x10] sm:$0xff] %v2035
  %2043 = vst [vmem:[%s3 + $0x18] sm:$0xff] %v2036
  %2044 = vst [vmem:[%s3 + $0x20] sm:$0xff] %v2037
  %2045 = vst [vmem:[%s3 + $0x28] sm:$0xff] %v2038
  %2046 = vst [vmem:[%s3 + $0x30] sm:$0x3] %v2039
  // Predicated region
  $region14: #{net_forward.4} parent=0 // pred_check
    _
  $region15: #{net_forward.4} parent=0 // pred_check_branch
    %2048 = sbr.rel (0) target = $region17
  $region16: #{net_forward.4} parent=0 // pred_region
    _
  $region17: #{net_forward.4} parent=0 // pred_fallthru
    _
  // Predicated region
  $region18: #{net_forward.4} parent=0 // pred_check
    _
  $region19: #{net_forward.4} parent=0 // pred_check_branch
    %2050 = sbr.rel (0) target = $region21
  $region20: #{net_forward.4} parent=0 // pred_region
    _
  $region21: #{net_forward.4} parent=0 // pred_fallthru
    _

// kernel: net_forward.5
$region0: #{net_forward.5}
  #allocation0 [shape = 'u32[]', space=smem, size = 0x4, offset = 0x4, fixed_abs, tag = 'smem constant byte address 0x4 - core index']
  #allocation1 [shape = 'u32[144,128]{1,0:T(1,128)}', space=vmem, size = 0x12000, scoped, tag = 'internal scratch']
  %s0 = inlined_call_operand.vmem [shape: f32[2,3136], index: 0, kind: input, shape index: {}]
  %s1 = inlined_call_operand.vmem [shape: f32[3136,128], index: 1, kind: input, shape index: {}]
  %s2 = inlined_call_operand.vmem [shape: f32[1,128], index: 2, kind: input, shape index: {}]
  %s3 = inlined_call_operand.vmem [shape: f32[128,128], index: 3, kind: input, shape index: {}]
  %s4 = inlined_call_operand.vmem [shape: f32[1,128], index: 4, kind: input, shape index: {}]
  %s5 = inlined_call_operand.hbm [shape: f32[2,128], index: 5, kind: output, shape index: {}]
  %s6 = sld [smem:[#allocation0]]
  $region30: #{net_forward.5} parent=0
    _
  %s8 = ssub.s32 1, %s6
  %s9 = scalar_select 0, %s8, %s6
  $region1: #{net_forward.5} parent=0
    #allocation2 [shape = 'u8[1024]{0}', space=vmem, size = 0x400, scoped, tag = 'output window, operand 0, single buffered']
    #allocation3 [shape = 's32[1]{0}', space=sflag, size = 0x4, scoped, tag = 'scoped memory for net_forward.5']
    %10 = vsyncpa [#allocation3], 0
    // Predicated region
    $region2: #{net_forward.5} parent=1 // pred_check
      _
    $region3: #{net_forward.5} parent=1 // pred_check_branch
      %12 = sbr.rel (0) target = $region5
    $region4: #{net_forward.5} parent=1 // pred_region
      _
    $region5: #{net_forward.5} parent=1 // pred_fallthru
      _
    // Predicated region
    $region6: #{net_forward.5} parent=1 // pred_check
      _
    $region7: #{net_forward.5} parent=1 // pred_check_branch
      %14 = sbr.rel (0) target = $region9
    $region8: #{net_forward.5} parent=1 // pred_region
      _
    $region9: #{net_forward.5} parent=1 // pred_fallthru
      _
    // Predicated region
    $region10: #{net_forward.5} parent=1 // pred_check
      _
    $region11: #{net_forward.5} parent=1 // pred_check_branch
      %16 = sbr.rel (0) target = $region13
    $region12: #{net_forward.5} parent=1 // pred_region
      _
    $region13: #{net_forward.5} parent=1 // pred_fallthru
      _
    // Predicated region
    $region14: #{net_forward.5} parent=1 // pred_check
      _
    $region15: #{net_forward.5} parent=1 // pred_check_branch
      %18 = sbr.rel (0) target = $region17
    $region16: #{net_forward.5} parent=1 // pred_region
      _
    $region17: #{net_forward.5} parent=1 // pred_fallthru
      _
    // Predicated region
    $region18: #{net_forward.5} parent=1 // pred_check
      _
    $region19: #{net_forward.5} parent=1 // pred_check_branch
      %20 = sbr.rel (0) target = $region21
    $region20: #{net_forward.5} parent=1 // pred_region
      _
    $region21: #{net_forward.5} parent=1 // pred_fallthru
      _
    %v21 = vld [vmem:[%s0] sm:$0xff]
    %v22 = vld [vmem:[%s0 + $0x8] sm:$0xff]
    %v23 = vld [vmem:[%s0 + $0x10] sm:$0xff]
    %v24 = vld [vmem:[%s0 + $0x18] sm:$0xff]
    %v25 = vld [vmem:[%s0 + $0x20] sm:$0xff]
    %v26 = vld [vmem:[%s0 + $0x28] sm:$0xff]
    %v27 = vld [vmem:[%s0 + $0x30] sm:$0x3]
    %v28 = vld [vmem:[%s1] sm:$0xff]
    %v29 = vld [vmem:[%s1 + $0x8] sm:$0xff]
    %v30 = vld [vmem:[%s1 + $0x10] sm:$0xff]
    %v31 = vld [vmem:[%s1 + $0x18] sm:$0xff]
    %v32 = vld [vmem:[%s1 + $0x20] sm:$0xff]
    %v33 = vld [vmem:[%s1 + $0x28] sm:$0xff]
    %v34 = vld [vmem:[%s1 + $0x30] sm:$0xff]
    %v35 = vld [vmem:[%s1 + $0x38] sm:$0xff]
    %v36 = vld [vmem:[%s1 + $0x40] sm:$0xff]
    %v37 = vld [vmem:[%s1 + $0x48] sm:$0xff]
    %v38 = vld [vmem:[%s1 + $0x50] sm:$0xff]
    %v39 = vld [vmem:[%s1 + $0x58] sm:$0xff]
    %v40 = vld [vmem:[%s1 + $0x60] sm:$0xff]
    %v41 = vld [vmem:[%s1 + $0x68] sm:$0xff]
    %v42 = vld [vmem:[%s1 + $0x70] sm:$0xff]
    %v43 = vld [vmem:[%s1 + $0x78] sm:$0xff]
    %v44 = vld [vmem:[%s1 + $0x80] sm:$0xff]
    %v45 = vld [vmem:[%s1 + $0x88] sm:$0xff]
    %v46 = vld [vmem:[%s1 + $0x90] sm:$0xff]
    %v47 = vld [vmem:[%s1 + $0x98] sm:$0xff]
    %v48 = vld [vmem:[%s1 + $0xa0] sm:$0xff]
    %v49 = vld [vmem:[%s1 + $0xa8] sm:$0xff]
    %v50 = vld [vmem:[%s1 + $0xb0] sm:$0xff]
    %v51 = vld [vmem:[%s1 + $0xb8] sm:$0xff]
    %v52 = vld [vmem:[%s1 + $0xc0] sm:$0xff]
    %v53 = vld [vmem:[%s1 + $0xc8] sm:$0xff]
    %v54 = vld [vmem:[%s1 + $0xd0] sm:$0xff]
    %v55 = vld [vmem:[%s1 + $0xd8] sm:$0xff]
    %v56 = vld [vmem:[%s1 + $0xe0] sm:$0xff]
    %v57 = vld [vmem:[%s1 + $0xe8] sm:$0xff]
    %v58 = vld [vmem:[%s1 + $0xf0] sm:$0xff]
    %v59 = vld [vmem:[%s1 + $0xf8] sm:$0xff]
    %v60 = vld [vmem:[%s1 + $0x100] sm:$0xff]
    %v61 = vld [vmem:[%s1 + $0x108] sm:$0xff]
    %v62 = vld [vmem:[%s1 + $0x110] sm:$0xff]
    %v63 = vld [vmem:[%s1 + $0x118] sm:$0xff]
    %v64 = vld [vmem:[%s1 + $0x120] sm:$0xff]
    %v65 = vld [vmem:[%s1 + $0x128] sm:$0xff]
    %v66 = vld [vmem:[%s1 + $0x130] sm:$0xff]
    %v67 = vld [vmem:[%s1 + $0x138] sm:$0xff]
    %v68 = vld [vmem:[%s1 + $0x140] sm:$0xff]
    %v69 = vld [vmem:[%s1 + $0x148] sm:$0xff]
    %v70 = vld [vmem:[%s1 + $0x150] sm:$0xff]
    %v71 = vld [vmem:[%s1 + $0x158] sm:$0xff]
    %v72 = vld [vmem:[%s1 + $0x160] sm:$0xff]
    %v73 = vld [vmem:[%s1 + $0x168] sm:$0xff]
    %v74 = vld [vmem:[%s1 + $0x170] sm:$0xff]
    %v75 = vld [vmem:[%s1 + $0x178] sm:$0xff]
    %v76 = vld [vmem:[%s1 + $0x180] sm:$0xff]
    %v77 = vld [vmem:[%s1 + $0x188] sm:$0xff]
    %v78 = vld [vmem:[%s1 + $0x190] sm:$0xff]
    %v79 = vld [vmem:[%s1 + $0x198] sm:$0xff]
    %v80 = vld [vmem:[%s1 + $0x1a0] sm:$0xff]
    %v81 = vld [vmem:[%s1 + $0x1a8] sm:$0xff]
    %v82 = vld [vmem:[%s1 + $0x1b0] sm:$0xff]
    %v83 = vld [vmem:[%s1 + $0x1b8] sm:$0xff]
    %v84 = vld [vmem:[%s1 + $0x1c0] sm:$0xff]
    %v85 = vld [vmem:[%s1 + $0x1c8] sm:$0xff]
    %v86 = vld [vmem:[%s1 + $0x1d0] sm:$0xff]
    %v87 = vld [vmem:[%s1 + $0x1d8] sm:$0xff]
    %v88 = vld [vmem:[%s1 + $0x1e0] sm:$0xff]
    %v89 = vld [vmem:[%s1 + $0x1e8] sm:$0xff]
    %v90 = vld [vmem:[%s1 + $0x1f0] sm:$0xff]
    %v91 = vld [vmem:[%s1 + $0x1f8] sm:$0xff]
    %v92 = vld [vmem:[%s1 + $0x200] sm:$0xff]
    %v93 = vld [vmem:[%s1 + $0x208] sm:$0xff]
    %v94 = vld [vmem:[%s1 + $0x210] sm:$0xff]
    %v95 = vld [vmem:[%s1 + $0x218] sm:$0xff]
    %v96 = vld [vmem:[%s1 + $0x220] sm:$0xff]
    %v97 = vld [vmem:[%s1 + $0x228] sm:$0xff]
    %v98 = vld [vmem:[%s1 + $0x230] sm:$0xff]
    %v99 = vld [vmem:[%s1 + $0x238] sm:$0xff]
    %v100 = vld [vmem:[%s1 + $0x240] sm:$0xff]
    %v101 = vld [vmem:[%s1 + $0x248] sm:$0xff]
    %v102 = vld [vmem:[%s1 + $0x250] sm:$0xff]
    %v103 = vld [vmem:[%s1 + $0x258] sm:$0xff]
    %v104 = vld [vmem:[%s1 + $0x260] sm:$0xff]
    %v105 = vld [vmem:[%s1 + $0x268] sm:$0xff]
    %v106 = vld [vmem:[%s1 + $0x270] sm:$0xff]
    %v107 = vld [vmem:[%s1 + $0x278] sm:$0xff]
    %v108 = vld [vmem:[%s1 + $0x280] sm:$0xff]
    %v109 = vld [vmem:[%s1 + $0x288] sm:$0xff]
    %v110 = vld [vmem:[%s1 + $0x290] sm:$0xff]
    %v111 = vld [vmem:[%s1 + $0x298] sm:$0xff]
    %v112 = vld [vmem:[%s1 + $0x2a0] sm:$0xff]
    %v113 = vld [vmem:[%s1 + $0x2a8] sm:$0xff]
    %v114 = vld [vmem:[%s1 + $0x2b0] sm:$0xff]
    %v115 = vld [vmem:[%s1 + $0x2b8] sm:$0xff]
    %v116 = vld [vmem:[%s1 + $0x2c0] sm:$0xff]
    %v117 = vld [vmem:[%s1 + $0x2c8] sm:$0xff]
    %v118 = vld [vmem:[%s1 + $0x2d0] sm:$0xff]
    %v119 = vld [vmem:[%s1 + $0x2d8] sm:$0xff]
    %v120 = vld [vmem:[%s1 + $0x2e0] sm:$0xff]
    %v121 = vld [vmem:[%s1 + $0x2e8] sm:$0xff]
    %v122 = vld [vmem:[%s1 + $0x2f0] sm:$0xff]
    %v123 = vld [vmem:[%s1 + $0x2f8] sm:$0xff]
    %v124 = vld [vmem:[%s1 + $0x300] sm:$0xff]
    %v125 = vld [vmem:[%s1 + $0x308] sm:$0xff]
    %v126 = vld [vmem:[%s1 + $0x310] sm:$0xff]
    %v127 = vld [vmem:[%s1 + $0x318] sm:$0xff]
    %v128 = vld [vmem:[%s1 + $0x320] sm:$0xff]
    %v129 = vld [vmem:[%s1 + $0x328] sm:$0xff]
    %v130 = vld [vmem:[%s1 + $0x330] sm:$0xff]
    %v131 = vld [vmem:[%s1 + $0x338] sm:$0xff]
    %v132 = vld [vmem:[%s1 + $0x340] sm:$0xff]
    %v133 = vld [vmem:[%s1 + $0x348] sm:$0xff]
    %v134 = vld [vmem:[%s1 + $0x350] sm:$0xff]
    %v135 = vld [vmem:[%s1 + $0x358] sm:$0xff]
    %v136 = vld [vmem:[%s1 + $0x360] sm:$0xff]
    %v137 = vld [vmem:[%s1 + $0x368] sm:$0xff]
    %v138 = vld [vmem:[%s1 + $0x370] sm:$0xff]
    %v139 = vld [vmem:[%s1 + $0x378] sm:$0xff]
    %v140 = vld [vmem:[%s1 + $0x380] sm:$0xff]
    %v141 = vld [vmem:[%s1 + $0x388] sm:$0xff]
    %v142 = vld [vmem:[%s1 + $0x390] sm:$0xff]
    %v143 = vld [vmem:[%s1 + $0x398] sm:$0xff]
    %v144 = vld [vmem:[%s1 + $0x3a0] sm:$0xff]
    %v145 = vld [vmem:[%s1 + $0x3a8] sm:$0xff]
    %v146 = vld [vmem:[%s1 + $0x3b0] sm:$0xff]
    %v147 = vld [vmem:[%s1 + $0x3b8] sm:$0xff]
    %v148 = vld [vmem:[%s1 + $0x3c0] sm:$0xff]
    %v149 = vld [vmem:[%s1 + $0x3c8] sm:$0xff]
    %v150 = vld [vmem:[%s1 + $0x3d0] sm:$0xff]
    %v151 = vld [vmem:[%s1 + $0x3d8] sm:$0xff]
    %v152 = vld [vmem:[%s1 + $0x3e0] sm:$0xff]
    %v153 = vld [vmem:[%s1 + $0x3e8] sm:$0xff]
    %v154 = vld [vmem:[%s1 + $0x3f0] sm:$0xff]
    %v155 = vld [vmem:[%s1 + $0x3f8] sm:$0xff]
    %v156 = vld [vmem:[%s1 + $0x400] sm:$0xff]
    %v157 = vld [vmem:[%s1 + $0x408] sm:$0xff]
    %v158 = vld [vmem:[%s1 + $0x410] sm:$0xff]
    %v159 = vld [vmem:[%s1 + $0x418] sm:$0xff]
    %v160 = vld [vmem:[%s1 + $0x420] sm:$0xff]
    %v161 = vld [vmem:[%s1 + $0x428] sm:$0xff]
    %v162 = vld [vmem:[%s1 + $0x430] sm:$0xff]
    %v163 = vld [vmem:[%s1 + $0x438] sm:$0xff]
    %v164 = vld [vmem:[%s1 + $0x440] sm:$0xff]
    %v165 = vld [vmem:[%s1 + $0x448] sm:$0xff]
    %v166 = vld [vmem:[%s1 + $0x450] sm:$0xff]
    %v167 = vld [vmem:[%s1 + $0x458] sm:$0xff]
    %v168 = vld [vmem:[%s1 + $0x460] sm:$0xff]
    %v169 = vld [vmem:[%s1 + $0x468] sm:$0xff]
    %v170 = vld [vmem:[%s1 + $0x470] sm:$0xff]
    %v171 = vld [vmem:[%s1 + $0x478] sm:$0xff]
    %v172 = vld [vmem:[%s1 + $0x480] sm:$0xff]
    %v173 = vld [vmem:[%s1 + $0x488] sm:$0xff]
    %v174 = vld [vmem:[%s1 + $0x490] sm:$0xff]
    %v175 = vld [vmem:[%s1 + $0x498] sm:$0xff]
    %v176 = vld [vmem:[%s1 + $0x4a0] sm:$0xff]
    %v177 = vld [vmem:[%s1 + $0x4a8] sm:$0xff]
    %v178 = vld [vmem:[%s1 + $0x4b0] sm:$0xff]
    %v179 = vld [vmem:[%s1 + $0x4b8] sm:$0xff]
    %v180 = vld [vmem:[%s1 + $0x4c0] sm:$0xff]
    %v181 = vld [vmem:[%s1 + $0x4c8] sm:$0xff]
    %v182 = vld [vmem:[%s1 + $0x4d0] sm:$0xff]
    %v183 = vld [vmem:[%s1 + $0x4d8] sm:$0xff]
    %v184 = vld [vmem:[%s1 + $0x4e0] sm:$0xff]
    %v185 = vld [vmem:[%s1 + $0x4e8] sm:$0xff]
    %v186 = vld [vmem:[%s1 + $0x4f0] sm:$0xff]
    %v187 = vld [vmem:[%s1 + $0x4f8] sm:$0xff]
    %v188 = vld [vmem:[%s1 + $0x500] sm:$0xff]
    %v189 = vld [vmem:[%s1 + $0x508] sm:$0xff]
    %v190 = vld [vmem:[%s1 + $0x510] sm:$0xff]
    %v191 = vld [vmem:[%s1 + $0x518] sm:$0xff]
    %v192 = vld [vmem:[%s1 + $0x520] sm:$0xff]
    %v193 = vld [vmem:[%s1 + $0x528] sm:$0xff]
    %v194 = vld [vmem:[%s1 + $0x530] sm:$0xff]
    %v195 = vld [vmem:[%s1 + $0x538] sm:$0xff]
    %v196 = vld [vmem:[%s1 + $0x540] sm:$0xff]
    %v197 = vld [vmem:[%s1 + $0x548] sm:$0xff]
    %v198 = vld [vmem:[%s1 + $0x550] sm:$0xff]
    %v199 = vld [vmem:[%s1 + $0x558] sm:$0xff]
    %v200 = vld [vmem:[%s1 + $0x560] sm:$0xff]
    %v201 = vld [vmem:[%s1 + $0x568] sm:$0xff]
    %v202 = vld [vmem:[%s1 + $0x570] sm:$0xff]
    %v203 = vld [vmem:[%s1 + $0x578] sm:$0xff]
    %v204 = vld [vmem:[%s1 + $0x580] sm:$0xff]
    %v205 = vld [vmem:[%s1 + $0x588] sm:$0xff]
    %v206 = vld [vmem:[%s1 + $0x590] sm:$0xff]
    %v207 = vld [vmem:[%s1 + $0x598] sm:$0xff]
    %v208 = vld [vmem:[%s1 + $0x5a0] sm:$0xff]
    %v209 = vld [vmem:[%s1 + $0x5a8] sm:$0xff]
    %v210 = vld [vmem:[%s1 + $0x5b0] sm:$0xff]
    %v211 = vld [vmem:[%s1 + $0x5b8] sm:$0xff]
    %v212 = vld [vmem:[%s1 + $0x5c0] sm:$0xff]
    %v213 = vld [vmem:[%s1 + $0x5c8] sm:$0xff]
    %v214 = vld [vmem:[%s1 + $0x5d0] sm:$0xff]
    %v215 = vld [vmem:[%s1 + $0x5d8] sm:$0xff]
    %v216 = vld [vmem:[%s1 + $0x5e0] sm:$0xff]
    %v217 = vld [vmem:[%s1 + $0x5e8] sm:$0xff]
    %v218 = vld [vmem:[%s1 + $0x5f0] sm:$0xff]
    %v219 = vld [vmem:[%s1 + $0x5f8] sm:$0xff]
    %v220 = vld [vmem:[%s1 + $0x600] sm:$0xff]
    %v221 = vld [vmem:[%s1 + $0x608] sm:$0xff]
    %v222 = vld [vmem:[%s1 + $0x610] sm:$0xff]
    %v223 = vld [vmem:[%s1 + $0x618] sm:$0xff]
    %v224 = vld [vmem:[%s1 + $0x620] sm:$0xff]
    %v225 = vld [vmem:[%s1 + $0x628] sm:$0xff]
    %v226 = vld [vmem:[%s1 + $0x630] sm:$0xff]
    %v227 = vld [vmem:[%s1 + $0x638] sm:$0xff]
    %v228 = vld [vmem:[%s1 + $0x640] sm:$0xff]
    %v229 = vld [vmem:[%s1 + $0x648] sm:$0xff]
    %v230 = vld [vmem:[%s1 + $0x650] sm:$0xff]
    %v231 = vld [vmem:[%s1 + $0x658] sm:$0xff]
    %v232 = vld [vmem:[%s1 + $0x660] sm:$0xff]
    %v233 = vld [vmem:[%s1 + $0x668] sm:$0xff]
    %v234 = vld [vmem:[%s1 + $0x670] sm:$0xff]
    %v235 = vld [vmem:[%s1 + $0x678] sm:$0xff]
    %v236 = vld [vmem:[%s1 + $0x680] sm:$0xff]
    %v237 = vld [vmem:[%s1 + $0x688] sm:$0xff]
    %v238 = vld [vmem:[%s1 + $0x690] sm:$0xff]
    %v239 = vld [vmem:[%s1 + $0x698] sm:$0xff]
    %v240 = vld [vmem:[%s1 + $0x6a0] sm:$0xff]
    %v241 = vld [vmem:[%s1 + $0x6a8] sm:$0xff]
    %v242 = vld [vmem:[%s1 + $0x6b0] sm:$0xff]
    %v243 = vld [vmem:[%s1 + $0x6b8] sm:$0xff]
    %v244 = vld [vmem:[%s1 + $0x6c0] sm:$0xff]
    %v245 = vld [vmem:[%s1 + $0x6c8] sm:$0xff]
    %v246 = vld [vmem:[%s1 + $0x6d0] sm:$0xff]
    %v247 = vld [vmem:[%s1 + $0x6d8] sm:$0xff]
    %v248 = vld [vmem:[%s1 + $0x6e0] sm:$0xff]
    %v249 = vld [vmem:[%s1 + $0x6e8] sm:$0xff]
    %v250 = vld [vmem:[%s1 + $0x6f0] sm:$0xff]
    %v251 = vld [vmem:[%s1 + $0x6f8] sm:$0xff]
    %v252 = vld [vmem:[%s1 + $0x700] sm:$0xff]
    %v253 = vld [vmem:[%s1 + $0x708] sm:$0xff]
    %v254 = vld [vmem:[%s1 + $0x710] sm:$0xff]
    %v255 = vld [vmem:[%s1 + $0x718] sm:$0xff]
    %v256 = vld [vmem:[%s1 + $0x720] sm:$0xff]
    %v257 = vld [vmem:[%s1 + $0x728] sm:$0xff]
    %v258 = vld [vmem:[%s1 + $0x730] sm:$0xff]
    %v259 = vld [vmem:[%s1 + $0x738] sm:$0xff]
    %v260 = vld [vmem:[%s1 + $0x740] sm:$0xff]
    %v261 = vld [vmem:[%s1 + $0x748] sm:$0xff]
    %v262 = vld [vmem:[%s1 + $0x750] sm:$0xff]
    %v263 = vld [vmem:[%s1 + $0x758] sm:$0xff]
    %v264 = vld [vmem:[%s1 + $0x760] sm:$0xff]
    %v265 = vld [vmem:[%s1 + $0x768] sm:$0xff]
    %v266 = vld [vmem:[%s1 + $0x770] sm:$0xff]
    %v267 = vld [vmem:[%s1 + $0x778] sm:$0xff]
    %v268 = vld [vmem:[%s1 + $0x780] sm:$0xff]
    %v269 = vld [vmem:[%s1 + $0x788] sm:$0xff]
    %v270 = vld [vmem:[%s1 + $0x790] sm:$0xff]
    %v271 = vld [vmem:[%s1 + $0x798] sm:$0xff]
    %v272 = vld [vmem:[%s1 + $0x7a0] sm:$0xff]
    %v273 = vld [vmem:[%s1 + $0x7a8] sm:$0xff]
    %v274 = vld [vmem:[%s1 + $0x7b0] sm:$0xff]
    %v275 = vld [vmem:[%s1 + $0x7b8] sm:$0xff]
    %v276 = vld [vmem:[%s1 + $0x7c0] sm:$0xff]
    %v277 = vld [vmem:[%s1 + $0x7c8] sm:$0xff]
    %v278 = vld [vmem:[%s1 + $0x7d0] sm:$0xff]
    %v279 = vld [vmem:[%s1 + $0x7d8] sm:$0xff]
    %v280 = vld [vmem:[%s1 + $0x7e0] sm:$0xff]
    %v281 = vld [vmem:[%s1 + $0x7e8] sm:$0xff]
    %v282 = vld [vmem:[%s1 + $0x7f0] sm:$0xff]
    %v283 = vld [vmem:[%s1 + $0x7f8] sm:$0xff]
    %v284 = vld [vmem:[%s1 + $0x800] sm:$0xff]
    %v285 = vld [vmem:[%s1 + $0x808] sm:$0xff]
    %v286 = vld [vmem:[%s1 + $0x810] sm:$0xff]
    %v287 = vld [vmem:[%s1 + $0x818] sm:$0xff]
    %v288 = vld [vmem:[%s1 + $0x820] sm:$0xff]
    %v289 = vld [vmem:[%s1 + $0x828] sm:$0xff]
    %v290 = vld [vmem:[%s1 + $0x830] sm:$0xff]
    %v291 = vld [vmem:[%s1 + $0x838] sm:$0xff]
    %v292 = vld [vmem:[%s1 + $0x840] sm:$0xff]
    %v293 = vld [vmem:[%s1 + $0x848] sm:$0xff]
    %v294 = vld [vmem:[%s1 + $0x850] sm:$0xff]
    %v295 = vld [vmem:[%s1 + $0x858] sm:$0xff]
    %v296 = vld [vmem:[%s1 + $0x860] sm:$0xff]
    %v297 = vld [vmem:[%s1 + $0x868] sm:$0xff]
    %v298 = vld [vmem:[%s1 + $0x870] sm:$0xff]
    %v299 = vld [vmem:[%s1 + $0x878] sm:$0xff]
    %v300 = vld [vmem:[%s1 + $0x880] sm:$0xff]
    %v301 = vld [vmem:[%s1 + $0x888] sm:$0xff]
    %v302 = vld [vmem:[%s1 + $0x890] sm:$0xff]
    %v303 = vld [vmem:[%s1 + $0x898] sm:$0xff]
    %v304 = vld [vmem:[%s1 + $0x8a0] sm:$0xff]
    %v305 = vld [vmem:[%s1 + $0x8a8] sm:$0xff]
    %v306 = vld [vmem:[%s1 + $0x8b0] sm:$0xff]
    %v307 = vld [vmem:[%s1 + $0x8b8] sm:$0xff]
    %v308 = vld [vmem:[%s1 + $0x8c0] sm:$0xff]
    %v309 = vld [vmem:[%s1 + $0x8c8] sm:$0xff]
    %v310 = vld [vmem:[%s1 + $0x8d0] sm:$0xff]
    %v311 = vld [vmem:[%s1 + $0x8d8] sm:$0xff]
    %v312 = vld [vmem:[%s1 + $0x8e0] sm:$0xff]
    %v313 = vld [vmem:[%s1 + $0x8e8] sm:$0xff]
    %v314 = vld [vmem:[%s1 + $0x8f0] sm:$0xff]
    %v315 = vld [vmem:[%s1 + $0x8f8] sm:$0xff]
    %v316 = vld [vmem:[%s1 + $0x900] sm:$0xff]
    %v317 = vld [vmem:[%s1 + $0x908] sm:$0xff]
    %v318 = vld [vmem:[%s1 + $0x910] sm:$0xff]
    %v319 = vld [vmem:[%s1 + $0x918] sm:$0xff]
    %v320 = vld [vmem:[%s1 + $0x920] sm:$0xff]
    %v321 = vld [vmem:[%s1 + $0x928] sm:$0xff]
    %v322 = vld [vmem:[%s1 + $0x930] sm:$0xff]
    %v323 = vld [vmem:[%s1 + $0x938] sm:$0xff]
    %v324 = vld [vmem:[%s1 + $0x940] sm:$0xff]
    %v325 = vld [vmem:[%s1 + $0x948] sm:$0xff]
    %v326 = vld [vmem:[%s1 + $0x950] sm:$0xff]
    %v327 = vld [vmem:[%s1 + $0x958] sm:$0xff]
    %v328 = vld [vmem:[%s1 + $0x960] sm:$0xff]
    %v329 = vld [vmem:[%s1 + $0x968] sm:$0xff]
    %v330 = vld [vmem:[%s1 + $0x970] sm:$0xff]
    %v331 = vld [vmem:[%s1 + $0x978] sm:$0xff]
    %v332 = vld [vmem:[%s1 + $0x980] sm:$0xff]
    %v333 = vld [vmem:[%s1 + $0x988] sm:$0xff]
    %v334 = vld [vmem:[%s1 + $0x990] sm:$0xff]
    %v335 = vld [vmem:[%s1 + $0x998] sm:$0xff]
    %v336 = vld [vmem:[%s1 + $0x9a0] sm:$0xff]
    %v337 = vld [vmem:[%s1 + $0x9a8] sm:$0xff]
    %v338 = vld [vmem:[%s1 + $0x9b0] sm:$0xff]
    %v339 = vld [vmem:[%s1 + $0x9b8] sm:$0xff]
    %v340 = vld [vmem:[%s1 + $0x9c0] sm:$0xff]
    %v341 = vld [vmem:[%s1 + $0x9c8] sm:$0xff]
    %v342 = vld [vmem:[%s1 + $0x9d0] sm:$0xff]
    %v343 = vld [vmem:[%s1 + $0x9d8] sm:$0xff]
    %v344 = vld [vmem:[%s1 + $0x9e0] sm:$0xff]
    %v345 = vld [vmem:[%s1 + $0x9e8] sm:$0xff]
    %v346 = vld [vmem:[%s1 + $0x9f0] sm:$0xff]
    %v347 = vld [vmem:[%s1 + $0x9f8] sm:$0xff]
    %v348 = vld [vmem:[%s1 + $0xa00] sm:$0xff]
    %v349 = vld [vmem:[%s1 + $0xa08] sm:$0xff]
    %v350 = vld [vmem:[%s1 + $0xa10] sm:$0xff]
    %v351 = vld [vmem:[%s1 + $0xa18] sm:$0xff]
    %v352 = vld [vmem:[%s1 + $0xa20] sm:$0xff]
    %v353 = vld [vmem:[%s1 + $0xa28] sm:$0xff]
    %v354 = vld [vmem:[%s1 + $0xa30] sm:$0xff]
    %v355 = vld [vmem:[%s1 + $0xa38] sm:$0xff]
    %v356 = vld [vmem:[%s1 + $0xa40] sm:$0xff]
    %v357 = vld [vmem:[%s1 + $0xa48] sm:$0xff]
    %v358 = vld [vmem:[%s1 + $0xa50] sm:$0xff]
    %v359 = vld [vmem:[%s1 + $0xa58] sm:$0xff]
    %v360 = vld [vmem:[%s1 + $0xa60] sm:$0xff]
    %v361 = vld [vmem:[%s1 + $0xa68] sm:$0xff]
    %v362 = vld [vmem:[%s1 + $0xa70] sm:$0xff]
    %v363 = vld [vmem:[%s1 + $0xa78] sm:$0xff]
    %v364 = vld [vmem:[%s1 + $0xa80] sm:$0xff]
    %v365 = vld [vmem:[%s1 + $0xa88] sm:$0xff]
    %v366 = vld [vmem:[%s1 + $0xa90] sm:$0xff]
    %v367 = vld [vmem:[%s1 + $0xa98] sm:$0xff]
    %v368 = vld [vmem:[%s1 + $0xaa0] sm:$0xff]
    %v369 = vld [vmem:[%s1 + $0xaa8] sm:$0xff]
    %v370 = vld [vmem:[%s1 + $0xab0] sm:$0xff]
    %v371 = vld [vmem:[%s1 + $0xab8] sm:$0xff]
    %v372 = vld [vmem:[%s1 + $0xac0] sm:$0xff]
    %v373 = vld [vmem:[%s1 + $0xac8] sm:$0xff]
    %v374 = vld [vmem:[%s1 + $0xad0] sm:$0xff]
    %v375 = vld [vmem:[%s1 + $0xad8] sm:$0xff]
    %v376 = vld [vmem:[%s1 + $0xae0] sm:$0xff]
    %v377 = vld [vmem:[%s1 + $0xae8] sm:$0xff]
    %v378 = vld [vmem:[%s1 + $0xaf0] sm:$0xff]
    %v379 = vld [vmem:[%s1 + $0xaf8] sm:$0xff]
    %v380 = vld [vmem:[%s1 + $0xb00] sm:$0xff]
    %v381 = vld [vmem:[%s1 + $0xb08] sm:$0xff]
    %v382 = vld [vmem:[%s1 + $0xb10] sm:$0xff]
    %v383 = vld [vmem:[%s1 + $0xb18] sm:$0xff]
    %v384 = vld [vmem:[%s1 + $0xb20] sm:$0xff]
    %v385 = vld [vmem:[%s1 + $0xb28] sm:$0xff]
    %v386 = vld [vmem:[%s1 + $0xb30] sm:$0xff]
    %v387 = vld [vmem:[%s1 + $0xb38] sm:$0xff]
    %v388 = vld [vmem:[%s1 + $0xb40] sm:$0xff]
    %v389 = vld [vmem:[%s1 + $0xb48] sm:$0xff]
    %v390 = vld [vmem:[%s1 + $0xb50] sm:$0xff]
    %v391 = vld [vmem:[%s1 + $0xb58] sm:$0xff]
    %v392 = vld [vmem:[%s1 + $0xb60] sm:$0xff]
    %v393 = vld [vmem:[%s1 + $0xb68] sm:$0xff]
    %v394 = vld [vmem:[%s1 + $0xb70] sm:$0xff]
    %v395 = vld [vmem:[%s1 + $0xb78] sm:$0xff]
    %v396 = vld [vmem:[%s1 + $0xb80] sm:$0xff]
    %v397 = vld [vmem:[%s1 + $0xb88] sm:$0xff]
    %v398 = vld [vmem:[%s1 + $0xb90] sm:$0xff]
    %v399 = vld [vmem:[%s1 + $0xb98] sm:$0xff]
    %v400 = vld [vmem:[%s1 + $0xba0] sm:$0xff]
    %v401 = vld [vmem:[%s1 + $0xba8] sm:$0xff]
    %v402 = vld [vmem:[%s1 + $0xbb0] sm:$0xff]
    %v403 = vld [vmem:[%s1 + $0xbb8] sm:$0xff]
    %v404 = vld [vmem:[%s1 + $0xbc0] sm:$0xff]
    %v405 = vld [vmem:[%s1 + $0xbc8] sm:$0xff]
    %v406 = vld [vmem:[%s1 + $0xbd0] sm:$0xff]
    %v407 = vld [vmem:[%s1 + $0xbd8] sm:$0xff]
    %v408 = vld [vmem:[%s1 + $0xbe0] sm:$0xff]
    %v409 = vld [vmem:[%s1 + $0xbe8] sm:$0xff]
    %v410 = vld [vmem:[%s1 + $0xbf0] sm:$0xff]
    %v411 = vld [vmem:[%s1 + $0xbf8] sm:$0xff]
    %v412 = vld [vmem:[%s1 + $0xc00] sm:$0xff]
    %v413 = vld [vmem:[%s1 + $0xc08] sm:$0xff]
    %v414 = vld [vmem:[%s1 + $0xc10] sm:$0xff]
    %v415 = vld [vmem:[%s1 + $0xc18] sm:$0xff]
    %v416 = vld [vmem:[%s1 + $0xc20] sm:$0xff]
    %v417 = vld [vmem:[%s1 + $0xc28] sm:$0xff]
    %v418 = vld [vmem:[%s1 + $0xc30] sm:$0xff]
    %v419 = vld [vmem:[%s1 + $0xc38] sm:$0xff]
    %v420 = vld [vmem:[%s2] sm:$0x1]
    %v422 = vlaneseq
    %v423 = vshrl.u32 %v422, 7
    %v424 = vsub.s32 0, %v423
    %v425 = vrot.slane %v420, %v424
    %v434 = vcombine.high %v21, %v21
    %v436 = vunpack.c.l.s4 1983009808
    %v437 = vunpack.c.0.s8 %v436
    %v438 = vlaneseq
    %v439 = vshrl.u32 %v438, 7
    %v440 = vsub.s32 %v437, %v439
    %v441 = vrot.slane %v21, %v440
    %v443 = vunpack.c.l.s4 1983009808
    %v444 = vunpack.c.0.s8 %v443
    %v445 = vlaneseq
    %v446 = vshrl.u32 %v445, 7
    %v447 = vsub.s32 %v444, %v446
    %v448 = vrot.slane %v434, %v447
    %v449 = vcombine.high %v441, %v441
    %v450 = vcombine.high %v448, %v448
    %v451 = vcombine.high %v22, %v22
    %v453 = vunpack.c.l.s4 1983009808
    %v454 = vunpack.c.0.s8 %v453
    %v455 = vlaneseq
    %v456 = vshrl.u32 %v455, 7
    %v457 = vsub.s32 %v454, %v456
    %v458 = vrot.slane %v22, %v457
    %v460 = vunpack.c.l.s4 1983009808
    %v461 = vunpack.c.0.s8 %v460
    %v462 = vlaneseq
    %v463 = vshrl.u32 %v462, 7
    %v464 = vsub.s32 %v461, %v463
    %v465 = vrot.slane %v451, %v464
    %v466 = vcombine.high %v458, %v458
    %v467 = vcombine.high %v465, %v465
    %v468 = vcombine.high %v23, %v23
    %v470 = vunpack.c.l.s4 1983009808
    %v471 = vunpack.c.0.s8 %v470
    %v472 = vlaneseq
    %v473 = vshrl.u32 %v472, 7
    %v474 = vsub.s32 %v471, %v473
    %v475 = vrot.slane %v23, %v474
    %v477 = vunpack.c.l.s4 1983009808
    %v478 = vunpack.c.0.s8 %v477
    %v479 = vlaneseq
    %v480 = vshrl.u32 %v479, 7
    %v481 = vsub.s32 %v478, %v480
    %v482 = vrot.slane %v468, %v481
    %v483 = vcombine.high %v475, %v475
    %v484 = vcombine.high %v482, %v482
    %v485 = vcombine.high %v24, %v24
    %v487 = vunpack.c.l.s4 1983009808
    %v488 = vunpack.c.0.s8 %v487
    %v489 = vlaneseq
    %v490 = vshrl.u32 %v489, 7
    %v491 = vsub.s32 %v488, %v490
    %v492 = vrot.slane %v24, %v491
    %v494 = vunpack.c.l.s4 1983009808
    %v495 = vunpack.c.0.s8 %v494
    %v496 = vlaneseq
    %v497 = vshrl.u32 %v496, 7
    %v498 = vsub.s32 %v495, %v497
    %v499 = vrot.slane %v485, %v498
    %v500 = vcombine.high %v492, %v492
    %v501 = vcombine.high %v499, %v499
    %v502 = vcombine.high %v25, %v25
    %v504 = vunpack.c.l.s4 1983009808
    %v505 = vunpack.c.0.s8 %v504
    %v506 = vlaneseq
    %v507 = vshrl.u32 %v506, 7
    %v508 = vsub.s32 %v505, %v507
    %v509 = vrot.slane %v25, %v508
    %v511 = vunpack.c.l.s4 1983009808
    %v512 = vunpack.c.0.s8 %v511
    %v513 = vlaneseq
    %v514 = vshrl.u32 %v513, 7
    %v515 = vsub.s32 %v512, %v514
    %v516 = vrot.slane %v502, %v515
    %v517 = vcombine.high %v509, %v509
    %v518 = vcombine.high %v516, %v516
    %v519 = vcombine.high %v26, %v26
    %v521 = vunpack.c.l.s4 1983009808
    %v522 = vunpack.c.0.s8 %v521
    %v523 = vlaneseq
    %v524 = vshrl.u32 %v523, 7
    %v525 = vsub.s32 %v522, %v524
    %v526 = vrot.slane %v26, %v525
    %v528 = vunpack.c.l.s4 1983009808
    %v529 = vunpack.c.0.s8 %v528
    %v530 = vlaneseq
    %v531 = vshrl.u32 %v530, 7
    %v532 = vsub.s32 %v529, %v531
    %v533 = vrot.slane %v519, %v532
    %v534 = vcombine.high %v526, %v526
    %v535 = vcombine.high %v533, %v533
    %v537 = vunpack.c.l.s4 1983009808
    %v538 = vunpack.c.0.s8 %v537
    %v539 = vlaneseq
    %v540 = vshrl.u32 %v539, 7
    %v541 = vsub.s32 %v538, %v540
    %v542 = vrot.slane %v27, %v541
    %vm567 = vcmask 523264
    %v568 = vsel %vm567, %v542, 0
    %570 = vmatprep.subr.mxu0 0.0
    %571 = vmatpush1.msra.mxu0 %v28
    %572 = vmatprep.subr.mxu0 0.0
    %573 = vmatpush1.msra.mxu0 %v29
    %574 = vmatprep.subr.mxu0 0.0
    %575 = vmatpush1.msra.mxu0 %v30
    %576 = vmatprep.subr.mxu0 0.0
    %577 = vmatpush1.msra.mxu0 %v31
    %578 = vmatprep.subr.mxu0 0.0
    %579 = vmatpush1.msra.mxu0 %v32
    %580 = vmatprep.subr.mxu0 0.0
    %581 = vmatpush1.msra.mxu0 %v33
    %582 = vmatprep.subr.mxu0 0.0
    %583 = vmatpush1.msra.mxu0 %v34
    %584 = vmatprep.subr.mxu0 0.0
    %585 = vmatpush1.msra.mxu0 %v35
    %586 = vmatprep.subr.mxu0 0.0
    %587 = vmatpush1.msra.mxu0 %v36
    %588 = vmatprep.subr.mxu0 0.0
    %589 = vmatpush1.msra.mxu0 %v37
    %590 = vmatprep.subr.mxu0 0.0
    %591 = vmatpush1.msra.mxu0 %v38
    %592 = vmatprep.subr.mxu0 0.0
    %593 = vmatpush1.msra.mxu0 %v39
    %594 = vmatprep.subr.mxu0 0.0
    %595 = vmatpush1.msra.mxu0 %v40
    %596 = vmatprep.subr.mxu0 0.0
    %597 = vmatpush1.msra.mxu0 %v41
    %598 = vmatprep.subr.mxu0 0.0
    %599 = vmatpush1.msra.mxu0 %v42
    %600 = vmatprep.subr.mxu0 0.0
    %601 = vmatpush1.msra.mxu0 %v43
    %602 = vmatprep.subr.mxu0 0.0
    %603 = vmatpush1.msra.mxu0 %v44
    %604 = vmatprep.subr.mxu0 0.0
    %605 = vmatpush1.msra.mxu0 %v45
    %606 = vmatprep.subr.mxu0 0.0
    %607 = vmatpush1.msra.mxu0 %v46
    %608 = vmatprep.subr.mxu0 0.0
    %609 = vmatpush1.msra.mxu0 %v47
    %610 = vmatprep.subr.mxu0 0.0
    %611 = vmatpush1.msra.mxu0 %v48
    %612 = vmatprep.subr.mxu0 0.0
    %613 = vmatpush1.msra.mxu0 %v49
    %614 = vmatprep.subr.mxu0 0.0
    %615 = vmatpush1.msra.mxu0 %v50
    %616 = vmatprep.subr.mxu0 0.0
    %617 = vmatpush1.msra.mxu0 %v51
    %618 = vmatprep.subr.mxu0 0.0
    %619 = vmatpush1.msra.mxu0 %v52
    %620 = vmatprep.subr.mxu0 0.0
    %621 = vmatpush1.msra.mxu0 %v53
    %622 = vmatprep.subr.mxu0 0.0
    %623 = vmatpush1.msra.mxu0 %v54
    %624 = vmatprep.subr.mxu0 0.0
    %625 = vmatpush1.msra.mxu0 %v55
    %626 = vmatprep.subr.mxu0 0.0
    %627 = vmatpush1.msra.mxu0 %v56
    %628 = vmatprep.subr.mxu0 0.0
    %629 = vmatpush1.msra.mxu0 %v57
    %630 = vmatprep.subr.mxu0 0.0
    %631 = vmatpush1.msra.mxu0 %v58
    %632 = vmatprep.subr.mxu0 0.0
    %633 = vmatpush1.msra.mxu0 %v59
    %634 = vmatprep.mubr.f32.mxu0 %v449
    %635 = vmatmul.mubr.f32.gmra.mrb[0].mxu0 %v441
    %v636 = vpop.f32.mrb[0].mxu0
    %v637 = vadd.f32 %v425, %v636
    %v638 = vpop.f32.mrb[0].mxu0
    %639 = vdwg.mxu0
    %640 = vmatprep.subr.mxu0 0.0
    %641 = vmatpush1.msra.mxu0 %v60
    %642 = vmatprep.subr.mxu0 0.0
    %643 = vmatpush1.msra.mxu0 %v61
    %644 = vmatprep.subr.mxu0 0.0
    %645 = vmatpush1.msra.mxu0 %v62
    %646 = vmatprep.subr.mxu0 0.0
    %647 = vmatpush1.msra.mxu0 %v63
    %648 = vmatprep.subr.mxu0 0.0
    %649 = vmatpush1.msra.mxu0 %v64
    %650 = vmatprep.subr.mxu0 0.0
    %651 = vmatpush1.msra.mxu0 %v65
    %652 = vmatprep.subr.mxu0 0.0
    %653 = vmatpush1.msra.mxu0 %v66
    %654 = vmatprep.subr.mxu0 0.0
    %655 = vmatpush1.msra.mxu0 %v67
    %656 = vmatprep.subr.mxu0 0.0
    %657 = vmatpush1.msra.mxu0 %v68
    %658 = vmatprep.subr.mxu0 0.0
    %659 = vmatpush1.msra.mxu0 %v69
    %660 = vmatprep.subr.mxu0 0.0
    %661 = vmatpush1.msra.mxu0 %v70
    %662 = vmatprep.subr.mxu0 0.0
    %663 = vmatpush1.msra.mxu0 %v71
    %664 = vmatprep.subr.mxu0 0.0
    %665 = vmatpush1.msra.mxu0 %v72
    %666 = vmatprep.subr.mxu0 0.0
    %667 = vmatpush1.msra.mxu0 %v73
    %668 = vmatprep.subr.mxu0 0.0
    %669 = vmatpush1.msra.mxu0 %v74
    %670 = vmatprep.subr.mxu0 0.0
    %671 = vmatpush1.msra.mxu0 %v75
    %672 = vmatprep.subr.mxu0 0.0
    %673 = vmatpush1.msra.mxu0 %v76
    %674 = vmatprep.subr.mxu0 0.0
    %675 = vmatpush1.msra.mxu0 %v77
    %676 = vmatprep.subr.mxu0 0.0
    %677 = vmatpush1.msra.mxu0 %v78
    %678 = vmatprep.subr.mxu0 0.0
    %679 = vmatpush1.msra.mxu0 %v79
    %680 = vmatprep.subr.mxu0 0.0
    %681 = vmatpush1.msra.mxu0 %v80
    %682 = vmatprep.subr.mxu0 0.0
    %683 = vmatpush1.msra.mxu0 %v81
    %684 = vmatprep.subr.mxu0 0.0
    %685 = vmatpush1.msra.mxu0 %v82
    %686 = vmatprep.subr.mxu0 0.0
    %687 = vmatpush1.msra.mxu0 %v83
    %688 = vmatprep.subr.mxu0 0.0
    %689 = vmatpush1.msra.mxu0 %v84
    %690 = vmatprep.subr.mxu0 0.0
    %691 = vmatpush1.msra.mxu0 %v85
    %692 = vmatprep.subr.mxu0 0.0
    %693 = vmatpush1.msra.mxu0 %v86
    %694 = vmatprep.subr.mxu0 0.0
    %695 = vmatpush1.msra.mxu0 %v87
    %696 = vmatprep.subr.mxu0 0.0
    %697 = vmatpush1.msra.mxu0 %v88
    %698 = vmatprep.subr.mxu0 0.0
    %699 = vmatpush1.msra.mxu0 %v89
    %700 = vmatprep.subr.mxu0 0.0
    %701 = vmatpush1.msra.mxu0 %v90
    %702 = vmatprep.subr.mxu0 0.0
    %703 = vmatpush1.msra.mxu0 %v91
    %704 = vmatprep.mubr.f32.mxu0 %v450
    %705 = vmatmul.mubr.f32.gmra.mrb[0].mxu0 %v448
    %v706 = vpop.f32.mrb[0].mxu0
    %v707 = vadd.f32 %v637, %v706
    %v708 = vpop.f32.mrb[0].mxu0
    %709 = vdwg.mxu0
    %710 = vmatprep.subr.mxu0 0.0
    %711 = vmatpush1.msra.mxu0 %v92
    %712 = vmatprep.subr.mxu0 0.0
    %713 = vmatpush1.msra.mxu0 %v93
    %714 = vmatprep.subr.mxu0 0.0
    %715 = vmatpush1.msra.mxu0 %v94
    %716 = vmatprep.subr.mxu0 0.0
    %717 = vmatpush1.msra.mxu0 %v95
    %718 = vmatprep.subr.mxu0 0.0
    %719 = vmatpush1.msra.mxu0 %v96
    %720 = vmatprep.subr.mxu0 0.0
    %721 = vmatpush1.msra.mxu0 %v97
    %722 = vmatprep.subr.mxu0 0.0
    %723 = vmatpush1.msra.mxu0 %v98
    %724 = vmatprep.subr.mxu0 0.0
    %725 = vmatpush1.msra.mxu0 %v99
    %726 = vmatprep.subr.mxu0 0.0
    %727 = vmatpush1.msra.mxu0 %v100
    %728 = vmatprep.subr.mxu0 0.0
    %729 = vmatpush1.msra.mxu0 %v101
    %730 = vmatprep.subr.mxu0 0.0
    %731 = vmatpush1.msra.mxu0 %v102
    %732 = vmatprep.subr.mxu0 0.0
    %733 = vmatpush1.msra.mxu0 %v103
    %734 = vmatprep.subr.mxu0 0.0
    %735 = vmatpush1.msra.mxu0 %v104
    %736 = vmatprep.subr.mxu0 0.0
    %737 = vmatpush1.msra.mxu0 %v105
    %738 = vmatprep.subr.mxu0 0.0
    %739 = vmatpush1.msra.mxu0 %v106
    %740 = vmatprep.subr.mxu0 0.0
    %741 = vmatpush1.msra.mxu0 %v107
    %742 = vmatprep.subr.mxu0 0.0
    %743 = vmatpush1.msra.mxu0 %v108
    %744 = vmatprep.subr.mxu0 0.0
    %745 = vmatpush1.msra.mxu0 %v109
    %746 = vmatprep.subr.mxu0 0.0
    %747 = vmatpush1.msra.mxu0 %v110
    %748 = vmatprep.subr.mxu0 0.0
    %749 = vmatpush1.msra.mxu0 %v111
    %750 = vmatprep.subr.mxu0 0.0
    %751 = vmatpush1.msra.mxu0 %v112
    %752 = vmatprep.subr.mxu0 0.0
    %753 = vmatpush1.msra.mxu0 %v113
    %754 = vmatprep.subr.mxu0 0.0
    %755 = vmatpush1.msra.mxu0 %v114
    %756 = vmatprep.subr.mxu0 0.0
    %757 = vmatpush1.msra.mxu0 %v115
    %758 = vmatprep.subr.mxu0 0.0
    %759 = vmatpush1.msra.mxu0 %v116
    %760 = vmatprep.subr.mxu0 0.0
    %761 = vmatpush1.msra.mxu0 %v117
    %762 = vmatprep.subr.mxu0 0.0
    %763 = vmatpush1.msra.mxu0 %v118
    %764 = vmatprep.subr.mxu0 0.0
    %765 = vmatpush1.msra.mxu0 %v119
    %766 = vmatprep.subr.mxu0 0.0
    %767 = vmatpush1.msra.mxu0 %v120
    %768 = vmatprep.subr.mxu0 0.0
    %769 = vmatpush1.msra.mxu0 %v121
    %770 = vmatprep.subr.mxu0 0.0
    %771 = vmatpush1.msra.mxu0 %v122
    %772 = vmatprep.subr.mxu0 0.0
    %773 = vmatpush1.msra.mxu0 %v123
    %774 = vmatprep.mubr.f32.mxu0 %v466
    %775 = vmatmul.mubr.f32.gmra.mrb[0].mxu0 %v458
    %v776 = vpop.f32.mrb[0].mxu0
    %v777 = vadd.f32 %v707, %v776
    %v778 = vpop.f32.mrb[0].mxu0
    %779 = vdwg.mxu0
    %780 = vmatprep.subr.mxu0 0.0
    %781 = vmatpush1.msra.mxu0 %v124
    %782 = vmatprep.subr.mxu0 0.0
    %783 = vmatpush1.msra.mxu0 %v125
    %784 = vmatprep.subr.mxu0 0.0
    %785 = vmatpush1.msra.mxu0 %v126
    %786 = vmatprep.subr.mxu0 0.0
    %787 = vmatpush1.msra.mxu0 %v127
    %788 = vmatprep.subr.mxu0 0.0
    %789 = vmatpush1.msra.mxu0 %v128
    %790 = vmatprep.subr.mxu0 0.0
    %791 = vmatpush1.msra.mxu0 %v129
    %792 = vmatprep.subr.mxu0 0.0
    %793 = vmatpush1.msra.mxu0 %v130
    %794 = vmatprep.subr.mxu0 0.0
    %795 = vmatpush1.msra.mxu0 %v131
    %796 = vmatprep.subr.mxu0 0.0
    %797 = vmatpush1.msra.mxu0 %v132
    %798 = vmatprep.subr.mxu0 0.0
    %799 = vmatpush1.msra.mxu0 %v133
    %800 = vmatprep.subr.mxu0 0.0
    %801 = vmatpush1.msra.mxu0 %v134
    %802 = vmatprep.subr.mxu0 0.0
    %803 = vmatpush1.msra.mxu0 %v135
    %804 = vmatprep.subr.mxu0 0.0
    %805 = vmatpush1.msra.mxu0 %v136
    %806 = vmatprep.subr.mxu0 0.0
    %807 = vmatpush1.msra.mxu0 %v137
    %808 = vmatprep.subr.mxu0 0.0
    %809 = vmatpush1.msra.mxu0 %v138
    %810 = vmatprep.subr.mxu0 0.0
    %811 = vmatpush1.msra.mxu0 %v139
    %812 = vmatprep.subr.mxu0 0.0
    %813 = vmatpush1.msra.mxu0 %v140
    %814 = vmatprep.subr.mxu0 0.0
    %815 = vmatpush1.msra.mxu0 %v141
    %816 = vmatprep.subr.mxu0 0.0
    %817 = vmatpush1.msra.mxu0 %v142
    %818 = vmatprep.subr.mxu0 0.0
    %819 = vmatpush1.msra.mxu0 %v143
    %820 = vmatprep.subr.mxu0 0.0
    %821 = vmatpush1.msra.mxu0 %v144
    %822 = vmatprep.subr.mxu0 0.0
    %823 = vmatpush1.msra.mxu0 %v145
    %824 = vmatprep.subr.mxu0 0.0
    %825 = vmatpush1.msra.mxu0 %v146
    %826 = vmatprep.subr.mxu0 0.0
    %827 = vmatpush1.msra.mxu0 %v147
    %828 = vmatprep.subr.mxu0 0.0
    %829 = vmatpush1.msra.mxu0 %v148
    %830 = vmatprep.subr.mxu0 0.0
    %831 = vmatpush1.msra.mxu0 %v149
    %832 = vmatprep.subr.mxu0 0.0
    %833 = vmatpush1.msra.mxu0 %v150
    %834 = vmatprep.subr.mxu0 0.0
    %835 = vmatpush1.msra.mxu0 %v151
    %836 = vmatprep.subr.mxu0 0.0
    %837 = vmatpush1.msra.mxu0 %v152
    %838 = vmatprep.subr.mxu0 0.0
    %839 = vmatpush1.msra.mxu0 %v153
    %840 = vmatprep.subr.mxu0 0.0
    %841 = vmatpush1.msra.mxu0 %v154
    %842 = vmatprep.subr.mxu0 0.0
    %843 = vmatpush1.msra.mxu0 %v155
    %844 = vmatprep.mubr.f32.mxu0 %v467
    %845 = vmatmul.mubr.f32.gmra.mrb[0].mxu0 %v465
    %v846 = vpop.f32.mrb[0].mxu0
    %v847 = vadd.f32 %v777, %v846
    %v848 = vpop.f32.mrb[0].mxu0
    %849 = vdwg.mxu0
    %850 = vmatprep.subr.mxu0 0.0
    %851 = vmatpush1.msra.mxu0 %v156
    %852 = vmatprep.subr.mxu0 0.0
    %853 = vmatpush1.msra.mxu0 %v157
    %854 = vmatprep.subr.mxu0 0.0
    %855 = vmatpush1.msra.mxu0 %v158
    %856 = vmatprep.subr.mxu0 0.0
    %857 = vmatpush1.msra.mxu0 %v159
    %858 = vmatprep.subr.mxu0 0.0
    %859 = vmatpush1.msra.mxu0 %v160
    %860 = vmatprep.subr.mxu0 0.0
    %861 = vmatpush1.msra.mxu0 %v161
    %862 = vmatprep.subr.mxu0 0.0
    %863 = vmatpush1.msra.mxu0 %v162
    %864 = vmatprep.subr.mxu0 0.0
    %865 = vmatpush1.msra.mxu0 %v163
    %866 = vmatprep.subr.mxu0 0.0
    %867 = vmatpush1.msra.mxu0 %v164
    %868 = vmatprep.subr.mxu0 0.0
    %869 = vmatpush1.msra.mxu0 %v165
    %870 = vmatprep.subr.mxu0 0.0
    %871 = vmatpush1.msra.mxu0 %v166
    %872 = vmatprep.subr.mxu0 0.0
    %873 = vmatpush1.msra.mxu0 %v167
    %874 = vmatprep.subr.mxu0 0.0
    %875 = vmatpush1.msra.mxu0 %v168
    %876 = vmatprep.subr.mxu0 0.0
    %877 = vmatpush1.msra.mxu0 %v169
    %878 = vmatprep.subr.mxu0 0.0
    %879 = vmatpush1.msra.mxu0 %v170
    %880 = vmatprep.subr.mxu0 0.0
    %881 = vmatpush1.msra.mxu0 %v171
    %882 = vmatprep.subr.mxu0 0.0
    %883 = vmatpush1.msra.mxu0 %v172
    %884 = vmatprep.subr.mxu0 0.0
    %885 = vmatpush1.msra.mxu0 %v173
    %886 = vmatprep.subr.mxu0 0.0
    %887 = vmatpush1.msra.mxu0 %v174
    %888 = vmatprep.subr.mxu0 0.0
    %889 = vmatpush1.msra.mxu0 %v175
    %890 = vmatprep.subr.mxu0 0.0
    %891 = vmatpush1.msra.mxu0 %v176
    %892 = vmatprep.subr.mxu0 0.0
    %893 = vmatpush1.msra.mxu0 %v177
    %894 = vmatprep.subr.mxu0 0.0
    %895 = vmatpush1.msra.mxu0 %v178
    %896 = vmatprep.subr.mxu0 0.0
    %897 = vmatpush1.msra.mxu0 %v179
    %898 = vmatprep.subr.mxu0 0.0
    %899 = vmatpush1.msra.mxu0 %v180
    %900 = vmatprep.subr.mxu0 0.0
    %901 = vmatpush1.msra.mxu0 %v181
    %902 = vmatprep.subr.mxu0 0.0
    %903 = vmatpush1.msra.mxu0 %v182
    %904 = vmatprep.subr.mxu0 0.0
    %905 = vmatpush1.msra.mxu0 %v183
    %906 = vmatprep.subr.mxu0 0.0
    %907 = vmatpush1.msra.mxu0 %v184
    %908 = vmatprep.subr.mxu0 0.0
    %909 = vmatpush1.msra.mxu0 %v185
    %910 = vmatprep.subr.mxu0 0.0
    %911 = vmatpush1.msra.mxu0 %v186
    %912 = vmatprep.subr.mxu0 0.0
    %913 = vmatpush1.msra.mxu0 %v187
    %914 = vmatprep.mubr.f32.mxu0 %v483
    %915 = vmatmul.mubr.f32.gmra.mrb[0].mxu0 %v475
    %v916 = vpop.f32.mrb[0].mxu0
    %v917 = vadd.f32 %v847, %v916
    %v918 = vpop.f32.mrb[0].mxu0
    %919 = vdwg.mxu0
    %920 = vmatprep.subr.mxu0 0.0
    %921 = vmatpush1.msra.mxu0 %v188
    %922 = vmatprep.subr.mxu0 0.0
    %923 = vmatpush1.msra.mxu0 %v189
    %924 = vmatprep.subr.mxu0 0.0
    %925 = vmatpush1.msra.mxu0 %v190
    %926 = vmatprep.subr.mxu0 0.0
    %927 = vmatpush1.msra.mxu0 %v191
    %928 = vmatprep.subr.mxu0 0.0
    %929 = vmatpush1.msra.mxu0 %v192
    %930 = vmatprep.subr.mxu0 0.0
    %931 = vmatpush1.msra.mxu0 %v193
    %932 = vmatprep.subr.mxu0 0.0
    %933 = vmatpush1.msra.mxu0 %v194
    %934 = vmatprep.subr.mxu0 0.0
    %935 = vmatpush1.msra.mxu0 %v195
    %936 = vmatprep.subr.mxu0 0.0
    %937 = vmatpush1.msra.mxu0 %v196
    %938 = vmatprep.subr.mxu0 0.0
    %939 = vmatpush1.msra.mxu0 %v197
    %940 = vmatprep.subr.mxu0 0.0
    %941 = vmatpush1.msra.mxu0 %v198
    %942 = vmatprep.subr.mxu0 0.0
    %943 = vmatpush1.msra.mxu0 %v199
    %944 = vmatprep.subr.mxu0 0.0
    %945 = vmatpush1.msra.mxu0 %v200
    %946 = vmatprep.subr.mxu0 0.0
    %947 = vmatpush1.msra.mxu0 %v201
    %948 = vmatprep.subr.mxu0 0.0
    %949 = vmatpush1.msra.mxu0 %v202
    %950 = vmatprep.subr.mxu0 0.0
    %951 = vmatpush1.msra.mxu0 %v203
    %952 = vmatprep.subr.mxu0 0.0
    %953 = vmatpush1.msra.mxu0 %v204
    %954 = vmatprep.subr.mxu0 0.0
    %955 = vmatpush1.msra.mxu0 %v205
    %956 = vmatprep.subr.mxu0 0.0
    %957 = vmatpush1.msra.mxu0 %v206
    %958 = vmatprep.subr.mxu0 0.0
    %959 = vmatpush1.msra.mxu0 %v207
    %960 = vmatprep.subr.mxu0 0.0
    %961 = vmatpush1.msra.mxu0 %v208
    %962 = vmatprep.subr.mxu0 0.0
    %963 = vmatpush1.msra.mxu0 %v209
    %964 = vmatprep.subr.mxu0 0.0
    %965 = vmatpush1.msra.mxu0 %v210
    %966 = vmatprep.subr.mxu0 0.0
    %967 = vmatpush1.msra.mxu0 %v211
    %968 = vmatprep.subr.mxu0 0.0
    %969 = vmatpush1.msra.mxu0 %v212
    %970 = vmatprep.subr.mxu0 0.0
    %971 = vmatpush1.msra.mxu0 %v213
    %972 = vmatprep.subr.mxu0 0.0
    %973 = vmatpush1.msra.mxu0 %v214
    %974 = vmatprep.subr.mxu0 0.0
    %975 = vmatpush1.msra.mxu0 %v215
    %976 = vmatprep.subr.mxu0 0.0
    %977 = vmatpush1.msra.mxu0 %v216
    %978 = vmatprep.subr.mxu0 0.0
    %979 = vmatpush1.msra.mxu0 %v217
    %980 = vmatprep.subr.mxu0 0.0
    %981 = vmatpush1.msra.mxu0 %v218
    %982 = vmatprep.subr.mxu0 0.0
    %983 = vmatpush1.msra.mxu0 %v219
    %984 = vmatprep.mubr.f32.mxu0 %v484
    %985 = vmatmul.mubr.f32.gmra.mrb[0].mxu0 %v482
    %v986 = vpop.f32.mrb[0].mxu0
    %v987 = vadd.f32 %v917, %v986
    %v988 = vpop.f32.mrb[0].mxu0
    %989 = vdwg.mxu0
    %990 = vmatprep.subr.mxu0 0.0
    %991 = vmatpush1.msra.mxu0 %v220
    %992 = vmatprep.subr.mxu0 0.0
    %993 = vmatpush1.msra.mxu0 %v221
    %994 = vmatprep.subr.mxu0 0.0
    %995 = vmatpush1.msra.mxu0 %v222
    %996 = vmatprep.subr.mxu0 0.0
    %997 = vmatpush1.msra.mxu0 %v223
    %998 = vmatprep.subr.mxu0 0.0
    %999 = vmatpush1.msra.mxu0 %v224
    %1000 = vmatprep.subr.mxu0 0.0
    %1001 = vmatpush1.msra.mxu0 %v225
    %1002 = vmatprep.subr.mxu0 0.0
    %1003 = vmatpush1.msra.mxu0 %v226
    %1004 = vmatprep.subr.mxu0 0.0
    %1005 = vmatpush1.msra.mxu0 %v227
    %1006 = vmatprep.subr.mxu0 0.0
    %1007 = vmatpush1.msra.mxu0 %v228
    %1008 = vmatprep.subr.mxu0 0.0
    %1009 = vmatpush1.msra.mxu0 %v229
    %1010 = vmatprep.subr.mxu0 0.0
    %1011 = vmatpush1.msra.mxu0 %v230
    %1012 = vmatprep.subr.mxu0 0.0
    %1013 = vmatpush1.msra.mxu0 %v231
    %1014 = vmatprep.subr.mxu0 0.0
    %1015 = vmatpush1.msra.mxu0 %v232
    %1016 = vmatprep.subr.mxu0 0.0
    %1017 = vmatpush1.msra.mxu0 %v233
    %1018 = vmatprep.subr.mxu0 0.0
    %1019 = vmatpush1.msra.mxu0 %v234
    %1020 = vmatprep.subr.mxu0 0.0
    %1021 = vmatpush1.msra.mxu0 %v235
    %1022 = vmatprep.subr.mxu0 0.0
    %1023 = vmatpush1.msra.mxu0 %v236
    %1024 = vmatprep.subr.mxu0 0.0
    %1025 = vmatpush1.msra.mxu0 %v237
    %1026 = vmatprep.subr.mxu0 0.0
    %1027 = vmatpush1.msra.mxu0 %v238
    %1028 = vmatprep.subr.mxu0 0.0
    %1029 = vmatpush1.msra.mxu0 %v239
    %1030 = vmatprep.subr.mxu0 0.0
    %1031 = vmatpush1.msra.mxu0 %v240
    %1032 = vmatprep.subr.mxu0 0.0
    %1033 = vmatpush1.msra.mxu0 %v241
    %1034 = vmatprep.subr.mxu0 0.0
    %1035 = vmatpush1.msra.mxu0 %v242
    %1036 = vmatprep.subr.mxu0 0.0
    %1037 = vmatpush1.msra.mxu0 %v243
    %1038 = vmatprep.subr.mxu0 0.0
    %1039 = vmatpush1.msra.mxu0 %v244
    %1040 = vmatprep.subr.mxu0 0.0
    %1041 = vmatpush1.msra.mxu0 %v245
    %1042 = vmatprep.subr.mxu0 0.0
    %1043 = vmatpush1.msra.mxu0 %v246
    %1044 = vmatprep.subr.mxu0 0.0
    %1045 = vmatpush1.msra.mxu0 %v247
    %1046 = vmatprep.subr.mxu0 0.0
    %1047 = vmatpush1.msra.mxu0 %v248
    %1048 = vmatprep.subr.mxu0 0.0
    %1049 = vmatpush1.msra.mxu0 %v249
    %1050 = vmatprep.subr.mxu0 0.0
    %1051 = vmatpush1.msra.mxu0 %v250
    %1052 = vmatprep.subr.mxu0 0.0
    %1053 = vmatpush1.msra.mxu0 %v251
    %1054 = vmatprep.mubr.f32.mxu0 %v500
    %1055 = vmatmul.mubr.f32.gmra.mrb[0].mxu0 %v492
    %v1056 = vpop.f32.mrb[0].mxu0
    %v1057 = vadd.f32 %v987, %v1056
    %v1058 = vpop.f32.mrb[0].mxu0
    %1059 = vdwg.mxu0
    %1060 = vmatprep.subr.mxu0 0.0
    %1061 = vmatpush1.msra.mxu0 %v252
    %1062 = vmatprep.subr.mxu0 0.0
    %1063 = vmatpush1.msra.mxu0 %v253
    %1064 = vmatprep.subr.mxu0 0.0
    %1065 = vmatpush1.msra.mxu0 %v254
    %1066 = vmatprep.subr.mxu0 0.0
    %1067 = vmatpush1.msra.mxu0 %v255
    %1068 = vmatprep.subr.mxu0 0.0
    %1069 = vmatpush1.msra.mxu0 %v256
    %1070 = vmatprep.subr.mxu0 0.0
    %1071 = vmatpush1.msra.mxu0 %v257
    %1072 = vmatprep.subr.mxu0 0.0
    %1073 = vmatpush1.msra.mxu0 %v258
    %1074 = vmatprep.subr.mxu0 0.0
    %1075 = vmatpush1.msra.mxu0 %v259
    %1076 = vmatprep.subr.mxu0 0.0
    %1077 = vmatpush1.msra.mxu0 %v260
    %1078 = vmatprep.subr.mxu0 0.0
    %1079 = vmatpush1.msra.mxu0 %v261
    %1080 = vmatprep.subr.mxu0 0.0
    %1081 = vmatpush1.msra.mxu0 %v262
    %1082 = vmatprep.subr.mxu0 0.0
    %1083 = vmatpush1.msra.mxu0 %v263
    %1084 = vmatprep.subr.mxu0 0.0
    %1085 = vmatpush1.msra.mxu0 %v264
    %1086 = vmatprep.subr.mxu0 0.0
    %1087 = vmatpush1.msra.mxu0 %v265
    %1088 = vmatprep.subr.mxu0 0.0
    %1089 = vmatpush1.msra.mxu0 %v266
    %1090 = vmatprep.subr.mxu0 0.0
    %1091 = vmatpush1.msra.mxu0 %v267
    %1092 = vmatprep.subr.mxu0 0.0
    %1093 = vmatpush1.msra.mxu0 %v268
    %1094 = vmatprep.subr.mxu0 0.0
    %1095 = vmatpush1.msra.mxu0 %v269
    %1096 = vmatprep.subr.mxu0 0.0
    %1097 = vmatpush1.msra.mxu0 %v270
    %1098 = vmatprep.subr.mxu0 0.0
    %1099 = vmatpush1.msra.mxu0 %v271
    %1100 = vmatprep.subr.mxu0 0.0
    %1101 = vmatpush1.msra.mxu0 %v272
    %1102 = vmatprep.subr.mxu0 0.0
    %1103 = vmatpush1.msra.mxu0 %v273
    %1104 = vmatprep.subr.mxu0 0.0
    %1105 = vmatpush1.msra.mxu0 %v274
    %1106 = vmatprep.subr.mxu0 0.0
    %1107 = vmatpush1.msra.mxu0 %v275
    %1108 = vmatprep.subr.mxu0 0.0
    %1109 = vmatpush1.msra.mxu0 %v276
    %1110 = vmatprep.subr.mxu0 0.0
    %1111 = vmatpush1.msra.mxu0 %v277
    %1112 = vmatprep.subr.mxu0 0.0
    %1113 = vmatpush1.msra.mxu0 %v278
    %1114 = vmatprep.subr.mxu0 0.0
    %1115 = vmatpush1.msra.mxu0 %v279
    %1116 = vmatprep.subr.mxu0 0.0
    %1117 = vmatpush1.msra.mxu0 %v280
    %1118 = vmatprep.subr.mxu0 0.0
    %1119 = vmatpush1.msra.mxu0 %v281
    %1120 = vmatprep.subr.mxu0 0.0
    %1121 = vmatpush1.msra.mxu0 %v282
    %1122 = vmatprep.subr.mxu0 0.0
    %1123 = vmatpush1.msra.mxu0 %v283
    %1124 = vmatprep.mubr.f32.mxu0 %v501
    %1125 = vmatmul.mubr.f32.gmra.mrb[0].mxu0 %v499
    %v1126 = vpop.f32.mrb[0].mxu0
    %v1127 = vadd.f32 %v1057, %v1126
    %v1128 = vpop.f32.mrb[0].mxu0
    %1129 = vdwg.mxu0
    %1130 = vmatprep.subr.mxu0 0.0
    %1131 = vmatpush1.msra.mxu0 %v284
    %1132 = vmatprep.subr.mxu0 0.0
    %1133 = vmatpush1.msra.mxu0 %v285
    %1134 = vmatprep.subr.mxu0 0.0
    %1135 = vmatpush1.msra.mxu0 %v286
    %1136 = vmatprep.subr.mxu0 0.0
    %1137 = vmatpush1.msra.mxu0 %v287
    %1138 = vmatprep.subr.mxu0 0.0
    %1139 = vmatpush1.msra.mxu0 %v288
    %1140 = vmatprep.subr.mxu0 0.0
    %1141 = vmatpush1.msra.mxu0 %v289
    %1142 = vmatprep.subr.mxu0 0.0
    %1143 = vmatpush1.msra.mxu0 %v290
    %1144 = vmatprep.subr.mxu0 0.0
    %1145 = vmatpush1.msra.mxu0 %v291
    %1146 = vmatprep.subr.mxu0 0.0
    %1147 = vmatpush1.msra.mxu0 %v292
    %1148 = vmatprep.subr.mxu0 0.0
    %1149 = vmatpush1.msra.mxu0 %v293
    %1150 = vmatprep.subr.mxu0 0.0
    %1151 = vmatpush1.msra.mxu0 %v294
    %1152 = vmatprep.subr.mxu0 0.0
    %1153 = vmatpush1.msra.mxu0 %v295
    %1154 = vmatprep.subr.mxu0 0.0
    %1155 = vmatpush1.msra.mxu0 %v296
    %1156 = vmatprep.subr.mxu0 0.0
    %1157 = vmatpush1.msra.mxu0 %v297
    %1158 = vmatprep.subr.mxu0 0.0
    %1159 = vmatpush1.msra.mxu0 %v298
    %1160 = vmatprep.subr.mxu0 0.0
    %1161 = vmatpush1.msra.mxu0 %v299
    %1162 = vmatprep.subr.mxu0 0.0
    %1163 = vmatpush1.msra.mxu0 %v300
    %1164 = vmatprep.subr.mxu0 0.0
    %1165 = vmatpush1.msra.mxu0 %v301
    %1166 = vmatprep.subr.mxu0 0.0
    %1167 = vmatpush1.msra.mxu0 %v302
    %1168 = vmatprep.subr.mxu0 0.0
    %1169 = vmatpush1.msra.mxu0 %v303
    %1170 = vmatprep.subr.mxu0 0.0
    %1171 = vmatpush1.msra.mxu0 %v304
    %1172 = vmatprep.subr.mxu0 0.0
    %1173 = vmatpush1.msra.mxu0 %v305
    %1174 = vmatprep.subr.mxu0 0.0
    %1175 = vmatpush1.msra.mxu0 %v306
    %1176 = vmatprep.subr.mxu0 0.0
    %1177 = vmatpush1.msra.mxu0 %v307
    %1178 = vmatprep.subr.mxu0 0.0
    %1179 = vmatpush1.msra.mxu0 %v308
    %1180 = vmatprep.subr.mxu0 0.0
    %1181 = vmatpush1.msra.mxu0 %v309
    %1182 = vmatprep.subr.mxu0 0.0
    %1183 = vmatpush1.msra.mxu0 %v310
    %1184 = vmatprep.subr.mxu0 0.0
    %1185 = vmatpush1.msra.mxu0 %v311
    %1186 = vmatprep.subr.mxu0 0.0
    %1187 = vmatpush1.msra.mxu0 %v312
    %1188 = vmatprep.subr.mxu0 0.0
    %1189 = vmatpush1.msra.mxu0 %v313
    %1190 = vmatprep.subr.mxu0 0.0
    %1191 = vmatpush1.msra.mxu0 %v314
    %1192 = vmatprep.subr.mxu0 0.0
    %1193 = vmatpush1.msra.mxu0 %v315
    %1194 = vmatprep.mubr.f32.mxu0 %v517
    %1195 = vmatmul.mubr.f32.gmra.mrb[0].mxu0 %v509
    %v1196 = vpop.f32.mrb[0].mxu0
    %v1197 = vadd.f32 %v1127, %v1196
    %v1198 = vpop.f32.mrb[0].mxu0
    %1199 = vdwg.mxu0
    %1200 = vmatprep.subr.mxu0 0.0
    %1201 = vmatpush1.msra.mxu0 %v316
    %1202 = vmatprep.subr.mxu0 0.0
    %1203 = vmatpush1.msra.mxu0 %v317
    %1204 = vmatprep.subr.mxu0 0.0
    %1205 = vmatpush1.msra.mxu0 %v318
    %1206 = vmatprep.subr.mxu0 0.0
    %1207 = vmatpush1.msra.mxu0 %v319
    %1208 = vmatprep.subr.mxu0 0.0
    %1209 = vmatpush1.msra.mxu0 %v320
    %1210 = vmatprep.subr.mxu0 0.0
    %1211 = vmatpush1.msra.mxu0 %v321
    %1212 = vmatprep.subr.mxu0 0.0
    %1213 = vmatpush1.msra.mxu0 %v322
    %1214 = vmatprep.subr.mxu0 0.0
    %1215 = vmatpush1.msra.mxu0 %v323
    %1216 = vmatprep.subr.mxu0 0.0
    %1217 = vmatpush1.msra.mxu0 %v324
    %1218 = vmatprep.subr.mxu0 0.0
    %1219 = vmatpush1.msra.mxu0 %v325
    %1220 = vmatprep.subr.mxu0 0.0
    %1221 = vmatpush1.msra.mxu0 %v326
    %1222 = vmatprep.subr.mxu0 0.0
    %1223 = vmatpush1.msra.mxu0 %v327
    %1224 = vmatprep.subr.mxu0 0.0
    %1225 = vmatpush1.msra.mxu0 %v328
    %1226 = vmatprep.subr.mxu0 0.0
    %1227 = vmatpush1.msra.mxu0 %v329
    %1228 = vmatprep.subr.mxu0 0.0
    %1229 = vmatpush1.msra.mxu0 %v330
    %1230 = vmatprep.subr.mxu0 0.0
    %1231 = vmatpush1.msra.mxu0 %v331
    %1232 = vmatprep.subr.mxu0 0.0
    %1233 = vmatpush1.msra.mxu0 %v332
    %1234 = vmatprep.subr.mxu0 0.0
    %1235 = vmatpush1.msra.mxu0 %v333
    %1236 = vmatprep.subr.mxu0 0.0
    %1237 = vmatpush1.msra.mxu0 %v334
    %1238 = vmatprep.subr.mxu0 0.0
    %1239 = vmatpush1.msra.mxu0 %v335
    %1240 = vmatprep.subr.mxu0 0.0
    %1241 = vmatpush1.msra.mxu0 %v336
    %1242 = vmatprep.subr.mxu0 0.0
    %1243 = vmatpush1.msra.mxu0 %v337
    %1244 = vmatprep.subr.mxu0 0.0
    %1245 = vmatpush1.msra.mxu0 %v338
    %1246 = vmatprep.subr.mxu0 0.0
    %1247 = vmatpush1.msra.mxu0 %v339
    %1248 = vmatprep.subr.mxu0 0.0
    %1249 = vmatpush1.msra.mxu0 %v340
    %1250 = vmatprep.subr.mxu0 0.0
    %1251 = vmatpush1.msra.mxu0 %v341
    %1252 = vmatprep.subr.mxu0 0.0
    %1253 = vmatpush1.msra.mxu0 %v342
    %1254 = vmatprep.subr.mxu0 0.0
    %1255 = vmatpush1.msra.mxu0 %v343
    %1256 = vmatprep.subr.mxu0 0.0
    %1257 = vmatpush1.msra.mxu0 %v344
    %1258 = vmatprep.subr.mxu0 0.0
    %1259 = vmatpush1.msra.mxu0 %v345
    %1260 = vmatprep.subr.mxu0 0.0
    %1261 = vmatpush1.msra.mxu0 %v346
    %1262 = vmatprep.subr.mxu0 0.0
    %1263 = vmatpush1.msra.mxu0 %v347
    %1264 = vmatprep.mubr.f32.mxu0 %v518
    %1265 = vmatmul.mubr.f32.gmra.mrb[0].mxu0 %v516
    %v1266 = vpop.f32.mrb[0].mxu0
    %v1267 = vadd.f32 %v1197, %v1266
    %v1268 = vpop.f32.mrb[0].mxu0
    %1269 = vdwg.mxu0
    %1270 = vmatprep.subr.mxu0 0.0
    %1271 = vmatpush1.msra.mxu0 %v348
    %1272 = vmatprep.subr.mxu0 0.0
    %1273 = vmatpush1.msra.mxu0 %v349
    %1274 = vmatprep.subr.mxu0 0.0
    %1275 = vmatpush1.msra.mxu0 %v350
    %1276 = vmatprep.subr.mxu0 0.0
    %1277 = vmatpush1.msra.mxu0 %v351
    %1278 = vmatprep.subr.mxu0 0.0
    %1279 = vmatpush1.msra.mxu0 %v352
    %1280 = vmatprep.subr.mxu0 0.0
    %1281 = vmatpush1.msra.mxu0 %v353
    %1282 = vmatprep.subr.mxu0 0.0
    %1283 = vmatpush1.msra.mxu0 %v354
    %1284 = vmatprep.subr.mxu0 0.0
    %1285 = vmatpush1.msra.mxu0 %v355
    %1286 = vmatprep.subr.mxu0 0.0
    %1287 = vmatpush1.msra.mxu0 %v356
    %1288 = vmatprep.subr.mxu0 0.0
    %1289 = vmatpush1.msra.mxu0 %v357
    %1290 = vmatprep.subr.mxu0 0.0
    %1291 = vmatpush1.msra.mxu0 %v358
    %1292 = vmatprep.subr.mxu0 0.0
    %1293 = vmatpush1.msra.mxu0 %v359
    %1294 = vmatprep.subr.mxu0 0.0
    %1295 = vmatpush1.msra.mxu0 %v360
    %1296 = vmatprep.subr.mxu0 0.0
    %1297 = vmatpush1.msra.mxu0 %v361
    %1298 = vmatprep.subr.mxu0 0.0
    %1299 = vmatpush1.msra.mxu0 %v362
    %1300 = vmatprep.subr.mxu0 0.0
    %1301 = vmatpush1.msra.mxu0 %v363
    %1302 = vmatprep.subr.mxu0 0.0
    %1303 = vmatpush1.msra.mxu0 %v364
    %1304 = vmatprep.subr.mxu0 0.0
    %1305 = vmatpush1.msra.mxu0 %v365
    %1306 = vmatprep.subr.mxu0 0.0
    %1307 = vmatpush1.msra.mxu0 %v366
    %1308 = vmatprep.subr.mxu0 0.0
    %1309 = vmatpush1.msra.mxu0 %v367
    %1310 = vmatprep.subr.mxu0 0.0
    %1311 = vmatpush1.msra.mxu0 %v368
    %1312 = vmatprep.subr.mxu0 0.0
    %1313 = vmatpush1.msra.mxu0 %v369
    %1314 = vmatprep.subr.mxu0 0.0
    %1315 = vmatpush1.msra.mxu0 %v370
    %1316 = vmatprep.subr.mxu0 0.0
    %1317 = vmatpush1.msra.mxu0 %v371
    %1318 = vmatprep.subr.mxu0 0.0
    %1319 = vmatpush1.msra.mxu0 %v372
    %1320 = vmatprep.subr.mxu0 0.0
    %1321 = vmatpush1.msra.mxu0 %v373
    %1322 = vmatprep.subr.mxu0 0.0
    %1323 = vmatpush1.msra.mxu0 %v374
    %1324 = vmatprep.subr.mxu0 0.0
    %1325 = vmatpush1.msra.mxu0 %v375
    %1326 = vmatprep.subr.mxu0 0.0
    %1327 = vmatpush1.msra.mxu0 %v376
    %1328 = vmatprep.subr.mxu0 0.0
    %1329 = vmatpush1.msra.mxu0 %v377
    %1330 = vmatprep.subr.mxu0 0.0
    %1331 = vmatpush1.msra.mxu0 %v378
    %1332 = vmatprep.subr.mxu0 0.0
    %1333 = vmatpush1.msra.mxu0 %v379
    %1334 = vmatprep.mubr.f32.mxu0 %v534
    %1335 = vmatmul.mubr.f32.gmra.mrb[0].mxu0 %v526
    %v1336 = vpop.f32.mrb[0].mxu0
    %v1337 = vadd.f32 %v1267, %v1336
    %v1338 = vpop.f32.mrb[0].mxu0
    %1339 = vdwg.mxu0
    %1340 = vmatprep.subr.mxu0 0.0
    %1341 = vmatpush1.msra.mxu0 %v380
    %1342 = vmatprep.subr.mxu0 0.0
    %1343 = vmatpush1.msra.mxu0 %v381
    %1344 = vmatprep.subr.mxu0 0.0
    %1345 = vmatpush1.msra.mxu0 %v382
    %1346 = vmatprep.subr.mxu0 0.0
    %1347 = vmatpush1.msra.mxu0 %v383
    %1348 = vmatprep.subr.mxu0 0.0
    %1349 = vmatpush1.msra.mxu0 %v384
    %1350 = vmatprep.subr.mxu0 0.0
    %1351 = vmatpush1.msra.mxu0 %v385
    %1352 = vmatprep.subr.mxu0 0.0
    %1353 = vmatpush1.msra.mxu0 %v386
    %1354 = vmatprep.subr.mxu0 0.0
    %1355 = vmatpush1.msra.mxu0 %v387
    %1356 = vmatprep.subr.mxu0 0.0
    %1357 = vmatpush1.msra.mxu0 %v388
    %1358 = vmatprep.subr.mxu0 0.0
    %1359 = vmatpush1.msra.mxu0 %v389
    %1360 = vmatprep.subr.mxu0 0.0
    %1361 = vmatpush1.msra.mxu0 %v390
    %1362 = vmatprep.subr.mxu0 0.0
    %1363 = vmatpush1.msra.mxu0 %v391
    %1364 = vmatprep.subr.mxu0 0.0
    %1365 = vmatpush1.msra.mxu0 %v392
    %1366 = vmatprep.subr.mxu0 0.0
    %1367 = vmatpush1.msra.mxu0 %v393
    %1368 = vmatprep.subr.mxu0 0.0
    %1369 = vmatpush1.msra.mxu0 %v394
    %1370 = vmatprep.subr.mxu0 0.0
    %1371 = vmatpush1.msra.mxu0 %v395
    %1372 = vmatprep.subr.mxu0 0.0
    %1373 = vmatpush1.msra.mxu0 %v396
    %1374 = vmatprep.subr.mxu0 0.0
    %1375 = vmatpush1.msra.mxu0 %v397
    %1376 = vmatprep.subr.mxu0 0.0
    %1377 = vmatpush1.msra.mxu0 %v398
    %1378 = vmatprep.subr.mxu0 0.0
    %1379 = vmatpush1.msra.mxu0 %v399
    %1380 = vmatprep.subr.mxu0 0.0
    %1381 = vmatpush1.msra.mxu0 %v400
    %1382 = vmatprep.subr.mxu0 0.0
    %1383 = vmatpush1.msra.mxu0 %v401
    %1384 = vmatprep.subr.mxu0 0.0
    %1385 = vmatpush1.msra.mxu0 %v402
    %1386 = vmatprep.subr.mxu0 0.0
    %1387 = vmatpush1.msra.mxu0 %v403
    %1388 = vmatprep.subr.mxu0 0.0
    %1389 = vmatpush1.msra.mxu0 %v404
    %1390 = vmatprep.subr.mxu0 0.0
    %1391 = vmatpush1.msra.mxu0 %v405
    %1392 = vmatprep.subr.mxu0 0.0
    %1393 = vmatpush1.msra.mxu0 %v406
    %1394 = vmatprep.subr.mxu0 0.0
    %1395 = vmatpush1.msra.mxu0 %v407
    %1396 = vmatprep.subr.mxu0 0.0
    %1397 = vmatpush1.msra.mxu0 %v408
    %1398 = vmatprep.subr.mxu0 0.0
    %1399 = vmatpush1.msra.mxu0 %v409
    %1400 = vmatprep.subr.mxu0 0.0
    %1401 = vmatpush1.msra.mxu0 %v410
    %1402 = vmatprep.subr.mxu0 0.0
    %1403 = vmatpush1.msra.mxu0 %v411
    %1404 = vmatprep.mubr.f32.mxu0 %v535
    %1405 = vmatmul.mubr.f32.gmra.mrb[0].mxu0 %v533
    %v1406 = vpop.f32.mrb[0].mxu0
    %v1407 = vadd.f32 %v1337, %v1406
    %v1408 = vpop.f32.mrb[0].mxu0
    %1409 = vdwg.mxu0
    %1410 = vmatprep.subr.mxu0 0.0
    %1411 = vmatpush1.msra.mxu0 %v412
    %1412 = vmatprep.subr.mxu0 0.0
    %1413 = vmatpush1.msra.mxu0 %v413
    %1414 = vmatprep.subr.mxu0 0.0
    %1415 = vmatpush1.msra.mxu0 %v414
    %1416 = vmatprep.subr.mxu0 0.0
    %1417 = vmatpush1.msra.mxu0 %v415
    %1418 = vmatprep.subr.mxu0 0.0
    %1419 = vmatpush1.msra.mxu0 %v416
    %1420 = vmatprep.subr.mxu0 0.0
    %1421 = vmatpush1.msra.mxu0 %v417
    %1422 = vmatprep.subr.mxu0 0.0
    %1423 = vmatpush1.msra.mxu0 %v418
    %1424 = vmatprep.subr.mxu0 0.0
    %1425 = vmatpush1.msra.mxu0 %v419
    %1426 = vmatprep.subr.mxu0 0.0
    %1427 = vmatpush1.msra.mxu0 0.0
    %1428 = vmatprep.subr.mxu0 0.0
    %1429 = vmatpush1.msra.mxu0 0.0
    %1430 = vmatprep.subr.mxu0 0.0
    %1431 = vmatpush1.msra.mxu0 0.0
    %1432 = vmatprep.subr.mxu0 0.0
    %1433 = vmatpush1.msra.mxu0 0.0
    %1434 = vmatprep.subr.mxu0 0.0
    %1435 = vmatpush1.msra.mxu0 0.0
    %1436 = vmatprep.subr.mxu0 0.0
    %1437 = vmatpush1.msra.mxu0 0.0
    %1438 = vmatprep.subr.mxu0 0.0
    %1439 = vmatpush1.msra.mxu0 0.0
    %1440 = vmatprep.subr.mxu0 0.0
    %1441 = vmatpush1.msra.mxu0 0.0
    %1442 = vmatprep.subr.mxu0 0.0
    %1443 = vmatpush1.msra.mxu0 0.0
    %1444 = vmatprep.subr.mxu0 0.0
    %1445 = vmatpush1.msra.mxu0 0.0
    %1446 = vmatprep.subr.mxu0 0.0
    %1447 = vmatpush1.msra.mxu0 0.0
    %1448 = vmatprep.subr.mxu0 0.0
    %1449 = vmatpush1.msra.mxu0 0.0
    %1450 = vmatprep.subr.mxu0 0.0
    %1451 = vmatpush1.msra.mxu0 0.0
    %1452 = vmatprep.subr.mxu0 0.0
    %1453 = vmatpush1.msra.mxu0 0.0
    %1454 = vmatprep.subr.mxu0 0.0
    %1455 = vmatpush1.msra.mxu0 0.0
    %1456 = vmatprep.subr.mxu0 0.0
    %1457 = vmatpush1.msra.mxu0 0.0
    %1458 = vmatprep.subr.mxu0 0.0
    %1459 = vmatpush1.msra.mxu0 0.0
    %1460 = vmatprep.subr.mxu0 0.0
    %1461 = vmatpush1.msra.mxu0 0.0
    %1462 = vmatprep.subr.mxu0 0.0
    %1463 = vmatpush1.msra.mxu0 0.0
    %1464 = vmatprep.subr.mxu0 0.0
    %1465 = vmatpush1.msra.mxu0 0.0
    %1466 = vmatprep.subr.mxu0 0.0
    %1467 = vmatpush1.msra.mxu0 0.0
    %1468 = vmatprep.subr.mxu0 0.0
    %1469 = vmatpush1.msra.mxu0 0.0
    %1470 = vmatprep.subr.mxu0 0.0
    %1471 = vmatpush1.msra.mxu0 0.0
    %1472 = vmatprep.subr.mxu0 0.0
    %1473 = vmatpush1.msra.mxu0 0.0
    %1474 = vmatprep.mubr.f32.mxu0 0.0
    %1475 = vmatmul.mubr.f32.gmra.mrb[0].mxu0 %v568
    %v1476 = vpop.f32.mrb[0].mxu0
    %v1477 = vadd.f32 %v1407, %v1476
    %v1478 = vpop.f32.mrb[0].mxu0
    %1479 = vdwg.mxu0
    %v1480 = vmax.f32 %v1477, 0.0
    %v1481 = vld [vmem:[%s3] sm:$0xff]
    %v1482 = vld [vmem:[%s3 + $0x8] sm:$0xff]
    %v1483 = vld [vmem:[%s3 + $0x10] sm:$0xff]
    %v1484 = vld [vmem:[%s3 + $0x18] sm:$0xff]
    %v1485 = vld [vmem:[%s3 + $0x20] sm:$0xff]
    %v1486 = vld [vmem:[%s3 + $0x28] sm:$0xff]
    %v1487 = vld [vmem:[%s3 + $0x30] sm:$0xff]
    %v1488 = vld [vmem:[%s3 + $0x38] sm:$0xff]
    %v1489 = vld [vmem:[%s3 + $0x40] sm:$0xff]
    %v1490 = vld [vmem:[%s3 + $0x48] sm:$0xff]
    %v1491 = vld [vmem:[%s3 + $0x50] sm:$0xff]
    %v1492 = vld [vmem:[%s3 + $0x58] sm:$0xff]
    %v1493 = vld [vmem:[%s3 + $0x60] sm:$0xff]
    %v1494 = vld [vmem:[%s3 + $0x68] sm:$0xff]
    %v1495 = vld [vmem:[%s3 + $0x70] sm:$0xff]
    %v1496 = vld [vmem:[%s3 + $0x78] sm:$0xff]
    %v1497 = vld [vmem:[%s4] sm:$0x1]
    %v1499 = vlaneseq
    %v1500 = vshrl.u32 %v1499, 7
    %v1501 = vsub.s32 0, %v1500
    %v1502 = vrot.slane %v1497, %v1501
    %1504 = vmatprep.subr.mxu0 0.0
    %1505 = vmatpush1.msra.mxu0 %v1481
    %1506 = vmatprep.subr.mxu0 0.0
    %1507 = vmatpush1.msra.mxu0 %v1482
    %1508 = vmatprep.subr.mxu0 0.0
    %1509 = vmatpush1.msra.mxu0 %v1483
    %1510 = vmatprep.subr.mxu0 0.0
    %1511 = vmatpush1.msra.mxu0 %v1484
    %1512 = vmatprep.subr.mxu0 0.0
    %1513 = vmatpush1.msra.mxu0 %v1485
    %1514 = vmatprep.subr.mxu0 0.0
    %1515 = vmatpush1.msra.mxu0 %v1486
    %1516 = vmatprep.subr.mxu0 0.0
    %1517 = vmatpush1.msra.mxu0 %v1487
    %1518 = vmatprep.subr.mxu0 0.0
    %1519 = vmatpush1.msra.mxu0 %v1488
    %1520 = vmatprep.subr.mxu0 0.0
    %1521 = vmatpush1.msra.mxu0 %v1489
    %1522 = vmatprep.subr.mxu0 0.0
    %1523 = vmatpush1.msra.mxu0 %v1490
    %1524 = vmatprep.subr.mxu0 0.0
    %1525 = vmatpush1.msra.mxu0 %v1491
    %1526 = vmatprep.subr.mxu0 0.0
    %1527 = vmatpush1.msra.mxu0 %v1492
    %1528 = vmatprep.subr.mxu0 0.0
    %1529 = vmatpush1.msra.mxu0 %v1493
    %1530 = vmatprep.subr.mxu0 0.0
    %1531 = vmatpush1.msra.mxu0 %v1494
    %1532 = vmatprep.subr.mxu0 0.0
    %1533 = vmatpush1.msra.mxu0 %v1495
    %1534 = vmatprep.subr.mxu0 0.0
    %1535 = vmatpush1.msra.mxu0 %v1496
    %1536 = vmatprep.subr.mxu0 0.0
    %1537 = vmatpush1.msra.mxu0 0.0
    %1538 = vmatprep.subr.mxu0 0.0
    %1539 = vmatpush1.msra.mxu0 0.0
    %1540 = vmatprep.subr.mxu0 0.0
    %1541 = vmatpush1.msra.mxu0 0.0
    %1542 = vmatprep.subr.mxu0 0.0
    %1543 = vmatpush1.msra.mxu0 0.0
    %1544 = vmatprep.subr.mxu0 0.0
    %1545 = vmatpush1.msra.mxu0 0.0
    %1546 = vmatprep.subr.mxu0 0.0
    %1547 = vmatpush1.msra.mxu0 0.0
    %1548 = vmatprep.subr.mxu0 0.0
    %1549 = vmatpush1.msra.mxu0 0.0
    %1550 = vmatprep.subr.mxu0 0.0
    %1551 = vmatpush1.msra.mxu0 0.0
    %1552 = vmatprep.subr.mxu0 0.0
    %1553 = vmatpush1.msra.mxu0 0.0
    %1554 = vmatprep.subr.mxu0 0.0
    %1555 = vmatpush1.msra.mxu0 0.0
    %1556 = vmatprep.subr.mxu0 0.0
    %1557 = vmatpush1.msra.mxu0 0.0
    %1558 = vmatprep.subr.mxu0 0.0
    %1559 = vmatpush1.msra.mxu0 0.0
    %1560 = vmatprep.subr.mxu0 0.0
    %1561 = vmatpush1.msra.mxu0 0.0
    %1562 = vmatprep.subr.mxu0 0.0
    %1563 = vmatpush1.msra.mxu0 0.0
    %1564 = vmatprep.subr.mxu0 0.0
    %1565 = vmatpush1.msra.mxu0 0.0
    %1566 = vmatprep.subr.mxu0 0.0
    %1567 = vmatpush1.msra.mxu0 0.0
    %1568 = vmatprep.mubr.f32.mxu0 0.0
    %1569 = vmatmul.mubr.f32.gmra.mrb[0].mxu0 %v1480
    %v1570 = vpop.f32.mrb[0].mxu0
    %v1571 = vadd.f32 %v1502, %v1570
    %v1572 = vpop.f32.mrb[0].mxu0
    %1573 = vdwg.mxu0
    %1574 = vst [vmem:[#allocation2] sm:$0x3] %v1571
    // Predicated region
    $region22: #{net_forward.5} parent=1 // pred_check
      _
    $region23: #{net_forward.5} parent=1 // pred_check_branch
      %1576 = sbr.rel (0) target = $region25
    $region24: #{net_forward.5} parent=1 // pred_region
      %s1578 = ssub.s32 32, 32
      %1579 = vsyncadd [#allocation3], %s1578
      %s1581 = sshll.u32 [#allocation2], 4
      %s1582 = int_to_ptr.vmem [resolvable:$true] %s1581
      %1584 = dma.vmem_to_hbm [thread:$0]  %s1582, 32, %s5, [#allocation3]
    $region25: #{net_forward.5} parent=1 // pred_fallthru
      _
    // Predicated region
    $region26: #{net_forward.5} parent=1 // pred_check
      _
    $region27: #{net_forward.5} parent=1 // pred_check_branch
      %1586 = sbr.rel (0) target = $region29
    $region28: #{net_forward.5} parent=1 // pred_region
      %1587 = dma.done [#allocation3], 32
    $region29: #{net_forward.5} parent=1 // pred_fallthru
      _
    %1588 = vsyncpa [#allocation3], 1

</llo_original>
